<compile_context>
chip_gen: v7x
topology: tpu7x:2x2x1
jax: 0.10.0
libtpu: 0.0.40
codegen_flags: <defaults>
</compile_context>

<pallas_src>
import functools

import jax
import jax.numpy as jnp
from jax import lax
from jax.experimental import pallas as pl
from jax.experimental.pallas import tpu as pltpu

_LANE = 128


def _round_up(x, m):
    return (x + m - 1) // m * m


def _vmem_limit_bytes():
    """Generation-aware scoped-VMEM limit: ~60% of physical, clamped to 32..96 MiB."""
    cap = 64 * 1024 * 1024
    try:
        cap = int(pltpu.get_tpu_info().vmem_capacity_bytes)
    except Exception:
        pass
    return max(32 * 1024 * 1024, min((cap * 3) // 5, 96 * 1024 * 1024))


def _pick_row_tile(h_out, w_out, c_out_p):
    """Largest th dividing h_out with M = th*w_out <= 512 and f32 acc <= 256 KiB."""
    m_cap = min(512, max(w_out, (256 * 1024) // (c_out_p * 4)))
    best = 1
    for th in range(1, h_out + 1):
        if h_out % th == 0 and th * w_out <= m_cap:
            best = th
    return best


def _conv_chunk(load_rows, w_ref, th, w_out, c_in_p, c_out_p, stride):
    """One row-chunk of a 3x3 conv as 9 accumulating MXU dots (no im2col concat)."""
    acc = jnp.zeros((th * w_out, c_out_p), jnp.float32)
    for dy in range(3):
        rows = load_rows(dy)                          # (th, W_in, c_in_p) bf16
        for dx in range(3):
            if stride == 1:
                tap = rows[:, dx:dx + w_out, :]
            else:
                # TODO(synk): stride>1 uses static strided value-slices on the
                # sublane axis; only stride=1 is validated here.
                tap = rows[:, dx:dx + stride * (w_out - 1) + 1:stride, :]
            acc = acc + jnp.dot(tap.reshape(th * w_out, c_in_p),
                                w_ref[dy * 3 + dx],
                                preferred_element_type=jnp.float32)
    return acc


def _conv1_kernel(xp_ref, w_ref, y_ref, stats_ref, ssum_ref, ssq_ref, *,
                  th, stride, h_out, w_out, c_in_p, c_out_p, unroll):
    """conv1 (pre-BN, bf16 store) for one image + per-image per-channel (sum, sumsq)."""
    ssum_ref[...] = jnp.zeros_like(ssum_ref)
    ssq_ref[...] = jnp.zeros_like(ssq_ref)

    def chunk(t):
        base = t * (th * stride)
        if not isinstance(t, int):
            base = pl.multiple_of(base, th * stride)

        def load_rows(dy):
            if stride == 1:
                return xp_ref[0, pl.ds(base + dy, th), :, :]
            return xp_ref[0, pl.ds(base + dy, th, stride), :, :]

        acc = _conv_chunk(load_rows, w_ref, th, w_out, c_in_p, c_out_p, stride)
        y_ref[0, pl.ds(t * th, th), :, :] = (
            acc.reshape(th, w_out, c_out_p).astype(y_ref.dtype))
        ssum_ref[...] += jnp.sum(acc, axis=0, keepdims=True)
        ssq_ref[...] += jnp.sum(acc * acc, axis=0, keepdims=True)

    n_chunks = h_out // th
    if unroll:
        for t in range(n_chunks):
            chunk(t)
    else:
        @pl.loop(0, n_chunks)
        def _(t):
            chunk(t)

    stats_ref[0, :, :] = jnp.concatenate([ssum_ref[...], ssq_ref[...]], axis=0)


def _bn_relu_conv2_kernel(y1_ref, scale_ref, shift_ref, w_ref, y2_ref, stats_ref,
                          zp_ref, ssum_ref, ssq_ref, *, th, h_out, w_out, c_p, unroll):
    """bn1+relu1 (pointwise, given global stats) fused with conv2 + stats2."""
    bf = jnp.bfloat16
    n_chunks = h_out // th

    # Zero only the top/bottom halo rows; left/right halo columns are folded
    # into the width-padded interior stores below (no size-1 column stores).
    zp_ref[0:1, :, :] = jnp.zeros((1, w_out + 2, c_p), bf)
    zp_ref[h_out + 1:h_out + 2, :, :] = jnp.zeros((1, w_out + 2, c_p), bf)

    scale = scale_ref[...].reshape(1, 1, c_p)
    shift = shift_ref[...].reshape(1, 1, c_p)

    def bn_chunk(t):
        y = y1_ref[0, pl.ds(t * th, th), :, :].astype(jnp.float32)
        z = jnp.maximum(y * scale + shift, 0.0).astype(bf)
        zp_ref[pl.ds(1 + t * th, th), :, :] = jnp.pad(z, ((0, 0), (1, 1), (0, 0)))

    def conv_chunk(t):
        base = t * th
        if not isinstance(t, int):
            base = pl.multiple_of(base, th)

        def load_rows(dy):
            return zp_ref[pl.ds(base + dy, th), :, :]

        acc = _conv_chunk(load_rows, w_ref, th, w_out, c_p, c_p, 1)
        y2_ref[0, pl.ds(t * th, th), :, :] = (
            acc.reshape(th, w_out, c_p).astype(y2_ref.dtype))
        ssum_ref[...] += jnp.sum(acc, axis=0, keepdims=True)
        ssq_ref[...] += jnp.sum(acc * acc, axis=0, keepdims=True)

    if unroll:
        for t in range(n_chunks):
            bn_chunk(t)
    else:
        @pl.loop(0, n_chunks)
        def _(t):
            bn_chunk(t)

    ssum_ref[...] = jnp.zeros_like(ssum_ref)
    ssq_ref[...] = jnp.zeros_like(ssq_ref)

    if unroll:
        for t in range(n_chunks):
            conv_chunk(t)
    else:
        @pl.loop(0, n_chunks)
        def _(t):
            conv_chunk(t)

    stats_ref[0, :, :] = jnp.concatenate([ssum_ref[...], ssq_ref[...]], axis=0)


def _pack_weights(w_oihw, c_in_p, c_out_p):
    """torch (Cout, Cin, 3, 3) -> (9, Cin_p, Cout_p) bf16, tap order = (dy, dx)."""
    c_out, c_in = w_oihw.shape[0], w_oihw.shape[1]
    wk = jnp.transpose(w_oihw, (2, 3, 1, 0))          # (3, 3, Cin, Cout)
    wk = jnp.pad(wk, ((0, 0), (0, 0), (0, c_in_p - c_in), (0, c_out_p - c_out)))
    return wk.reshape(9, c_in_p, c_out_p).astype(jnp.bfloat16)


def _bn_scale_shift(stats, gamma, beta, count, c_out, c_out_p, eps):
    """Per-channel affine (scale, shift) from per-image partial (sum, sumsq)."""
    s = jnp.sum(stats.astype(jnp.float32), axis=0)     # (2, c_out_p)
    mean = s[0] / count
    # TODO(synk): E[x^2]-E[x]^2 variance (clamped at 0); consider Welford-style
    # combination for very large N*H*W or large-magnitude activations.
    var = jnp.maximum(s[1] / count - mean * mean, 0.0)
    g = jnp.pad(gamma.astype(jnp.float32), (0, c_out_p - c_out))
    b = jnp.pad(beta.astype(jnp.float32), (0, c_out_p - c_out))
    scale = g * lax.rsqrt(var + eps)
    shift = b - mean * scale
    return scale.reshape(1, c_out_p), shift.reshape(1, c_out_p)


def plain_block(x_nchw, w1, g1, b1, w2, g2, b2, *, stride=1, eps=1e-5):
    """Forward of PlainBlock.  x_nchw: (N, Cin, H, W); w1: (Cout, Cin, 3, 3)."""
    assert stride in (1, 2)
    n, c_in, h, w = x_nchw.shape
    c_out = w1.shape[0]
    ho = (h + 2 - 3) // stride + 1
    wo = (w + 2 - 3) // stride + 1
    c_in_p = _round_up(c_in, _LANE)
    c_out_p = _round_up(c_out, _LANE)
    th = _pick_row_tile(ho, wo, c_out_p)
    unroll = (ho // th) <= 8

    # NCHW -> NHWC + bf16 cast + spatial pad=1 + channel (lane) pad.
    x = jnp.transpose(x_nchw, (0, 2, 3, 1)).astype(jnp.bfloat16)
    xp = jnp.pad(x, ((0, 0), (1, 1), (1, 1), (0, c_in_p - c_in)))

    w1k = _pack_weights(w1, c_in_p, c_out_p)
    w2k = _pack_weights(w2, c_out_p, c_out_p)

    params = pltpu.CompilerParams(dimension_semantics=("parallel",),
                                  vmem_limit_bytes=_vmem_limit_bytes())

    # ---- pass 1: conv1 (bf16 out) + per-image partial BN1 statistics ---------
    flops1 = 2 * n * ho * wo * 9 * c_in_p * c_out_p
    bytes1 = (xp.size * 2 + w1k.size * 2
              + n * ho * wo * c_out_p * 2 + n * 2 * c_out_p * 4)
    y1, stats1 = pl.pallas_call(
        functools.partial(_conv1_kernel, th=th, stride=stride, h_out=ho,
                          w_out=wo, c_in_p=c_in_p, c_out_p=c_out_p, unroll=unroll),
        grid=(n,),
        in_specs=[
            pl.BlockSpec((1, h + 2, w + 2, c_in_p), lambda i: (i, 0, 0, 0)),
            pl.BlockSpec((9, c_in_p, c_out_p), lambda i: (0, 0, 0)),
        ],
        out_specs=(
            pl.BlockSpec((1, ho, wo, c_out_p), lambda i: (i, 0, 0, 0)),
            pl.BlockSpec((1, 2, c_out_p), lambda i: (i, 0, 0)),
        ),
        out_shape=(
            jax.ShapeDtypeStruct((n, ho, wo, c_out_p), jnp.bfloat16),
            jax.ShapeDtypeStruct((n, 2, c_out_p), jnp.float32),
        ),
        scratch_shapes=[pltpu.VMEM((1, c_out_p), jnp.float32),
                        pltpu.VMEM((1, c_out_p), jnp.float32)],
        compiler_params=params,
        cost_estimate=pl.CostEstimate(flops=flops1, transcendentals=0,
                                      bytes_accessed=bytes1),
    )(xp, w1k)

    count = float(n * ho * wo)
    scale1, shift1 = _bn_scale_shift(stats1, g1, b1, count, c_out, c_out_p, eps)

    # ---- pass 2: bn1+relu1 fused with conv2 (bf16 out), + partial BN2 stats --
    flops2 = 2 * n * ho * wo * 9 * c_out_p * c_out_p
    bytes2 = (2 * n * ho * wo * c_out_p * 2 + w2k.size * 2
              + n * 2 * c_out_p * 4 + 4 * c_out_p * 4)
    y2, stats2 = pl.pallas_call(
        functools.partial(_bn_relu_conv2_kernel, th=th, h_out=ho, w_out=wo,
                          c_p=c_out_p, unroll=unroll),
        grid=(n,),
        in_specs=[
            pl.BlockSpec((1, ho, wo, c_out_p), lambda i: (i, 0, 0, 0)),
            pl.BlockSpec((1, c_out_p), lambda i: (0, 0)),
            pl.BlockSpec((1, c_out_p), lambda i: (0, 0)),
            pl.BlockSpec((9, c_out_p, c_out_p), lambda i: (0, 0, 0)),
        ],
        out_specs=(
            pl.BlockSpec((1, ho, wo, c_out_p), lambda i: (i, 0, 0, 0)),
            pl.BlockSpec((1, 2, c_out_p), lambda i: (i, 0, 0)),
        ),
        out_shape=(
            jax.ShapeDtypeStruct((n, ho, wo, c_out_p), jnp.bfloat16),
            jax.ShapeDtypeStruct((n, 2, c_out_p), jnp.float32),
        ),
        scratch_shapes=[pltpu.VMEM((ho + 2, wo + 2, c_out_p), jnp.bfloat16),
                        pltpu.VMEM((1, c_out_p), jnp.float32),
                        pltpu.VMEM((1, c_out_p), jnp.float32)],
        compiler_params=params,
        cost_estimate=pl.CostEstimate(flops=flops2, transcendentals=0,
                                      bytes_accessed=bytes2),
    )(y1, scale1, shift1, w2k)

    scale2, shift2 = _bn_scale_shift(stats2, g2, b2, count, c_out, c_out_p, eps)

    # ---- bn2 + relu2: plain JAX, fused by XLA with slice + transpose ---------
    s2 = scale2[0, :c_out].reshape(1, 1, 1, c_out)
    t2 = shift2[0, :c_out].reshape(1, 1, 1, c_out)
    out_nhwc = jnp.maximum(y2[:, :, :, :c_out].astype(jnp.float32) * s2 + t2, 0.0)
    return jnp.transpose(out_nhwc, (0, 3, 1, 2))


def _reference(x_nchw, w1, g1, b1, w2, g2, b2, *, stride=1, eps=1e-5, mixed=False):
    """Pure-JAX reference (lax conv, NCHW).  mixed=True rounds the conv inputs
    and the inter-layer activations to bf16 at the same points as the kernel
    (BN stats stay in f32), so the two can be compared tightly."""
    def rnd(a):
        return a.astype(jnp.bfloat16).astype(jnp.float32) if mixed else a

    def conv(xx, ww, s):
        return lax.conv_general_dilated(
            rnd(xx), rnd(ww), window_strides=(s, s), padding=((1, 1), (1, 1)),
            dimension_numbers=("NCHW", "OIHW", "NCHW"),
            precision=lax.Precision.HIGHEST)

    def bn_relu(y_f32, g, b):
        mean = jnp.mean(y_f32, axis=(0, 2, 3), keepdims=True)
        var = jnp.mean((y_f32 - mean) ** 2, axis=(0, 2, 3), keepdims=True)
        y_in = rnd(y_f32)           # kernel stores the pre-BN activation in bf16
        out = (y_in - mean) * lax.rsqrt(var + eps)
        out = out * g.reshape(1, -1, 1, 1) + b.reshape(1, -1, 1, 1)
        return jnp.maximum(out, 0.0)

    y = bn_relu(conv(x_nchw, w1, stride), g1, b1)
    return bn_relu(conv(y, w2, 1), g2, b2)


if __name__ == "__main__":
    N, C_IN, C_OUT, H, W = 2, 4, 8, 16, 16
    STRIDE = 1  # TODO(synk): stride>1 kernel path exists but is not validated here.

    key = jax.random.PRNGKey(0)
    k_x, k_w1, k_w2, k_g1, k_b1, k_g2, k_b2 = jax.random.split(key, 7)

    x = jax.random.normal(k_x, (N, C_IN, H, W), dtype=jnp.float32)

    w1_bound = 1.0 / (C_IN * 9.0) ** 0.5
    w2_bound = 1.0 / (C_OUT * 9.0) ** 0.5
    w1 = jax.random.uniform(k_w1, (C_OUT, C_IN, 3, 3), jnp.float32,
                            -w1_bound, w1_bound)
    w2 = jax.random.uniform(k_w2, (C_OUT, C_OUT, 3, 3), jnp.float32,
                            -w2_bound, w2_bound)
    g1 = jax.random.uniform(k_g1, (C_OUT,), jnp.float32, 0.5, 1.5)
    b1 = 0.1 * jax.random.normal(k_b1, (C_OUT,), jnp.float32)
    g2 = jax.random.uniform(k_g2, (C_OUT,), jnp.float32, 0.5, 1.5)
    b2 = 0.1 * jax.random.normal(k_b2, (C_OUT,), jnp.float32)

    fwd = jax.jit(functools.partial(plain_block, stride=STRIDE))
    out = jax.block_until_ready(fwd(x, w1, g1, b1, w2, g2, b2))

    ref_bf16 = _reference(x, w1, g1, b1, w2, g2, b2, stride=STRIDE, mixed=True)
    ref_f32 = _reference(x, w1, g1, b1, w2, g2, b2, stride=STRIDE, mixed=False)

    assert out.shape == (N, C_OUT, H // STRIDE, W // STRIDE), out.shape
    err_bf16 = float(jnp.max(jnp.abs(out - ref_bf16)))
    err_f32 = float(jnp.max(jnp.abs(out - ref_f32)))
    # Tight check against the precision-matched reference; loose sanity check
    # against the pure-f32 PyTorch-equivalent reference.
    assert jnp.allclose(out, ref_bf16, atol=2e-2, rtol=2e-2), err_bf16
    assert jnp.allclose(out, ref_f32, atol=1e-1, rtol=1e-1), err_f32

    print("KERNEL_OK")
</pallas_src>

<mosaic_0001>
module attributes {stable_mosaic.version = 11 : i64} {
  func.func @_conv1_kernel(%arg0: i32, %arg1: memref<1x18x18x128xbf16, #tpu.memory_space<vmem>>, %arg2: memref<9x128x128xbf16, #tpu.memory_space<vmem>>, %arg3: memref<1x16x16x128xbf16, #tpu.memory_space<vmem>>, %arg4: memref<1x2x128xf32, #tpu.memory_space<vmem>>, %arg5: memref<1x128xf32, #tpu.memory_space<vmem>>, %arg6: memref<1x128xf32, #tpu.memory_space<vmem>>) attributes {dimension_semantics = [#tpu.dimension_semantics<parallel>], iteration_bounds = array<i64: 2>, scalar_prefetch = 0 : i64, scratch_operands = 2 : i64, tpu.core_type = #tpu.core_type<tc>, window_params = [{transform_indices = @transform_0, window_bounds = array<i64: 1, 18, 18, 128>}, {pipeline_mode = #tpu.pipeline_mode<synchronous>, transform_indices = @transform_1, window_bounds = array<i64: 9, 128, 128>}, {transform_indices = @transform_2, window_bounds = array<i64: 1, 16, 16, 128>}, {transform_indices = @transform_3, window_bounds = array<i64: 1, 2, 128>}]} {
    %cst = arith.constant 0.000000e+00 : f32
    %0 = vector.broadcast %cst : f32 to vector<1x128xf32>
    %c0 = arith.constant 0 : index
    %c0_0 = arith.constant 0 : index
    %1 = vector.load %arg5[%c0, %c0_0] : memref<1x128xf32, #tpu.memory_space<vmem>>, vector<1x128xf32>
    tpu.vector_store %arg5[%c0, %c0_0], %0 {strides = array<i32>} : memref<1x128xf32, #tpu.memory_space<vmem>>, vector<1x128xf32>,
    %cst_1 = arith.constant 0.000000e+00 : f32
    %2 = vector.broadcast %cst_1 : f32 to vector<1x128xf32>
    %c0_2 = arith.constant 0 : index
    %c0_3 = arith.constant 0 : index
    %3 = vector.load %arg6[%c0_2, %c0_3] : memref<1x128xf32, #tpu.memory_space<vmem>>, vector<1x128xf32>
    tpu.vector_store %arg6[%c0_2, %c0_3], %2 {strides = array<i32>} : memref<1x128xf32, #tpu.memory_space<vmem>>, vector<1x128xf32>,
    %cst_4 = arith.constant 0.000000e+00 : f32
    %4 = vector.broadcast %cst_4 : f32 to vector<256x128xf32>
    %c0_5 = arith.constant 0 : index
    %c0_6 = arith.constant 0 : index
    %c0_7 = arith.constant 0 : index
    %c0_8 = arith.constant 0 : index
    %5 = vector.load %arg1[%c0_5, %c0_6, %c0_7, %c0_8] : memref<1x18x18x128xbf16, #tpu.memory_space<vmem>>, vector<1x16x18x128xbf16>
    %6 = vector.shape_cast %5 : vector<1x16x18x128xbf16> to vector<16x18x128xbf16>
    %7 = vector.extract_strided_slice %6 {offsets = [0, 0, 0], sizes = [16, 16, 128], strides = [1, 1, 1]} : vector<16x18x128xbf16> to vector<16x16x128xbf16>
    %8 = vector.shape_cast %7 : vector<16x16x128xbf16> to vector<256x128xbf16>
    %c0_9 = arith.constant 0 : index
    %c0_10 = arith.constant 0 : index
    %c0_11 = arith.constant 0 : index
    %9 = vector.load %arg2[%c0_9, %c0_10, %c0_11] : memref<9x128x128xbf16, #tpu.memory_space<vmem>>, vector<1x128x128xbf16>
    %10 = vector.shape_cast %9 : vector<1x128x128xbf16> to vector<128x128xbf16>
    %cst_12 = arith.constant dense<0.000000e+00> : vector<256x128xf32>
    %11 = tpu.matmul %8, %10, %cst_12 {dimension_numbers = #tpu.dot_dimension_numbers<[1], [0], [0], [1], [0, 0, 1, 1], [], []>} : vector<256x128xbf16>, vector<128x128xbf16>, vector<256x128xf32> -> vector<256x128xf32>
    %12 = arith.addf %4, %11 : vector<256x128xf32>
    %13 = vector.extract_strided_slice %6 {offsets = [0, 1, 0], sizes = [16, 16, 128], strides = [1, 1, 1]} : vector<16x18x128xbf16> to vector<16x16x128xbf16>
    %14 = vector.shape_cast %13 : vector<16x16x128xbf16> to vector<256x128xbf16>
    %c1 = arith.constant 1 : index
    %c0_13 = arith.constant 0 : index
    %c0_14 = arith.constant 0 : index
    %15 = vector.load %arg2[%c1, %c0_13, %c0_14] : memref<9x128x128xbf16, #tpu.memory_space<vmem>>, vector<1x128x128xbf16>
    %16 = vector.shape_cast %15 : vector<1x128x128xbf16> to vector<128x128xbf16>
    %cst_15 = arith.constant dense<0.000000e+00> : vector<256x128xf32>
    %17 = tpu.matmul %14, %16, %cst_15 {dimension_numbers = #tpu.dot_dimension_numbers<[1], [0], [0], [1], [0, 0, 1, 1], [], []>} : vector<256x128xbf16>, vector<128x128xbf16>, vector<256x128xf32> -> vector<256x128xf32>
    %18 = arith.addf %12, %17 : vector<256x128xf32>
    %19 = vector.extract_strided_slice %6 {offsets = [0, 2, 0], sizes = [16, 16, 128], strides = [1, 1, 1]} : vector<16x18x128xbf16> to vector<16x16x128xbf16>
    %20 = vector.shape_cast %19 : vector<16x16x128xbf16> to vector<256x128xbf16>
    %c2 = arith.constant 2 : index
    %c0_16 = arith.constant 0 : index
    %c0_17 = arith.constant 0 : index
    %21 = vector.load %arg2[%c2, %c0_16, %c0_17] : memref<9x128x128xbf16, #tpu.memory_space<vmem>>, vector<1x128x128xbf16>
    %22 = vector.shape_cast %21 : vector<1x128x128xbf16> to vector<128x128xbf16>
    %cst_18 = arith.constant dense<0.000000e+00> : vector<256x128xf32>
    %23 = tpu.matmul %20, %22, %cst_18 {dimension_numbers = #tpu.dot_dimension_numbers<[1], [0], [0], [1], [0, 0, 1, 1], [], []>} : vector<256x128xbf16>, vector<128x128xbf16>, vector<256x128xf32> -> vector<256x128xf32>
    %24 = arith.addf %18, %23 : vector<256x128xf32>
    %c0_19 = arith.constant 0 : index
    %c1_20 = arith.constant 1 : index
    %c0_21 = arith.constant 0 : index
    %c0_22 = arith.constant 0 : index
    %25 = vector.load %arg1[%c0_19, %c1_20, %c0_21, %c0_22] : memref<1x18x18x128xbf16, #tpu.memory_space<vmem>>, vector<1x16x18x128xbf16>
    %26 = vector.shape_cast %25 : vector<1x16x18x128xbf16> to vector<16x18x128xbf16>
    %27 = vector.extract_strided_slice %26 {offsets = [0, 0, 0], sizes = [16, 16, 128], strides = [1, 1, 1]} : vector<16x18x128xbf16> to vector<16x16x128xbf16>
    %28 = vector.shape_cast %27 : vector<16x16x128xbf16> to vector<256x128xbf16>
    %c3 = arith.constant 3 : index
    %c0_23 = arith.constant 0 : index
    %c0_24 = arith.constant 0 : index
    %29 = vector.load %arg2[%c3, %c0_23, %c0_24] : memref<9x128x128xbf16, #tpu.memory_space<vmem>>, vector<1x128x128xbf16>
    %30 = vector.shape_cast %29 : vector<1x128x128xbf16> to vector<128x128xbf16>
    %cst_25 = arith.constant dense<0.000000e+00> : vector<256x128xf32>
    %31 = tpu.matmul %28, %30, %cst_25 {dimension_numbers = #tpu.dot_dimension_numbers<[1], [0], [0], [1], [0, 0, 1, 1], [], []>} : vector<256x128xbf16>, vector<128x128xbf16>, vector<256x128xf32> -> vector<256x128xf32>
    %32 = arith.addf %24, %31 : vector<256x128xf32>
    %33 = vector.extract_strided_slice %26 {offsets = [0, 1, 0], sizes = [16, 16, 128], strides = [1, 1, 1]} : vector<16x18x128xbf16> to vector<16x16x128xbf16>
    %34 = vector.shape_cast %33 : vector<16x16x128xbf16> to vector<256x128xbf16>
    %c4 = arith.constant 4 : index
    %c0_26 = arith.constant 0 : index
    %c0_27 = arith.constant 0 : index
    %35 = vector.load %arg2[%c4, %c0_26, %c0_27] : memref<9x128x128xbf16, #tpu.memory_space<vmem>>, vector<1x128x128xbf16>
    %36 = vector.shape_cast %35 : vector<1x128x128xbf16> to vector<128x128xbf16>
    %cst_28 = arith.constant dense<0.000000e+00> : vector<256x128xf32>
    %37 = tpu.matmul %34, %36, %cst_28 {dimension_numbers = #tpu.dot_dimension_numbers<[1], [0], [0], [1], [0, 0, 1, 1], [], []>} : vector<256x128xbf16>, vector<128x128xbf16>, vector<256x128xf32> -> vector<256x128xf32>
    %38 = arith.addf %32, %37 : vector<256x128xf32>
    %39 = vector.extract_strided_slice %26 {offsets = [0, 2, 0], sizes = [16, 16, 128], strides = [1, 1, 1]} : vector<16x18x128xbf16> to vector<16x16x128xbf16>
    %40 = vector.shape_cast %39 : vector<16x16x128xbf16> to vector<256x128xbf16>
    %c5 = arith.constant 5 : index
    %c0_29 = arith.constant 0 : index
    %c0_30 = arith.constant 0 : index
    %41 = vector.load %arg2[%c5, %c0_29, %c0_30] : memref<9x128x128xbf16, #tpu.memory_space<vmem>>, vector<1x128x128xbf16>
    %42 = vector.shape_cast %41 : vector<1x128x128xbf16> to vector<128x128xbf16>
    %cst_31 = arith.constant dense<0.000000e+00> : vector<256x128xf32>
    %43 = tpu.matmul %40, %42, %cst_31 {dimension_numbers = #tpu.dot_dimension_numbers<[1], [0], [0], [1], [0, 0, 1, 1], [], []>} : vector<256x128xbf16>, vector<128x128xbf16>, vector<256x128xf32> -> vector<256x128xf32>
    %44 = arith.addf %38, %43 : vector<256x128xf32>
    %c0_32 = arith.constant 0 : index
    %c2_33 = arith.constant 2 : index
    %c0_34 = arith.constant 0 : index
    %c0_35 = arith.constant 0 : index
    %45 = vector.load %arg1[%c0_32, %c2_33, %c0_34, %c0_35] : memref<1x18x18x128xbf16, #tpu.memory_space<vmem>>, vector<1x16x18x128xbf16>
    %46 = vector.shape_cast %45 : vector<1x16x18x128xbf16> to vector<16x18x128xbf16>
    %47 = vector.extract_strided_slice %46 {offsets = [0, 0, 0], sizes = [16, 16, 128], strides = [1, 1, 1]} : vector<16x18x128xbf16> to vector<16x16x128xbf16>
    %48 = vector.shape_cast %47 : vector<16x16x128xbf16> to vector<256x128xbf16>
    %c6 = arith.constant 6 : index
    %c0_36 = arith.constant 0 : index
    %c0_37 = arith.constant 0 : index
    %49 = vector.load %arg2[%c6, %c0_36, %c0_37] : memref<9x128x128xbf16, #tpu.memory_space<vmem>>, vector<1x128x128xbf16>
    %50 = vector.shape_cast %49 : vector<1x128x128xbf16> to vector<128x128xbf16>
    %cst_38 = arith.constant dense<0.000000e+00> : vector<256x128xf32>
    %51 = tpu.matmul %48, %50, %cst_38 {dimension_numbers = #tpu.dot_dimension_numbers<[1], [0], [0], [1], [0, 0, 1, 1], [], []>} : vector<256x128xbf16>, vector<128x128xbf16>, vector<256x128xf32> -> vector<256x128xf32>
    %52 = arith.addf %44, %51 : vector<256x128xf32>
    %53 = vector.extract_strided_slice %46 {offsets = [0, 1, 0], sizes = [16, 16, 128], strides = [1, 1, 1]} : vector<16x18x128xbf16> to vector<16x16x128xbf16>
    %54 = vector.shape_cast %53 : vector<16x16x128xbf16> to vector<256x128xbf16>
    %c7 = arith.constant 7 : index
    %c0_39 = arith.constant 0 : index
    %c0_40 = arith.constant 0 : index
    %55 = vector.load %arg2[%c7, %c0_39, %c0_40] : memref<9x128x128xbf16, #tpu.memory_space<vmem>>, vector<1x128x128xbf16>
    %56 = vector.shape_cast %55 : vector<1x128x128xbf16> to vector<128x128xbf16>
    %cst_41 = arith.constant dense<0.000000e+00> : vector<256x128xf32>
    %57 = tpu.matmul %54, %56, %cst_41 {dimension_numbers = #tpu.dot_dimension_numbers<[1], [0], [0], [1], [0, 0, 1, 1], [], []>} : vector<256x128xbf16>, vector<128x128xbf16>, vector<256x128xf32> -> vector<256x128xf32>
    %58 = arith.addf %52, %57 : vector<256x128xf32>
    %59 = vector.extract_strided_slice %46 {offsets = [0, 2, 0], sizes = [16, 16, 128], strides = [1, 1, 1]} : vector<16x18x128xbf16> to vector<16x16x128xbf16>
    %60 = vector.shape_cast %59 : vector<16x16x128xbf16> to vector<256x128xbf16>
    %c8 = arith.constant 8 : index
    %c0_42 = arith.constant 0 : index
    %c0_43 = arith.constant 0 : index
    %61 = vector.load %arg2[%c8, %c0_42, %c0_43] : memref<9x128x128xbf16, #tpu.memory_space<vmem>>, vector<1x128x128xbf16>
    %62 = vector.shape_cast %61 : vector<1x128x128xbf16> to vector<128x128xbf16>
    %cst_44 = arith.constant dense<0.000000e+00> : vector<256x128xf32>
    %63 = tpu.matmul %60, %62, %cst_44 {dimension_numbers = #tpu.dot_dimension_numbers<[1], [0], [0], [1], [0, 0, 1, 1], [], []>} : vector<256x128xbf16>, vector<128x128xbf16>, vector<256x128xf32> -> vector<256x128xf32>
    %64 = arith.addf %58, %63 : vector<256x128xf32>
    %65 = vector.shape_cast %64 : vector<256x128xf32> to vector<16x16x128xf32>
    %66 = arith.truncf %65 : vector<16x16x128xf32> to vector<16x16x128xbf16>
    %c0_45 = arith.constant 0 : index
    %c0_46 = arith.constant 0 : index
    %c0_47 = arith.constant 0 : index
    %c0_48 = arith.constant 0 : index
    %67 = vector.load %arg3[%c0_45, %c0_46, %c0_47, %c0_48] : memref<1x16x16x128xbf16, #tpu.memory_space<vmem>>, vector<1x16x16x128xbf16>
    %68 = vector.shape_cast %67 : vector<1x16x16x128xbf16> to vector<16x16x128xbf16>
    %69 = vector.shape_cast %66 : vector<16x16x128xbf16> to vector<1x16x16x128xbf16>
    tpu.vector_store %arg3[%c0_45, %c0_46, %c0_47, %c0_48], %69 {strides = array<i32>} : memref<1x16x16x128xbf16, #tpu.memory_space<vmem>>, vector<1x16x16x128xbf16>,
    %c0_49 = arith.constant 0 : index
    %c0_50 = arith.constant 0 : index
    %70 = vector.load %arg5[%c0_49, %c0_50] : memref<1x128xf32, #tpu.memory_space<vmem>>, vector<1x128xf32>
    %cst_51 = arith.constant dense<0.000000e+00> : vector<128xf32>
    %71 = vector.multi_reduction <add>, %64, %cst_51 [0] : vector<256x128xf32> to vector<128xf32>
    %72 = vector.shape_cast %71 : vector<128xf32> to vector<1x128xf32>
    %73 = arith.addf %70, %72 : vector<1x128xf32>
    %c0_52 = arith.constant 0 : index
    %c0_53 = arith.constant 0 : index
    %74 = vector.load %arg5[%c0_52, %c0_53] : memref<1x128xf32, #tpu.memory_space<vmem>>, vector<1x128xf32>
    tpu.vector_store %arg5[%c0_52, %c0_53], %73 {strides = array<i32>} : memref<1x128xf32, #tpu.memory_space<vmem>>, vector<1x128xf32>,
    %c0_54 = arith.constant 0 : index
    %c0_55 = arith.constant 0 : index
    %75 = vector.load %arg6[%c0_54, %c0_55] : memref<1x128xf32, #tpu.memory_space<vmem>>, vector<1x128xf32>
    %76 = arith.mulf %64, %64 : vector<256x128xf32>
    %cst_56 = arith.constant dense<0.000000e+00> : vector<128xf32>
    %77 = vector.multi_reduction <add>, %76, %cst_56 [0] : vector<256x128xf32> to vector<128xf32>
    %78 = vector.shape_cast %77 : vector<128xf32> to vector<1x128xf32>
    %79 = arith.addf %75, %78 : vector<1x128xf32>
    %c0_57 = arith.constant 0 : index
    %c0_58 = arith.constant 0 : index
    %80 = vector.load %arg6[%c0_57, %c0_58] : memref<1x128xf32, #tpu.memory_space<vmem>>, vector<1x128xf32>
    tpu.vector_store %arg6[%c0_57, %c0_58], %79 {strides = array<i32>} : memref<1x128xf32, #tpu.memory_space<vmem>>, vector<1x128xf32>,
    %c0_59 = arith.constant 0 : index
    %c0_60 = arith.constant 0 : index
    %81 = vector.load %arg5[%c0_59, %c0_60] : memref<1x128xf32, #tpu.memory_space<vmem>>, vector<1x128xf32>
    %c0_61 = arith.constant 0 : index
    %c0_62 = arith.constant 0 : index
    %82 = vector.load %arg6[%c0_61, %c0_62] : memref<1x128xf32, #tpu.memory_space<vmem>>, vector<1x128xf32>
    %83 = tpu.concatenate %81, %82 in 0 : vector<1x128xf32>, vector<1x128xf32> -> vector<2x128xf32>
    %c0_63 = arith.constant 0 : index
    %c0_64 = arith.constant 0 : index
    %c0_65 = arith.constant 0 : index
    %84 = vector.load %arg4[%c0_63, %c0_64, %c0_65] : memref<1x2x128xf32, #tpu.memory_space<vmem>>, vector<1x2x128xf32>
    %85 = vector.shape_cast %84 : vector<1x2x128xf32> to vector<2x128xf32>
    %86 = vector.shape_cast %83 : vector<2x128xf32> to vector<1x2x128xf32>
    tpu.vector_store %arg4[%c0_63, %c0_64, %c0_65], %86 {strides = array<i32>} : memref<1x2x128xf32, #tpu.memory_space<vmem>>, vector<1x2x128xf32>,
    return
  }
  func.func @transform_0(%arg0: i32) -> (i32, i32, i32, i32) {
    %c0_i32 = arith.constant 0 : i32
    %c0_i32_0 = arith.constant 0 : i32
    %c0_i32_1 = arith.constant 0 : i32
    %c0_i32_2 = arith.constant 0 : i32
    return %arg0, %c0_i32, %c0_i32_0, %c0_i32_1 : i32, i32, i32, i32
  }
  func.func @transform_1(%arg0: i32) -> (i32, i32, i32) {
    %c0_i32 = arith.constant 0 : i32
    %c0_i32_0 = arith.constant 0 : i32
    %c0_i32_1 = arith.constant 0 : i32
    %c0_i32_2 = arith.constant 0 : i32
    return %c0_i32, %c0_i32_0, %c0_i32_1 : i32, i32, i32
  }
  func.func @transform_2(%arg0: i32) -> (i32, i32, i32, i32) {
    %c0_i32 = arith.constant 0 : i32
    %c0_i32_0 = arith.constant 0 : i32
    %c0_i32_1 = arith.constant 0 : i32
    %c0_i32_2 = arith.constant 0 : i32
    return %arg0, %c0_i32, %c0_i32_0, %c0_i32_1 : i32, i32, i32, i32
  }
  func.func @transform_3(%arg0: i32) -> (i32, i32, i32) {
    %c0_i32 = arith.constant 0 : i32
    %c0_i32_0 = arith.constant 0 : i32
    %c0_i32_1 = arith.constant 0 : i32
    return %arg0, %c0_i32, %c0_i32_0 : i32, i32, i32
  }
}

module attributes {stable_mosaic.version = 11 : i64} {
  func.func @_bn_relu_conv2_kernel(%arg0: i32, %arg1: memref<1x16x16x128xbf16, #tpu.memory_space<vmem>>, %arg2: memref<1x128xf32, #tpu.memory_space<vmem>>, %arg3: memref<1x128xf32, #tpu.memory_space<vmem>>, %arg4: memref<9x128x128xbf16, #tpu.memory_space<vmem>>, %arg5: memref<1x16x16x128xbf16, #tpu.memory_space<vmem>>, %arg6: memref<1x2x128xf32, #tpu.memory_space<vmem>>, %arg7: memref<18x18x128xbf16, #tpu.memory_space<vmem>>, %arg8: memref<1x128xf32, #tpu.memory_space<vmem>>, %arg9: memref<1x128xf32, #tpu.memory_space<vmem>>) attributes {dimension_semantics = [#tpu.dimension_semantics<parallel>], iteration_bounds = array<i64: 2>, scalar_prefetch = 0 : i64, scratch_operands = 3 : i64, tpu.core_type = #tpu.core_type<tc>, window_params = [{transform_indices = @transform_0, window_bounds = array<i64: 1, 16, 16, 128>}, {pipeline_mode = #tpu.pipeline_mode<synchronous>, transform_indices = @transform_1, window_bounds = array<i64: 1, 128>}, {pipeline_mode = #tpu.pipeline_mode<synchronous>, transform_indices = @transform_2, window_bounds = array<i64: 1, 128>}, {pipeline_mode = #tpu.pipeline_mode<synchronous>, transform_indices = @transform_3, window_bounds = array<i64: 9, 128, 128>}, {transform_indices = @transform_4, window_bounds = array<i64: 1, 16, 16, 128>}, {transform_indices = @transform_5, window_bounds = array<i64: 1, 2, 128>}]} {
    %cst = arith.constant 0.000000e+00 : bf16
    %0 = vector.broadcast %cst : bf16 to vector<1x18x128xbf16>
    %c0 = arith.constant 0 : index
    %c0_0 = arith.constant 0 : index
    %c0_1 = arith.constant 0 : index
    %1 = vector.load %arg7[%c0, %c0_0, %c0_1] : memref<18x18x128xbf16, #tpu.memory_space<vmem>>, vector<1x18x128xbf16>
    tpu.vector_store %arg7[%c0, %c0_0, %c0_1], %0 {strides = array<i32>} : memref<18x18x128xbf16, #tpu.memory_space<vmem>>, vector<1x18x128xbf16>,
    %cst_2 = arith.constant 0.000000e+00 : bf16
    %2 = vector.broadcast %cst_2 : bf16 to vector<1x18x128xbf16>
    %c17 = arith.constant 17 : index
    %c0_3 = arith.constant 0 : index
    %c0_4 = arith.constant 0 : index
    %3 = vector.load %arg7[%c17, %c0_3, %c0_4] : memref<18x18x128xbf16, #tpu.memory_space<vmem>>, vector<1x18x128xbf16>
    tpu.vector_store %arg7[%c17, %c0_3, %c0_4], %2 {strides = array<i32>} : memref<18x18x128xbf16, #tpu.memory_space<vmem>>, vector<1x18x128xbf16>,
    %c0_5 = arith.constant 0 : index
    %c0_6 = arith.constant 0 : index
    %4 = vector.load %arg2[%c0_5, %c0_6] : memref<1x128xf32, #tpu.memory_space<vmem>>, vector<1x128xf32>
    %5 = vector.shape_cast %4 : vector<1x128xf32> to vector<1x1x128xf32>
    %c0_7 = arith.constant 0 : index
    %c0_8 = arith.constant 0 : index
    %6 = vector.load %arg3[%c0_7, %c0_8] : memref<1x128xf32, #tpu.memory_space<vmem>>, vector<1x128xf32>
    %7 = vector.shape_cast %6 : vector<1x128xf32> to vector<1x1x128xf32>
    %c0_9 = arith.constant 0 : index
    %c0_10 = arith.constant 0 : index
    %c0_11 = arith.constant 0 : index
    %c0_12 = arith.constant 0 : index
    %8 = vector.load %arg1[%c0_9, %c0_10, %c0_11, %c0_12] : memref<1x16x16x128xbf16, #tpu.memory_space<vmem>>, vector<1x16x16x128xbf16>
    %9 = vector.shape_cast %8 : vector<1x16x16x128xbf16> to vector<16x16x128xbf16>
    %10 = arith.extf %9 : vector<16x16x128xbf16> to vector<16x16x128xf32>
    %11 = vector.broadcast %5 : vector<1x1x128xf32> to vector<16x16x128xf32>
    %12 = arith.mulf %10, %11 : vector<16x16x128xf32>
    %13 = vector.broadcast %7 : vector<1x1x128xf32> to vector<16x16x128xf32>
    %14 = arith.addf %12, %13 : vector<16x16x128xf32>
    %cst_13 = arith.constant 0.000000e+00 : f32
    %15 = vector.broadcast %cst_13 : f32 to vector<16x16x128xf32>
    %16 = arith.maximumf %14, %15 : vector<16x16x128xf32>
    %17 = arith.truncf %16 : vector<16x16x128xf32> to vector<16x16x128xbf16>
    %c0_i32 = arith.constant 0 : i32
    %18 = arith.sitofp %c0_i32 : i32 to bf16
    %19 = vector.broadcast %18 : bf16 to vector<16x1x128xbf16>
    %20 = tpu.concatenate %19, %17 in 1 : vector<16x1x128xbf16>, vector<16x16x128xbf16> -> vector<16x17x128xbf16>
    %21 = vector.broadcast %18 : bf16 to vector<16x1x128xbf16>
    %22 = tpu.concatenate %20, %21 in 1 : vector<16x17x128xbf16>, vector<16x1x128xbf16> -> vector<16x18x128xbf16>
    %c1 = arith.constant 1 : index
    %c0_14 = arith.constant 0 : index
    %c0_15 = arith.constant 0 : index
    %23 = vector.load %arg7[%c1, %c0_14, %c0_15] : memref<18x18x128xbf16, #tpu.memory_space<vmem>>, vector<16x18x128xbf16>
    tpu.vector_store %arg7[%c1, %c0_14, %c0_15], %22 {strides = array<i32>} : memref<18x18x128xbf16, #tpu.memory_space<vmem>>, vector<16x18x128xbf16>,
    %cst_16 = arith.constant 0.000000e+00 : f32
    %24 = vector.broadcast %cst_16 : f32 to vector<1x128xf32>
    %c0_17 = arith.constant 0 : index
    %c0_18 = arith.constant 0 : index
    %25 = vector.load %arg8[%c0_17, %c0_18] : memref<1x128xf32, #tpu.memory_space<vmem>>, vector<1x128xf32>
    tpu.vector_store %arg8[%c0_17, %c0_18], %24 {strides = array<i32>} : memref<1x128xf32, #tpu.memory_space<vmem>>, vector<1x128xf32>,
    %cst_19 = arith.constant 0.000000e+00 : f32
    %26 = vector.broadcast %cst_19 : f32 to vector<1x128xf32>
    %c0_20 = arith.constant 0 : index
    %c0_21 = arith.constant 0 : index
    %27 = vector.load %arg9[%c0_20, %c0_21] : memref<1x128xf32, #tpu.memory_space<vmem>>, vector<1x128xf32>
    tpu.vector_store %arg9[%c0_20, %c0_21], %26 {strides = array<i32>} : memref<1x128xf32, #tpu.memory_space<vmem>>, vector<1x128xf32>,
    %cst_22 = arith.constant 0.000000e+00 : f32
    %28 = vector.broadcast %cst_22 : f32 to vector<256x128xf32>
    %c0_23 = arith.constant 0 : index
    %c0_24 = arith.constant 0 : index
    %c0_25 = arith.constant 0 : index
    %29 = vector.load %arg7[%c0_23, %c0_24, %c0_25] : memref<18x18x128xbf16, #tpu.memory_space<vmem>>, vector<16x18x128xbf16>
    %30 = vector.extract_strided_slice %29 {offsets = [0, 0, 0], sizes = [16, 16, 128], strides = [1, 1, 1]} : vector<16x18x128xbf16> to vector<16x16x128xbf16>
    %31 = vector.shape_cast %30 : vector<16x16x128xbf16> to vector<256x128xbf16>
    %c0_26 = arith.constant 0 : index
    %c0_27 = arith.constant 0 : index
    %c0_28 = arith.constant 0 : index
    %32 = vector.load %arg4[%c0_26, %c0_27, %c0_28] : memref<9x128x128xbf16, #tpu.memory_space<vmem>>, vector<1x128x128xbf16>
    %33 = vector.shape_cast %32 : vector<1x128x128xbf16> to vector<128x128xbf16>
    %cst_29 = arith.constant dense<0.000000e+00> : vector<256x128xf32>
    %34 = tpu.matmul %31, %33, %cst_29 {dimension_numbers = #tpu.dot_dimension_numbers<[1], [0], [0], [1], [0, 0, 1, 1], [], []>} : vector<256x128xbf16>, vector<128x128xbf16>, vector<256x128xf32> -> vector<256x128xf32>
    %35 = arith.addf %28, %34 : vector<256x128xf32>
    %36 = vector.extract_strided_slice %29 {offsets = [0, 1, 0], sizes = [16, 16, 128], strides = [1, 1, 1]} : vector<16x18x128xbf16> to vector<16x16x128xbf16>
    %37 = vector.shape_cast %36 : vector<16x16x128xbf16> to vector<256x128xbf16>
    %c1_30 = arith.constant 1 : index
    %c0_31 = arith.constant 0 : index
    %c0_32 = arith.constant 0 : index
    %38 = vector.load %arg4[%c1_30, %c0_31, %c0_32] : memref<9x128x128xbf16, #tpu.memory_space<vmem>>, vector<1x128x128xbf16>
    %39 = vector.shape_cast %38 : vector<1x128x128xbf16> to vector<128x128xbf16>
    %cst_33 = arith.constant dense<0.000000e+00> : vector<256x128xf32>
    %40 = tpu.matmul %37, %39, %cst_33 {dimension_numbers = #tpu.dot_dimension_numbers<[1], [0], [0], [1], [0, 0, 1, 1], [], []>} : vector<256x128xbf16>, vector<128x128xbf16>, vector<256x128xf32> -> vector<256x128xf32>
    %41 = arith.addf %35, %40 : vector<256x128xf32>
    %42 = vector.extract_strided_slice %29 {offsets = [0, 2, 0], sizes = [16, 16, 128], strides = [1, 1, 1]} : vector<16x18x128xbf16> to vector<16x16x128xbf16>
    %43 = vector.shape_cast %42 : vector<16x16x128xbf16> to vector<256x128xbf16>
    %c2 = arith.constant 2 : index
    %c0_34 = arith.constant 0 : index
    %c0_35 = arith.constant 0 : index
    %44 = vector.load %arg4[%c2, %c0_34, %c0_35] : memref<9x128x128xbf16, #tpu.memory_space<vmem>>, vector<1x128x128xbf16>
    %45 = vector.shape_cast %44 : vector<1x128x128xbf16> to vector<128x128xbf16>
    %cst_36 = arith.constant dense<0.000000e+00> : vector<256x128xf32>
    %46 = tpu.matmul %43, %45, %cst_36 {dimension_numbers = #tpu.dot_dimension_numbers<[1], [0], [0], [1], [0, 0, 1, 1], [], []>} : vector<256x128xbf16>, vector<128x128xbf16>, vector<256x128xf32> -> vector<256x128xf32>
    %47 = arith.addf %41, %46 : vector<256x128xf32>
    %c1_37 = arith.constant 1 : index
    %c0_38 = arith.constant 0 : index
    %c0_39 = arith.constant 0 : index
    %48 = vector.load %arg7[%c1_37, %c0_38, %c0_39] : memref<18x18x128xbf16, #tpu.memory_space<vmem>>, vector<16x18x128xbf16>
    %49 = vector.extract_strided_slice %48 {offsets = [0, 0, 0], sizes = [16, 16, 128], strides = [1, 1, 1]} : vector<16x18x128xbf16> to vector<16x16x128xbf16>
    %50 = vector.shape_cast %49 : vector<16x16x128xbf16> to vector<256x128xbf16>
    %c3 = arith.constant 3 : index
    %c0_40 = arith.constant 0 : index
    %c0_41 = arith.constant 0 : index
    %51 = vector.load %arg4[%c3, %c0_40, %c0_41] : memref<9x128x128xbf16, #tpu.memory_space<vmem>>, vector<1x128x128xbf16>
    %52 = vector.shape_cast %51 : vector<1x128x128xbf16> to vector<128x128xbf16>
    %cst_42 = arith.constant dense<0.000000e+00> : vector<256x128xf32>
    %53 = tpu.matmul %50, %52, %cst_42 {dimension_numbers = #tpu.dot_dimension_numbers<[1], [0], [0], [1], [0, 0, 1, 1], [], []>} : vector<256x128xbf16>, vector<128x128xbf16>, vector<256x128xf32> -> vector<256x128xf32>
    %54 = arith.addf %47, %53 : vector<256x128xf32>
    %55 = vector.extract_strided_slice %48 {offsets = [0, 1, 0], sizes = [16, 16, 128], strides = [1, 1, 1]} : vector<16x18x128xbf16> to vector<16x16x128xbf16>
    %56 = vector.shape_cast %55 : vector<16x16x128xbf16> to vector<256x128xbf16>
    %c4 = arith.constant 4 : index
    %c0_43 = arith.constant 0 : index
    %c0_44 = arith.constant 0 : index
    %57 = vector.load %arg4[%c4, %c0_43, %c0_44] : memref<9x128x128xbf16, #tpu.memory_space<vmem>>, vector<1x128x128xbf16>
    %58 = vector.shape_cast %57 : vector<1x128x128xbf16> to vector<128x128xbf16>
    %cst_45 = arith.constant dense<0.000000e+00> : vector<256x128xf32>
    %59 = tpu.matmul %56, %58, %cst_45 {dimension_numbers = #tpu.dot_dimension_numbers<[1], [0], [0], [1], [0, 0, 1, 1], [], []>} : vector<256x128xbf16>, vector<128x128xbf16>, vector<256x128xf32> -> vector<256x128xf32>
    %60 = arith.addf %54, %59 : vector<256x128xf32>
    %61 = vector.extract_strided_slice %48 {offsets = [0, 2, 0], sizes = [16, 16, 128], strides = [1, 1, 1]} : vector<16x18x128xbf16> to vector<16x16x128xbf16>
    %62 = vector.shape_cast %61 : vector<16x16x128xbf16> to vector<256x128xbf16>
    %c5 = arith.constant 5 : index
    %c0_46 = arith.constant 0 : index
    %c0_47 = arith.constant 0 : index
    %63 = vector.load %arg4[%c5, %c0_46, %c0_47] : memref<9x128x128xbf16, #tpu.memory_space<vmem>>, vector<1x128x128xbf16>
    %64 = vector.shape_cast %63 : vector<1x128x128xbf16> to vector<128x128xbf16>
    %cst_48 = arith.constant dense<0.000000e+00> : vector<256x128xf32>
    %65 = tpu.matmul %62, %64, %cst_48 {dimension_numbers = #tpu.dot_dimension_numbers<[1], [0], [0], [1], [0, 0, 1, 1], [], []>} : vector<256x128xbf16>, vector<128x128xbf16>, vector<256x128xf32> -> vector<256x128xf32>
    %66 = arith.addf %60, %65 : vector<256x128xf32>
    %c2_49 = arith.constant 2 : index
    %c0_50 = arith.constant 0 : index
    %c0_51 = arith.constant 0 : index
    %67 = vector.load %arg7[%c2_49, %c0_50, %c0_51] : memref<18x18x128xbf16, #tpu.memory_space<vmem>>, vector<16x18x128xbf16>
    %68 = vector.extract_strided_slice %67 {offsets = [0, 0, 0], sizes = [16, 16, 128], strides = [1, 1, 1]} : vector<16x18x128xbf16> to vector<16x16x128xbf16>
    %69 = vector.shape_cast %68 : vector<16x16x128xbf16> to vector<256x128xbf16>
    %c6 = arith.constant 6 : index
    %c0_52 = arith.constant 0 : index
    %c0_53 = arith.constant 0 : index
    %70 = vector.load %arg4[%c6, %c0_52, %c0_53] : memref<9x128x128xbf16, #tpu.memory_space<vmem>>, vector<1x128x128xbf16>
    %71 = vector.shape_cast %70 : vector<1x128x128xbf16> to vector<128x128xbf16>
    %cst_54 = arith.constant dense<0.000000e+00> : vector<256x128xf32>
    %72 = tpu.matmul %69, %71, %cst_54 {dimension_numbers = #tpu.dot_dimension_numbers<[1], [0], [0], [1], [0, 0, 1, 1], [], []>} : vector<256x128xbf16>, vector<128x128xbf16>, vector<256x128xf32> -> vector<256x128xf32>
    %73 = arith.addf %66, %72 : vector<256x128xf32>
    %74 = vector.extract_strided_slice %67 {offsets = [0, 1, 0], sizes = [16, 16, 128], strides = [1, 1, 1]} : vector<16x18x128xbf16> to vector<16x16x128xbf16>
    %75 = vector.shape_cast %74 : vector<16x16x128xbf16> to vector<256x128xbf16>
    %c7 = arith.constant 7 : index
    %c0_55 = arith.constant 0 : index
    %c0_56 = arith.constant 0 : index
    %76 = vector.load %arg4[%c7, %c0_55, %c0_56] : memref<9x128x128xbf16, #tpu.memory_space<vmem>>, vector<1x128x128xbf16>
    %77 = vector.shape_cast %76 : vector<1x128x128xbf16> to vector<128x128xbf16>
    %cst_57 = arith.constant dense<0.000000e+00> : vector<256x128xf32>
    %78 = tpu.matmul %75, %77, %cst_57 {dimension_numbers = #tpu.dot_dimension_numbers<[1], [0], [0], [1], [0, 0, 1, 1], [], []>} : vector<256x128xbf16>, vector<128x128xbf16>, vector<256x128xf32> -> vector<256x128xf32>
    %79 = arith.addf %73, %78 : vector<256x128xf32>
    %80 = vector.extract_strided_slice %67 {offsets = [0, 2, 0], sizes = [16, 16, 128], strides = [1, 1, 1]} : vector<16x18x128xbf16> to vector<16x16x128xbf16>
    %81 = vector.shape_cast %80 : vector<16x16x128xbf16> to vector<256x128xbf16>
    %c8 = arith.constant 8 : index
    %c0_58 = arith.constant 0 : index
    %c0_59 = arith.constant 0 : index
    %82 = vector.load %arg4[%c8, %c0_58, %c0_59] : memref<9x128x128xbf16, #tpu.memory_space<vmem>>, vector<1x128x128xbf16>
    %83 = vector.shape_cast %82 : vector<1x128x128xbf16> to vector<128x128xbf16>
    %cst_60 = arith.constant dense<0.000000e+00> : vector<256x128xf32>
    %84 = tpu.matmul %81, %83, %cst_60 {dimension_numbers = #tpu.dot_dimension_numbers<[1], [0], [0], [1], [0, 0, 1, 1], [], []>} : vector<256x128xbf16>, vector<128x128xbf16>, vector<256x128xf32> -> vector<256x128xf32>
    %85 = arith.addf %79, %84 : vector<256x128xf32>
    %86 = vector.shape_cast %85 : vector<256x128xf32> to vector<16x16x128xf32>
    %87 = arith.truncf %86 : vector<16x16x128xf32> to vector<16x16x128xbf16>
    %c0_61 = arith.constant 0 : index
    %c0_62 = arith.constant 0 : index
    %c0_63 = arith.constant 0 : index
    %c0_64 = arith.constant 0 : index
    %88 = vector.load %arg5[%c0_61, %c0_62, %c0_63, %c0_64] : memref<1x16x16x128xbf16, #tpu.memory_space<vmem>>, vector<1x16x16x128xbf16>
    %89 = vector.shape_cast %88 : vector<1x16x16x128xbf16> to vector<16x16x128xbf16>
    %90 = vector.shape_cast %87 : vector<16x16x128xbf16> to vector<1x16x16x128xbf16>
    tpu.vector_store %arg5[%c0_61, %c0_62, %c0_63, %c0_64], %90 {strides = array<i32>} : memref<1x16x16x128xbf16, #tpu.memory_space<vmem>>, vector<1x16x16x128xbf16>,
    %c0_65 = arith.constant 0 : index
    %c0_66 = arith.constant 0 : index
    %91 = vector.load %arg8[%c0_65, %c0_66] : memref<1x128xf32, #tpu.memory_space<vmem>>, vector<1x128xf32>
    %cst_67 = arith.constant dense<0.000000e+00> : vector<128xf32>
    %92 = vector.multi_reduction <add>, %85, %cst_67 [0] : vector<256x128xf32> to vector<128xf32>
    %93 = vector.shape_cast %92 : vector<128xf32> to vector<1x128xf32>
    %94 = arith.addf %91, %93 : vector<1x128xf32>
    %c0_68 = arith.constant 0 : index
    %c0_69 = arith.constant 0 : index
    %95 = vector.load %arg8[%c0_68, %c0_69] : memref<1x128xf32, #tpu.memory_space<vmem>>, vector<1x128xf32>
    tpu.vector_store %arg8[%c0_68, %c0_69], %94 {strides = array<i32>} : memref<1x128xf32, #tpu.memory_space<vmem>>, vector<1x128xf32>,
    %c0_70 = arith.constant 0 : index
    %c0_71 = arith.constant 0 : index
    %96 = vector.load %arg9[%c0_70, %c0_71] : memref<1x128xf32, #tpu.memory_space<vmem>>, vector<1x128xf32>
    %97 = arith.mulf %85, %85 : vector<256x128xf32>
    %cst_72 = arith.constant dense<0.000000e+00> : vector<128xf32>
    %98 = vector.multi_reduction <add>, %97, %cst_72 [0] : vector<256x128xf32> to vector<128xf32>
    %99 = vector.shape_cast %98 : vector<128xf32> to vector<1x128xf32>
    %100 = arith.addf %96, %99 : vector<1x128xf32>
    %c0_73 = arith.constant 0 : index
    %c0_74 = arith.constant 0 : index
    %101 = vector.load %arg9[%c0_73, %c0_74] : memref<1x128xf32, #tpu.memory_space<vmem>>, vector<1x128xf32>
    tpu.vector_store %arg9[%c0_73, %c0_74], %100 {strides = array<i32>} : memref<1x128xf32, #tpu.memory_space<vmem>>, vector<1x128xf32>,
    %c0_75 = arith.constant 0 : index
    %c0_76 = arith.constant 0 : index
    %102 = vector.load %arg8[%c0_75, %c0_76] : memref<1x128xf32, #tpu.memory_space<vmem>>, vector<1x128xf32>
    %c0_77 = arith.constant 0 : index
    %c0_78 = arith.constant 0 : index
    %103 = vector.load %arg9[%c0_77, %c0_78] : memref<1x128xf32, #tpu.memory_space<vmem>>, vector<1x128xf32>
    %104 = tpu.concatenate %102, %103 in 0 : vector<1x128xf32>, vector<1x128xf32> -> vector<2x128xf32>
    %c0_79 = arith.constant 0 : index
    %c0_80 = arith.constant 0 : index
    %c0_81 = arith.constant 0 : index
    %105 = vector.load %arg6[%c0_79, %c0_80, %c0_81] : memref<1x2x128xf32, #tpu.memory_space<vmem>>, vector<1x2x128xf32>
    %106 = vector.shape_cast %105 : vector<1x2x128xf32> to vector<2x128xf32>
    %107 = vector.shape_cast %104 : vector<2x128xf32> to vector<1x2x128xf32>
    tpu.vector_store %arg6[%c0_79, %c0_80, %c0_81], %107 {strides = array<i32>} : memref<1x2x128xf32, #tpu.memory_space<vmem>>, vector<1x2x128xf32>,
    return
  }
  func.func @transform_0(%arg0: i32) -> (i32, i32, i32, i32) {
    %c0_i32 = arith.constant 0 : i32
    %c0_i32_0 = arith.constant 0 : i32
    %c0_i32_1 = arith.constant 0 : i32
    %c0_i32_2 = arith.constant 0 : i32
    return %arg0, %c0_i32, %c0_i32_0, %c0_i32_1 : i32, i32, i32, i32
  }
  func.func @transform_1(%arg0: i32) -> (i32, i32) {
    %c0_i32 = arith.constant 0 : i32
    %c0_i32_0 = arith.constant 0 : i32
    %c0_i32_1 = arith.constant 0 : i32
    return %c0_i32, %c0_i32_0 : i32, i32
  }
  func.func @transform_2(%arg0: i32) -> (i32, i32) {
    %c0_i32 = arith.constant 0 : i32
    %c0_i32_0 = arith.constant 0 : i32
    %c0_i32_1 = arith.constant 0 : i32
    return %c0_i32, %c0_i32_0 : i32, i32
  }
  func.func @transform_3(%arg0: i32) -> (i32, i32, i32) {
    %c0_i32 = arith.constant 0 : i32
    %c0_i32_0 = arith.constant 0 : i32
    %c0_i32_1 = arith.constant 0 : i32
    %c0_i32_2 = arith.constant 0 : i32
    return %c0_i32, %c0_i32_0, %c0_i32_1 : i32, i32, i32
  }
  func.func @transform_4(%arg0: i32) -> (i32, i32, i32, i32) {
    %c0_i32 = arith.constant 0 : i32
    %c0_i32_0 = arith.constant 0 : i32
    %c0_i32_1 = arith.constant 0 : i32
    %c0_i32_2 = arith.constant 0 : i32
    return %arg0, %c0_i32, %c0_i32_0, %c0_i32_1 : i32, i32, i32, i32
  }
  func.func @transform_5(%arg0: i32) -> (i32, i32, i32) {
    %c0_i32 = arith.constant 0 : i32
    %c0_i32_0 = arith.constant 0 : i32
    %c0_i32_1 = arith.constant 0 : i32
    return %arg0, %c0_i32, %c0_i32_0 : i32, i32, i32
  }
}

</mosaic_0001>

<llo_original>
// kernel: plain_block.2
$region0: #{plain_block.2}
  #allocation0 [shape = 'u32[]', space=smem, size = 0x4, offset = 0x4, fixed_abs, tag = 'smem constant byte address 0x4 - core index']
  #allocation1 [shape = 'u32[144,128]{1,0:T(1,128)}', space=vmem, size = 0x12000, scoped, tag = 'internal scratch']
  #allocation2 [shape = 'f32[1,128]{1,0:T(1,128)}', space=vmem, size = 0x200, scoped, tag = 'scratch operand']
  #allocation3 [shape = 'f32[1,128]{1,0:T(1,128)}', space=vmem, size = 0x200, scoped, tag = 'scratch operand']
  %s0 = inlined_call_operand.vmem [shape: bf16[2,18,18,128], index: 0, kind: input, shape index: {}]
  %s1 = inlined_call_operand.vmem [shape: bf16[9,128,128], index: 1, kind: input, shape index: {}]
  %s2 = inlined_call_operand.vmem [shape: bf16[2,16,16,128], index: 2, kind: output, shape index: {0}]
  %s3 = inlined_call_operand.vmem [shape: f32[2,2,128], index: 3, kind: output, shape index: {1}]
  %4 = xla_tuple %s2, %s3
  %s5 = sld [smem:[#allocation0]]
  $region49: #{plain_block.2} parent=0
    _
  %s7 = ssub.s32 1, %s5
  %s8 = scalar_select 0, %s7, %s5
  loop: start=0, step=1, limit=4
  $region2: #{plain_block.2} parent=0 // loop_pre_header
    _
  $region3: #{plain_block.2} parent=0 // loop_header
    %s10 = sphi 0, %s14
    %p11 = scmp.ge.s32.totalorder %s10, 4
    %s20 = sphi 0, %s22
    %s23 = sphi 0, %s20
    %s24 = sphi 0, %s23
    %s40 = sphi 0, %s24
    %s44 = sphi 0, %s44
    %s46 = sphi 0, %s44
    %s47 = sphi 0, %s46
    %s61 = sphi 0, %s47
    %s67 = sphi 0, %s69
    %s70 = sphi 0, %s67
    %s71 = sphi 0, %s70
    %s87 = sphi 0, %s71
    %s93 = sphi 0, %s95
    %s96 = sphi 0, %s93
    %s97 = sphi 0, %s96
    %s113 = sphi 0, %s97
  $region4: #{plain_block.2} parent=0 // loop_header_branch
    %13 = sbr.rel (%p11) target = $region8
  $region5: #{plain_block.2} parent=0 // loop_body
    %s15 = ssub.s32 %s10, 1
    %s16 = ssub.s32 %s10, 2
    %s17 = sadd.s32 %s10, 1
    %s18 = ssub.s32 %s10, %s17
    %p19 = scmp.eq.s32.totalorder %s18, 0
    %s21 = sadd.s32 %s20, 1
    %s22 = scalar_select %p19, %s20, %s21
    %p25 = pneg %p19
    %p26 = scmp.eq.s32.totalorder %s10, 1
    %p27 = por %p25, %p26
    %p28 = scmp.ne.s32.totalorder %s20, %s23
    %p29 = scmp.eq.s32.totalorder %s10, 0
    %p30 = por %p28, %p29
    %p31 = scmp.ne.s32.totalorder %s20, %s23
    %p32 = scmp.eq.s32.totalorder %s15, 1
    %p33 = por %p31, %p32
    %p34 = scmp.ne.s32.totalorder %s23, %s24
    %p35 = scmp.eq.s32.totalorder %s15, 0
    %p36 = por %p34, %p35
    %p37 = scmp.ne.s32.totalorder %s23, %s24
    %p38 = scmp.eq.s32.totalorder %s16, 1
    %p39 = por %p37, %p38
    %p41 = scmp.ne.s32.totalorder %s24, %s40
    %p42 = scmp.eq.s32.totalorder %s16, 0
    %p43 = por %p41, %p42
    %s45 = sadd.s32 %s44, 1
    %p48 = scmp.eq.s32.totalorder %s10, 1
    %p49 = scmp.ne.s32.totalorder %s44, %s46
    %p50 = scmp.eq.s32.totalorder %s10, 0
    %p51 = por %p49, %p50
    %p52 = scmp.ne.s32.totalorder %s44, %s46
    %p53 = scmp.eq.s32.totalorder %s15, 1
    %p54 = por %p52, %p53
    %p55 = scmp.ne.s32.totalorder %s46, %s47
    %p56 = scmp.eq.s32.totalorder %s15, 0
    %p57 = por %p55, %p56
    %p58 = scmp.ne.s32.totalorder %s46, %s47
    %p59 = scmp.eq.s32.totalorder %s16, 1
    %p60 = por %p58, %p59
    %p62 = scmp.ne.s32.totalorder %s47, %s61
    %p63 = scmp.eq.s32.totalorder %s16, 0
    %p64 = por %p62, %p63
    %s65 = ssub.s32 %s10, %s17
    %p66 = scmp.eq.s32.totalorder %s65, 0
    %s68 = sadd.s32 %s67, 1
    %s69 = scalar_select %p66, %s67, %s68
    %p72 = pneg %p66
    %p73 = scmp.eq.s32.totalorder %s10, 1
    %p74 = por %p72, %p73
    %p75 = scmp.ne.s32.totalorder %s67, %s70
    %p76 = scmp.eq.s32.totalorder %s10, 0
    %p77 = por %p75, %p76
    %p78 = scmp.ne.s32.totalorder %s67, %s70
    %p79 = scmp.eq.s32.totalorder %s15, 1
    %p80 = por %p78, %p79
    %p81 = scmp.ne.s32.totalorder %s70, %s71
    %p82 = scmp.eq.s32.totalorder %s15, 0
    %p83 = por %p81, %p82
    %p84 = scmp.ne.s32.totalorder %s70, %s71
    %p85 = scmp.eq.s32.totalorder %s16, 1
    %p86 = por %p84, %p85
    %p88 = scmp.ne.s32.totalorder %s71, %s87
    %p89 = scmp.eq.s32.totalorder %s16, 0
    %p90 = por %p88, %p89
    %s91 = ssub.s32 %s10, %s17
    %p92 = scmp.eq.s32.totalorder %s91, 0
    %s94 = sadd.s32 %s93, 1
    %s95 = scalar_select %p92, %s93, %s94
    %p98 = pneg %p92
    %p99 = scmp.eq.s32.totalorder %s10, 1
    %p100 = por %p98, %p99
    %p101 = scmp.ne.s32.totalorder %s93, %s96
    %p102 = scmp.eq.s32.totalorder %s10, 0
    %p103 = por %p101, %p102
    %p104 = scmp.ne.s32.totalorder %s93, %s96
    %p105 = scmp.eq.s32.totalorder %s15, 1
    %p106 = por %p104, %p105
    %p107 = scmp.ne.s32.totalorder %s96, %s97
    %p108 = scmp.eq.s32.totalorder %s15, 0
    %p109 = por %p107, %p108
    %p110 = scmp.ne.s32.totalorder %s96, %s97
    %p111 = scmp.eq.s32.totalorder %s16, 1
    %p112 = por %p110, %p111
    %p114 = scmp.ne.s32.totalorder %s97, %s113
    %p115 = scmp.eq.s32.totalorder %s16, 0
    %p116 = por %p114, %p115
    %p117 = scmp.le.s32.totalorder 1, %s10
    %p118 = scmp.lt.s32.totalorder %s10, 3
    %p119 = pnand %p117, %p118
    %p120 = pneg %p119
    // Predicated region
    $region9: #{plain_block.2} parent=5 // pred_check
      _
    $region10: #{plain_block.2} parent=5 // pred_check_branch
      %122 = sbr.rel (%p119) target = $region12
    $region11: #{plain_block.2} parent=5 // pred_region
      %s123 = ssub.s32 %s10, 1
      // Predicated region
      $region13: #{plain_block.2} parent=11 // pred_check
        %p124 = pneg %p57
      $region14: #{plain_block.2} parent=11 // pred_check_branch
        %126 = sbr.rel (%p124) target = $region16
      $region15: #{plain_block.2} parent=11 // pred_region
        _
      $region16: #{plain_block.2} parent=11 // pred_fallthru
        _
    $region12: #{plain_block.2} parent=5 // pred_fallthru
      _
    %p127 = scmp.lt.s32.totalorder %s10, 2
    // Predicated region
    $region17: #{plain_block.2} parent=5 // pred_check
      %p128 = pneg %p127
    $region18: #{plain_block.2} parent=5 // pred_check_branch
      %130 = sbr.rel (%p128) target = $region20
    $region19: #{plain_block.2} parent=5 // pred_region
      // Predicated region
      $region21: #{plain_block.2} parent=19 // pred_check
        %p131 = pneg %p30
      $region22: #{plain_block.2} parent=19 // pred_check_branch
        %133 = sbr.rel (%p131) target = $region24
      $region23: #{plain_block.2} parent=19 // pred_region
        %p134 = scmp.lt.s32.totalorder %s10, 1
        %s135 = scalar_select %p134, %s10, 1
        %s136 = smul.addr %s135, 54
        %s137 = smul.addr %s136, 4
        %s138 = scalar_lea.vmem %s0, %s137
      $region24: #{plain_block.2} parent=19 // pred_fallthru
        _
    $region20: #{plain_block.2} parent=5 // pred_fallthru
      _
    %p139 = scmp.le.s32.totalorder 1, %s10
    %p140 = scmp.lt.s32.totalorder %s10, 3
    %p141 = pnand %p139, %p140
    %p142 = pneg %p141
    // Predicated region
    $region25: #{plain_block.2} parent=5 // pred_check
      _
    $region26: #{plain_block.2} parent=5 // pred_check_branch
      %144 = sbr.rel (%p141) target = $region28
    $region27: #{plain_block.2} parent=5 // pred_region
      %s145 = ssub.s32 %s10, 1
      %p146 = scmp.lt.s32.totalorder %s15, 1
      %s147 = scalar_select %p146, %s15, 1
      %s148 = smul.addr %s147, 54
      %s149 = smul.addr %s148, 4
      %s150 = scalar_lea.vmem %s0, %s149
      %p151 = pneg %p36
      %p152 = pneg %p33
      %p153 = pneg %p57
      %p154 = pneg %p54
      %p155 = pneg %p83
      %p156 = pneg %p80
      %p157 = scmp.lt.s32.totalorder %s15, 1
      %s158 = scalar_select %p157, %s15, 1
      %s159 = smul.addr %s158, 32
      %s160 = smul.addr %s159, 4
      %s161 = scalar_lea.vmem %s2, %s160
      %p162 = pneg %p109
      %p163 = pneg %p106
      %p164 = scmp.lt.s32.totalorder %s15, 1
      %s165 = scalar_select %p164, %s15, 1
      %s166 = smul.addr %s165, 2
      %s167 = scalar_lea.vmem %s3, %s166
      %p168 = scmp.lt.s32.totalorder %s15, 1
      %s169 = scalar_select %p168, %s15, 1
      %s170 = smul.addr %s169, 54
      %s171 = smul.addr %s170, 4
      %s172 = scalar_lea.vmem %s0, %s171
      %p173 = scmp.lt.s32.totalorder %s15, 1
      %s174 = scalar_select %p173, %s15, 1
      %s175 = smul.addr %s174, 32
      %s176 = smul.addr %s175, 4
      %s177 = scalar_lea.vmem %s2, %s176
      %p178 = scmp.lt.s32.totalorder %s15, 1
      %s179 = scalar_select %p178, %s15, 1
      %s180 = smul.addr %s179, 2
      %s181 = scalar_lea.vmem %s3, %s180
      %183 = vst [vmem:[#allocation2] sm:$0x1] 0.0
      %184 = vst [vmem:[#allocation3] sm:$0x1] 0.0
      %v185 = vld [vmem:[%s172] sm:$0xf]
      %v186 = vld [vmem:[%s172 + $0x4] sm:$0xf]
      %v187 = vld [vmem:[%s172 + $0x8] sm:$0x1]
      %v188 = vld [vmem:[%s172 + $0xc] sm:$0xf]
      %v189 = vld [vmem:[%s172 + $0x10] sm:$0xf]
      %v190 = vld [vmem:[%s172 + $0x14] sm:$0x1]
      %v191 = vld [vmem:[%s172 + $0x18] sm:$0xf]
      %v192 = vld [vmem:[%s172 + $0x1c] sm:$0xf]
      %v193 = vld [vmem:[%s172 + $0x20] sm:$0x1]
      %v194 = vld [vmem:[%s172 + $0x24] sm:$0xf]
      %v195 = vld [vmem:[%s172 + $0x28] sm:$0xf]
      %v196 = vld [vmem:[%s172 + $0x2c] sm:$0x1]
      %v197 = vld [vmem:[%s172 + $0x30] sm:$0xf]
      %v198 = vld [vmem:[%s172 + $0x34] sm:$0xf]
      %v199 = vld [vmem:[%s172 + $0x38] sm:$0x1]
      %v200 = vld [vmem:[%s172 + $0x3c] sm:$0xf]
      %v201 = vld [vmem:[%s172 + $0x40] sm:$0xf]
      %v202 = vld [vmem:[%s172 + $0x44] sm:$0x1]
      %v203 = vld [vmem:[%s172 + $0x48] sm:$0xf]
      %v204 = vld [vmem:[%s172 + $0x4c] sm:$0xf]
      %v205 = vld [vmem:[%s172 + $0x50] sm:$0x1]
      %v206 = vld [vmem:[%s172 + $0x54] sm:$0xf]
      %v207 = vld [vmem:[%s172 + $0x58] sm:$0xf]
      %v208 = vld [vmem:[%s172 + $0x5c] sm:$0x1]
      %v209 = vld [vmem:[%s172 + $0x60] sm:$0xf]
      %v210 = vld [vmem:[%s172 + $0x64] sm:$0xf]
      %v211 = vld [vmem:[%s172 + $0x68] sm:$0x1]
      %v212 = vld [vmem:[%s172 + $0x6c] sm:$0xf]
      %v213 = vld [vmem:[%s172 + $0x70] sm:$0xf]
      %v214 = vld [vmem:[%s172 + $0x74] sm:$0x1]
      %v215 = vld [vmem:[%s172 + $0x78] sm:$0xf]
      %v216 = vld [vmem:[%s172 + $0x7c] sm:$0xf]
      %v217 = vld [vmem:[%s172 + $0x80] sm:$0x1]
      %v218 = vld [vmem:[%s172 + $0x84] sm:$0xf]
      %v219 = vld [vmem:[%s172 + $0x88] sm:$0xf]
      %v220 = vld [vmem:[%s172 + $0x8c] sm:$0x1]
      %v221 = vld [vmem:[%s172 + $0x90] sm:$0xf]
      %v222 = vld [vmem:[%s172 + $0x94] sm:$0xf]
      %v223 = vld [vmem:[%s172 + $0x98] sm:$0x1]
      %v224 = vld [vmem:[%s172 + $0x9c] sm:$0xf]
      %v225 = vld [vmem:[%s172 + $0xa0] sm:$0xf]
      %v226 = vld [vmem:[%s172 + $0xa4] sm:$0x1]
      %v227 = vld [vmem:[%s172 + $0xa8] sm:$0xf]
      %v228 = vld [vmem:[%s172 + $0xac] sm:$0xf]
      %v229 = vld [vmem:[%s172 + $0xb0] sm:$0x1]
      %v230 = vld [vmem:[%s172 + $0xb4] sm:$0xf]
      %v231 = vld [vmem:[%s172 + $0xb8] sm:$0xf]
      %v232 = vld [vmem:[%s172 + $0xbc] sm:$0x1]
      %v233 = vld [vmem:[%s1] sm:$0xf]
      %v234 = vld [vmem:[%s1 + $0x4] sm:$0xf]
      %v235 = vld [vmem:[%s1 + $0x8] sm:$0xf]
      %v236 = vld [vmem:[%s1 + $0xc] sm:$0xf]
      %v237 = vld [vmem:[%s1 + $0x10] sm:$0xf]
      %v238 = vld [vmem:[%s1 + $0x14] sm:$0xf]
      %v239 = vld [vmem:[%s1 + $0x18] sm:$0xf]
      %v240 = vld [vmem:[%s1 + $0x1c] sm:$0xf]
      %v241 = vld [vmem:[%s1 + $0x20] sm:$0xf]
      %v242 = vld [vmem:[%s1 + $0x24] sm:$0xf]
      %v243 = vld [vmem:[%s1 + $0x28] sm:$0xf]
      %v244 = vld [vmem:[%s1 + $0x2c] sm:$0xf]
      %v245 = vld [vmem:[%s1 + $0x30] sm:$0xf]
      %v246 = vld [vmem:[%s1 + $0x34] sm:$0xf]
      %v247 = vld [vmem:[%s1 + $0x38] sm:$0xf]
      %v248 = vld [vmem:[%s1 + $0x3c] sm:$0xf]
      %vm249 = vsmask.f32 3328
      %vm250 = vsmask.f32 7440
      %vm251 = vmor %vm249, %vm250
      %v253 = vshrl.u32 %v185, 16
      %v255 = vrot.slane %v253, 4
      %v256 = vshll.u32 %v185, 16
      %v258 = vrot.slane %v256, 5
      %v259 = vor.u32 %v255, %v258
      %v260 = vrot.slane %v259, 4
      %v262 = vshll.u32 %v186, 16
      %v264 = vrot.slane %v262, 5
      %v265 = vsel %vm251, %v260, %v264
      %v266 = vshrl.u32 %v186, 16
      %v268 = vrot.slane %v266, 4
      %v269 = vor.u32 %v268, %v264
      %v270 = vrot.slane %v269, 4
      %v272 = vshll.u32 %v187, 16
      %v274 = vrot.slane %v272, 5
      %v275 = vsel %vm251, %v270, %v274
      %v277 = vshrl.u32 %v188, 16
      %v279 = vrot.slane %v277, 4
      %v280 = vshll.u32 %v188, 16
      %v282 = vrot.slane %v280, 5
      %v283 = vor.u32 %v279, %v282
      %v284 = vrot.slane %v283, 4
      %v286 = vshll.u32 %v189, 16
      %v288 = vrot.slane %v286, 5
      %v289 = vsel %vm251, %v284, %v288
      %v290 = vshrl.u32 %v189, 16
      %v292 = vrot.slane %v290, 4
      %v293 = vor.u32 %v292, %v288
      %v294 = vrot.slane %v293, 4
      %v296 = vshll.u32 %v190, 16
      %v298 = vrot.slane %v296, 5
      %v299 = vsel %vm251, %v294, %v298
      %v301 = vshrl.u32 %v191, 16
      %v303 = vrot.slane %v301, 4
      %v304 = vshll.u32 %v191, 16
      %v306 = vrot.slane %v304, 5
      %v307 = vor.u32 %v303, %v306
      %v308 = vrot.slane %v307, 4
      %v310 = vshll.u32 %v192, 16
      %v312 = vrot.slane %v310, 5
      %v313 = vsel %vm251, %v308, %v312
      %v314 = vshrl.u32 %v192, 16
      %v316 = vrot.slane %v314, 4
      %v317 = vor.u32 %v316, %v312
      %v318 = vrot.slane %v317, 4
      %v320 = vshll.u32 %v193, 16
      %v322 = vrot.slane %v320, 5
      %v323 = vsel %vm251, %v318, %v322
      %v325 = vshrl.u32 %v194, 16
      %v327 = vrot.slane %v325, 4
      %v328 = vshll.u32 %v194, 16
      %v330 = vrot.slane %v328, 5
      %v331 = vor.u32 %v327, %v330
      %v332 = vrot.slane %v331, 4
      %v334 = vshll.u32 %v195, 16
      %v336 = vrot.slane %v334, 5
      %v337 = vsel %vm251, %v332, %v336
      %v338 = vshrl.u32 %v195, 16
      %v340 = vrot.slane %v338, 4
      %v341 = vor.u32 %v340, %v336
      %v342 = vrot.slane %v341, 4
      %v344 = vshll.u32 %v196, 16
      %v346 = vrot.slane %v344, 5
      %v347 = vsel %vm251, %v342, %v346
      %v349 = vshrl.u32 %v197, 16
      %v351 = vrot.slane %v349, 4
      %v352 = vshll.u32 %v197, 16
      %v354 = vrot.slane %v352, 5
      %v355 = vor.u32 %v351, %v354
      %v356 = vrot.slane %v355, 4
      %v358 = vshll.u32 %v198, 16
      %v360 = vrot.slane %v358, 5
      %v361 = vsel %vm251, %v356, %v360
      %v362 = vshrl.u32 %v198, 16
      %v364 = vrot.slane %v362, 4
      %v365 = vor.u32 %v364, %v360
      %v366 = vrot.slane %v365, 4
      %v368 = vshll.u32 %v199, 16
      %v370 = vrot.slane %v368, 5
      %v371 = vsel %vm251, %v366, %v370
      %v373 = vshrl.u32 %v200, 16
      %v375 = vrot.slane %v373, 4
      %v376 = vshll.u32 %v200, 16
      %v378 = vrot.slane %v376, 5
      %v379 = vor.u32 %v375, %v378
      %v380 = vrot.slane %v379, 4
      %v382 = vshll.u32 %v201, 16
      %v384 = vrot.slane %v382, 5
      %v385 = vsel %vm251, %v380, %v384
      %v386 = vshrl.u32 %v201, 16
      %v388 = vrot.slane %v386, 4
      %v389 = vor.u32 %v388, %v384
      %v390 = vrot.slane %v389, 4
      %v392 = vshll.u32 %v202, 16
      %v394 = vrot.slane %v392, 5
      %v395 = vsel %vm251, %v390, %v394
      %v397 = vshrl.u32 %v203, 16
      %v399 = vrot.slane %v397, 4
      %v400 = vshll.u32 %v203, 16
      %v402 = vrot.slane %v400, 5
      %v403 = vor.u32 %v399, %v402
      %v404 = vrot.slane %v403, 4
      %v406 = vshll.u32 %v204, 16
      %v408 = vrot.slane %v406, 5
      %v409 = vsel %vm251, %v404, %v408
      %v410 = vshrl.u32 %v204, 16
      %v412 = vrot.slane %v410, 4
      %v413 = vor.u32 %v412, %v408
      %v414 = vrot.slane %v413, 4
      %v416 = vshll.u32 %v205, 16
      %v418 = vrot.slane %v416, 5
      %v419 = vsel %vm251, %v414, %v418
      %v421 = vshrl.u32 %v206, 16
      %v423 = vrot.slane %v421, 4
      %v424 = vshll.u32 %v206, 16
      %v426 = vrot.slane %v424, 5
      %v427 = vor.u32 %v423, %v426
      %v428 = vrot.slane %v427, 4
      %v430 = vshll.u32 %v207, 16
      %v432 = vrot.slane %v430, 5
      %v433 = vsel %vm251, %v428, %v432
      %v434 = vshrl.u32 %v207, 16
      %v436 = vrot.slane %v434, 4
      %v437 = vor.u32 %v436, %v432
      %v438 = vrot.slane %v437, 4
      %v440 = vshll.u32 %v208, 16
      %v442 = vrot.slane %v440, 5
      %v443 = vsel %vm251, %v438, %v442
      %v445 = vshrl.u32 %v209, 16
      %v447 = vrot.slane %v445, 4
      %v448 = vshll.u32 %v209, 16
      %v450 = vrot.slane %v448, 5
      %v451 = vor.u32 %v447, %v450
      %v452 = vrot.slane %v451, 4
      %v454 = vshll.u32 %v210, 16
      %v456 = vrot.slane %v454, 5
      %v457 = vsel %vm251, %v452, %v456
      %v458 = vshrl.u32 %v210, 16
      %v460 = vrot.slane %v458, 4
      %v461 = vor.u32 %v460, %v456
      %v462 = vrot.slane %v461, 4
      %v464 = vshll.u32 %v211, 16
      %v466 = vrot.slane %v464, 5
      %v467 = vsel %vm251, %v462, %v466
      %v469 = vshrl.u32 %v212, 16
      %v471 = vrot.slane %v469, 4
      %v472 = vshll.u32 %v212, 16
      %v474 = vrot.slane %v472, 5
      %v475 = vor.u32 %v471, %v474
      %v476 = vrot.slane %v475, 4
      %v478 = vshll.u32 %v213, 16
      %v480 = vrot.slane %v478, 5
      %v481 = vsel %vm251, %v476, %v480
      %v482 = vshrl.u32 %v213, 16
      %v484 = vrot.slane %v482, 4
      %v485 = vor.u32 %v484, %v480
      %v486 = vrot.slane %v485, 4
      %v488 = vshll.u32 %v214, 16
      %v490 = vrot.slane %v488, 5
      %v491 = vsel %vm251, %v486, %v490
      %v493 = vshrl.u32 %v215, 16
      %v495 = vrot.slane %v493, 4
      %v496 = vshll.u32 %v215, 16
      %v498 = vrot.slane %v496, 5
      %v499 = vor.u32 %v495, %v498
      %v500 = vrot.slane %v499, 4
      %v502 = vshll.u32 %v216, 16
      %v504 = vrot.slane %v502, 5
      %v505 = vsel %vm251, %v500, %v504
      %v506 = vshrl.u32 %v216, 16
      %v508 = vrot.slane %v506, 4
      %v509 = vor.u32 %v508, %v504
      %v510 = vrot.slane %v509, 4
      %v512 = vshll.u32 %v217, 16
      %v514 = vrot.slane %v512, 5
      %v515 = vsel %vm251, %v510, %v514
      %v517 = vshrl.u32 %v218, 16
      %v519 = vrot.slane %v517, 4
      %v520 = vshll.u32 %v218, 16
      %v522 = vrot.slane %v520, 5
      %v523 = vor.u32 %v519, %v522
      %v524 = vrot.slane %v523, 4
      %v526 = vshll.u32 %v219, 16
      %v528 = vrot.slane %v526, 5
      %v529 = vsel %vm251, %v524, %v528
      %v530 = vshrl.u32 %v219, 16
      %v532 = vrot.slane %v530, 4
      %v533 = vor.u32 %v532, %v528
      %v534 = vrot.slane %v533, 4
      %v536 = vshll.u32 %v220, 16
      %v538 = vrot.slane %v536, 5
      %v539 = vsel %vm251, %v534, %v538
      %v541 = vshrl.u32 %v221, 16
      %v543 = vrot.slane %v541, 4
      %v544 = vshll.u32 %v221, 16
      %v546 = vrot.slane %v544, 5
      %v547 = vor.u32 %v543, %v546
      %v548 = vrot.slane %v547, 4
      %v550 = vshll.u32 %v222, 16
      %v552 = vrot.slane %v550, 5
      %v553 = vsel %vm251, %v548, %v552
      %v554 = vshrl.u32 %v222, 16
      %v556 = vrot.slane %v554, 4
      %v557 = vor.u32 %v556, %v552
      %v558 = vrot.slane %v557, 4
      %v560 = vshll.u32 %v223, 16
      %v562 = vrot.slane %v560, 5
      %v563 = vsel %vm251, %v558, %v562
      %v565 = vshrl.u32 %v224, 16
      %v567 = vrot.slane %v565, 4
      %v568 = vshll.u32 %v224, 16
      %v570 = vrot.slane %v568, 5
      %v571 = vor.u32 %v567, %v570
      %v572 = vrot.slane %v571, 4
      %v574 = vshll.u32 %v225, 16
      %v576 = vrot.slane %v574, 5
      %v577 = vsel %vm251, %v572, %v576
      %v578 = vshrl.u32 %v225, 16
      %v580 = vrot.slane %v578, 4
      %v581 = vor.u32 %v580, %v576
      %v582 = vrot.slane %v581, 4
      %v584 = vshll.u32 %v226, 16
      %v586 = vrot.slane %v584, 5
      %v587 = vsel %vm251, %v582, %v586
      %v589 = vshrl.u32 %v227, 16
      %v591 = vrot.slane %v589, 4
      %v592 = vshll.u32 %v227, 16
      %v594 = vrot.slane %v592, 5
      %v595 = vor.u32 %v591, %v594
      %v596 = vrot.slane %v595, 4
      %v598 = vshll.u32 %v228, 16
      %v600 = vrot.slane %v598, 5
      %v601 = vsel %vm251, %v596, %v600
      %v602 = vshrl.u32 %v228, 16
      %v604 = vrot.slane %v602, 4
      %v605 = vor.u32 %v604, %v600
      %v606 = vrot.slane %v605, 4
      %v608 = vshll.u32 %v229, 16
      %v610 = vrot.slane %v608, 5
      %v611 = vsel %vm251, %v606, %v610
      %v613 = vshrl.u32 %v230, 16
      %v615 = vrot.slane %v613, 4
      %v616 = vshll.u32 %v230, 16
      %v618 = vrot.slane %v616, 5
      %v619 = vor.u32 %v615, %v618
      %v620 = vrot.slane %v619, 4
      %v622 = vshll.u32 %v231, 16
      %v624 = vrot.slane %v622, 5
      %v625 = vsel %vm251, %v620, %v624
      %v626 = vshrl.u32 %v231, 16
      %v628 = vrot.slane %v626, 4
      %v629 = vor.u32 %v628, %v624
      %v630 = vrot.slane %v629, 4
      %v632 = vshll.u32 %v232, 16
      %v634 = vrot.slane %v632, 5
      %v635 = vsel %vm251, %v630, %v634
      %s636 = scalar_lea.vmem %s1, 64
      %v637 = vld [vmem:[%s636] sm:$0xf]
      %v638 = vld [vmem:[%s636 + $0x4] sm:$0xf]
      %v639 = vld [vmem:[%s636 + $0x8] sm:$0xf]
      %v640 = vld [vmem:[%s636 + $0xc] sm:$0xf]
      %v641 = vld [vmem:[%s636 + $0x10] sm:$0xf]
      %v642 = vld [vmem:[%s636 + $0x14] sm:$0xf]
      %v643 = vld [vmem:[%s636 + $0x18] sm:$0xf]
      %v644 = vld [vmem:[%s636 + $0x1c] sm:$0xf]
      %v645 = vld [vmem:[%s636 + $0x20] sm:$0xf]
      %v646 = vld [vmem:[%s636 + $0x24] sm:$0xf]
      %v647 = vld [vmem:[%s636 + $0x28] sm:$0xf]
      %v648 = vld [vmem:[%s636 + $0x2c] sm:$0xf]
      %v649 = vld [vmem:[%s636 + $0x30] sm:$0xf]
      %v650 = vld [vmem:[%s636 + $0x34] sm:$0xf]
      %v651 = vld [vmem:[%s636 + $0x38] sm:$0xf]
      %v652 = vld [vmem:[%s636 + $0x3c] sm:$0xf]
      %v653 = vunpack.c.l.b16 %v265
      %v654 = vunpack.c.l.b16 %v275
      %v655 = vunpack.c.l.b16 %v289
      %v656 = vunpack.c.l.b16 %v299
      %v657 = vunpack.c.l.b16 %v313
      %v658 = vunpack.c.l.b16 %v323
      %v659 = vunpack.c.l.b16 %v337
      %v660 = vunpack.c.l.b16 %v347
      %v661 = vunpack.c.l.b16 %v361
      %v662 = vunpack.c.l.b16 %v371
      %v663 = vunpack.c.l.b16 %v385
      %v664 = vunpack.c.l.b16 %v395
      %v665 = vunpack.c.l.b16 %v409
      %v666 = vunpack.c.l.b16 %v419
      %v667 = vunpack.c.l.b16 %v433
      %v668 = vunpack.c.l.b16 %v443
      %v669 = vunpack.c.l.b16 %v457
      %v670 = vunpack.c.l.b16 %v467
      %v671 = vunpack.c.l.b16 %v481
      %v672 = vunpack.c.l.b16 %v491
      %v673 = vunpack.c.l.b16 %v505
      %v674 = vunpack.c.l.b16 %v515
      %v675 = vunpack.c.l.b16 %v529
      %v676 = vunpack.c.l.b16 %v539
      %v677 = vunpack.c.l.b16 %v553
      %v678 = vunpack.c.l.b16 %v563
      %v679 = vunpack.c.l.b16 %v577
      %v680 = vunpack.c.l.b16 %v587
      %v681 = vunpack.c.l.b16 %v601
      %v682 = vunpack.c.l.b16 %v611
      %v683 = vunpack.c.l.b16 %v625
      %v684 = vunpack.c.l.b16 %v635
      %v685 = vpack.c.b16 %v654, %v653
      %v686 = vpack.c.b16 %v656, %v655
      %v687 = vpack.c.b16 %v658, %v657
      %v688 = vpack.c.b16 %v660, %v659
      %v689 = vpack.c.b16 %v662, %v661
      %v690 = vpack.c.b16 %v664, %v663
      %v691 = vpack.c.b16 %v666, %v665
      %v692 = vpack.c.b16 %v668, %v667
      %v693 = vpack.c.b16 %v670, %v669
      %v694 = vpack.c.b16 %v672, %v671
      %v695 = vpack.c.b16 %v674, %v673
      %v696 = vpack.c.b16 %v676, %v675
      %v697 = vpack.c.b16 %v678, %v677
      %v698 = vpack.c.b16 %v680, %v679
      %v699 = vpack.c.b16 %v682, %v681
      %v700 = vpack.c.b16 %v684, %v683
      %v733 = vunpack.c.l.b16 %v637
      %v734 = vunpack.c.l.b16 %v638
      %v735 = vunpack.c.l.b16 %v639
      %v736 = vunpack.c.l.b16 %v640
      %v737 = vunpack.c.l.b16 %v641
      %v738 = vunpack.c.l.b16 %v642
      %v739 = vunpack.c.l.b16 %v643
      %v740 = vunpack.c.l.b16 %v644
      %v741 = vunpack.c.l.b16 %v645
      %v742 = vunpack.c.l.b16 %v646
      %v743 = vunpack.c.l.b16 %v647
      %v744 = vunpack.c.l.b16 %v648
      %v745 = vunpack.c.l.b16 %v649
      %v746 = vunpack.c.l.b16 %v650
      %v747 = vunpack.c.l.b16 %v651
      %v748 = vunpack.c.l.b16 %v652
      %v749 = vpack.c.b16 %v734, %v733
      %v750 = vpack.c.b16 %v736, %v735
      %v751 = vpack.c.b16 %v738, %v737
      %v752 = vpack.c.b16 %v740, %v739
      %v753 = vpack.c.b16 %v742, %v741
      %v754 = vpack.c.b16 %v744, %v743
      %v755 = vpack.c.b16 %v746, %v745
      %v756 = vpack.c.b16 %v748, %v747
      %765 = vmatprep.subr.bf16.mxu0 0
      %766 = vmatpush1.bf16.msra.mxu0 %v749
      %767 = vmatprep.subr.bf16.mxu0 0
      %768 = vmatpush1.bf16.msra.mxu0 %v750
      %769 = vmatprep.subr.bf16.mxu0 0
      %770 = vmatpush1.bf16.msra.mxu0 %v751
      %771 = vmatprep.subr.bf16.mxu0 0
      %772 = vmatpush1.bf16.msra.mxu0 %v752
      %773 = vmatprep.subr.bf16.mxu0 0
      %774 = vmatpush1.bf16.msra.mxu0 %v753
      %775 = vmatprep.subr.bf16.mxu0 0
      %776 = vmatpush1.bf16.msra.mxu0 %v754
      %777 = vmatprep.subr.bf16.mxu0 0
      %778 = vmatpush1.bf16.msra.mxu0 %v755
      %779 = vmatprep.subr.bf16.mxu0 0
      %780 = vmatpush1.bf16.msra.mxu0 %v756
      %781 = vmatprep.subr.bf16.mxu0 0
      %782 = vmatpush1.bf16.msra.mxu0 0
      %783 = vmatprep.subr.bf16.mxu0 0
      %784 = vmatpush1.bf16.msra.mxu0 0
      %785 = vmatprep.subr.bf16.mxu0 0
      %786 = vmatpush1.bf16.msra.mxu0 0
      %787 = vmatprep.subr.bf16.mxu0 0
      %788 = vmatpush1.bf16.msra.mxu0 0
      %789 = vmatprep.subr.bf16.mxu0 0
      %790 = vmatpush1.bf16.msra.mxu0 0
      %791 = vmatprep.subr.bf16.mxu0 0
      %792 = vmatpush1.bf16.msra.mxu0 0
      %793 = vmatprep.subr.bf16.mxu0 0
      %794 = vmatpush1.bf16.msra.mxu0 0
      %795 = vmatprep.subr.bf16.mxu0 0
      %796 = vmatpush1.bf16.msra.mxu0 0
      %797 = vmatprep.mubr.bf16.mxu0 0
      %798 = vmatmul.mubr.bf16.gmra.mrb[0].mxu0 %v685
      %v799 = vpop.f32.mrb[0].mxu0
      %v800 = vadd.f32 0.0, %v799
      %v801 = vpop.f32.mrb[0].mxu0
      %v802 = vpop.f32.mrb[0].mxu0
      %v803 = vadd.f32 0.0, %v802
      %v804 = vpop.f32.mrb[0].mxu0
      %805 = vmatprep.mubr.bf16.mxu0 0
      %806 = vmatmul.mubr.bf16.gmra.mrb[0].mxu0 %v686
      %v807 = vpop.f32.mrb[0].mxu0
      %v808 = vadd.f32 0.0, %v807
      %v809 = vpop.f32.mrb[0].mxu0
      %v810 = vpop.f32.mrb[0].mxu0
      %v811 = vadd.f32 0.0, %v810
      %v812 = vpop.f32.mrb[0].mxu0
      %813 = vmatprep.mubr.bf16.mxu0 0
      %814 = vmatmul.mubr.bf16.gmra.mrb[0].mxu0 %v687
      %v815 = vpop.f32.mrb[0].mxu0
      %v816 = vadd.f32 0.0, %v815
      %v817 = vpop.f32.mrb[0].mxu0
      %v818 = vpop.f32.mrb[0].mxu0
      %v819 = vadd.f32 0.0, %v818
      %v820 = vpop.f32.mrb[0].mxu0
      %821 = vmatprep.mubr.bf16.mxu0 0
      %822 = vmatmul.mubr.bf16.gmra.mrb[0].mxu0 %v688
      %v823 = vpop.f32.mrb[0].mxu0
      %v824 = vadd.f32 0.0, %v823
      %v825 = vpop.f32.mrb[0].mxu0
      %v826 = vpop.f32.mrb[0].mxu0
      %v827 = vadd.f32 0.0, %v826
      %v828 = vpop.f32.mrb[0].mxu0
      %829 = vmatprep.mubr.bf16.mxu0 0
      %830 = vmatmul.mubr.bf16.gmra.mrb[0].mxu0 %v689
      %v831 = vpop.f32.mrb[0].mxu0
      %v832 = vadd.f32 0.0, %v831
      %v833 = vpop.f32.mrb[0].mxu0
      %v834 = vpop.f32.mrb[0].mxu0
      %v835 = vadd.f32 0.0, %v834
      %v836 = vpop.f32.mrb[0].mxu0
      %837 = vmatprep.mubr.bf16.mxu0 0
      %838 = vmatmul.mubr.bf16.gmra.mrb[0].mxu0 %v690
      %v839 = vpop.f32.mrb[0].mxu0
      %v840 = vadd.f32 0.0, %v839
      %v841 = vpop.f32.mrb[0].mxu0
      %v842 = vpop.f32.mrb[0].mxu0
      %v843 = vadd.f32 0.0, %v842
      %v844 = vpop.f32.mrb[0].mxu0
      %845 = vmatprep.mubr.bf16.mxu0 0
      %846 = vmatmul.mubr.bf16.gmra.mrb[0].mxu0 %v691
      %v847 = vpop.f32.mrb[0].mxu0
      %v848 = vadd.f32 0.0, %v847
      %v849 = vpop.f32.mrb[0].mxu0
      %v850 = vpop.f32.mrb[0].mxu0
      %v851 = vadd.f32 0.0, %v850
      %v852 = vpop.f32.mrb[0].mxu0
      %853 = vmatprep.mubr.bf16.mxu0 0
      %854 = vmatmul.mubr.bf16.gmra.mrb[0].mxu0 %v692
      %v855 = vpop.f32.mrb[0].mxu0
      %v856 = vadd.f32 0.0, %v855
      %v857 = vpop.f32.mrb[0].mxu0
      %v858 = vpop.f32.mrb[0].mxu0
      %v859 = vadd.f32 0.0, %v858
      %v860 = vpop.f32.mrb[0].mxu0
      %861 = vmatprep.mubr.bf16.mxu0 0
      %862 = vmatmul.mubr.bf16.gmra.mrb[0].mxu0 %v693
      %v863 = vpop.f32.mrb[0].mxu0
      %v864 = vadd.f32 0.0, %v863
      %v865 = vpop.f32.mrb[0].mxu0
      %v866 = vpop.f32.mrb[0].mxu0
      %v867 = vadd.f32 0.0, %v866
      %v868 = vpop.f32.mrb[0].mxu0
      %869 = vmatprep.mubr.bf16.mxu0 0
      %870 = vmatmul.mubr.bf16.gmra.mrb[0].mxu0 %v694
      %v871 = vpop.f32.mrb[0].mxu0
      %v872 = vadd.f32 0.0, %v871
      %v873 = vpop.f32.mrb[0].mxu0
      %v874 = vpop.f32.mrb[0].mxu0
      %v875 = vadd.f32 0.0, %v874
      %v876 = vpop.f32.mrb[0].mxu0
      %877 = vmatprep.mubr.bf16.mxu0 0
      %878 = vmatmul.mubr.bf16.gmra.mrb[0].mxu0 %v695
      %v879 = vpop.f32.mrb[0].mxu0
      %v880 = vadd.f32 0.0, %v879
      %v881 = vpop.f32.mrb[0].mxu0
      %v882 = vpop.f32.mrb[0].mxu0
      %v883 = vadd.f32 0.0, %v882
      %v884 = vpop.f32.mrb[0].mxu0
      %885 = vmatprep.mubr.bf16.mxu0 0
      %886 = vmatmul.mubr.bf16.gmra.mrb[0].mxu0 %v696
      %v887 = vpop.f32.mrb[0].mxu0
      %v888 = vadd.f32 0.0, %v887
      %v889 = vpop.f32.mrb[0].mxu0
      %v890 = vpop.f32.mrb[0].mxu0
      %v891 = vadd.f32 0.0, %v890
      %v892 = vpop.f32.mrb[0].mxu0
      %893 = vmatprep.mubr.bf16.mxu0 0
      %894 = vmatmul.mubr.bf16.gmra.mrb[0].mxu0 %v697
      %v895 = vpop.f32.mrb[0].mxu0
      %v896 = vadd.f32 0.0, %v895
      %v897 = vpop.f32.mrb[0].mxu0
      %v898 = vpop.f32.mrb[0].mxu0
      %v899 = vadd.f32 0.0, %v898
      %v900 = vpop.f32.mrb[0].mxu0
      %901 = vmatprep.mubr.bf16.mxu0 0
      %902 = vmatmul.mubr.bf16.gmra.mrb[0].mxu0 %v698
      %v903 = vpop.f32.mrb[0].mxu0
      %v904 = vadd.f32 0.0, %v903
      %v905 = vpop.f32.mrb[0].mxu0
      %v906 = vpop.f32.mrb[0].mxu0
      %v907 = vadd.f32 0.0, %v906
      %v908 = vpop.f32.mrb[0].mxu0
      %909 = vmatprep.mubr.bf16.mxu0 0
      %910 = vmatmul.mubr.bf16.gmra.mrb[0].mxu0 %v699
      %v911 = vpop.f32.mrb[0].mxu0
      %v912 = vadd.f32 0.0, %v911
      %v913 = vpop.f32.mrb[0].mxu0
      %v914 = vpop.f32.mrb[0].mxu0
      %v915 = vadd.f32 0.0, %v914
      %v916 = vpop.f32.mrb[0].mxu0
      %917 = vmatprep.mubr.bf16.mxu0 0
      %918 = vmatmul.mubr.bf16.gmra.mrb[0].mxu0 %v700
      %v919 = vpop.f32.mrb[0].mxu0
      %v920 = vadd.f32 0.0, %v919
      %v921 = vpop.f32.mrb[0].mxu0
      %v922 = vpop.f32.mrb[0].mxu0
      %v923 = vadd.f32 0.0, %v922
      %v924 = vpop.f32.mrb[0].mxu0
      %925 = vdwg.mxu0
      %v958 = vunpack.c.l.b16 %v185
      %v959 = vunpack.c.l.b16 %v186
      %v960 = vunpack.c.l.b16 %v188
      %v961 = vunpack.c.l.b16 %v189
      %v962 = vunpack.c.l.b16 %v191
      %v963 = vunpack.c.l.b16 %v192
      %v964 = vunpack.c.l.b16 %v194
      %v965 = vunpack.c.l.b16 %v195
      %v966 = vunpack.c.l.b16 %v197
      %v967 = vunpack.c.l.b16 %v198
      %v968 = vunpack.c.l.b16 %v200
      %v969 = vunpack.c.l.b16 %v201
      %v970 = vunpack.c.l.b16 %v203
      %v971 = vunpack.c.l.b16 %v204
      %v972 = vunpack.c.l.b16 %v206
      %v973 = vunpack.c.l.b16 %v207
      %v974 = vunpack.c.l.b16 %v209
      %v975 = vunpack.c.l.b16 %v210
      %v976 = vunpack.c.l.b16 %v212
      %v977 = vunpack.c.l.b16 %v213
      %v978 = vunpack.c.l.b16 %v215
      %v979 = vunpack.c.l.b16 %v216
      %v980 = vunpack.c.l.b16 %v218
      %v981 = vunpack.c.l.b16 %v219
      %v982 = vunpack.c.l.b16 %v221
      %v983 = vunpack.c.l.b16 %v222
      %v984 = vunpack.c.l.b16 %v224
      %v985 = vunpack.c.l.b16 %v225
      %v986 = vunpack.c.l.b16 %v227
      %v987 = vunpack.c.l.b16 %v228
      %v988 = vunpack.c.l.b16 %v230
      %v989 = vunpack.c.l.b16 %v231
      %v990 = vpack.c.b16 %v959, %v958
      %v991 = vpack.c.b16 %v961, %v960
      %v992 = vpack.c.b16 %v963, %v962
      %v993 = vpack.c.b16 %v965, %v964
      %v994 = vpack.c.b16 %v967, %v966
      %v995 = vpack.c.b16 %v969, %v968
      %v996 = vpack.c.b16 %v971, %v970
      %v997 = vpack.c.b16 %v973, %v972
      %v998 = vpack.c.b16 %v975, %v974
      %v999 = vpack.c.b16 %v977, %v976
      %v1000 = vpack.c.b16 %v979, %v978
      %v1001 = vpack.c.b16 %v981, %v980
      %v1002 = vpack.c.b16 %v983, %v982
      %v1003 = vpack.c.b16 %v985, %v984
      %v1004 = vpack.c.b16 %v987, %v986
      %v1005 = vpack.c.b16 %v989, %v988
      %v1038 = vunpack.c.l.b16 %v233
      %v1039 = vunpack.c.l.b16 %v234
      %v1040 = vunpack.c.l.b16 %v235
      %v1041 = vunpack.c.l.b16 %v236
      %v1042 = vunpack.c.l.b16 %v237
      %v1043 = vunpack.c.l.b16 %v238
      %v1044 = vunpack.c.l.b16 %v239
      %v1045 = vunpack.c.l.b16 %v240
      %v1046 = vunpack.c.l.b16 %v241
      %v1047 = vunpack.c.l.b16 %v242
      %v1048 = vunpack.c.l.b16 %v243
      %v1049 = vunpack.c.l.b16 %v244
      %v1050 = vunpack.c.l.b16 %v245
      %v1051 = vunpack.c.l.b16 %v246
      %v1052 = vunpack.c.l.b16 %v247
      %v1053 = vunpack.c.l.b16 %v248
      %v1054 = vpack.c.b16 %v1039, %v1038
      %v1055 = vpack.c.b16 %v1041, %v1040
      %v1056 = vpack.c.b16 %v1043, %v1042
      %v1057 = vpack.c.b16 %v1045, %v1044
      %v1058 = vpack.c.b16 %v1047, %v1046
      %v1059 = vpack.c.b16 %v1049, %v1048
      %v1060 = vpack.c.b16 %v1051, %v1050
      %v1061 = vpack.c.b16 %v1053, %v1052
      %1070 = vmatprep.subr.bf16.mxu0 0
      %1071 = vmatpush1.bf16.msra.mxu0 %v1054
      %1072 = vmatprep.subr.bf16.mxu0 0
      %1073 = vmatpush1.bf16.msra.mxu0 %v1055
      %1074 = vmatprep.subr.bf16.mxu0 0
      %1075 = vmatpush1.bf16.msra.mxu0 %v1056
      %1076 = vmatprep.subr.bf16.mxu0 0
      %1077 = vmatpush1.bf16.msra.mxu0 %v1057
      %1078 = vmatprep.subr.bf16.mxu0 0
      %1079 = vmatpush1.bf16.msra.mxu0 %v1058
      %1080 = vmatprep.subr.bf16.mxu0 0
      %1081 = vmatpush1.bf16.msra.mxu0 %v1059
      %1082 = vmatprep.subr.bf16.mxu0 0
      %1083 = vmatpush1.bf16.msra.mxu0 %v1060
      %1084 = vmatprep.subr.bf16.mxu0 0
      %1085 = vmatpush1.bf16.msra.mxu0 %v1061
      %1086 = vmatprep.subr.bf16.mxu0 0
      %1087 = vmatpush1.bf16.msra.mxu0 0
      %1088 = vmatprep.subr.bf16.mxu0 0
      %1089 = vmatpush1.bf16.msra.mxu0 0
      %1090 = vmatprep.subr.bf16.mxu0 0
      %1091 = vmatpush1.bf16.msra.mxu0 0
      %1092 = vmatprep.subr.bf16.mxu0 0
      %1093 = vmatpush1.bf16.msra.mxu0 0
      %1094 = vmatprep.subr.bf16.mxu0 0
      %1095 = vmatpush1.bf16.msra.mxu0 0
      %1096 = vmatprep.subr.bf16.mxu0 0
      %1097 = vmatpush1.bf16.msra.mxu0 0
      %1098 = vmatprep.subr.bf16.mxu0 0
      %1099 = vmatpush1.bf16.msra.mxu0 0
      %1100 = vmatprep.subr.bf16.mxu0 0
      %1101 = vmatpush1.bf16.msra.mxu0 0
      %1102 = vmatprep.mubr.bf16.mxu0 0
      %1103 = vmatmul.mubr.bf16.gmra.mrb[0].mxu0 %v990
      %v1104 = vpop.f32.mrb[0].mxu0
      %v1105 = vadd.f32 %v800, %v1104
      %v1106 = vpop.f32.mrb[0].mxu0
      %v1107 = vpop.f32.mrb[0].mxu0
      %v1108 = vadd.f32 %v803, %v1107
      %v1109 = vpop.f32.mrb[0].mxu0
      %1110 = vmatprep.mubr.bf16.mxu0 0
      %1111 = vmatmul.mubr.bf16.gmra.mrb[0].mxu0 %v991
      %v1112 = vpop.f32.mrb[0].mxu0
      %v1113 = vadd.f32 %v808, %v1112
      %v1114 = vpop.f32.mrb[0].mxu0
      %v1115 = vpop.f32.mrb[0].mxu0
      %v1116 = vadd.f32 %v811, %v1115
      %v1117 = vpop.f32.mrb[0].mxu0
      %1118 = vmatprep.mubr.bf16.mxu0 0
      %1119 = vmatmul.mubr.bf16.gmra.mrb[0].mxu0 %v992
      %v1120 = vpop.f32.mrb[0].mxu0
      %v1121 = vadd.f32 %v816, %v1120
      %v1122 = vpop.f32.mrb[0].mxu0
      %v1123 = vpop.f32.mrb[0].mxu0
      %v1124 = vadd.f32 %v819, %v1123
      %v1125 = vpop.f32.mrb[0].mxu0
      %1126 = vmatprep.mubr.bf16.mxu0 0
      %1127 = vmatmul.mubr.bf16.gmra.mrb[0].mxu0 %v993
      %v1128 = vpop.f32.mrb[0].mxu0
      %v1129 = vadd.f32 %v824, %v1128
      %v1130 = vpop.f32.mrb[0].mxu0
      %v1131 = vpop.f32.mrb[0].mxu0
      %v1132 = vadd.f32 %v827, %v1131
      %v1133 = vpop.f32.mrb[0].mxu0
      %1134 = vmatprep.mubr.bf16.mxu0 0
      %1135 = vmatmul.mubr.bf16.gmra.mrb[0].mxu0 %v994
      %v1136 = vpop.f32.mrb[0].mxu0
      %v1137 = vadd.f32 %v832, %v1136
      %v1138 = vpop.f32.mrb[0].mxu0
      %v1139 = vpop.f32.mrb[0].mxu0
      %v1140 = vadd.f32 %v835, %v1139
      %v1141 = vpop.f32.mrb[0].mxu0
      %1142 = vmatprep.mubr.bf16.mxu0 0
      %1143 = vmatmul.mubr.bf16.gmra.mrb[0].mxu0 %v995
      %v1144 = vpop.f32.mrb[0].mxu0
      %v1145 = vadd.f32 %v840, %v1144
      %v1146 = vpop.f32.mrb[0].mxu0
      %v1147 = vpop.f32.mrb[0].mxu0
      %v1148 = vadd.f32 %v843, %v1147
      %v1149 = vpop.f32.mrb[0].mxu0
      %1150 = vmatprep.mubr.bf16.mxu0 0
      %1151 = vmatmul.mubr.bf16.gmra.mrb[0].mxu0 %v996
      %v1152 = vpop.f32.mrb[0].mxu0
      %v1153 = vadd.f32 %v848, %v1152
      %v1154 = vpop.f32.mrb[0].mxu0
      %v1155 = vpop.f32.mrb[0].mxu0
      %v1156 = vadd.f32 %v851, %v1155
      %v1157 = vpop.f32.mrb[0].mxu0
      %1158 = vmatprep.mubr.bf16.mxu0 0
      %1159 = vmatmul.mubr.bf16.gmra.mrb[0].mxu0 %v997
      %v1160 = vpop.f32.mrb[0].mxu0
      %v1161 = vadd.f32 %v856, %v1160
      %v1162 = vpop.f32.mrb[0].mxu0
      %v1163 = vpop.f32.mrb[0].mxu0
      %v1164 = vadd.f32 %v859, %v1163
      %v1165 = vpop.f32.mrb[0].mxu0
      %1166 = vmatprep.mubr.bf16.mxu0 0
      %1167 = vmatmul.mubr.bf16.gmra.mrb[0].mxu0 %v998
      %v1168 = vpop.f32.mrb[0].mxu0
      %v1169 = vadd.f32 %v864, %v1168
      %v1170 = vpop.f32.mrb[0].mxu0
      %v1171 = vpop.f32.mrb[0].mxu0
      %v1172 = vadd.f32 %v867, %v1171
      %v1173 = vpop.f32.mrb[0].mxu0
      %1174 = vmatprep.mubr.bf16.mxu0 0
      %1175 = vmatmul.mubr.bf16.gmra.mrb[0].mxu0 %v999
      %v1176 = vpop.f32.mrb[0].mxu0
      %v1177 = vadd.f32 %v872, %v1176
      %v1178 = vpop.f32.mrb[0].mxu0
      %v1179 = vpop.f32.mrb[0].mxu0
      %v1180 = vadd.f32 %v875, %v1179
      %v1181 = vpop.f32.mrb[0].mxu0
      %1182 = vmatprep.mubr.bf16.mxu0 0
      %1183 = vmatmul.mubr.bf16.gmra.mrb[0].mxu0 %v1000
      %v1184 = vpop.f32.mrb[0].mxu0
      %v1185 = vadd.f32 %v880, %v1184
      %v1186 = vpop.f32.mrb[0].mxu0
      %v1187 = vpop.f32.mrb[0].mxu0
      %v1188 = vadd.f32 %v883, %v1187
      %v1189 = vpop.f32.mrb[0].mxu0
      %1190 = vmatprep.mubr.bf16.mxu0 0
      %1191 = vmatmul.mubr.bf16.gmra.mrb[0].mxu0 %v1001
      %v1192 = vpop.f32.mrb[0].mxu0
      %v1193 = vadd.f32 %v888, %v1192
      %v1194 = vpop.f32.mrb[0].mxu0
      %v1195 = vpop.f32.mrb[0].mxu0
      %v1196 = vadd.f32 %v891, %v1195
      %v1197 = vpop.f32.mrb[0].mxu0
      %1198 = vmatprep.mubr.bf16.mxu0 0
      %1199 = vmatmul.mubr.bf16.gmra.mrb[0].mxu0 %v1002
      %v1200 = vpop.f32.mrb[0].mxu0
      %v1201 = vadd.f32 %v896, %v1200
      %v1202 = vpop.f32.mrb[0].mxu0
      %v1203 = vpop.f32.mrb[0].mxu0
      %v1204 = vadd.f32 %v899, %v1203
      %v1205 = vpop.f32.mrb[0].mxu0
      %1206 = vmatprep.mubr.bf16.mxu0 0
      %1207 = vmatmul.mubr.bf16.gmra.mrb[0].mxu0 %v1003
      %v1208 = vpop.f32.mrb[0].mxu0
      %v1209 = vadd.f32 %v904, %v1208
      %v1210 = vpop.f32.mrb[0].mxu0
      %v1211 = vpop.f32.mrb[0].mxu0
      %v1212 = vadd.f32 %v907, %v1211
      %v1213 = vpop.f32.mrb[0].mxu0
      %1214 = vmatprep.mubr.bf16.mxu0 0
      %1215 = vmatmul.mubr.bf16.gmra.mrb[0].mxu0 %v1004
      %v1216 = vpop.f32.mrb[0].mxu0
      %v1217 = vadd.f32 %v912, %v1216
      %v1218 = vpop.f32.mrb[0].mxu0
      %v1219 = vpop.f32.mrb[0].mxu0
      %v1220 = vadd.f32 %v915, %v1219
      %v1221 = vpop.f32.mrb[0].mxu0
      %1222 = vmatprep.mubr.bf16.mxu0 0
      %1223 = vmatmul.mubr.bf16.gmra.mrb[0].mxu0 %v1005
      %v1224 = vpop.f32.mrb[0].mxu0
      %v1225 = vadd.f32 %v920, %v1224
      %v1226 = vpop.f32.mrb[0].mxu0
      %v1227 = vpop.f32.mrb[0].mxu0
      %v1228 = vadd.f32 %v923, %v1227
      %v1229 = vpop.f32.mrb[0].mxu0
      %1230 = vdwg.mxu0
      %vm1247 = vcmask 1042432
      %vm1248 = vcmask 1046532
      %vm1249 = vmor %vm1247, %vm1248
      %v1250 = vrot.slane %v185, 5
      %v1251 = vrot.slane %v1250, 4
      %v1252 = vrot.slane %v186, 5
      %v1253 = vsel %vm1249, %v1251, %v1252
      %v1254 = vrot.slane %v1252, 4
      %v1255 = vrot.slane %v187, 5
      %v1256 = vsel %vm1249, %v1254, %v1255
      %v1257 = vrot.slane %v188, 5
      %v1258 = vrot.slane %v1257, 4
      %v1259 = vrot.slane %v189, 5
      %v1260 = vsel %vm1249, %v1258, %v1259
      %v1261 = vrot.slane %v1259, 4
      %v1262 = vrot.slane %v190, 5
      %v1263 = vsel %vm1249, %v1261, %v1262
      %v1264 = vrot.slane %v191, 5
      %v1265 = vrot.slane %v1264, 4
      %v1266 = vrot.slane %v192, 5
      %v1267 = vsel %vm1249, %v1265, %v1266
      %v1268 = vrot.slane %v1266, 4
      %v1269 = vrot.slane %v193, 5
      %v1270 = vsel %vm1249, %v1268, %v1269
      %v1271 = vrot.slane %v194, 5
      %v1272 = vrot.slane %v1271, 4
      %v1273 = vrot.slane %v195, 5
      %v1274 = vsel %vm1249, %v1272, %v1273
      %v1275 = vrot.slane %v1273, 4
      %v1276 = vrot.slane %v196, 5
      %v1277 = vsel %vm1249, %v1275, %v1276
      %v1278 = vrot.slane %v197, 5
      %v1279 = vrot.slane %v1278, 4
      %v1280 = vrot.slane %v198, 5
      %v1281 = vsel %vm1249, %v1279, %v1280
      %v1282 = vrot.slane %v1280, 4
      %v1283 = vrot.slane %v199, 5
      %v1284 = vsel %vm1249, %v1282, %v1283
      %v1285 = vrot.slane %v200, 5
      %v1286 = vrot.slane %v1285, 4
      %v1287 = vrot.slane %v201, 5
      %v1288 = vsel %vm1249, %v1286, %v1287
      %v1289 = vrot.slane %v1287, 4
      %v1290 = vrot.slane %v202, 5
      %v1291 = vsel %vm1249, %v1289, %v1290
      %v1292 = vrot.slane %v203, 5
      %v1293 = vrot.slane %v1292, 4
      %v1294 = vrot.slane %v204, 5
      %v1295 = vsel %vm1249, %v1293, %v1294
      %v1296 = vrot.slane %v1294, 4
      %v1297 = vrot.slane %v205, 5
      %v1298 = vsel %vm1249, %v1296, %v1297
      %v1299 = vrot.slane %v206, 5
      %v1300 = vrot.slane %v1299, 4
      %v1301 = vrot.slane %v207, 5
      %v1302 = vsel %vm1249, %v1300, %v1301
      %v1303 = vrot.slane %v1301, 4
      %v1304 = vrot.slane %v208, 5
      %v1305 = vsel %vm1249, %v1303, %v1304
      %v1306 = vrot.slane %v209, 5
      %v1307 = vrot.slane %v1306, 4
      %v1308 = vrot.slane %v210, 5
      %v1309 = vsel %vm1249, %v1307, %v1308
      %v1310 = vrot.slane %v1308, 4
      %v1311 = vrot.slane %v211, 5
      %v1312 = vsel %vm1249, %v1310, %v1311
      %v1313 = vrot.slane %v212, 5
      %v1314 = vrot.slane %v1313, 4
      %v1315 = vrot.slane %v213, 5
      %v1316 = vsel %vm1249, %v1314, %v1315
      %v1317 = vrot.slane %v1315, 4
      %v1318 = vrot.slane %v214, 5
      %v1319 = vsel %vm1249, %v1317, %v1318
      %v1320 = vrot.slane %v215, 5
      %v1321 = vrot.slane %v1320, 4
      %v1322 = vrot.slane %v216, 5
      %v1323 = vsel %vm1249, %v1321, %v1322
      %v1324 = vrot.slane %v1322, 4
      %v1325 = vrot.slane %v217, 5
      %v1326 = vsel %vm1249, %v1324, %v1325
      %v1327 = vrot.slane %v218, 5
      %v1328 = vrot.slane %v1327, 4
      %v1329 = vrot.slane %v219, 5
      %v1330 = vsel %vm1249, %v1328, %v1329
      %v1331 = vrot.slane %v1329, 4
      %v1332 = vrot.slane %v220, 5
      %v1333 = vsel %vm1249, %v1331, %v1332
      %v1334 = vrot.slane %v221, 5
      %v1335 = vrot.slane %v1334, 4
      %v1336 = vrot.slane %v222, 5
      %v1337 = vsel %vm1249, %v1335, %v1336
      %v1338 = vrot.slane %v1336, 4
      %v1339 = vrot.slane %v223, 5
      %v1340 = vsel %vm1249, %v1338, %v1339
      %v1341 = vrot.slane %v224, 5
      %v1342 = vrot.slane %v1341, 4
      %v1343 = vrot.slane %v225, 5
      %v1344 = vsel %vm1249, %v1342, %v1343
      %v1345 = vrot.slane %v1343, 4
      %v1346 = vrot.slane %v226, 5
      %v1347 = vsel %vm1249, %v1345, %v1346
      %v1348 = vrot.slane %v227, 5
      %v1349 = vrot.slane %v1348, 4
      %v1350 = vrot.slane %v228, 5
      %v1351 = vsel %vm1249, %v1349, %v1350
      %v1352 = vrot.slane %v1350, 4
      %v1353 = vrot.slane %v229, 5
      %v1354 = vsel %vm1249, %v1352, %v1353
      %v1355 = vrot.slane %v230, 5
      %v1356 = vrot.slane %v1355, 4
      %v1357 = vrot.slane %v231, 5
      %v1358 = vsel %vm1249, %v1356, %v1357
      %v1359 = vrot.slane %v1357, 4
      %v1360 = vrot.slane %v232, 5
      %v1361 = vsel %vm1249, %v1359, %v1360
      %s1362 = scalar_lea.vmem %s1, 128
      %v1363 = vld [vmem:[%s1362] sm:$0xf]
      %v1364 = vld [vmem:[%s1362 + $0x4] sm:$0xf]
      %v1365 = vld [vmem:[%s1362 + $0x8] sm:$0xf]
      %v1366 = vld [vmem:[%s1362 + $0xc] sm:$0xf]
      %v1367 = vld [vmem:[%s1362 + $0x10] sm:$0xf]
      %v1368 = vld [vmem:[%s1362 + $0x14] sm:$0xf]
      %v1369 = vld [vmem:[%s1362 + $0x18] sm:$0xf]
      %v1370 = vld [vmem:[%s1362 + $0x1c] sm:$0xf]
      %v1371 = vld [vmem:[%s1362 + $0x20] sm:$0xf]
      %v1372 = vld [vmem:[%s1362 + $0x24] sm:$0xf]
      %v1373 = vld [vmem:[%s1362 + $0x28] sm:$0xf]
      %v1374 = vld [vmem:[%s1362 + $0x2c] sm:$0xf]
      %v1375 = vld [vmem:[%s1362 + $0x30] sm:$0xf]
      %v1376 = vld [vmem:[%s1362 + $0x34] sm:$0xf]
      %v1377 = vld [vmem:[%s1362 + $0x38] sm:$0xf]
      %v1378 = vld [vmem:[%s1362 + $0x3c] sm:$0xf]
      %v1379 = vunpack.c.l.b16 %v1253
      %v1380 = vunpack.c.l.b16 %v1256
      %v1381 = vunpack.c.l.b16 %v1260
      %v1382 = vunpack.c.l.b16 %v1263
      %v1383 = vunpack.c.l.b16 %v1267
      %v1384 = vunpack.c.l.b16 %v1270
      %v1385 = vunpack.c.l.b16 %v1274
      %v1386 = vunpack.c.l.b16 %v1277
      %v1387 = vunpack.c.l.b16 %v1281
      %v1388 = vunpack.c.l.b16 %v1284
      %v1389 = vunpack.c.l.b16 %v1288
      %v1390 = vunpack.c.l.b16 %v1291
      %v1391 = vunpack.c.l.b16 %v1295
      %v1392 = vunpack.c.l.b16 %v1298
      %v1393 = vunpack.c.l.b16 %v1302
      %v1394 = vunpack.c.l.b16 %v1305
      %v1395 = vunpack.c.l.b16 %v1309
      %v1396 = vunpack.c.l.b16 %v1312
      %v1397 = vunpack.c.l.b16 %v1316
      %v1398 = vunpack.c.l.b16 %v1319
      %v1399 = vunpack.c.l.b16 %v1323
      %v1400 = vunpack.c.l.b16 %v1326
      %v1401 = vunpack.c.l.b16 %v1330
      %v1402 = vunpack.c.l.b16 %v1333
      %v1403 = vunpack.c.l.b16 %v1337
      %v1404 = vunpack.c.l.b16 %v1340
      %v1405 = vunpack.c.l.b16 %v1344
      %v1406 = vunpack.c.l.b16 %v1347
      %v1407 = vunpack.c.l.b16 %v1351
      %v1408 = vunpack.c.l.b16 %v1354
      %v1409 = vunpack.c.l.b16 %v1358
      %v1410 = vunpack.c.l.b16 %v1361
      %v1411 = vpack.c.b16 %v1380, %v1379
      %v1412 = vpack.c.b16 %v1382, %v1381
      %v1413 = vpack.c.b16 %v1384, %v1383
      %v1414 = vpack.c.b16 %v1386, %v1385
      %v1415 = vpack.c.b16 %v1388, %v1387
      %v1416 = vpack.c.b16 %v1390, %v1389
      %v1417 = vpack.c.b16 %v1392, %v1391
      %v1418 = vpack.c.b16 %v1394, %v1393
      %v1419 = vpack.c.b16 %v1396, %v1395
      %v1420 = vpack.c.b16 %v1398, %v1397
      %v1421 = vpack.c.b16 %v1400, %v1399
      %v1422 = vpack.c.b16 %v1402, %v1401
      %v1423 = vpack.c.b16 %v1404, %v1403
      %v1424 = vpack.c.b16 %v1406, %v1405
      %v1425 = vpack.c.b16 %v1408, %v1407
      %v1426 = vpack.c.b16 %v1410, %v1409
      %v1459 = vunpack.c.l.b16 %v1363
      %v1460 = vunpack.c.l.b16 %v1364
      %v1461 = vunpack.c.l.b16 %v1365
      %v1462 = vunpack.c.l.b16 %v1366
      %v1463 = vunpack.c.l.b16 %v1367
      %v1464 = vunpack.c.l.b16 %v1368
      %v1465 = vunpack.c.l.b16 %v1369
      %v1466 = vunpack.c.l.b16 %v1370
      %v1467 = vunpack.c.l.b16 %v1371
      %v1468 = vunpack.c.l.b16 %v1372
      %v1469 = vunpack.c.l.b16 %v1373
      %v1470 = vunpack.c.l.b16 %v1374
      %v1471 = vunpack.c.l.b16 %v1375
      %v1472 = vunpack.c.l.b16 %v1376
      %v1473 = vunpack.c.l.b16 %v1377
      %v1474 = vunpack.c.l.b16 %v1378
      %v1475 = vpack.c.b16 %v1460, %v1459
      %v1476 = vpack.c.b16 %v1462, %v1461
      %v1477 = vpack.c.b16 %v1464, %v1463
      %v1478 = vpack.c.b16 %v1466, %v1465
      %v1479 = vpack.c.b16 %v1468, %v1467
      %v1480 = vpack.c.b16 %v1470, %v1469
      %v1481 = vpack.c.b16 %v1472, %v1471
      %v1482 = vpack.c.b16 %v1474, %v1473
      %1491 = vmatprep.subr.bf16.mxu0 0
      %1492 = vmatpush1.bf16.msra.mxu0 %v1475
      %1493 = vmatprep.subr.bf16.mxu0 0
      %1494 = vmatpush1.bf16.msra.mxu0 %v1476
      %1495 = vmatprep.subr.bf16.mxu0 0
      %1496 = vmatpush1.bf16.msra.mxu0 %v1477
      %1497 = vmatprep.subr.bf16.mxu0 0
      %1498 = vmatpush1.bf16.msra.mxu0 %v1478
      %1499 = vmatprep.subr.bf16.mxu0 0
      %1500 = vmatpush1.bf16.msra.mxu0 %v1479
      %1501 = vmatprep.subr.bf16.mxu0 0
      %1502 = vmatpush1.bf16.msra.mxu0 %v1480
      %1503 = vmatprep.subr.bf16.mxu0 0
      %1504 = vmatpush1.bf16.msra.mxu0 %v1481
      %1505 = vmatprep.subr.bf16.mxu0 0
      %1506 = vmatpush1.bf16.msra.mxu0 %v1482
      %1507 = vmatprep.subr.bf16.mxu0 0
      %1508 = vmatpush1.bf16.msra.mxu0 0
      %1509 = vmatprep.subr.bf16.mxu0 0
      %1510 = vmatpush1.bf16.msra.mxu0 0
      %1511 = vmatprep.subr.bf16.mxu0 0
      %1512 = vmatpush1.bf16.msra.mxu0 0
      %1513 = vmatprep.subr.bf16.mxu0 0
      %1514 = vmatpush1.bf16.msra.mxu0 0
      %1515 = vmatprep.subr.bf16.mxu0 0
      %1516 = vmatpush1.bf16.msra.mxu0 0
      %1517 = vmatprep.subr.bf16.mxu0 0
      %1518 = vmatpush1.bf16.msra.mxu0 0
      %1519 = vmatprep.subr.bf16.mxu0 0
      %1520 = vmatpush1.bf16.msra.mxu0 0
      %1521 = vmatprep.subr.bf16.mxu0 0
      %1522 = vmatpush1.bf16.msra.mxu0 0
      %1523 = vmatprep.mubr.bf16.mxu0 0
      %1524 = vmatmul.mubr.bf16.gmra.mrb[0].mxu0 %v1411
      %v1525 = vpop.f32.mrb[0].mxu0
      %v1526 = vadd.f32 0.0, %v1525
      %v1527 = vpop.f32.mrb[0].mxu0
      %v1528 = vpop.f32.mrb[0].mxu0
      %v1529 = vadd.f32 0.0, %v1528
      %v1530 = vpop.f32.mrb[0].mxu0
      %1531 = vmatprep.mubr.bf16.mxu0 0
      %1532 = vmatmul.mubr.bf16.gmra.mrb[0].mxu0 %v1412
      %v1533 = vpop.f32.mrb[0].mxu0
      %v1534 = vadd.f32 0.0, %v1533
      %v1535 = vpop.f32.mrb[0].mxu0
      %v1536 = vpop.f32.mrb[0].mxu0
      %v1537 = vadd.f32 0.0, %v1536
      %v1538 = vpop.f32.mrb[0].mxu0
      %1539 = vmatprep.mubr.bf16.mxu0 0
      %1540 = vmatmul.mubr.bf16.gmra.mrb[0].mxu0 %v1413
      %v1541 = vpop.f32.mrb[0].mxu0
      %v1542 = vadd.f32 0.0, %v1541
      %v1543 = vpop.f32.mrb[0].mxu0
      %v1544 = vpop.f32.mrb[0].mxu0
      %v1545 = vadd.f32 0.0, %v1544
      %v1546 = vpop.f32.mrb[0].mxu0
      %1547 = vmatprep.mubr.bf16.mxu0 0
      %1548 = vmatmul.mubr.bf16.gmra.mrb[0].mxu0 %v1414
      %v1549 = vpop.f32.mrb[0].mxu0
      %v1550 = vadd.f32 0.0, %v1549
      %v1551 = vpop.f32.mrb[0].mxu0
      %v1552 = vpop.f32.mrb[0].mxu0
      %v1553 = vadd.f32 0.0, %v1552
      %v1554 = vpop.f32.mrb[0].mxu0
      %1555 = vmatprep.mubr.bf16.mxu0 0
      %1556 = vmatmul.mubr.bf16.gmra.mrb[0].mxu0 %v1415
      %v1557 = vpop.f32.mrb[0].mxu0
      %v1558 = vadd.f32 0.0, %v1557
      %v1559 = vpop.f32.mrb[0].mxu0
      %v1560 = vpop.f32.mrb[0].mxu0
      %v1561 = vadd.f32 0.0, %v1560
      %v1562 = vpop.f32.mrb[0].mxu0
      %1563 = vmatprep.mubr.bf16.mxu0 0
      %1564 = vmatmul.mubr.bf16.gmra.mrb[0].mxu0 %v1416
      %v1565 = vpop.f32.mrb[0].mxu0
      %v1566 = vadd.f32 0.0, %v1565
      %v1567 = vpop.f32.mrb[0].mxu0
      %v1568 = vpop.f32.mrb[0].mxu0
      %v1569 = vadd.f32 0.0, %v1568
      %v1570 = vpop.f32.mrb[0].mxu0
      %1571 = vmatprep.mubr.bf16.mxu0 0
      %1572 = vmatmul.mubr.bf16.gmra.mrb[0].mxu0 %v1417
      %v1573 = vpop.f32.mrb[0].mxu0
      %v1574 = vadd.f32 0.0, %v1573
      %v1575 = vpop.f32.mrb[0].mxu0
      %v1576 = vpop.f32.mrb[0].mxu0
      %v1577 = vadd.f32 0.0, %v1576
      %v1578 = vpop.f32.mrb[0].mxu0
      %1579 = vmatprep.mubr.bf16.mxu0 0
      %1580 = vmatmul.mubr.bf16.gmra.mrb[0].mxu0 %v1418
      %v1581 = vpop.f32.mrb[0].mxu0
      %v1582 = vadd.f32 0.0, %v1581
      %v1583 = vpop.f32.mrb[0].mxu0
      %v1584 = vpop.f32.mrb[0].mxu0
      %v1585 = vadd.f32 0.0, %v1584
      %v1586 = vpop.f32.mrb[0].mxu0
      %1587 = vmatprep.mubr.bf16.mxu0 0
      %1588 = vmatmul.mubr.bf16.gmra.mrb[0].mxu0 %v1419
      %v1589 = vpop.f32.mrb[0].mxu0
      %v1590 = vadd.f32 0.0, %v1589
      %v1591 = vpop.f32.mrb[0].mxu0
      %v1592 = vpop.f32.mrb[0].mxu0
      %v1593 = vadd.f32 0.0, %v1592
      %v1594 = vpop.f32.mrb[0].mxu0
      %1595 = vmatprep.mubr.bf16.mxu0 0
      %1596 = vmatmul.mubr.bf16.gmra.mrb[0].mxu0 %v1420
      %v1597 = vpop.f32.mrb[0].mxu0
      %v1598 = vadd.f32 0.0, %v1597
      %v1599 = vpop.f32.mrb[0].mxu0
      %v1600 = vpop.f32.mrb[0].mxu0
      %v1601 = vadd.f32 0.0, %v1600
      %v1602 = vpop.f32.mrb[0].mxu0
      %1603 = vmatprep.mubr.bf16.mxu0 0
      %1604 = vmatmul.mubr.bf16.gmra.mrb[0].mxu0 %v1421
      %v1605 = vpop.f32.mrb[0].mxu0
      %v1606 = vadd.f32 0.0, %v1605
      %v1607 = vpop.f32.mrb[0].mxu0
      %v1608 = vpop.f32.mrb[0].mxu0
      %v1609 = vadd.f32 0.0, %v1608
      %v1610 = vpop.f32.mrb[0].mxu0
      %1611 = vmatprep.mubr.bf16.mxu0 0
      %1612 = vmatmul.mubr.bf16.gmra.mrb[0].mxu0 %v1422
      %v1613 = vpop.f32.mrb[0].mxu0
      %v1614 = vadd.f32 0.0, %v1613
      %v1615 = vpop.f32.mrb[0].mxu0
      %v1616 = vpop.f32.mrb[0].mxu0
      %v1617 = vadd.f32 0.0, %v1616
      %v1618 = vpop.f32.mrb[0].mxu0
      %1619 = vmatprep.mubr.bf16.mxu0 0
      %1620 = vmatmul.mubr.bf16.gmra.mrb[0].mxu0 %v1423
      %v1621 = vpop.f32.mrb[0].mxu0
      %v1622 = vadd.f32 0.0, %v1621
      %v1623 = vpop.f32.mrb[0].mxu0
      %v1624 = vpop.f32.mrb[0].mxu0
      %v1625 = vadd.f32 0.0, %v1624
      %v1626 = vpop.f32.mrb[0].mxu0
      %1627 = vmatprep.mubr.bf16.mxu0 0
      %1628 = vmatmul.mubr.bf16.gmra.mrb[0].mxu0 %v1424
      %v1629 = vpop.f32.mrb[0].mxu0
      %v1630 = vadd.f32 0.0, %v1629
      %v1631 = vpop.f32.mrb[0].mxu0
      %v1632 = vpop.f32.mrb[0].mxu0
      %v1633 = vadd.f32 0.0, %v1632
      %v1634 = vpop.f32.mrb[0].mxu0
      %1635 = vmatprep.mubr.bf16.mxu0 0
      %1636 = vmatmul.mubr.bf16.gmra.mrb[0].mxu0 %v1425
      %v1637 = vpop.f32.mrb[0].mxu0
      %v1638 = vadd.f32 0.0, %v1637
      %v1639 = vpop.f32.mrb[0].mxu0
      %v1640 = vpop.f32.mrb[0].mxu0
      %v1641 = vadd.f32 0.0, %v1640
      %v1642 = vpop.f32.mrb[0].mxu0
      %1643 = vmatprep.mubr.bf16.mxu0 0
      %1644 = vmatmul.mubr.bf16.gmra.mrb[0].mxu0 %v1426
      %v1645 = vpop.f32.mrb[0].mxu0
      %v1646 = vadd.f32 0.0, %v1645
      %v1647 = vpop.f32.mrb[0].mxu0
      %v1648 = vpop.f32.mrb[0].mxu0
      %v1649 = vadd.f32 0.0, %v1648
      %v1650 = vpop.f32.mrb[0].mxu0
      %1651 = vdwg.mxu0
      %v1652 = vadd.f32 %v1105, %v1526
      %v1653 = vadd.f32 %v1108, %v1529
      %v1654 = vadd.f32 %v1113, %v1534
      %v1655 = vadd.f32 %v1116, %v1537
      %v1656 = vadd.f32 %v1121, %v1542
      %v1657 = vadd.f32 %v1124, %v1545
      %v1658 = vadd.f32 %v1129, %v1550
      %v1659 = vadd.f32 %v1132, %v1553
      %v1660 = vadd.f32 %v1137, %v1558
      %v1661 = vadd.f32 %v1140, %v1561
      %v1662 = vadd.f32 %v1145, %v1566
      %v1663 = vadd.f32 %v1148, %v1569
      %v1664 = vadd.f32 %v1153, %v1574
      %v1665 = vadd.f32 %v1156, %v1577
      %v1666 = vadd.f32 %v1161, %v1582
      %v1667 = vadd.f32 %v1164, %v1585
      %v1668 = vadd.f32 %v1169, %v1590
      %v1669 = vadd.f32 %v1172, %v1593
      %v1670 = vadd.f32 %v1177, %v1598
      %v1671 = vadd.f32 %v1180, %v1601
      %v1672 = vadd.f32 %v1185, %v1606
      %v1673 = vadd.f32 %v1188, %v1609
      %v1674 = vadd.f32 %v1193, %v1614
      %v1675 = vadd.f32 %v1196, %v1617
      %v1676 = vadd.f32 %v1201, %v1622
      %v1677 = vadd.f32 %v1204, %v1625
      %v1678 = vadd.f32 %v1209, %v1630
      %v1679 = vadd.f32 %v1212, %v1633
      %v1680 = vadd.f32 %v1217, %v1638
      %v1681 = vadd.f32 %v1220, %v1641
      %v1682 = vadd.f32 %v1225, %v1646
      %v1683 = vadd.f32 %v1228, %v1649
      %s1684 = scalar_lea.vmem %s172, 12
      %v1685 = vld [vmem:[%s1684] sm:$0xf]
      %v1686 = vld [vmem:[%s1684 + $0x4] sm:$0xf]
      %v1687 = vld [vmem:[%s1684 + $0x8] sm:$0x1]
      %v1688 = vld [vmem:[%s1684 + $0xc] sm:$0xf]
      %v1689 = vld [vmem:[%s1684 + $0x10] sm:$0xf]
      %v1690 = vld [vmem:[%s1684 + $0x14] sm:$0x1]
      %v1691 = vld [vmem:[%s1684 + $0x18] sm:$0xf]
      %v1692 = vld [vmem:[%s1684 + $0x1c] sm:$0xf]
      %v1693 = vld [vmem:[%s1684 + $0x20] sm:$0x1]
      %v1694 = vld [vmem:[%s1684 + $0x24] sm:$0xf]
      %v1695 = vld [vmem:[%s1684 + $0x28] sm:$0xf]
      %v1696 = vld [vmem:[%s1684 + $0x2c] sm:$0x1]
      %v1697 = vld [vmem:[%s1684 + $0x30] sm:$0xf]
      %v1698 = vld [vmem:[%s1684 + $0x34] sm:$0xf]
      %v1699 = vld [vmem:[%s1684 + $0x38] sm:$0x1]
      %v1700 = vld [vmem:[%s1684 + $0x3c] sm:$0xf]
      %v1701 = vld [vmem:[%s1684 + $0x40] sm:$0xf]
      %v1702 = vld [vmem:[%s1684 + $0x44] sm:$0x1]
      %v1703 = vld [vmem:[%s1684 + $0x48] sm:$0xf]
      %v1704 = vld [vmem:[%s1684 + $0x4c] sm:$0xf]
      %v1705 = vld [vmem:[%s1684 + $0x50] sm:$0x1]
      %v1706 = vld [vmem:[%s1684 + $0x54] sm:$0xf]
      %v1707 = vld [vmem:[%s1684 + $0x58] sm:$0xf]
      %v1708 = vld [vmem:[%s1684 + $0x5c] sm:$0x1]
      %v1709 = vld [vmem:[%s1684 + $0x60] sm:$0xf]
      %v1710 = vld [vmem:[%s1684 + $0x64] sm:$0xf]
      %v1711 = vld [vmem:[%s1684 + $0x68] sm:$0x1]
      %v1712 = vld [vmem:[%s1684 + $0x6c] sm:$0xf]
      %v1713 = vld [vmem:[%s1684 + $0x70] sm:$0xf]
      %v1714 = vld [vmem:[%s1684 + $0x74] sm:$0x1]
      %v1715 = vld [vmem:[%s1684 + $0x78] sm:$0xf]
      %v1716 = vld [vmem:[%s1684 + $0x7c] sm:$0xf]
      %v1717 = vld [vmem:[%s1684 + $0x80] sm:$0x1]
      %v1718 = vld [vmem:[%s1684 + $0x84] sm:$0xf]
      %v1719 = vld [vmem:[%s1684 + $0x88] sm:$0xf]
      %v1720 = vld [vmem:[%s1684 + $0x8c] sm:$0x1]
      %v1721 = vld [vmem:[%s1684 + $0x90] sm:$0xf]
      %v1722 = vld [vmem:[%s1684 + $0x94] sm:$0xf]
      %v1723 = vld [vmem:[%s1684 + $0x98] sm:$0x1]
      %v1724 = vld [vmem:[%s1684 + $0x9c] sm:$0xf]
      %v1725 = vld [vmem:[%s1684 + $0xa0] sm:$0xf]
      %v1726 = vld [vmem:[%s1684 + $0xa4] sm:$0x1]
      %v1727 = vld [vmem:[%s1684 + $0xa8] sm:$0xf]
      %v1728 = vld [vmem:[%s1684 + $0xac] sm:$0xf]
      %v1729 = vld [vmem:[%s1684 + $0xb0] sm:$0x1]
      %v1730 = vld [vmem:[%s1684 + $0xb4] sm:$0xf]
      %v1731 = vld [vmem:[%s1684 + $0xb8] sm:$0xf]
      %v1732 = vld [vmem:[%s1684 + $0xbc] sm:$0x1]
      %s1733 = scalar_lea.vmem %s1, 192
      %v1734 = vld [vmem:[%s1733] sm:$0xf]
      %v1735 = vld [vmem:[%s1733 + $0x4] sm:$0xf]
      %v1736 = vld [vmem:[%s1733 + $0x8] sm:$0xf]
      %v1737 = vld [vmem:[%s1733 + $0xc] sm:$0xf]
      %v1738 = vld [vmem:[%s1733 + $0x10] sm:$0xf]
      %v1739 = vld [vmem:[%s1733 + $0x14] sm:$0xf]
      %v1740 = vld [vmem:[%s1733 + $0x18] sm:$0xf]
      %v1741 = vld [vmem:[%s1733 + $0x1c] sm:$0xf]
      %v1742 = vld [vmem:[%s1733 + $0x20] sm:$0xf]
      %v1743 = vld [vmem:[%s1733 + $0x24] sm:$0xf]
      %v1744 = vld [vmem:[%s1733 + $0x28] sm:$0xf]
      %v1745 = vld [vmem:[%s1733 + $0x2c] sm:$0xf]
      %v1746 = vld [vmem:[%s1733 + $0x30] sm:$0xf]
      %v1747 = vld [vmem:[%s1733 + $0x34] sm:$0xf]
      %v1748 = vld [vmem:[%s1733 + $0x38] sm:$0xf]
      %v1749 = vld [vmem:[%s1733 + $0x3c] sm:$0xf]
      %v1782 = vunpack.c.l.b16 %v1685
      %v1783 = vunpack.c.l.b16 %v1686
      %v1784 = vunpack.c.l.b16 %v1688
      %v1785 = vunpack.c.l.b16 %v1689
      %v1786 = vunpack.c.l.b16 %v1691
      %v1787 = vunpack.c.l.b16 %v1692
      %v1788 = vunpack.c.l.b16 %v1694
      %v1789 = vunpack.c.l.b16 %v1695
      %v1790 = vunpack.c.l.b16 %v1697
      %v1791 = vunpack.c.l.b16 %v1698
      %v1792 = vunpack.c.l.b16 %v1700
      %v1793 = vunpack.c.l.b16 %v1701
      %v1794 = vunpack.c.l.b16 %v1703
      %v1795 = vunpack.c.l.b16 %v1704
      %v1796 = vunpack.c.l.b16 %v1706
      %v1797 = vunpack.c.l.b16 %v1707
      %v1798 = vunpack.c.l.b16 %v1709
      %v1799 = vunpack.c.l.b16 %v1710
      %v1800 = vunpack.c.l.b16 %v1712
      %v1801 = vunpack.c.l.b16 %v1713
      %v1802 = vunpack.c.l.b16 %v1715
      %v1803 = vunpack.c.l.b16 %v1716
      %v1804 = vunpack.c.l.b16 %v1718
      %v1805 = vunpack.c.l.b16 %v1719
      %v1806 = vunpack.c.l.b16 %v1721
      %v1807 = vunpack.c.l.b16 %v1722
      %v1808 = vunpack.c.l.b16 %v1724
      %v1809 = vunpack.c.l.b16 %v1725
      %v1810 = vunpack.c.l.b16 %v1727
      %v1811 = vunpack.c.l.b16 %v1728
      %v1812 = vunpack.c.l.b16 %v1730
      %v1813 = vunpack.c.l.b16 %v1731
      %v1814 = vpack.c.b16 %v1783, %v1782
      %v1815 = vpack.c.b16 %v1785, %v1784
      %v1816 = vpack.c.b16 %v1787, %v1786
      %v1817 = vpack.c.b16 %v1789, %v1788
      %v1818 = vpack.c.b16 %v1791, %v1790
      %v1819 = vpack.c.b16 %v1793, %v1792
      %v1820 = vpack.c.b16 %v1795, %v1794
      %v1821 = vpack.c.b16 %v1797, %v1796
      %v1822 = vpack.c.b16 %v1799, %v1798
      %v1823 = vpack.c.b16 %v1801, %v1800
      %v1824 = vpack.c.b16 %v1803, %v1802
      %v1825 = vpack.c.b16 %v1805, %v1804
      %v1826 = vpack.c.b16 %v1807, %v1806
      %v1827 = vpack.c.b16 %v1809, %v1808
      %v1828 = vpack.c.b16 %v1811, %v1810
      %v1829 = vpack.c.b16 %v1813, %v1812
      %v1862 = vunpack.c.l.b16 %v1734
      %v1863 = vunpack.c.l.b16 %v1735
      %v1864 = vunpack.c.l.b16 %v1736
      %v1865 = vunpack.c.l.b16 %v1737
      %v1866 = vunpack.c.l.b16 %v1738
      %v1867 = vunpack.c.l.b16 %v1739
      %v1868 = vunpack.c.l.b16 %v1740
      %v1869 = vunpack.c.l.b16 %v1741
      %v1870 = vunpack.c.l.b16 %v1742
      %v1871 = vunpack.c.l.b16 %v1743
      %v1872 = vunpack.c.l.b16 %v1744
      %v1873 = vunpack.c.l.b16 %v1745
      %v1874 = vunpack.c.l.b16 %v1746
      %v1875 = vunpack.c.l.b16 %v1747
      %v1876 = vunpack.c.l.b16 %v1748
      %v1877 = vunpack.c.l.b16 %v1749
      %v1878 = vpack.c.b16 %v1863, %v1862
      %v1879 = vpack.c.b16 %v1865, %v1864
      %v1880 = vpack.c.b16 %v1867, %v1866
      %v1881 = vpack.c.b16 %v1869, %v1868
      %v1882 = vpack.c.b16 %v1871, %v1870
      %v1883 = vpack.c.b16 %v1873, %v1872
      %v1884 = vpack.c.b16 %v1875, %v1874
      %v1885 = vpack.c.b16 %v1877, %v1876
      %1894 = vmatprep.subr.bf16.mxu0 0
      %1895 = vmatpush1.bf16.msra.mxu0 %v1878
      %1896 = vmatprep.subr.bf16.mxu0 0
      %1897 = vmatpush1.bf16.msra.mxu0 %v1879
      %1898 = vmatprep.subr.bf16.mxu0 0
      %1899 = vmatpush1.bf16.msra.mxu0 %v1880
      %1900 = vmatprep.subr.bf16.mxu0 0
      %1901 = vmatpush1.bf16.msra.mxu0 %v1881
      %1902 = vmatprep.subr.bf16.mxu0 0
      %1903 = vmatpush1.bf16.msra.mxu0 %v1882
      %1904 = vmatprep.subr.bf16.mxu0 0
      %1905 = vmatpush1.bf16.msra.mxu0 %v1883
      %1906 = vmatprep.subr.bf16.mxu0 0
      %1907 = vmatpush1.bf16.msra.mxu0 %v1884
      %1908 = vmatprep.subr.bf16.mxu0 0
      %1909 = vmatpush1.bf16.msra.mxu0 %v1885
      %1910 = vmatprep.subr.bf16.mxu0 0
      %1911 = vmatpush1.bf16.msra.mxu0 0
      %1912 = vmatprep.subr.bf16.mxu0 0
      %1913 = vmatpush1.bf16.msra.mxu0 0
      %1914 = vmatprep.subr.bf16.mxu0 0
      %1915 = vmatpush1.bf16.msra.mxu0 0
      %1916 = vmatprep.subr.bf16.mxu0 0
      %1917 = vmatpush1.bf16.msra.mxu0 0
      %1918 = vmatprep.subr.bf16.mxu0 0
      %1919 = vmatpush1.bf16.msra.mxu0 0
      %1920 = vmatprep.subr.bf16.mxu0 0
      %1921 = vmatpush1.bf16.msra.mxu0 0
      %1922 = vmatprep.subr.bf16.mxu0 0
      %1923 = vmatpush1.bf16.msra.mxu0 0
      %1924 = vmatprep.subr.bf16.mxu0 0
      %1925 = vmatpush1.bf16.msra.mxu0 0
      %1926 = vmatprep.mubr.bf16.mxu0 0
      %1927 = vmatmul.mubr.bf16.gmra.mrb[0].mxu0 %v1814
      %v1928 = vpop.f32.mrb[0].mxu0
      %v1929 = vadd.f32 0.0, %v1928
      %v1930 = vpop.f32.mrb[0].mxu0
      %v1931 = vpop.f32.mrb[0].mxu0
      %v1932 = vadd.f32 0.0, %v1931
      %v1933 = vpop.f32.mrb[0].mxu0
      %1934 = vmatprep.mubr.bf16.mxu0 0
      %1935 = vmatmul.mubr.bf16.gmra.mrb[0].mxu0 %v1815
      %v1936 = vpop.f32.mrb[0].mxu0
      %v1937 = vadd.f32 0.0, %v1936
      %v1938 = vpop.f32.mrb[0].mxu0
      %v1939 = vpop.f32.mrb[0].mxu0
      %v1940 = vadd.f32 0.0, %v1939
      %v1941 = vpop.f32.mrb[0].mxu0
      %1942 = vmatprep.mubr.bf16.mxu0 0
      %1943 = vmatmul.mubr.bf16.gmra.mrb[0].mxu0 %v1816
      %v1944 = vpop.f32.mrb[0].mxu0
      %v1945 = vadd.f32 0.0, %v1944
      %v1946 = vpop.f32.mrb[0].mxu0
      %v1947 = vpop.f32.mrb[0].mxu0
      %v1948 = vadd.f32 0.0, %v1947
      %v1949 = vpop.f32.mrb[0].mxu0
      %1950 = vmatprep.mubr.bf16.mxu0 0
      %1951 = vmatmul.mubr.bf16.gmra.mrb[0].mxu0 %v1817
      %v1952 = vpop.f32.mrb[0].mxu0
      %v1953 = vadd.f32 0.0, %v1952
      %v1954 = vpop.f32.mrb[0].mxu0
      %v1955 = vpop.f32.mrb[0].mxu0
      %v1956 = vadd.f32 0.0, %v1955
      %v1957 = vpop.f32.mrb[0].mxu0
      %1958 = vmatprep.mubr.bf16.mxu0 0
      %1959 = vmatmul.mubr.bf16.gmra.mrb[0].mxu0 %v1818
      %v1960 = vpop.f32.mrb[0].mxu0
      %v1961 = vadd.f32 0.0, %v1960
      %v1962 = vpop.f32.mrb[0].mxu0
      %v1963 = vpop.f32.mrb[0].mxu0
      %v1964 = vadd.f32 0.0, %v1963
      %v1965 = vpop.f32.mrb[0].mxu0
      %1966 = vmatprep.mubr.bf16.mxu0 0
      %1967 = vmatmul.mubr.bf16.gmra.mrb[0].mxu0 %v1819
      %v1968 = vpop.f32.mrb[0].mxu0
      %v1969 = vadd.f32 0.0, %v1968
      %v1970 = vpop.f32.mrb[0].mxu0
      %v1971 = vpop.f32.mrb[0].mxu0
      %v1972 = vadd.f32 0.0, %v1971
      %v1973 = vpop.f32.mrb[0].mxu0
      %1974 = vmatprep.mubr.bf16.mxu0 0
      %1975 = vmatmul.mubr.bf16.gmra.mrb[0].mxu0 %v1820
      %v1976 = vpop.f32.mrb[0].mxu0
      %v1977 = vadd.f32 0.0, %v1976
      %v1978 = vpop.f32.mrb[0].mxu0
      %v1979 = vpop.f32.mrb[0].mxu0
      %v1980 = vadd.f32 0.0, %v1979
      %v1981 = vpop.f32.mrb[0].mxu0
      %1982 = vmatprep.mubr.bf16.mxu0 0
      %1983 = vmatmul.mubr.bf16.gmra.mrb[0].mxu0 %v1821
      %v1984 = vpop.f32.mrb[0].mxu0
      %v1985 = vadd.f32 0.0, %v1984
      %v1986 = vpop.f32.mrb[0].mxu0
      %v1987 = vpop.f32.mrb[0].mxu0
      %v1988 = vadd.f32 0.0, %v1987
      %v1989 = vpop.f32.mrb[0].mxu0
      %1990 = vmatprep.mubr.bf16.mxu0 0
      %1991 = vmatmul.mubr.bf16.gmra.mrb[0].mxu0 %v1822
      %v1992 = vpop.f32.mrb[0].mxu0
      %v1993 = vadd.f32 0.0, %v1992
      %v1994 = vpop.f32.mrb[0].mxu0
      %v1995 = vpop.f32.mrb[0].mxu0
      %v1996 = vadd.f32 0.0, %v1995
      %v1997 = vpop.f32.mrb[0].mxu0
      %1998 = vmatprep.mubr.bf16.mxu0 0
      %1999 = vmatmul.mubr.bf16.gmra.mrb[0].mxu0 %v1823
      %v2000 = vpop.f32.mrb[0].mxu0
      %v2001 = vadd.f32 0.0, %v2000
      %v2002 = vpop.f32.mrb[0].mxu0
      %v2003 = vpop.f32.mrb[0].mxu0
      %v2004 = vadd.f32 0.0, %v2003
      %v2005 = vpop.f32.mrb[0].mxu0
      %2006 = vmatprep.mubr.bf16.mxu0 0
      %2007 = vmatmul.mubr.bf16.gmra.mrb[0].mxu0 %v1824
      %v2008 = vpop.f32.mrb[0].mxu0
      %v2009 = vadd.f32 0.0, %v2008
      %v2010 = vpop.f32.mrb[0].mxu0
      %v2011 = vpop.f32.mrb[0].mxu0
      %v2012 = vadd.f32 0.0, %v2011
      %v2013 = vpop.f32.mrb[0].mxu0
      %2014 = vmatprep.mubr.bf16.mxu0 0
      %2015 = vmatmul.mubr.bf16.gmra.mrb[0].mxu0 %v1825
      %v2016 = vpop.f32.mrb[0].mxu0
      %v2017 = vadd.f32 0.0, %v2016
      %v2018 = vpop.f32.mrb[0].mxu0
      %v2019 = vpop.f32.mrb[0].mxu0
      %v2020 = vadd.f32 0.0, %v2019
      %v2021 = vpop.f32.mrb[0].mxu0
      %2022 = vmatprep.mubr.bf16.mxu0 0
      %2023 = vmatmul.mubr.bf16.gmra.mrb[0].mxu0 %v1826
      %v2024 = vpop.f32.mrb[0].mxu0
      %v2025 = vadd.f32 0.0, %v2024
      %v2026 = vpop.f32.mrb[0].mxu0
      %v2027 = vpop.f32.mrb[0].mxu0
      %v2028 = vadd.f32 0.0, %v2027
      %v2029 = vpop.f32.mrb[0].mxu0
      %2030 = vmatprep.mubr.bf16.mxu0 0
      %2031 = vmatmul.mubr.bf16.gmra.mrb[0].mxu0 %v1827
      %v2032 = vpop.f32.mrb[0].mxu0
      %v2033 = vadd.f32 0.0, %v2032
      %v2034 = vpop.f32.mrb[0].mxu0
      %v2035 = vpop.f32.mrb[0].mxu0
      %v2036 = vadd.f32 0.0, %v2035
      %v2037 = vpop.f32.mrb[0].mxu0
      %2038 = vmatprep.mubr.bf16.mxu0 0
      %2039 = vmatmul.mubr.bf16.gmra.mrb[0].mxu0 %v1828
      %v2040 = vpop.f32.mrb[0].mxu0
      %v2041 = vadd.f32 0.0, %v2040
      %v2042 = vpop.f32.mrb[0].mxu0
      %v2043 = vpop.f32.mrb[0].mxu0
      %v2044 = vadd.f32 0.0, %v2043
      %v2045 = vpop.f32.mrb[0].mxu0
      %2046 = vmatprep.mubr.bf16.mxu0 0
      %2047 = vmatmul.mubr.bf16.gmra.mrb[0].mxu0 %v1829
      %v2048 = vpop.f32.mrb[0].mxu0
      %v2049 = vadd.f32 0.0, %v2048
      %v2050 = vpop.f32.mrb[0].mxu0
      %v2051 = vpop.f32.mrb[0].mxu0
      %v2052 = vadd.f32 0.0, %v2051
      %v2053 = vpop.f32.mrb[0].mxu0
      %2054 = vdwg.mxu0
      %v2055 = vadd.f32 %v1652, %v1929
      %v2056 = vadd.f32 %v1653, %v1932
      %v2057 = vadd.f32 %v1654, %v1937
      %v2058 = vadd.f32 %v1655, %v1940
      %v2059 = vadd.f32 %v1656, %v1945
      %v2060 = vadd.f32 %v1657, %v1948
      %v2061 = vadd.f32 %v1658, %v1953
      %v2062 = vadd.f32 %v1659, %v1956
      %v2063 = vadd.f32 %v1660, %v1961
      %v2064 = vadd.f32 %v1661, %v1964
      %v2065 = vadd.f32 %v1662, %v1969
      %v2066 = vadd.f32 %v1663, %v1972
      %v2067 = vadd.f32 %v1664, %v1977
      %v2068 = vadd.f32 %v1665, %v1980
      %v2069 = vadd.f32 %v1666, %v1985
      %v2070 = vadd.f32 %v1667, %v1988
      %v2071 = vadd.f32 %v1668, %v1993
      %v2072 = vadd.f32 %v1669, %v1996
      %v2073 = vadd.f32 %v1670, %v2001
      %v2074 = vadd.f32 %v1671, %v2004
      %v2075 = vadd.f32 %v1672, %v2009
      %v2076 = vadd.f32 %v1673, %v2012
      %v2077 = vadd.f32 %v1674, %v2017
      %v2078 = vadd.f32 %v1675, %v2020
      %v2079 = vadd.f32 %v1676, %v2025
      %v2080 = vadd.f32 %v1677, %v2028
      %v2081 = vadd.f32 %v1678, %v2033
      %v2082 = vadd.f32 %v1679, %v2036
      %v2083 = vadd.f32 %v1680, %v2041
      %v2084 = vadd.f32 %v1681, %v2044
      %v2085 = vadd.f32 %v1682, %v2049
      %v2086 = vadd.f32 %v1683, %v2052
      %v2088 = vshrl.u32 %v1685, 16
      %v2090 = vrot.slane %v2088, 4
      %v2091 = vshll.u32 %v1685, 16
      %v2093 = vrot.slane %v2091, 5
      %v2094 = vor.u32 %v2090, %v2093
      %v2095 = vrot.slane %v2094, 4
      %v2097 = vshll.u32 %v1686, 16
      %v2099 = vrot.slane %v2097, 5
      %v2100 = vsel %vm251, %v2095, %v2099
      %v2101 = vshrl.u32 %v1686, 16
      %v2103 = vrot.slane %v2101, 4
      %v2104 = vor.u32 %v2103, %v2099
      %v2105 = vrot.slane %v2104, 4
      %v2107 = vshll.u32 %v1687, 16
      %v2109 = vrot.slane %v2107, 5
      %v2110 = vsel %vm251, %v2105, %v2109
      %v2112 = vshrl.u32 %v1688, 16
      %v2114 = vrot.slane %v2112, 4
      %v2115 = vshll.u32 %v1688, 16
      %v2117 = vrot.slane %v2115, 5
      %v2118 = vor.u32 %v2114, %v2117
      %v2119 = vrot.slane %v2118, 4
      %v2121 = vshll.u32 %v1689, 16
      %v2123 = vrot.slane %v2121, 5
      %v2124 = vsel %vm251, %v2119, %v2123
      %v2125 = vshrl.u32 %v1689, 16
      %v2127 = vrot.slane %v2125, 4
      %v2128 = vor.u32 %v2127, %v2123
      %v2129 = vrot.slane %v2128, 4
      %v2131 = vshll.u32 %v1690, 16
      %v2133 = vrot.slane %v2131, 5
      %v2134 = vsel %vm251, %v2129, %v2133
      %v2136 = vshrl.u32 %v1691, 16
      %v2138 = vrot.slane %v2136, 4
      %v2139 = vshll.u32 %v1691, 16
      %v2141 = vrot.slane %v2139, 5
      %v2142 = vor.u32 %v2138, %v2141
      %v2143 = vrot.slane %v2142, 4
      %v2145 = vshll.u32 %v1692, 16
      %v2147 = vrot.slane %v2145, 5
      %v2148 = vsel %vm251, %v2143, %v2147
      %v2149 = vshrl.u32 %v1692, 16
      %v2151 = vrot.slane %v2149, 4
      %v2152 = vor.u32 %v2151, %v2147
      %v2153 = vrot.slane %v2152, 4
      %v2155 = vshll.u32 %v1693, 16
      %v2157 = vrot.slane %v2155, 5
      %v2158 = vsel %vm251, %v2153, %v2157
      %v2160 = vshrl.u32 %v1694, 16
      %v2162 = vrot.slane %v2160, 4
      %v2163 = vshll.u32 %v1694, 16
      %v2165 = vrot.slane %v2163, 5
      %v2166 = vor.u32 %v2162, %v2165
      %v2167 = vrot.slane %v2166, 4
      %v2169 = vshll.u32 %v1695, 16
      %v2171 = vrot.slane %v2169, 5
      %v2172 = vsel %vm251, %v2167, %v2171
      %v2173 = vshrl.u32 %v1695, 16
      %v2175 = vrot.slane %v2173, 4
      %v2176 = vor.u32 %v2175, %v2171
      %v2177 = vrot.slane %v2176, 4
      %v2179 = vshll.u32 %v1696, 16
      %v2181 = vrot.slane %v2179, 5
      %v2182 = vsel %vm251, %v2177, %v2181
      %v2184 = vshrl.u32 %v1697, 16
      %v2186 = vrot.slane %v2184, 4
      %v2187 = vshll.u32 %v1697, 16
      %v2189 = vrot.slane %v2187, 5
      %v2190 = vor.u32 %v2186, %v2189
      %v2191 = vrot.slane %v2190, 4
      %v2193 = vshll.u32 %v1698, 16
      %v2195 = vrot.slane %v2193, 5
      %v2196 = vsel %vm251, %v2191, %v2195
      %v2197 = vshrl.u32 %v1698, 16
      %v2199 = vrot.slane %v2197, 4
      %v2200 = vor.u32 %v2199, %v2195
      %v2201 = vrot.slane %v2200, 4
      %v2203 = vshll.u32 %v1699, 16
      %v2205 = vrot.slane %v2203, 5
      %v2206 = vsel %vm251, %v2201, %v2205
      %v2208 = vshrl.u32 %v1700, 16
      %v2210 = vrot.slane %v2208, 4
      %v2211 = vshll.u32 %v1700, 16
      %v2213 = vrot.slane %v2211, 5
      %v2214 = vor.u32 %v2210, %v2213
      %v2215 = vrot.slane %v2214, 4
      %v2217 = vshll.u32 %v1701, 16
      %v2219 = vrot.slane %v2217, 5
      %v2220 = vsel %vm251, %v2215, %v2219
      %v2221 = vshrl.u32 %v1701, 16
      %v2223 = vrot.slane %v2221, 4
      %v2224 = vor.u32 %v2223, %v2219
      %v2225 = vrot.slane %v2224, 4
      %v2227 = vshll.u32 %v1702, 16
      %v2229 = vrot.slane %v2227, 5
      %v2230 = vsel %vm251, %v2225, %v2229
      %v2232 = vshrl.u32 %v1703, 16
      %v2234 = vrot.slane %v2232, 4
      %v2235 = vshll.u32 %v1703, 16
      %v2237 = vrot.slane %v2235, 5
      %v2238 = vor.u32 %v2234, %v2237
      %v2239 = vrot.slane %v2238, 4
      %v2241 = vshll.u32 %v1704, 16
      %v2243 = vrot.slane %v2241, 5
      %v2244 = vsel %vm251, %v2239, %v2243
      %v2245 = vshrl.u32 %v1704, 16
      %v2247 = vrot.slane %v2245, 4
      %v2248 = vor.u32 %v2247, %v2243
      %v2249 = vrot.slane %v2248, 4
      %v2251 = vshll.u32 %v1705, 16
      %v2253 = vrot.slane %v2251, 5
      %v2254 = vsel %vm251, %v2249, %v2253
      %v2256 = vshrl.u32 %v1706, 16
      %v2258 = vrot.slane %v2256, 4
      %v2259 = vshll.u32 %v1706, 16
      %v2261 = vrot.slane %v2259, 5
      %v2262 = vor.u32 %v2258, %v2261
      %v2263 = vrot.slane %v2262, 4
      %v2265 = vshll.u32 %v1707, 16
      %v2267 = vrot.slane %v2265, 5
      %v2268 = vsel %vm251, %v2263, %v2267
      %v2269 = vshrl.u32 %v1707, 16
      %v2271 = vrot.slane %v2269, 4
      %v2272 = vor.u32 %v2271, %v2267
      %v2273 = vrot.slane %v2272, 4
      %v2275 = vshll.u32 %v1708, 16
      %v2277 = vrot.slane %v2275, 5
      %v2278 = vsel %vm251, %v2273, %v2277
      %v2280 = vshrl.u32 %v1709, 16
      %v2282 = vrot.slane %v2280, 4
      %v2283 = vshll.u32 %v1709, 16
      %v2285 = vrot.slane %v2283, 5
      %v2286 = vor.u32 %v2282, %v2285
      %v2287 = vrot.slane %v2286, 4
      %v2289 = vshll.u32 %v1710, 16
      %v2291 = vrot.slane %v2289, 5
      %v2292 = vsel %vm251, %v2287, %v2291
      %v2293 = vshrl.u32 %v1710, 16
      %v2295 = vrot.slane %v2293, 4
      %v2296 = vor.u32 %v2295, %v2291
      %v2297 = vrot.slane %v2296, 4
      %v2299 = vshll.u32 %v1711, 16
      %v2301 = vrot.slane %v2299, 5
      %v2302 = vsel %vm251, %v2297, %v2301
      %v2304 = vshrl.u32 %v1712, 16
      %v2306 = vrot.slane %v2304, 4
      %v2307 = vshll.u32 %v1712, 16
      %v2309 = vrot.slane %v2307, 5
      %v2310 = vor.u32 %v2306, %v2309
      %v2311 = vrot.slane %v2310, 4
      %v2313 = vshll.u32 %v1713, 16
      %v2315 = vrot.slane %v2313, 5
      %v2316 = vsel %vm251, %v2311, %v2315
      %v2317 = vshrl.u32 %v1713, 16
      %v2319 = vrot.slane %v2317, 4
      %v2320 = vor.u32 %v2319, %v2315
      %v2321 = vrot.slane %v2320, 4
      %v2323 = vshll.u32 %v1714, 16
      %v2325 = vrot.slane %v2323, 5
      %v2326 = vsel %vm251, %v2321, %v2325
      %v2328 = vshrl.u32 %v1715, 16
      %v2330 = vrot.slane %v2328, 4
      %v2331 = vshll.u32 %v1715, 16
      %v2333 = vrot.slane %v2331, 5
      %v2334 = vor.u32 %v2330, %v2333
      %v2335 = vrot.slane %v2334, 4
      %v2337 = vshll.u32 %v1716, 16
      %v2339 = vrot.slane %v2337, 5
      %v2340 = vsel %vm251, %v2335, %v2339
      %v2341 = vshrl.u32 %v1716, 16
      %v2343 = vrot.slane %v2341, 4
      %v2344 = vor.u32 %v2343, %v2339
      %v2345 = vrot.slane %v2344, 4
      %v2347 = vshll.u32 %v1717, 16
      %v2349 = vrot.slane %v2347, 5
      %v2350 = vsel %vm251, %v2345, %v2349
      %v2352 = vshrl.u32 %v1718, 16
      %v2354 = vrot.slane %v2352, 4
      %v2355 = vshll.u32 %v1718, 16
      %v2357 = vrot.slane %v2355, 5
      %v2358 = vor.u32 %v2354, %v2357
      %v2359 = vrot.slane %v2358, 4
      %v2361 = vshll.u32 %v1719, 16
      %v2363 = vrot.slane %v2361, 5
      %v2364 = vsel %vm251, %v2359, %v2363
      %v2365 = vshrl.u32 %v1719, 16
      %v2367 = vrot.slane %v2365, 4
      %v2368 = vor.u32 %v2367, %v2363
      %v2369 = vrot.slane %v2368, 4
      %v2371 = vshll.u32 %v1720, 16
      %v2373 = vrot.slane %v2371, 5
      %v2374 = vsel %vm251, %v2369, %v2373
      %v2376 = vshrl.u32 %v1721, 16
      %v2378 = vrot.slane %v2376, 4
      %v2379 = vshll.u32 %v1721, 16
      %v2381 = vrot.slane %v2379, 5
      %v2382 = vor.u32 %v2378, %v2381
      %v2383 = vrot.slane %v2382, 4
      %v2385 = vshll.u32 %v1722, 16
      %v2387 = vrot.slane %v2385, 5
      %v2388 = vsel %vm251, %v2383, %v2387
      %v2389 = vshrl.u32 %v1722, 16
      %v2391 = vrot.slane %v2389, 4
      %v2392 = vor.u32 %v2391, %v2387
      %v2393 = vrot.slane %v2392, 4
      %v2395 = vshll.u32 %v1723, 16
      %v2397 = vrot.slane %v2395, 5
      %v2398 = vsel %vm251, %v2393, %v2397
      %v2400 = vshrl.u32 %v1724, 16
      %v2402 = vrot.slane %v2400, 4
      %v2403 = vshll.u32 %v1724, 16
      %v2405 = vrot.slane %v2403, 5
      %v2406 = vor.u32 %v2402, %v2405
      %v2407 = vrot.slane %v2406, 4
      %v2409 = vshll.u32 %v1725, 16
      %v2411 = vrot.slane %v2409, 5
      %v2412 = vsel %vm251, %v2407, %v2411
      %v2413 = vshrl.u32 %v1725, 16
      %v2415 = vrot.slane %v2413, 4
      %v2416 = vor.u32 %v2415, %v2411
      %v2417 = vrot.slane %v2416, 4
      %v2419 = vshll.u32 %v1726, 16
      %v2421 = vrot.slane %v2419, 5
      %v2422 = vsel %vm251, %v2417, %v2421
      %v2424 = vshrl.u32 %v1727, 16
      %v2426 = vrot.slane %v2424, 4
      %v2427 = vshll.u32 %v1727, 16
      %v2429 = vrot.slane %v2427, 5
      %v2430 = vor.u32 %v2426, %v2429
      %v2431 = vrot.slane %v2430, 4
      %v2433 = vshll.u32 %v1728, 16
      %v2435 = vrot.slane %v2433, 5
      %v2436 = vsel %vm251, %v2431, %v2435
      %v2437 = vshrl.u32 %v1728, 16
      %v2439 = vrot.slane %v2437, 4
      %v2440 = vor.u32 %v2439, %v2435
      %v2441 = vrot.slane %v2440, 4
      %v2443 = vshll.u32 %v1729, 16
      %v2445 = vrot.slane %v2443, 5
      %v2446 = vsel %vm251, %v2441, %v2445
      %v2448 = vshrl.u32 %v1730, 16
      %v2450 = vrot.slane %v2448, 4
      %v2451 = vshll.u32 %v1730, 16
      %v2453 = vrot.slane %v2451, 5
      %v2454 = vor.u32 %v2450, %v2453
      %v2455 = vrot.slane %v2454, 4
      %v2457 = vshll.u32 %v1731, 16
      %v2459 = vrot.slane %v2457, 5
      %v2460 = vsel %vm251, %v2455, %v2459
      %v2461 = vshrl.u32 %v1731, 16
      %v2463 = vrot.slane %v2461, 4
      %v2464 = vor.u32 %v2463, %v2459
      %v2465 = vrot.slane %v2464, 4
      %v2467 = vshll.u32 %v1732, 16
      %v2469 = vrot.slane %v2467, 5
      %v2470 = vsel %vm251, %v2465, %v2469
      %s2471 = scalar_lea.vmem %s1, 256
      %v2472 = vld [vmem:[%s2471] sm:$0xf]
      %v2473 = vld [vmem:[%s2471 + $0x4] sm:$0xf]
      %v2474 = vld [vmem:[%s2471 + $0x8] sm:$0xf]
      %v2475 = vld [vmem:[%s2471 + $0xc] sm:$0xf]
      %v2476 = vld [vmem:[%s2471 + $0x10] sm:$0xf]
      %v2477 = vld [vmem:[%s2471 + $0x14] sm:$0xf]
      %v2478 = vld [vmem:[%s2471 + $0x18] sm:$0xf]
      %v2479 = vld [vmem:[%s2471 + $0x1c] sm:$0xf]
      %v2480 = vld [vmem:[%s2471 + $0x20] sm:$0xf]
      %v2481 = vld [vmem:[%s2471 + $0x24] sm:$0xf]
      %v2482 = vld [vmem:[%s2471 + $0x28] sm:$0xf]
      %v2483 = vld [vmem:[%s2471 + $0x2c] sm:$0xf]
      %v2484 = vld [vmem:[%s2471 + $0x30] sm:$0xf]
      %v2485 = vld [vmem:[%s2471 + $0x34] sm:$0xf]
      %v2486 = vld [vmem:[%s2471 + $0x38] sm:$0xf]
      %v2487 = vld [vmem:[%s2471 + $0x3c] sm:$0xf]
      %v2488 = vunpack.c.l.b16 %v2100
      %v2489 = vunpack.c.l.b16 %v2110
      %v2490 = vunpack.c.l.b16 %v2124
      %v2491 = vunpack.c.l.b16 %v2134
      %v2492 = vunpack.c.l.b16 %v2148
      %v2493 = vunpack.c.l.b16 %v2158
      %v2494 = vunpack.c.l.b16 %v2172
      %v2495 = vunpack.c.l.b16 %v2182
      %v2496 = vunpack.c.l.b16 %v2196
      %v2497 = vunpack.c.l.b16 %v2206
      %v2498 = vunpack.c.l.b16 %v2220
      %v2499 = vunpack.c.l.b16 %v2230
      %v2500 = vunpack.c.l.b16 %v2244
      %v2501 = vunpack.c.l.b16 %v2254
      %v2502 = vunpack.c.l.b16 %v2268
      %v2503 = vunpack.c.l.b16 %v2278
      %v2504 = vunpack.c.l.b16 %v2292
      %v2505 = vunpack.c.l.b16 %v2302
      %v2506 = vunpack.c.l.b16 %v2316
      %v2507 = vunpack.c.l.b16 %v2326
      %v2508 = vunpack.c.l.b16 %v2340
      %v2509 = vunpack.c.l.b16 %v2350
      %v2510 = vunpack.c.l.b16 %v2364
      %v2511 = vunpack.c.l.b16 %v2374
      %v2512 = vunpack.c.l.b16 %v2388
      %v2513 = vunpack.c.l.b16 %v2398
      %v2514 = vunpack.c.l.b16 %v2412
      %v2515 = vunpack.c.l.b16 %v2422
      %v2516 = vunpack.c.l.b16 %v2436
      %v2517 = vunpack.c.l.b16 %v2446
      %v2518 = vunpack.c.l.b16 %v2460
      %v2519 = vunpack.c.l.b16 %v2470
      %v2520 = vpack.c.b16 %v2489, %v2488
      %v2521 = vpack.c.b16 %v2491, %v2490
      %v2522 = vpack.c.b16 %v2493, %v2492
      %v2523 = vpack.c.b16 %v2495, %v2494
      %v2524 = vpack.c.b16 %v2497, %v2496
      %v2525 = vpack.c.b16 %v2499, %v2498
      %v2526 = vpack.c.b16 %v2501, %v2500
      %v2527 = vpack.c.b16 %v2503, %v2502
      %v2528 = vpack.c.b16 %v2505, %v2504
      %v2529 = vpack.c.b16 %v2507, %v2506
      %v2530 = vpack.c.b16 %v2509, %v2508
      %v2531 = vpack.c.b16 %v2511, %v2510
      %v2532 = vpack.c.b16 %v2513, %v2512
      %v2533 = vpack.c.b16 %v2515, %v2514
      %v2534 = vpack.c.b16 %v2517, %v2516
      %v2535 = vpack.c.b16 %v2519, %v2518
      %v2568 = vunpack.c.l.b16 %v2472
      %v2569 = vunpack.c.l.b16 %v2473
      %v2570 = vunpack.c.l.b16 %v2474
      %v2571 = vunpack.c.l.b16 %v2475
      %v2572 = vunpack.c.l.b16 %v2476
      %v2573 = vunpack.c.l.b16 %v2477
      %v2574 = vunpack.c.l.b16 %v2478
      %v2575 = vunpack.c.l.b16 %v2479
      %v2576 = vunpack.c.l.b16 %v2480
      %v2577 = vunpack.c.l.b16 %v2481
      %v2578 = vunpack.c.l.b16 %v2482
      %v2579 = vunpack.c.l.b16 %v2483
      %v2580 = vunpack.c.l.b16 %v2484
      %v2581 = vunpack.c.l.b16 %v2485
      %v2582 = vunpack.c.l.b16 %v2486
      %v2583 = vunpack.c.l.b16 %v2487
      %v2584 = vpack.c.b16 %v2569, %v2568
      %v2585 = vpack.c.b16 %v2571, %v2570
      %v2586 = vpack.c.b16 %v2573, %v2572
      %v2587 = vpack.c.b16 %v2575, %v2574
      %v2588 = vpack.c.b16 %v2577, %v2576
      %v2589 = vpack.c.b16 %v2579, %v2578
      %v2590 = vpack.c.b16 %v2581, %v2580
      %v2591 = vpack.c.b16 %v2583, %v2582
      %2600 = vmatprep.subr.bf16.mxu0 0
      %2601 = vmatpush1.bf16.msra.mxu0 %v2584
      %2602 = vmatprep.subr.bf16.mxu0 0
      %2603 = vmatpush1.bf16.msra.mxu0 %v2585
      %2604 = vmatprep.subr.bf16.mxu0 0
      %2605 = vmatpush1.bf16.msra.mxu0 %v2586
      %2606 = vmatprep.subr.bf16.mxu0 0
      %2607 = vmatpush1.bf16.msra.mxu0 %v2587
      %2608 = vmatprep.subr.bf16.mxu0 0
      %2609 = vmatpush1.bf16.msra.mxu0 %v2588
      %2610 = vmatprep.subr.bf16.mxu0 0
      %2611 = vmatpush1.bf16.msra.mxu0 %v2589
      %2612 = vmatprep.subr.bf16.mxu0 0
      %2613 = vmatpush1.bf16.msra.mxu0 %v2590
      %2614 = vmatprep.subr.bf16.mxu0 0
      %2615 = vmatpush1.bf16.msra.mxu0 %v2591
      %2616 = vmatprep.subr.bf16.mxu0 0
      %2617 = vmatpush1.bf16.msra.mxu0 0
      %2618 = vmatprep.subr.bf16.mxu0 0
      %2619 = vmatpush1.bf16.msra.mxu0 0
      %2620 = vmatprep.subr.bf16.mxu0 0
      %2621 = vmatpush1.bf16.msra.mxu0 0
      %2622 = vmatprep.subr.bf16.mxu0 0
      %2623 = vmatpush1.bf16.msra.mxu0 0
      %2624 = vmatprep.subr.bf16.mxu0 0
      %2625 = vmatpush1.bf16.msra.mxu0 0
      %2626 = vmatprep.subr.bf16.mxu0 0
      %2627 = vmatpush1.bf16.msra.mxu0 0
      %2628 = vmatprep.subr.bf16.mxu0 0
      %2629 = vmatpush1.bf16.msra.mxu0 0
      %2630 = vmatprep.subr.bf16.mxu0 0
      %2631 = vmatpush1.bf16.msra.mxu0 0
      %2632 = vmatprep.mubr.bf16.mxu0 0
      %2633 = vmatmul.mubr.bf16.gmra.mrb[0].mxu0 %v2520
      %v2634 = vpop.f32.mrb[0].mxu0
      %v2635 = vadd.f32 0.0, %v2634
      %v2636 = vpop.f32.mrb[0].mxu0
      %v2637 = vpop.f32.mrb[0].mxu0
      %v2638 = vadd.f32 0.0, %v2637
      %v2639 = vpop.f32.mrb[0].mxu0
      %2640 = vmatprep.mubr.bf16.mxu0 0
      %2641 = vmatmul.mubr.bf16.gmra.mrb[0].mxu0 %v2521
      %v2642 = vpop.f32.mrb[0].mxu0
      %v2643 = vadd.f32 0.0, %v2642
      %v2644 = vpop.f32.mrb[0].mxu0
      %v2645 = vpop.f32.mrb[0].mxu0
      %v2646 = vadd.f32 0.0, %v2645
      %v2647 = vpop.f32.mrb[0].mxu0
      %2648 = vmatprep.mubr.bf16.mxu0 0
      %2649 = vmatmul.mubr.bf16.gmra.mrb[0].mxu0 %v2522
      %v2650 = vpop.f32.mrb[0].mxu0
      %v2651 = vadd.f32 0.0, %v2650
      %v2652 = vpop.f32.mrb[0].mxu0
      %v2653 = vpop.f32.mrb[0].mxu0
      %v2654 = vadd.f32 0.0, %v2653
      %v2655 = vpop.f32.mrb[0].mxu0
      %2656 = vmatprep.mubr.bf16.mxu0 0
      %2657 = vmatmul.mubr.bf16.gmra.mrb[0].mxu0 %v2523
      %v2658 = vpop.f32.mrb[0].mxu0
      %v2659 = vadd.f32 0.0, %v2658
      %v2660 = vpop.f32.mrb[0].mxu0
      %v2661 = vpop.f32.mrb[0].mxu0
      %v2662 = vadd.f32 0.0, %v2661
      %v2663 = vpop.f32.mrb[0].mxu0
      %2664 = vmatprep.mubr.bf16.mxu0 0
      %2665 = vmatmul.mubr.bf16.gmra.mrb[0].mxu0 %v2524
      %v2666 = vpop.f32.mrb[0].mxu0
      %v2667 = vadd.f32 0.0, %v2666
      %v2668 = vpop.f32.mrb[0].mxu0
      %v2669 = vpop.f32.mrb[0].mxu0
      %v2670 = vadd.f32 0.0, %v2669
      %v2671 = vpop.f32.mrb[0].mxu0
      %2672 = vmatprep.mubr.bf16.mxu0 0
      %2673 = vmatmul.mubr.bf16.gmra.mrb[0].mxu0 %v2525
      %v2674 = vpop.f32.mrb[0].mxu0
      %v2675 = vadd.f32 0.0, %v2674
      %v2676 = vpop.f32.mrb[0].mxu0
      %v2677 = vpop.f32.mrb[0].mxu0
      %v2678 = vadd.f32 0.0, %v2677
      %v2679 = vpop.f32.mrb[0].mxu0
      %2680 = vmatprep.mubr.bf16.mxu0 0
      %2681 = vmatmul.mubr.bf16.gmra.mrb[0].mxu0 %v2526
      %v2682 = vpop.f32.mrb[0].mxu0
      %v2683 = vadd.f32 0.0, %v2682
      %v2684 = vpop.f32.mrb[0].mxu0
      %v2685 = vpop.f32.mrb[0].mxu0
      %v2686 = vadd.f32 0.0, %v2685
      %v2687 = vpop.f32.mrb[0].mxu0
      %2688 = vmatprep.mubr.bf16.mxu0 0
      %2689 = vmatmul.mubr.bf16.gmra.mrb[0].mxu0 %v2527
      %v2690 = vpop.f32.mrb[0].mxu0
      %v2691 = vadd.f32 0.0, %v2690
      %v2692 = vpop.f32.mrb[0].mxu0
      %v2693 = vpop.f32.mrb[0].mxu0
      %v2694 = vadd.f32 0.0, %v2693
      %v2695 = vpop.f32.mrb[0].mxu0
      %2696 = vmatprep.mubr.bf16.mxu0 0
      %2697 = vmatmul.mubr.bf16.gmra.mrb[0].mxu0 %v2528
      %v2698 = vpop.f32.mrb[0].mxu0
      %v2699 = vadd.f32 0.0, %v2698
      %v2700 = vpop.f32.mrb[0].mxu0
      %v2701 = vpop.f32.mrb[0].mxu0
      %v2702 = vadd.f32 0.0, %v2701
      %v2703 = vpop.f32.mrb[0].mxu0
      %2704 = vmatprep.mubr.bf16.mxu0 0
      %2705 = vmatmul.mubr.bf16.gmra.mrb[0].mxu0 %v2529
      %v2706 = vpop.f32.mrb[0].mxu0
      %v2707 = vadd.f32 0.0, %v2706
      %v2708 = vpop.f32.mrb[0].mxu0
      %v2709 = vpop.f32.mrb[0].mxu0
      %v2710 = vadd.f32 0.0, %v2709
      %v2711 = vpop.f32.mrb[0].mxu0
      %2712 = vmatprep.mubr.bf16.mxu0 0
      %2713 = vmatmul.mubr.bf16.gmra.mrb[0].mxu0 %v2530
      %v2714 = vpop.f32.mrb[0].mxu0
      %v2715 = vadd.f32 0.0, %v2714
      %v2716 = vpop.f32.mrb[0].mxu0
      %v2717 = vpop.f32.mrb[0].mxu0
      %v2718 = vadd.f32 0.0, %v2717
      %v2719 = vpop.f32.mrb[0].mxu0
      %2720 = vmatprep.mubr.bf16.mxu0 0
      %2721 = vmatmul.mubr.bf16.gmra.mrb[0].mxu0 %v2531
      %v2722 = vpop.f32.mrb[0].mxu0
      %v2723 = vadd.f32 0.0, %v2722
      %v2724 = vpop.f32.mrb[0].mxu0
      %v2725 = vpop.f32.mrb[0].mxu0
      %v2726 = vadd.f32 0.0, %v2725
      %v2727 = vpop.f32.mrb[0].mxu0
      %2728 = vmatprep.mubr.bf16.mxu0 0
      %2729 = vmatmul.mubr.bf16.gmra.mrb[0].mxu0 %v2532
      %v2730 = vpop.f32.mrb[0].mxu0
      %v2731 = vadd.f32 0.0, %v2730
      %v2732 = vpop.f32.mrb[0].mxu0
      %v2733 = vpop.f32.mrb[0].mxu0
      %v2734 = vadd.f32 0.0, %v2733
      %v2735 = vpop.f32.mrb[0].mxu0
      %2736 = vmatprep.mubr.bf16.mxu0 0
      %2737 = vmatmul.mubr.bf16.gmra.mrb[0].mxu0 %v2533
      %v2738 = vpop.f32.mrb[0].mxu0
      %v2739 = vadd.f32 0.0, %v2738
      %v2740 = vpop.f32.mrb[0].mxu0
      %v2741 = vpop.f32.mrb[0].mxu0
      %v2742 = vadd.f32 0.0, %v2741
      %v2743 = vpop.f32.mrb[0].mxu0
      %2744 = vmatprep.mubr.bf16.mxu0 0
      %2745 = vmatmul.mubr.bf16.gmra.mrb[0].mxu0 %v2534
      %v2746 = vpop.f32.mrb[0].mxu0
      %v2747 = vadd.f32 0.0, %v2746
      %v2748 = vpop.f32.mrb[0].mxu0
      %v2749 = vpop.f32.mrb[0].mxu0
      %v2750 = vadd.f32 0.0, %v2749
      %v2751 = vpop.f32.mrb[0].mxu0
      %2752 = vmatprep.mubr.bf16.mxu0 0
      %2753 = vmatmul.mubr.bf16.gmra.mrb[0].mxu0 %v2535
      %v2754 = vpop.f32.mrb[0].mxu0
      %v2755 = vadd.f32 0.0, %v2754
      %v2756 = vpop.f32.mrb[0].mxu0
      %v2757 = vpop.f32.mrb[0].mxu0
      %v2758 = vadd.f32 0.0, %v2757
      %v2759 = vpop.f32.mrb[0].mxu0
      %2760 = vdwg.mxu0
      %v2761 = vadd.f32 %v2055, %v2635
      %v2762 = vadd.f32 %v2056, %v2638
      %v2763 = vadd.f32 %v2057, %v2643
      %v2764 = vadd.f32 %v2058, %v2646
      %v2765 = vadd.f32 %v2059, %v2651
      %v2766 = vadd.f32 %v2060, %v2654
      %v2767 = vadd.f32 %v2061, %v2659
      %v2768 = vadd.f32 %v2062, %v2662
      %v2769 = vadd.f32 %v2063, %v2667
      %v2770 = vadd.f32 %v2064, %v2670
      %v2771 = vadd.f32 %v2065, %v2675
      %v2772 = vadd.f32 %v2066, %v2678
      %v2773 = vadd.f32 %v2067, %v2683
      %v2774 = vadd.f32 %v2068, %v2686
      %v2775 = vadd.f32 %v2069, %v2691
      %v2776 = vadd.f32 %v2070, %v2694
      %v2777 = vadd.f32 %v2071, %v2699
      %v2778 = vadd.f32 %v2072, %v2702
      %v2779 = vadd.f32 %v2073, %v2707
      %v2780 = vadd.f32 %v2074, %v2710
      %v2781 = vadd.f32 %v2075, %v2715
      %v2782 = vadd.f32 %v2076, %v2718
      %v2783 = vadd.f32 %v2077, %v2723
      %v2784 = vadd.f32 %v2078, %v2726
      %v2785 = vadd.f32 %v2079, %v2731
      %v2786 = vadd.f32 %v2080, %v2734
      %v2787 = vadd.f32 %v2081, %v2739
      %v2788 = vadd.f32 %v2082, %v2742
      %v2789 = vadd.f32 %v2083, %v2747
      %v2790 = vadd.f32 %v2084, %v2750
      %v2791 = vadd.f32 %v2085, %v2755
      %v2792 = vadd.f32 %v2086, %v2758
      %v2809 = vrot.slane %v1685, 5
      %v2810 = vrot.slane %v2809, 4
      %v2811 = vrot.slane %v1686, 5
      %v2812 = vsel %vm1249, %v2810, %v2811
      %v2813 = vrot.slane %v2811, 4
      %v2814 = vrot.slane %v1687, 5
      %v2815 = vsel %vm1249, %v2813, %v2814
      %v2816 = vrot.slane %v1688, 5
      %v2817 = vrot.slane %v2816, 4
      %v2818 = vrot.slane %v1689, 5
      %v2819 = vsel %vm1249, %v2817, %v2818
      %v2820 = vrot.slane %v2818, 4
      %v2821 = vrot.slane %v1690, 5
      %v2822 = vsel %vm1249, %v2820, %v2821
      %v2823 = vrot.slane %v1691, 5
      %v2824 = vrot.slane %v2823, 4
      %v2825 = vrot.slane %v1692, 5
      %v2826 = vsel %vm1249, %v2824, %v2825
      %v2827 = vrot.slane %v2825, 4
      %v2828 = vrot.slane %v1693, 5
      %v2829 = vsel %vm1249, %v2827, %v2828
      %v2830 = vrot.slane %v1694, 5
      %v2831 = vrot.slane %v2830, 4
      %v2832 = vrot.slane %v1695, 5
      %v2833 = vsel %vm1249, %v2831, %v2832
      %v2834 = vrot.slane %v2832, 4
      %v2835 = vrot.slane %v1696, 5
      %v2836 = vsel %vm1249, %v2834, %v2835
      %v2837 = vrot.slane %v1697, 5
      %v2838 = vrot.slane %v2837, 4
      %v2839 = vrot.slane %v1698, 5
      %v2840 = vsel %vm1249, %v2838, %v2839
      %v2841 = vrot.slane %v2839, 4
      %v2842 = vrot.slane %v1699, 5
      %v2843 = vsel %vm1249, %v2841, %v2842
      %v2844 = vrot.slane %v1700, 5
      %v2845 = vrot.slane %v2844, 4
      %v2846 = vrot.slane %v1701, 5
      %v2847 = vsel %vm1249, %v2845, %v2846
      %v2848 = vrot.slane %v2846, 4
      %v2849 = vrot.slane %v1702, 5
      %v2850 = vsel %vm1249, %v2848, %v2849
      %v2851 = vrot.slane %v1703, 5
      %v2852 = vrot.slane %v2851, 4
      %v2853 = vrot.slane %v1704, 5
      %v2854 = vsel %vm1249, %v2852, %v2853
      %v2855 = vrot.slane %v2853, 4
      %v2856 = vrot.slane %v1705, 5
      %v2857 = vsel %vm1249, %v2855, %v2856
      %v2858 = vrot.slane %v1706, 5
      %v2859 = vrot.slane %v2858, 4
      %v2860 = vrot.slane %v1707, 5
      %v2861 = vsel %vm1249, %v2859, %v2860
      %v2862 = vrot.slane %v2860, 4
      %v2863 = vrot.slane %v1708, 5
      %v2864 = vsel %vm1249, %v2862, %v2863
      %v2865 = vrot.slane %v1709, 5
      %v2866 = vrot.slane %v2865, 4
      %v2867 = vrot.slane %v1710, 5
      %v2868 = vsel %vm1249, %v2866, %v2867
      %v2869 = vrot.slane %v2867, 4
      %v2870 = vrot.slane %v1711, 5
      %v2871 = vsel %vm1249, %v2869, %v2870
      %v2872 = vrot.slane %v1712, 5
      %v2873 = vrot.slane %v2872, 4
      %v2874 = vrot.slane %v1713, 5
      %v2875 = vsel %vm1249, %v2873, %v2874
      %v2876 = vrot.slane %v2874, 4
      %v2877 = vrot.slane %v1714, 5
      %v2878 = vsel %vm1249, %v2876, %v2877
      %v2879 = vrot.slane %v1715, 5
      %v2880 = vrot.slane %v2879, 4
      %v2881 = vrot.slane %v1716, 5
      %v2882 = vsel %vm1249, %v2880, %v2881
      %v2883 = vrot.slane %v2881, 4
      %v2884 = vrot.slane %v1717, 5
      %v2885 = vsel %vm1249, %v2883, %v2884
      %v2886 = vrot.slane %v1718, 5
      %v2887 = vrot.slane %v2886, 4
      %v2888 = vrot.slane %v1719, 5
      %v2889 = vsel %vm1249, %v2887, %v2888
      %v2890 = vrot.slane %v2888, 4
      %v2891 = vrot.slane %v1720, 5
      %v2892 = vsel %vm1249, %v2890, %v2891
      %v2893 = vrot.slane %v1721, 5
      %v2894 = vrot.slane %v2893, 4
      %v2895 = vrot.slane %v1722, 5
      %v2896 = vsel %vm1249, %v2894, %v2895
      %v2897 = vrot.slane %v2895, 4
      %v2898 = vrot.slane %v1723, 5
      %v2899 = vsel %vm1249, %v2897, %v2898
      %v2900 = vrot.slane %v1724, 5
      %v2901 = vrot.slane %v2900, 4
      %v2902 = vrot.slane %v1725, 5
      %v2903 = vsel %vm1249, %v2901, %v2902
      %v2904 = vrot.slane %v2902, 4
      %v2905 = vrot.slane %v1726, 5
      %v2906 = vsel %vm1249, %v2904, %v2905
      %v2907 = vrot.slane %v1727, 5
      %v2908 = vrot.slane %v2907, 4
      %v2909 = vrot.slane %v1728, 5
      %v2910 = vsel %vm1249, %v2908, %v2909
      %v2911 = vrot.slane %v2909, 4
      %v2912 = vrot.slane %v1729, 5
      %v2913 = vsel %vm1249, %v2911, %v2912
      %v2914 = vrot.slane %v1730, 5
      %v2915 = vrot.slane %v2914, 4
      %v2916 = vrot.slane %v1731, 5
      %v2917 = vsel %vm1249, %v2915, %v2916
      %v2918 = vrot.slane %v2916, 4
      %v2919 = vrot.slane %v1732, 5
      %v2920 = vsel %vm1249, %v2918, %v2919
      %s2921 = scalar_lea.vmem %s1, 320
      %v2922 = vld [vmem:[%s2921] sm:$0xf]
      %v2923 = vld [vmem:[%s2921 + $0x4] sm:$0xf]
      %v2924 = vld [vmem:[%s2921 + $0x8] sm:$0xf]
      %v2925 = vld [vmem:[%s2921 + $0xc] sm:$0xf]
      %v2926 = vld [vmem:[%s2921 + $0x10] sm:$0xf]
      %v2927 = vld [vmem:[%s2921 + $0x14] sm:$0xf]
      %v2928 = vld [vmem:[%s2921 + $0x18] sm:$0xf]
      %v2929 = vld [vmem:[%s2921 + $0x1c] sm:$0xf]
      %v2930 = vld [vmem:[%s2921 + $0x20] sm:$0xf]
      %v2931 = vld [vmem:[%s2921 + $0x24] sm:$0xf]
      %v2932 = vld [vmem:[%s2921 + $0x28] sm:$0xf]
      %v2933 = vld [vmem:[%s2921 + $0x2c] sm:$0xf]
      %v2934 = vld [vmem:[%s2921 + $0x30] sm:$0xf]
      %v2935 = vld [vmem:[%s2921 + $0x34] sm:$0xf]
      %v2936 = vld [vmem:[%s2921 + $0x38] sm:$0xf]
      %v2937 = vld [vmem:[%s2921 + $0x3c] sm:$0xf]
      %v2938 = vunpack.c.l.b16 %v2812
      %v2939 = vunpack.c.l.b16 %v2815
      %v2940 = vunpack.c.l.b16 %v2819
      %v2941 = vunpack.c.l.b16 %v2822
      %v2942 = vunpack.c.l.b16 %v2826
      %v2943 = vunpack.c.l.b16 %v2829
      %v2944 = vunpack.c.l.b16 %v2833
      %v2945 = vunpack.c.l.b16 %v2836
      %v2946 = vunpack.c.l.b16 %v2840
      %v2947 = vunpack.c.l.b16 %v2843
      %v2948 = vunpack.c.l.b16 %v2847
      %v2949 = vunpack.c.l.b16 %v2850
      %v2950 = vunpack.c.l.b16 %v2854
      %v2951 = vunpack.c.l.b16 %v2857
      %v2952 = vunpack.c.l.b16 %v2861
      %v2953 = vunpack.c.l.b16 %v2864
      %v2954 = vunpack.c.l.b16 %v2868
      %v2955 = vunpack.c.l.b16 %v2871
      %v2956 = vunpack.c.l.b16 %v2875
      %v2957 = vunpack.c.l.b16 %v2878
      %v2958 = vunpack.c.l.b16 %v2882
      %v2959 = vunpack.c.l.b16 %v2885
      %v2960 = vunpack.c.l.b16 %v2889
      %v2961 = vunpack.c.l.b16 %v2892
      %v2962 = vunpack.c.l.b16 %v2896
      %v2963 = vunpack.c.l.b16 %v2899
      %v2964 = vunpack.c.l.b16 %v2903
      %v2965 = vunpack.c.l.b16 %v2906
      %v2966 = vunpack.c.l.b16 %v2910
      %v2967 = vunpack.c.l.b16 %v2913
      %v2968 = vunpack.c.l.b16 %v2917
      %v2969 = vunpack.c.l.b16 %v2920
      %v2970 = vpack.c.b16 %v2939, %v2938
      %v2971 = vpack.c.b16 %v2941, %v2940
      %v2972 = vpack.c.b16 %v2943, %v2942
      %v2973 = vpack.c.b16 %v2945, %v2944
      %v2974 = vpack.c.b16 %v2947, %v2946
      %v2975 = vpack.c.b16 %v2949, %v2948
      %v2976 = vpack.c.b16 %v2951, %v2950
      %v2977 = vpack.c.b16 %v2953, %v2952
      %v2978 = vpack.c.b16 %v2955, %v2954
      %v2979 = vpack.c.b16 %v2957, %v2956
      %v2980 = vpack.c.b16 %v2959, %v2958
      %v2981 = vpack.c.b16 %v2961, %v2960
      %v2982 = vpack.c.b16 %v2963, %v2962
      %v2983 = vpack.c.b16 %v2965, %v2964
      %v2984 = vpack.c.b16 %v2967, %v2966
      %v2985 = vpack.c.b16 %v2969, %v2968
      %v3018 = vunpack.c.l.b16 %v2922
      %v3019 = vunpack.c.l.b16 %v2923
      %v3020 = vunpack.c.l.b16 %v2924
      %v3021 = vunpack.c.l.b16 %v2925
      %v3022 = vunpack.c.l.b16 %v2926
      %v3023 = vunpack.c.l.b16 %v2927
      %v3024 = vunpack.c.l.b16 %v2928
      %v3025 = vunpack.c.l.b16 %v2929
      %v3026 = vunpack.c.l.b16 %v2930
      %v3027 = vunpack.c.l.b16 %v2931
      %v3028 = vunpack.c.l.b16 %v2932
      %v3029 = vunpack.c.l.b16 %v2933
      %v3030 = vunpack.c.l.b16 %v2934
      %v3031 = vunpack.c.l.b16 %v2935
      %v3032 = vunpack.c.l.b16 %v2936
      %v3033 = vunpack.c.l.b16 %v2937
      %v3034 = vpack.c.b16 %v3019, %v3018
      %v3035 = vpack.c.b16 %v3021, %v3020
      %v3036 = vpack.c.b16 %v3023, %v3022
      %v3037 = vpack.c.b16 %v3025, %v3024
      %v3038 = vpack.c.b16 %v3027, %v3026
      %v3039 = vpack.c.b16 %v3029, %v3028
      %v3040 = vpack.c.b16 %v3031, %v3030
      %v3041 = vpack.c.b16 %v3033, %v3032
      %3050 = vmatprep.subr.bf16.mxu0 0
      %3051 = vmatpush1.bf16.msra.mxu0 %v3034
      %3052 = vmatprep.subr.bf16.mxu0 0
      %3053 = vmatpush1.bf16.msra.mxu0 %v3035
      %3054 = vmatprep.subr.bf16.mxu0 0
      %3055 = vmatpush1.bf16.msra.mxu0 %v3036
      %3056 = vmatprep.subr.bf16.mxu0 0
      %3057 = vmatpush1.bf16.msra.mxu0 %v3037
      %3058 = vmatprep.subr.bf16.mxu0 0
      %3059 = vmatpush1.bf16.msra.mxu0 %v3038
      %3060 = vmatprep.subr.bf16.mxu0 0
      %3061 = vmatpush1.bf16.msra.mxu0 %v3039
      %3062 = vmatprep.subr.bf16.mxu0 0
      %3063 = vmatpush1.bf16.msra.mxu0 %v3040
      %3064 = vmatprep.subr.bf16.mxu0 0
      %3065 = vmatpush1.bf16.msra.mxu0 %v3041
      %3066 = vmatprep.subr.bf16.mxu0 0
      %3067 = vmatpush1.bf16.msra.mxu0 0
      %3068 = vmatprep.subr.bf16.mxu0 0
      %3069 = vmatpush1.bf16.msra.mxu0 0
      %3070 = vmatprep.subr.bf16.mxu0 0
      %3071 = vmatpush1.bf16.msra.mxu0 0
      %3072 = vmatprep.subr.bf16.mxu0 0
      %3073 = vmatpush1.bf16.msra.mxu0 0
      %3074 = vmatprep.subr.bf16.mxu0 0
      %3075 = vmatpush1.bf16.msra.mxu0 0
      %3076 = vmatprep.subr.bf16.mxu0 0
      %3077 = vmatpush1.bf16.msra.mxu0 0
      %3078 = vmatprep.subr.bf16.mxu0 0
      %3079 = vmatpush1.bf16.msra.mxu0 0
      %3080 = vmatprep.subr.bf16.mxu0 0
      %3081 = vmatpush1.bf16.msra.mxu0 0
      %3082 = vmatprep.mubr.bf16.mxu0 0
      %3083 = vmatmul.mubr.bf16.gmra.mrb[0].mxu0 %v2970
      %v3084 = vpop.f32.mrb[0].mxu0
      %v3085 = vadd.f32 0.0, %v3084
      %v3086 = vpop.f32.mrb[0].mxu0
      %v3087 = vpop.f32.mrb[0].mxu0
      %v3088 = vadd.f32 0.0, %v3087
      %v3089 = vpop.f32.mrb[0].mxu0
      %3090 = vmatprep.mubr.bf16.mxu0 0
      %3091 = vmatmul.mubr.bf16.gmra.mrb[0].mxu0 %v2971
      %v3092 = vpop.f32.mrb[0].mxu0
      %v3093 = vadd.f32 0.0, %v3092
      %v3094 = vpop.f32.mrb[0].mxu0
      %v3095 = vpop.f32.mrb[0].mxu0
      %v3096 = vadd.f32 0.0, %v3095
      %v3097 = vpop.f32.mrb[0].mxu0
      %3098 = vmatprep.mubr.bf16.mxu0 0
      %3099 = vmatmul.mubr.bf16.gmra.mrb[0].mxu0 %v2972
      %v3100 = vpop.f32.mrb[0].mxu0
      %v3101 = vadd.f32 0.0, %v3100
      %v3102 = vpop.f32.mrb[0].mxu0
      %v3103 = vpop.f32.mrb[0].mxu0
      %v3104 = vadd.f32 0.0, %v3103
      %v3105 = vpop.f32.mrb[0].mxu0
      %3106 = vmatprep.mubr.bf16.mxu0 0
      %3107 = vmatmul.mubr.bf16.gmra.mrb[0].mxu0 %v2973
      %v3108 = vpop.f32.mrb[0].mxu0
      %v3109 = vadd.f32 0.0, %v3108
      %v3110 = vpop.f32.mrb[0].mxu0
      %v3111 = vpop.f32.mrb[0].mxu0
      %v3112 = vadd.f32 0.0, %v3111
      %v3113 = vpop.f32.mrb[0].mxu0
      %3114 = vmatprep.mubr.bf16.mxu0 0
      %3115 = vmatmul.mubr.bf16.gmra.mrb[0].mxu0 %v2974
      %v3116 = vpop.f32.mrb[0].mxu0
      %v3117 = vadd.f32 0.0, %v3116
      %v3118 = vpop.f32.mrb[0].mxu0
      %v3119 = vpop.f32.mrb[0].mxu0
      %v3120 = vadd.f32 0.0, %v3119
      %v3121 = vpop.f32.mrb[0].mxu0
      %3122 = vmatprep.mubr.bf16.mxu0 0
      %3123 = vmatmul.mubr.bf16.gmra.mrb[0].mxu0 %v2975
      %v3124 = vpop.f32.mrb[0].mxu0
      %v3125 = vadd.f32 0.0, %v3124
      %v3126 = vpop.f32.mrb[0].mxu0
      %v3127 = vpop.f32.mrb[0].mxu0
      %v3128 = vadd.f32 0.0, %v3127
      %v3129 = vpop.f32.mrb[0].mxu0
      %3130 = vmatprep.mubr.bf16.mxu0 0
      %3131 = vmatmul.mubr.bf16.gmra.mrb[0].mxu0 %v2976
      %v3132 = vpop.f32.mrb[0].mxu0
      %v3133 = vadd.f32 0.0, %v3132
      %v3134 = vpop.f32.mrb[0].mxu0
      %v3135 = vpop.f32.mrb[0].mxu0
      %v3136 = vadd.f32 0.0, %v3135
      %v3137 = vpop.f32.mrb[0].mxu0
      %3138 = vmatprep.mubr.bf16.mxu0 0
      %3139 = vmatmul.mubr.bf16.gmra.mrb[0].mxu0 %v2977
      %v3140 = vpop.f32.mrb[0].mxu0
      %v3141 = vadd.f32 0.0, %v3140
      %v3142 = vpop.f32.mrb[0].mxu0
      %v3143 = vpop.f32.mrb[0].mxu0
      %v3144 = vadd.f32 0.0, %v3143
      %v3145 = vpop.f32.mrb[0].mxu0
      %3146 = vmatprep.mubr.bf16.mxu0 0
      %3147 = vmatmul.mubr.bf16.gmra.mrb[0].mxu0 %v2978
      %v3148 = vpop.f32.mrb[0].mxu0
      %v3149 = vadd.f32 0.0, %v3148
      %v3150 = vpop.f32.mrb[0].mxu0
      %v3151 = vpop.f32.mrb[0].mxu0
      %v3152 = vadd.f32 0.0, %v3151
      %v3153 = vpop.f32.mrb[0].mxu0
      %3154 = vmatprep.mubr.bf16.mxu0 0
      %3155 = vmatmul.mubr.bf16.gmra.mrb[0].mxu0 %v2979
      %v3156 = vpop.f32.mrb[0].mxu0
      %v3157 = vadd.f32 0.0, %v3156
      %v3158 = vpop.f32.mrb[0].mxu0
      %v3159 = vpop.f32.mrb[0].mxu0
      %v3160 = vadd.f32 0.0, %v3159
      %v3161 = vpop.f32.mrb[0].mxu0
      %3162 = vmatprep.mubr.bf16.mxu0 0
      %3163 = vmatmul.mubr.bf16.gmra.mrb[0].mxu0 %v2980
      %v3164 = vpop.f32.mrb[0].mxu0
      %v3165 = vadd.f32 0.0, %v3164
      %v3166 = vpop.f32.mrb[0].mxu0
      %v3167 = vpop.f32.mrb[0].mxu0
      %v3168 = vadd.f32 0.0, %v3167
      %v3169 = vpop.f32.mrb[0].mxu0
      %3170 = vmatprep.mubr.bf16.mxu0 0
      %3171 = vmatmul.mubr.bf16.gmra.mrb[0].mxu0 %v2981
      %v3172 = vpop.f32.mrb[0].mxu0
      %v3173 = vadd.f32 0.0, %v3172
      %v3174 = vpop.f32.mrb[0].mxu0
      %v3175 = vpop.f32.mrb[0].mxu0
      %v3176 = vadd.f32 0.0, %v3175
      %v3177 = vpop.f32.mrb[0].mxu0
      %3178 = vmatprep.mubr.bf16.mxu0 0
      %3179 = vmatmul.mubr.bf16.gmra.mrb[0].mxu0 %v2982
      %v3180 = vpop.f32.mrb[0].mxu0
      %v3181 = vadd.f32 0.0, %v3180
      %v3182 = vpop.f32.mrb[0].mxu0
      %v3183 = vpop.f32.mrb[0].mxu0
      %v3184 = vadd.f32 0.0, %v3183
      %v3185 = vpop.f32.mrb[0].mxu0
      %3186 = vmatprep.mubr.bf16.mxu0 0
      %3187 = vmatmul.mubr.bf16.gmra.mrb[0].mxu0 %v2983
      %v3188 = vpop.f32.mrb[0].mxu0
      %v3189 = vadd.f32 0.0, %v3188
      %v3190 = vpop.f32.mrb[0].mxu0
      %v3191 = vpop.f32.mrb[0].mxu0
      %v3192 = vadd.f32 0.0, %v3191
      %v3193 = vpop.f32.mrb[0].mxu0
      %3194 = vmatprep.mubr.bf16.mxu0 0
      %3195 = vmatmul.mubr.bf16.gmra.mrb[0].mxu0 %v2984
      %v3196 = vpop.f32.mrb[0].mxu0
      %v3197 = vadd.f32 0.0, %v3196
      %v3198 = vpop.f32.mrb[0].mxu0
      %v3199 = vpop.f32.mrb[0].mxu0
      %v3200 = vadd.f32 0.0, %v3199
      %v3201 = vpop.f32.mrb[0].mxu0
      %3202 = vmatprep.mubr.bf16.mxu0 0
      %3203 = vmatmul.mubr.bf16.gmra.mrb[0].mxu0 %v2985
      %v3204 = vpop.f32.mrb[0].mxu0
      %v3205 = vadd.f32 0.0, %v3204
      %v3206 = vpop.f32.mrb[0].mxu0
      %v3207 = vpop.f32.mrb[0].mxu0
      %v3208 = vadd.f32 0.0, %v3207
      %v3209 = vpop.f32.mrb[0].mxu0
      %3210 = vdwg.mxu0
      %v3211 = vadd.f32 %v2761, %v3085
      %v3212 = vadd.f32 %v2762, %v3088
      %v3213 = vadd.f32 %v2763, %v3093
      %v3214 = vadd.f32 %v2764, %v3096
      %v3215 = vadd.f32 %v2765, %v3101
      %v3216 = vadd.f32 %v2766, %v3104
      %v3217 = vadd.f32 %v2767, %v3109
      %v3218 = vadd.f32 %v2768, %v3112
      %v3219 = vadd.f32 %v2769, %v3117
      %v3220 = vadd.f32 %v2770, %v3120
      %v3221 = vadd.f32 %v2771, %v3125
      %v3222 = vadd.f32 %v2772, %v3128
      %v3223 = vadd.f32 %v2773, %v3133
      %v3224 = vadd.f32 %v2774, %v3136
      %v3225 = vadd.f32 %v2775, %v3141
      %v3226 = vadd.f32 %v2776, %v3144
      %v3227 = vadd.f32 %v2777, %v3149
      %v3228 = vadd.f32 %v2778, %v3152
      %v3229 = vadd.f32 %v2779, %v3157
      %v3230 = vadd.f32 %v2780, %v3160
      %v3231 = vadd.f32 %v2781, %v3165
      %v3232 = vadd.f32 %v2782, %v3168
      %v3233 = vadd.f32 %v2783, %v3173
      %v3234 = vadd.f32 %v2784, %v3176
      %v3235 = vadd.f32 %v2785, %v3181
      %v3236 = vadd.f32 %v2786, %v3184
      %v3237 = vadd.f32 %v2787, %v3189
      %v3238 = vadd.f32 %v2788, %v3192
      %v3239 = vadd.f32 %v2789, %v3197
      %v3240 = vadd.f32 %v2790, %v3200
      %v3241 = vadd.f32 %v2791, %v3205
      %v3242 = vadd.f32 %v2792, %v3208
      %s3243 = scalar_lea.vmem %s172, 24
      %v3244 = vld [vmem:[%s3243] sm:$0xf]
      %v3245 = vld [vmem:[%s3243 + $0x4] sm:$0xf]
      %v3246 = vld [vmem:[%s3243 + $0x8] sm:$0x1]
      %v3247 = vld [vmem:[%s3243 + $0xc] sm:$0xf]
      %v3248 = vld [vmem:[%s3243 + $0x10] sm:$0xf]
      %v3249 = vld [vmem:[%s3243 + $0x14] sm:$0x1]
      %v3250 = vld [vmem:[%s3243 + $0x18] sm:$0xf]
      %v3251 = vld [vmem:[%s3243 + $0x1c] sm:$0xf]
      %v3252 = vld [vmem:[%s3243 + $0x20] sm:$0x1]
      %v3253 = vld [vmem:[%s3243 + $0x24] sm:$0xf]
      %v3254 = vld [vmem:[%s3243 + $0x28] sm:$0xf]
      %v3255 = vld [vmem:[%s3243 + $0x2c] sm:$0x1]
      %v3256 = vld [vmem:[%s3243 + $0x30] sm:$0xf]
      %v3257 = vld [vmem:[%s3243 + $0x34] sm:$0xf]
      %v3258 = vld [vmem:[%s3243 + $0x38] sm:$0x1]
      %v3259 = vld [vmem:[%s3243 + $0x3c] sm:$0xf]
      %v3260 = vld [vmem:[%s3243 + $0x40] sm:$0xf]
      %v3261 = vld [vmem:[%s3243 + $0x44] sm:$0x1]
      %v3262 = vld [vmem:[%s3243 + $0x48] sm:$0xf]
      %v3263 = vld [vmem:[%s3243 + $0x4c] sm:$0xf]
      %v3264 = vld [vmem:[%s3243 + $0x50] sm:$0x1]
      %v3265 = vld [vmem:[%s3243 + $0x54] sm:$0xf]
      %v3266 = vld [vmem:[%s3243 + $0x58] sm:$0xf]
      %v3267 = vld [vmem:[%s3243 + $0x5c] sm:$0x1]
      %v3268 = vld [vmem:[%s3243 + $0x60] sm:$0xf]
      %v3269 = vld [vmem:[%s3243 + $0x64] sm:$0xf]
      %v3270 = vld [vmem:[%s3243 + $0x68] sm:$0x1]
      %v3271 = vld [vmem:[%s3243 + $0x6c] sm:$0xf]
      %v3272 = vld [vmem:[%s3243 + $0x70] sm:$0xf]
      %v3273 = vld [vmem:[%s3243 + $0x74] sm:$0x1]
      %v3274 = vld [vmem:[%s3243 + $0x78] sm:$0xf]
      %v3275 = vld [vmem:[%s3243 + $0x7c] sm:$0xf]
      %v3276 = vld [vmem:[%s3243 + $0x80] sm:$0x1]
      %v3277 = vld [vmem:[%s3243 + $0x84] sm:$0xf]
      %v3278 = vld [vmem:[%s3243 + $0x88] sm:$0xf]
      %v3279 = vld [vmem:[%s3243 + $0x8c] sm:$0x1]
      %v3280 = vld [vmem:[%s3243 + $0x90] sm:$0xf]
      %v3281 = vld [vmem:[%s3243 + $0x94] sm:$0xf]
      %v3282 = vld [vmem:[%s3243 + $0x98] sm:$0x1]
      %v3283 = vld [vmem:[%s3243 + $0x9c] sm:$0xf]
      %v3284 = vld [vmem:[%s3243 + $0xa0] sm:$0xf]
      %v3285 = vld [vmem:[%s3243 + $0xa4] sm:$0x1]
      %v3286 = vld [vmem:[%s3243 + $0xa8] sm:$0xf]
      %v3287 = vld [vmem:[%s3243 + $0xac] sm:$0xf]
      %v3288 = vld [vmem:[%s3243 + $0xb0] sm:$0x1]
      %v3289 = vld [vmem:[%s3243 + $0xb4] sm:$0xf]
      %v3290 = vld [vmem:[%s3243 + $0xb8] sm:$0xf]
      %v3291 = vld [vmem:[%s3243 + $0xbc] sm:$0x1]
      %s3292 = scalar_lea.vmem %s1, 384
      %v3293 = vld [vmem:[%s3292] sm:$0xf]
      %v3294 = vld [vmem:[%s3292 + $0x4] sm:$0xf]
      %v3295 = vld [vmem:[%s3292 + $0x8] sm:$0xf]
      %v3296 = vld [vmem:[%s3292 + $0xc] sm:$0xf]
      %v3297 = vld [vmem:[%s3292 + $0x10] sm:$0xf]
      %v3298 = vld [vmem:[%s3292 + $0x14] sm:$0xf]
      %v3299 = vld [vmem:[%s3292 + $0x18] sm:$0xf]
      %v3300 = vld [vmem:[%s3292 + $0x1c] sm:$0xf]
      %v3301 = vld [vmem:[%s3292 + $0x20] sm:$0xf]
      %v3302 = vld [vmem:[%s3292 + $0x24] sm:$0xf]
      %v3303 = vld [vmem:[%s3292 + $0x28] sm:$0xf]
      %v3304 = vld [vmem:[%s3292 + $0x2c] sm:$0xf]
      %v3305 = vld [vmem:[%s3292 + $0x30] sm:$0xf]
      %v3306 = vld [vmem:[%s3292 + $0x34] sm:$0xf]
      %v3307 = vld [vmem:[%s3292 + $0x38] sm:$0xf]
      %v3308 = vld [vmem:[%s3292 + $0x3c] sm:$0xf]
      %v3341 = vunpack.c.l.b16 %v3244
      %v3342 = vunpack.c.l.b16 %v3245
      %v3343 = vunpack.c.l.b16 %v3247
      %v3344 = vunpack.c.l.b16 %v3248
      %v3345 = vunpack.c.l.b16 %v3250
      %v3346 = vunpack.c.l.b16 %v3251
      %v3347 = vunpack.c.l.b16 %v3253
      %v3348 = vunpack.c.l.b16 %v3254
      %v3349 = vunpack.c.l.b16 %v3256
      %v3350 = vunpack.c.l.b16 %v3257
      %v3351 = vunpack.c.l.b16 %v3259
      %v3352 = vunpack.c.l.b16 %v3260
      %v3353 = vunpack.c.l.b16 %v3262
      %v3354 = vunpack.c.l.b16 %v3263
      %v3355 = vunpack.c.l.b16 %v3265
      %v3356 = vunpack.c.l.b16 %v3266
      %v3357 = vunpack.c.l.b16 %v3268
      %v3358 = vunpack.c.l.b16 %v3269
      %v3359 = vunpack.c.l.b16 %v3271
      %v3360 = vunpack.c.l.b16 %v3272
      %v3361 = vunpack.c.l.b16 %v3274
      %v3362 = vunpack.c.l.b16 %v3275
      %v3363 = vunpack.c.l.b16 %v3277
      %v3364 = vunpack.c.l.b16 %v3278
      %v3365 = vunpack.c.l.b16 %v3280
      %v3366 = vunpack.c.l.b16 %v3281
      %v3367 = vunpack.c.l.b16 %v3283
      %v3368 = vunpack.c.l.b16 %v3284
      %v3369 = vunpack.c.l.b16 %v3286
      %v3370 = vunpack.c.l.b16 %v3287
      %v3371 = vunpack.c.l.b16 %v3289
      %v3372 = vunpack.c.l.b16 %v3290
      %v3373 = vpack.c.b16 %v3342, %v3341
      %v3374 = vpack.c.b16 %v3344, %v3343
      %v3375 = vpack.c.b16 %v3346, %v3345
      %v3376 = vpack.c.b16 %v3348, %v3347
      %v3377 = vpack.c.b16 %v3350, %v3349
      %v3378 = vpack.c.b16 %v3352, %v3351
      %v3379 = vpack.c.b16 %v3354, %v3353
      %v3380 = vpack.c.b16 %v3356, %v3355
      %v3381 = vpack.c.b16 %v3358, %v3357
      %v3382 = vpack.c.b16 %v3360, %v3359
      %v3383 = vpack.c.b16 %v3362, %v3361
      %v3384 = vpack.c.b16 %v3364, %v3363
      %v3385 = vpack.c.b16 %v3366, %v3365
      %v3386 = vpack.c.b16 %v3368, %v3367
      %v3387 = vpack.c.b16 %v3370, %v3369
      %v3388 = vpack.c.b16 %v3372, %v3371
      %v3421 = vunpack.c.l.b16 %v3293
      %v3422 = vunpack.c.l.b16 %v3294
      %v3423 = vunpack.c.l.b16 %v3295
      %v3424 = vunpack.c.l.b16 %v3296
      %v3425 = vunpack.c.l.b16 %v3297
      %v3426 = vunpack.c.l.b16 %v3298
      %v3427 = vunpack.c.l.b16 %v3299
      %v3428 = vunpack.c.l.b16 %v3300
      %v3429 = vunpack.c.l.b16 %v3301
      %v3430 = vunpack.c.l.b16 %v3302
      %v3431 = vunpack.c.l.b16 %v3303
      %v3432 = vunpack.c.l.b16 %v3304
      %v3433 = vunpack.c.l.b16 %v3305
      %v3434 = vunpack.c.l.b16 %v3306
      %v3435 = vunpack.c.l.b16 %v3307
      %v3436 = vunpack.c.l.b16 %v3308
      %v3437 = vpack.c.b16 %v3422, %v3421
      %v3438 = vpack.c.b16 %v3424, %v3423
      %v3439 = vpack.c.b16 %v3426, %v3425
      %v3440 = vpack.c.b16 %v3428, %v3427
      %v3441 = vpack.c.b16 %v3430, %v3429
      %v3442 = vpack.c.b16 %v3432, %v3431
      %v3443 = vpack.c.b16 %v3434, %v3433
      %v3444 = vpack.c.b16 %v3436, %v3435
      %3453 = vmatprep.subr.bf16.mxu0 0
      %3454 = vmatpush1.bf16.msra.mxu0 %v3437
      %3455 = vmatprep.subr.bf16.mxu0 0
      %3456 = vmatpush1.bf16.msra.mxu0 %v3438
      %3457 = vmatprep.subr.bf16.mxu0 0
      %3458 = vmatpush1.bf16.msra.mxu0 %v3439
      %3459 = vmatprep.subr.bf16.mxu0 0
      %3460 = vmatpush1.bf16.msra.mxu0 %v3440
      %3461 = vmatprep.subr.bf16.mxu0 0
      %3462 = vmatpush1.bf16.msra.mxu0 %v3441
      %3463 = vmatprep.subr.bf16.mxu0 0
      %3464 = vmatpush1.bf16.msra.mxu0 %v3442
      %3465 = vmatprep.subr.bf16.mxu0 0
      %3466 = vmatpush1.bf16.msra.mxu0 %v3443
      %3467 = vmatprep.subr.bf16.mxu0 0
      %3468 = vmatpush1.bf16.msra.mxu0 %v3444
      %3469 = vmatprep.subr.bf16.mxu0 0
      %3470 = vmatpush1.bf16.msra.mxu0 0
      %3471 = vmatprep.subr.bf16.mxu0 0
      %3472 = vmatpush1.bf16.msra.mxu0 0
      %3473 = vmatprep.subr.bf16.mxu0 0
      %3474 = vmatpush1.bf16.msra.mxu0 0
      %3475 = vmatprep.subr.bf16.mxu0 0
      %3476 = vmatpush1.bf16.msra.mxu0 0
      %3477 = vmatprep.subr.bf16.mxu0 0
      %3478 = vmatpush1.bf16.msra.mxu0 0
      %3479 = vmatprep.subr.bf16.mxu0 0
      %3480 = vmatpush1.bf16.msra.mxu0 0
      %3481 = vmatprep.subr.bf16.mxu0 0
      %3482 = vmatpush1.bf16.msra.mxu0 0
      %3483 = vmatprep.subr.bf16.mxu0 0
      %3484 = vmatpush1.bf16.msra.mxu0 0
      %3485 = vmatprep.mubr.bf16.mxu0 0
      %3486 = vmatmul.mubr.bf16.gmra.mrb[0].mxu0 %v3373
      %v3487 = vpop.f32.mrb[0].mxu0
      %v3488 = vadd.f32 0.0, %v3487
      %v3489 = vpop.f32.mrb[0].mxu0
      %v3490 = vpop.f32.mrb[0].mxu0
      %v3491 = vadd.f32 0.0, %v3490
      %v3492 = vpop.f32.mrb[0].mxu0
      %3493 = vmatprep.mubr.bf16.mxu0 0
      %3494 = vmatmul.mubr.bf16.gmra.mrb[0].mxu0 %v3374
      %v3495 = vpop.f32.mrb[0].mxu0
      %v3496 = vadd.f32 0.0, %v3495
      %v3497 = vpop.f32.mrb[0].mxu0
      %v3498 = vpop.f32.mrb[0].mxu0
      %v3499 = vadd.f32 0.0, %v3498
      %v3500 = vpop.f32.mrb[0].mxu0
      %3501 = vmatprep.mubr.bf16.mxu0 0
      %3502 = vmatmul.mubr.bf16.gmra.mrb[0].mxu0 %v3375
      %v3503 = vpop.f32.mrb[0].mxu0
      %v3504 = vadd.f32 0.0, %v3503
      %v3505 = vpop.f32.mrb[0].mxu0
      %v3506 = vpop.f32.mrb[0].mxu0
      %v3507 = vadd.f32 0.0, %v3506
      %v3508 = vpop.f32.mrb[0].mxu0
      %3509 = vmatprep.mubr.bf16.mxu0 0
      %3510 = vmatmul.mubr.bf16.gmra.mrb[0].mxu0 %v3376
      %v3511 = vpop.f32.mrb[0].mxu0
      %v3512 = vadd.f32 0.0, %v3511
      %v3513 = vpop.f32.mrb[0].mxu0
      %v3514 = vpop.f32.mrb[0].mxu0
      %v3515 = vadd.f32 0.0, %v3514
      %v3516 = vpop.f32.mrb[0].mxu0
      %3517 = vmatprep.mubr.bf16.mxu0 0
      %3518 = vmatmul.mubr.bf16.gmra.mrb[0].mxu0 %v3377
      %v3519 = vpop.f32.mrb[0].mxu0
      %v3520 = vadd.f32 0.0, %v3519
      %v3521 = vpop.f32.mrb[0].mxu0
      %v3522 = vpop.f32.mrb[0].mxu0
      %v3523 = vadd.f32 0.0, %v3522
      %v3524 = vpop.f32.mrb[0].mxu0
      %3525 = vmatprep.mubr.bf16.mxu0 0
      %3526 = vmatmul.mubr.bf16.gmra.mrb[0].mxu0 %v3378
      %v3527 = vpop.f32.mrb[0].mxu0
      %v3528 = vadd.f32 0.0, %v3527
      %v3529 = vpop.f32.mrb[0].mxu0
      %v3530 = vpop.f32.mrb[0].mxu0
      %v3531 = vadd.f32 0.0, %v3530
      %v3532 = vpop.f32.mrb[0].mxu0
      %3533 = vmatprep.mubr.bf16.mxu0 0
      %3534 = vmatmul.mubr.bf16.gmra.mrb[0].mxu0 %v3379
      %v3535 = vpop.f32.mrb[0].mxu0
      %v3536 = vadd.f32 0.0, %v3535
      %v3537 = vpop.f32.mrb[0].mxu0
      %v3538 = vpop.f32.mrb[0].mxu0
      %v3539 = vadd.f32 0.0, %v3538
      %v3540 = vpop.f32.mrb[0].mxu0
      %3541 = vmatprep.mubr.bf16.mxu0 0
      %3542 = vmatmul.mubr.bf16.gmra.mrb[0].mxu0 %v3380
      %v3543 = vpop.f32.mrb[0].mxu0
      %v3544 = vadd.f32 0.0, %v3543
      %v3545 = vpop.f32.mrb[0].mxu0
      %v3546 = vpop.f32.mrb[0].mxu0
      %v3547 = vadd.f32 0.0, %v3546
      %v3548 = vpop.f32.mrb[0].mxu0
      %3549 = vmatprep.mubr.bf16.mxu0 0
      %3550 = vmatmul.mubr.bf16.gmra.mrb[0].mxu0 %v3381
      %v3551 = vpop.f32.mrb[0].mxu0
      %v3552 = vadd.f32 0.0, %v3551
      %v3553 = vpop.f32.mrb[0].mxu0
      %v3554 = vpop.f32.mrb[0].mxu0
      %v3555 = vadd.f32 0.0, %v3554
      %v3556 = vpop.f32.mrb[0].mxu0
      %3557 = vmatprep.mubr.bf16.mxu0 0
      %3558 = vmatmul.mubr.bf16.gmra.mrb[0].mxu0 %v3382
      %v3559 = vpop.f32.mrb[0].mxu0
      %v3560 = vadd.f32 0.0, %v3559
      %v3561 = vpop.f32.mrb[0].mxu0
      %v3562 = vpop.f32.mrb[0].mxu0
      %v3563 = vadd.f32 0.0, %v3562
      %v3564 = vpop.f32.mrb[0].mxu0
      %3565 = vmatprep.mubr.bf16.mxu0 0
      %3566 = vmatmul.mubr.bf16.gmra.mrb[0].mxu0 %v3383
      %v3567 = vpop.f32.mrb[0].mxu0
      %v3568 = vadd.f32 0.0, %v3567
      %v3569 = vpop.f32.mrb[0].mxu0
      %v3570 = vpop.f32.mrb[0].mxu0
      %v3571 = vadd.f32 0.0, %v3570
      %v3572 = vpop.f32.mrb[0].mxu0
      %3573 = vmatprep.mubr.bf16.mxu0 0
      %3574 = vmatmul.mubr.bf16.gmra.mrb[0].mxu0 %v3384
      %v3575 = vpop.f32.mrb[0].mxu0
      %v3576 = vadd.f32 0.0, %v3575
      %v3577 = vpop.f32.mrb[0].mxu0
      %v3578 = vpop.f32.mrb[0].mxu0
      %v3579 = vadd.f32 0.0, %v3578
      %v3580 = vpop.f32.mrb[0].mxu0
      %3581 = vmatprep.mubr.bf16.mxu0 0
      %3582 = vmatmul.mubr.bf16.gmra.mrb[0].mxu0 %v3385
      %v3583 = vpop.f32.mrb[0].mxu0
      %v3584 = vadd.f32 0.0, %v3583
      %v3585 = vpop.f32.mrb[0].mxu0
      %v3586 = vpop.f32.mrb[0].mxu0
      %v3587 = vadd.f32 0.0, %v3586
      %v3588 = vpop.f32.mrb[0].mxu0
      %3589 = vmatprep.mubr.bf16.mxu0 0
      %3590 = vmatmul.mubr.bf16.gmra.mrb[0].mxu0 %v3386
      %v3591 = vpop.f32.mrb[0].mxu0
      %v3592 = vadd.f32 0.0, %v3591
      %v3593 = vpop.f32.mrb[0].mxu0
      %v3594 = vpop.f32.mrb[0].mxu0
      %v3595 = vadd.f32 0.0, %v3594
      %v3596 = vpop.f32.mrb[0].mxu0
      %3597 = vmatprep.mubr.bf16.mxu0 0
      %3598 = vmatmul.mubr.bf16.gmra.mrb[0].mxu0 %v3387
      %v3599 = vpop.f32.mrb[0].mxu0
      %v3600 = vadd.f32 0.0, %v3599
      %v3601 = vpop.f32.mrb[0].mxu0
      %v3602 = vpop.f32.mrb[0].mxu0
      %v3603 = vadd.f32 0.0, %v3602
      %v3604 = vpop.f32.mrb[0].mxu0
      %3605 = vmatprep.mubr.bf16.mxu0 0
      %3606 = vmatmul.mubr.bf16.gmra.mrb[0].mxu0 %v3388
      %v3607 = vpop.f32.mrb[0].mxu0
      %v3608 = vadd.f32 0.0, %v3607
      %v3609 = vpop.f32.mrb[0].mxu0
      %v3610 = vpop.f32.mrb[0].mxu0
      %v3611 = vadd.f32 0.0, %v3610
      %v3612 = vpop.f32.mrb[0].mxu0
      %3613 = vdwg.mxu0
      %v3614 = vadd.f32 %v3211, %v3488
      %v3615 = vadd.f32 %v3212, %v3491
      %v3616 = vadd.f32 %v3213, %v3496
      %v3617 = vadd.f32 %v3214, %v3499
      %v3618 = vadd.f32 %v3215, %v3504
      %v3619 = vadd.f32 %v3216, %v3507
      %v3620 = vadd.f32 %v3217, %v3512
      %v3621 = vadd.f32 %v3218, %v3515
      %v3622 = vadd.f32 %v3219, %v3520
      %v3623 = vadd.f32 %v3220, %v3523
      %v3624 = vadd.f32 %v3221, %v3528
      %v3625 = vadd.f32 %v3222, %v3531
      %v3626 = vadd.f32 %v3223, %v3536
      %v3627 = vadd.f32 %v3224, %v3539
      %v3628 = vadd.f32 %v3225, %v3544
      %v3629 = vadd.f32 %v3226, %v3547
      %v3630 = vadd.f32 %v3227, %v3552
      %v3631 = vadd.f32 %v3228, %v3555
      %v3632 = vadd.f32 %v3229, %v3560
      %v3633 = vadd.f32 %v3230, %v3563
      %v3634 = vadd.f32 %v3231, %v3568
      %v3635 = vadd.f32 %v3232, %v3571
      %v3636 = vadd.f32 %v3233, %v3576
      %v3637 = vadd.f32 %v3234, %v3579
      %v3638 = vadd.f32 %v3235, %v3584
      %v3639 = vadd.f32 %v3236, %v3587
      %v3640 = vadd.f32 %v3237, %v3592
      %v3641 = vadd.f32 %v3238, %v3595
      %v3642 = vadd.f32 %v3239, %v3600
      %v3643 = vadd.f32 %v3240, %v3603
      %v3644 = vadd.f32 %v3241, %v3608
      %v3645 = vadd.f32 %v3242, %v3611
      %v3647 = vshrl.u32 %v3244, 16
      %v3649 = vrot.slane %v3647, 4
      %v3650 = vshll.u32 %v3244, 16
      %v3652 = vrot.slane %v3650, 5
      %v3653 = vor.u32 %v3649, %v3652
      %v3654 = vrot.slane %v3653, 4
      %v3656 = vshll.u32 %v3245, 16
      %v3658 = vrot.slane %v3656, 5
      %v3659 = vsel %vm251, %v3654, %v3658
      %v3660 = vshrl.u32 %v3245, 16
      %v3662 = vrot.slane %v3660, 4
      %v3663 = vor.u32 %v3662, %v3658
      %v3664 = vrot.slane %v3663, 4
      %v3666 = vshll.u32 %v3246, 16
      %v3668 = vrot.slane %v3666, 5
      %v3669 = vsel %vm251, %v3664, %v3668
      %v3671 = vshrl.u32 %v3247, 16
      %v3673 = vrot.slane %v3671, 4
      %v3674 = vshll.u32 %v3247, 16
      %v3676 = vrot.slane %v3674, 5
      %v3677 = vor.u32 %v3673, %v3676
      %v3678 = vrot.slane %v3677, 4
      %v3680 = vshll.u32 %v3248, 16
      %v3682 = vrot.slane %v3680, 5
      %v3683 = vsel %vm251, %v3678, %v3682
      %v3684 = vshrl.u32 %v3248, 16
      %v3686 = vrot.slane %v3684, 4
      %v3687 = vor.u32 %v3686, %v3682
      %v3688 = vrot.slane %v3687, 4
      %v3690 = vshll.u32 %v3249, 16
      %v3692 = vrot.slane %v3690, 5
      %v3693 = vsel %vm251, %v3688, %v3692
      %v3695 = vshrl.u32 %v3250, 16
      %v3697 = vrot.slane %v3695, 4
      %v3698 = vshll.u32 %v3250, 16
      %v3700 = vrot.slane %v3698, 5
      %v3701 = vor.u32 %v3697, %v3700
      %v3702 = vrot.slane %v3701, 4
      %v3704 = vshll.u32 %v3251, 16
      %v3706 = vrot.slane %v3704, 5
      %v3707 = vsel %vm251, %v3702, %v3706
      %v3708 = vshrl.u32 %v3251, 16
      %v3710 = vrot.slane %v3708, 4
      %v3711 = vor.u32 %v3710, %v3706
      %v3712 = vrot.slane %v3711, 4
      %v3714 = vshll.u32 %v3252, 16
      %v3716 = vrot.slane %v3714, 5
      %v3717 = vsel %vm251, %v3712, %v3716
      %v3719 = vshrl.u32 %v3253, 16
      %v3721 = vrot.slane %v3719, 4
      %v3722 = vshll.u32 %v3253, 16
      %v3724 = vrot.slane %v3722, 5
      %v3725 = vor.u32 %v3721, %v3724
      %v3726 = vrot.slane %v3725, 4
      %v3728 = vshll.u32 %v3254, 16
      %v3730 = vrot.slane %v3728, 5
      %v3731 = vsel %vm251, %v3726, %v3730
      %v3732 = vshrl.u32 %v3254, 16
      %v3734 = vrot.slane %v3732, 4
      %v3735 = vor.u32 %v3734, %v3730
      %v3736 = vrot.slane %v3735, 4
      %v3738 = vshll.u32 %v3255, 16
      %v3740 = vrot.slane %v3738, 5
      %v3741 = vsel %vm251, %v3736, %v3740
      %v3743 = vshrl.u32 %v3256, 16
      %v3745 = vrot.slane %v3743, 4
      %v3746 = vshll.u32 %v3256, 16
      %v3748 = vrot.slane %v3746, 5
      %v3749 = vor.u32 %v3745, %v3748
      %v3750 = vrot.slane %v3749, 4
      %v3752 = vshll.u32 %v3257, 16
      %v3754 = vrot.slane %v3752, 5
      %v3755 = vsel %vm251, %v3750, %v3754
      %v3756 = vshrl.u32 %v3257, 16
      %v3758 = vrot.slane %v3756, 4
      %v3759 = vor.u32 %v3758, %v3754
      %v3760 = vrot.slane %v3759, 4
      %v3762 = vshll.u32 %v3258, 16
      %v3764 = vrot.slane %v3762, 5
      %v3765 = vsel %vm251, %v3760, %v3764
      %v3767 = vshrl.u32 %v3259, 16
      %v3769 = vrot.slane %v3767, 4
      %v3770 = vshll.u32 %v3259, 16
      %v3772 = vrot.slane %v3770, 5
      %v3773 = vor.u32 %v3769, %v3772
      %v3774 = vrot.slane %v3773, 4
      %v3776 = vshll.u32 %v3260, 16
      %v3778 = vrot.slane %v3776, 5
      %v3779 = vsel %vm251, %v3774, %v3778
      %v3780 = vshrl.u32 %v3260, 16
      %v3782 = vrot.slane %v3780, 4
      %v3783 = vor.u32 %v3782, %v3778
      %v3784 = vrot.slane %v3783, 4
      %v3786 = vshll.u32 %v3261, 16
      %v3788 = vrot.slane %v3786, 5
      %v3789 = vsel %vm251, %v3784, %v3788
      %v3791 = vshrl.u32 %v3262, 16
      %v3793 = vrot.slane %v3791, 4
      %v3794 = vshll.u32 %v3262, 16
      %v3796 = vrot.slane %v3794, 5
      %v3797 = vor.u32 %v3793, %v3796
      %v3798 = vrot.slane %v3797, 4
      %v3800 = vshll.u32 %v3263, 16
      %v3802 = vrot.slane %v3800, 5
      %v3803 = vsel %vm251, %v3798, %v3802
      %v3804 = vshrl.u32 %v3263, 16
      %v3806 = vrot.slane %v3804, 4
      %v3807 = vor.u32 %v3806, %v3802
      %v3808 = vrot.slane %v3807, 4
      %v3810 = vshll.u32 %v3264, 16
      %v3812 = vrot.slane %v3810, 5
      %v3813 = vsel %vm251, %v3808, %v3812
      %v3815 = vshrl.u32 %v3265, 16
      %v3817 = vrot.slane %v3815, 4
      %v3818 = vshll.u32 %v3265, 16
      %v3820 = vrot.slane %v3818, 5
      %v3821 = vor.u32 %v3817, %v3820
      %v3822 = vrot.slane %v3821, 4
      %v3824 = vshll.u32 %v3266, 16
      %v3826 = vrot.slane %v3824, 5
      %v3827 = vsel %vm251, %v3822, %v3826
      %v3828 = vshrl.u32 %v3266, 16
      %v3830 = vrot.slane %v3828, 4
      %v3831 = vor.u32 %v3830, %v3826
      %v3832 = vrot.slane %v3831, 4
      %v3834 = vshll.u32 %v3267, 16
      %v3836 = vrot.slane %v3834, 5
      %v3837 = vsel %vm251, %v3832, %v3836
      %v3839 = vshrl.u32 %v3268, 16
      %v3841 = vrot.slane %v3839, 4
      %v3842 = vshll.u32 %v3268, 16
      %v3844 = vrot.slane %v3842, 5
      %v3845 = vor.u32 %v3841, %v3844
      %v3846 = vrot.slane %v3845, 4
      %v3848 = vshll.u32 %v3269, 16
      %v3850 = vrot.slane %v3848, 5
      %v3851 = vsel %vm251, %v3846, %v3850
      %v3852 = vshrl.u32 %v3269, 16
      %v3854 = vrot.slane %v3852, 4
      %v3855 = vor.u32 %v3854, %v3850
      %v3856 = vrot.slane %v3855, 4
      %v3858 = vshll.u32 %v3270, 16
      %v3860 = vrot.slane %v3858, 5
      %v3861 = vsel %vm251, %v3856, %v3860
      %v3863 = vshrl.u32 %v3271, 16
      %v3865 = vrot.slane %v3863, 4
      %v3866 = vshll.u32 %v3271, 16
      %v3868 = vrot.slane %v3866, 5
      %v3869 = vor.u32 %v3865, %v3868
      %v3870 = vrot.slane %v3869, 4
      %v3872 = vshll.u32 %v3272, 16
      %v3874 = vrot.slane %v3872, 5
      %v3875 = vsel %vm251, %v3870, %v3874
      %v3876 = vshrl.u32 %v3272, 16
      %v3878 = vrot.slane %v3876, 4
      %v3879 = vor.u32 %v3878, %v3874
      %v3880 = vrot.slane %v3879, 4
      %v3882 = vshll.u32 %v3273, 16
      %v3884 = vrot.slane %v3882, 5
      %v3885 = vsel %vm251, %v3880, %v3884
      %v3887 = vshrl.u32 %v3274, 16
      %v3889 = vrot.slane %v3887, 4
      %v3890 = vshll.u32 %v3274, 16
      %v3892 = vrot.slane %v3890, 5
      %v3893 = vor.u32 %v3889, %v3892
      %v3894 = vrot.slane %v3893, 4
      %v3896 = vshll.u32 %v3275, 16
      %v3898 = vrot.slane %v3896, 5
      %v3899 = vsel %vm251, %v3894, %v3898
      %v3900 = vshrl.u32 %v3275, 16
      %v3902 = vrot.slane %v3900, 4
      %v3903 = vor.u32 %v3902, %v3898
      %v3904 = vrot.slane %v3903, 4
      %v3906 = vshll.u32 %v3276, 16
      %v3908 = vrot.slane %v3906, 5
      %v3909 = vsel %vm251, %v3904, %v3908
      %v3911 = vshrl.u32 %v3277, 16
      %v3913 = vrot.slane %v3911, 4
      %v3914 = vshll.u32 %v3277, 16
      %v3916 = vrot.slane %v3914, 5
      %v3917 = vor.u32 %v3913, %v3916
      %v3918 = vrot.slane %v3917, 4
      %v3920 = vshll.u32 %v3278, 16
      %v3922 = vrot.slane %v3920, 5
      %v3923 = vsel %vm251, %v3918, %v3922
      %v3924 = vshrl.u32 %v3278, 16
      %v3926 = vrot.slane %v3924, 4
      %v3927 = vor.u32 %v3926, %v3922
      %v3928 = vrot.slane %v3927, 4
      %v3930 = vshll.u32 %v3279, 16
      %v3932 = vrot.slane %v3930, 5
      %v3933 = vsel %vm251, %v3928, %v3932
      %v3935 = vshrl.u32 %v3280, 16
      %v3937 = vrot.slane %v3935, 4
      %v3938 = vshll.u32 %v3280, 16
      %v3940 = vrot.slane %v3938, 5
      %v3941 = vor.u32 %v3937, %v3940
      %v3942 = vrot.slane %v3941, 4
      %v3944 = vshll.u32 %v3281, 16
      %v3946 = vrot.slane %v3944, 5
      %v3947 = vsel %vm251, %v3942, %v3946
      %v3948 = vshrl.u32 %v3281, 16
      %v3950 = vrot.slane %v3948, 4
      %v3951 = vor.u32 %v3950, %v3946
      %v3952 = vrot.slane %v3951, 4
      %v3954 = vshll.u32 %v3282, 16
      %v3956 = vrot.slane %v3954, 5
      %v3957 = vsel %vm251, %v3952, %v3956
      %v3959 = vshrl.u32 %v3283, 16
      %v3961 = vrot.slane %v3959, 4
      %v3962 = vshll.u32 %v3283, 16
      %v3964 = vrot.slane %v3962, 5
      %v3965 = vor.u32 %v3961, %v3964
      %v3966 = vrot.slane %v3965, 4
      %v3968 = vshll.u32 %v3284, 16
      %v3970 = vrot.slane %v3968, 5
      %v3971 = vsel %vm251, %v3966, %v3970
      %v3972 = vshrl.u32 %v3284, 16
      %v3974 = vrot.slane %v3972, 4
      %v3975 = vor.u32 %v3974, %v3970
      %v3976 = vrot.slane %v3975, 4
      %v3978 = vshll.u32 %v3285, 16
      %v3980 = vrot.slane %v3978, 5
      %v3981 = vsel %vm251, %v3976, %v3980
      %v3983 = vshrl.u32 %v3286, 16
      %v3985 = vrot.slane %v3983, 4
      %v3986 = vshll.u32 %v3286, 16
      %v3988 = vrot.slane %v3986, 5
      %v3989 = vor.u32 %v3985, %v3988
      %v3990 = vrot.slane %v3989, 4
      %v3992 = vshll.u32 %v3287, 16
      %v3994 = vrot.slane %v3992, 5
      %v3995 = vsel %vm251, %v3990, %v3994
      %v3996 = vshrl.u32 %v3287, 16
      %v3998 = vrot.slane %v3996, 4
      %v3999 = vor.u32 %v3998, %v3994
      %v4000 = vrot.slane %v3999, 4
      %v4002 = vshll.u32 %v3288, 16
      %v4004 = vrot.slane %v4002, 5
      %v4005 = vsel %vm251, %v4000, %v4004
      %v4007 = vshrl.u32 %v3289, 16
      %v4009 = vrot.slane %v4007, 4
      %v4010 = vshll.u32 %v3289, 16
      %v4012 = vrot.slane %v4010, 5
      %v4013 = vor.u32 %v4009, %v4012
      %v4014 = vrot.slane %v4013, 4
      %v4016 = vshll.u32 %v3290, 16
      %v4018 = vrot.slane %v4016, 5
      %v4019 = vsel %vm251, %v4014, %v4018
      %v4020 = vshrl.u32 %v3290, 16
      %v4022 = vrot.slane %v4020, 4
      %v4023 = vor.u32 %v4022, %v4018
      %v4024 = vrot.slane %v4023, 4
      %v4026 = vshll.u32 %v3291, 16
      %v4028 = vrot.slane %v4026, 5
      %v4029 = vsel %vm251, %v4024, %v4028
      %s4030 = scalar_lea.vmem %s1, 448
      %v4031 = vld [vmem:[%s4030] sm:$0xf]
      %v4032 = vld [vmem:[%s4030 + $0x4] sm:$0xf]
      %v4033 = vld [vmem:[%s4030 + $0x8] sm:$0xf]
      %v4034 = vld [vmem:[%s4030 + $0xc] sm:$0xf]
      %v4035 = vld [vmem:[%s4030 + $0x10] sm:$0xf]
      %v4036 = vld [vmem:[%s4030 + $0x14] sm:$0xf]
      %v4037 = vld [vmem:[%s4030 + $0x18] sm:$0xf]
      %v4038 = vld [vmem:[%s4030 + $0x1c] sm:$0xf]
      %v4039 = vld [vmem:[%s4030 + $0x20] sm:$0xf]
      %v4040 = vld [vmem:[%s4030 + $0x24] sm:$0xf]
      %v4041 = vld [vmem:[%s4030 + $0x28] sm:$0xf]
      %v4042 = vld [vmem:[%s4030 + $0x2c] sm:$0xf]
      %v4043 = vld [vmem:[%s4030 + $0x30] sm:$0xf]
      %v4044 = vld [vmem:[%s4030 + $0x34] sm:$0xf]
      %v4045 = vld [vmem:[%s4030 + $0x38] sm:$0xf]
      %v4046 = vld [vmem:[%s4030 + $0x3c] sm:$0xf]
      %v4047 = vunpack.c.l.b16 %v3659
      %v4048 = vunpack.c.l.b16 %v3669
      %v4049 = vunpack.c.l.b16 %v3683
      %v4050 = vunpack.c.l.b16 %v3693
      %v4051 = vunpack.c.l.b16 %v3707
      %v4052 = vunpack.c.l.b16 %v3717
      %v4053 = vunpack.c.l.b16 %v3731
      %v4054 = vunpack.c.l.b16 %v3741
      %v4055 = vunpack.c.l.b16 %v3755
      %v4056 = vunpack.c.l.b16 %v3765
      %v4057 = vunpack.c.l.b16 %v3779
      %v4058 = vunpack.c.l.b16 %v3789
      %v4059 = vunpack.c.l.b16 %v3803
      %v4060 = vunpack.c.l.b16 %v3813
      %v4061 = vunpack.c.l.b16 %v3827
      %v4062 = vunpack.c.l.b16 %v3837
      %v4063 = vunpack.c.l.b16 %v3851
      %v4064 = vunpack.c.l.b16 %v3861
      %v4065 = vunpack.c.l.b16 %v3875
      %v4066 = vunpack.c.l.b16 %v3885
      %v4067 = vunpack.c.l.b16 %v3899
      %v4068 = vunpack.c.l.b16 %v3909
      %v4069 = vunpack.c.l.b16 %v3923
      %v4070 = vunpack.c.l.b16 %v3933
      %v4071 = vunpack.c.l.b16 %v3947
      %v4072 = vunpack.c.l.b16 %v3957
      %v4073 = vunpack.c.l.b16 %v3971
      %v4074 = vunpack.c.l.b16 %v3981
      %v4075 = vunpack.c.l.b16 %v3995
      %v4076 = vunpack.c.l.b16 %v4005
      %v4077 = vunpack.c.l.b16 %v4019
      %v4078 = vunpack.c.l.b16 %v4029
      %v4079 = vpack.c.b16 %v4048, %v4047
      %v4080 = vpack.c.b16 %v4050, %v4049
      %v4081 = vpack.c.b16 %v4052, %v4051
      %v4082 = vpack.c.b16 %v4054, %v4053
      %v4083 = vpack.c.b16 %v4056, %v4055
      %v4084 = vpack.c.b16 %v4058, %v4057
      %v4085 = vpack.c.b16 %v4060, %v4059
      %v4086 = vpack.c.b16 %v4062, %v4061
      %v4087 = vpack.c.b16 %v4064, %v4063
      %v4088 = vpack.c.b16 %v4066, %v4065
      %v4089 = vpack.c.b16 %v4068, %v4067
      %v4090 = vpack.c.b16 %v4070, %v4069
      %v4091 = vpack.c.b16 %v4072, %v4071
      %v4092 = vpack.c.b16 %v4074, %v4073
      %v4093 = vpack.c.b16 %v4076, %v4075
      %v4094 = vpack.c.b16 %v4078, %v4077
      %v4127 = vunpack.c.l.b16 %v4031
      %v4128 = vunpack.c.l.b16 %v4032
      %v4129 = vunpack.c.l.b16 %v4033
      %v4130 = vunpack.c.l.b16 %v4034
      %v4131 = vunpack.c.l.b16 %v4035
      %v4132 = vunpack.c.l.b16 %v4036
      %v4133 = vunpack.c.l.b16 %v4037
      %v4134 = vunpack.c.l.b16 %v4038
      %v4135 = vunpack.c.l.b16 %v4039
      %v4136 = vunpack.c.l.b16 %v4040
      %v4137 = vunpack.c.l.b16 %v4041
      %v4138 = vunpack.c.l.b16 %v4042
      %v4139 = vunpack.c.l.b16 %v4043
      %v4140 = vunpack.c.l.b16 %v4044
      %v4141 = vunpack.c.l.b16 %v4045
      %v4142 = vunpack.c.l.b16 %v4046
      %v4143 = vpack.c.b16 %v4128, %v4127
      %v4144 = vpack.c.b16 %v4130, %v4129
      %v4145 = vpack.c.b16 %v4132, %v4131
      %v4146 = vpack.c.b16 %v4134, %v4133
      %v4147 = vpack.c.b16 %v4136, %v4135
      %v4148 = vpack.c.b16 %v4138, %v4137
      %v4149 = vpack.c.b16 %v4140, %v4139
      %v4150 = vpack.c.b16 %v4142, %v4141
      %4159 = vmatprep.subr.bf16.mxu0 0
      %4160 = vmatpush1.bf16.msra.mxu0 %v4143
      %4161 = vmatprep.subr.bf16.mxu0 0
      %4162 = vmatpush1.bf16.msra.mxu0 %v4144
      %4163 = vmatprep.subr.bf16.mxu0 0
      %4164 = vmatpush1.bf16.msra.mxu0 %v4145
      %4165 = vmatprep.subr.bf16.mxu0 0
      %4166 = vmatpush1.bf16.msra.mxu0 %v4146
      %4167 = vmatprep.subr.bf16.mxu0 0
      %4168 = vmatpush1.bf16.msra.mxu0 %v4147
      %4169 = vmatprep.subr.bf16.mxu0 0
      %4170 = vmatpush1.bf16.msra.mxu0 %v4148
      %4171 = vmatprep.subr.bf16.mxu0 0
      %4172 = vmatpush1.bf16.msra.mxu0 %v4149
      %4173 = vmatprep.subr.bf16.mxu0 0
      %4174 = vmatpush1.bf16.msra.mxu0 %v4150
      %4175 = vmatprep.subr.bf16.mxu0 0
      %4176 = vmatpush1.bf16.msra.mxu0 0
      %4177 = vmatprep.subr.bf16.mxu0 0
      %4178 = vmatpush1.bf16.msra.mxu0 0
      %4179 = vmatprep.subr.bf16.mxu0 0
      %4180 = vmatpush1.bf16.msra.mxu0 0
      %4181 = vmatprep.subr.bf16.mxu0 0
      %4182 = vmatpush1.bf16.msra.mxu0 0
      %4183 = vmatprep.subr.bf16.mxu0 0
      %4184 = vmatpush1.bf16.msra.mxu0 0
      %4185 = vmatprep.subr.bf16.mxu0 0
      %4186 = vmatpush1.bf16.msra.mxu0 0
      %4187 = vmatprep.subr.bf16.mxu0 0
      %4188 = vmatpush1.bf16.msra.mxu0 0
      %4189 = vmatprep.subr.bf16.mxu0 0
      %4190 = vmatpush1.bf16.msra.mxu0 0
      %4191 = vmatprep.mubr.bf16.mxu0 0
      %4192 = vmatmul.mubr.bf16.gmra.mrb[0].mxu0 %v4079
      %v4193 = vpop.f32.mrb[0].mxu0
      %v4194 = vadd.f32 0.0, %v4193
      %v4195 = vpop.f32.mrb[0].mxu0
      %v4196 = vpop.f32.mrb[0].mxu0
      %v4197 = vadd.f32 0.0, %v4196
      %v4198 = vpop.f32.mrb[0].mxu0
      %4199 = vmatprep.mubr.bf16.mxu0 0
      %4200 = vmatmul.mubr.bf16.gmra.mrb[0].mxu0 %v4080
      %v4201 = vpop.f32.mrb[0].mxu0
      %v4202 = vadd.f32 0.0, %v4201
      %v4203 = vpop.f32.mrb[0].mxu0
      %v4204 = vpop.f32.mrb[0].mxu0
      %v4205 = vadd.f32 0.0, %v4204
      %v4206 = vpop.f32.mrb[0].mxu0
      %4207 = vmatprep.mubr.bf16.mxu0 0
      %4208 = vmatmul.mubr.bf16.gmra.mrb[0].mxu0 %v4081
      %v4209 = vpop.f32.mrb[0].mxu0
      %v4210 = vadd.f32 0.0, %v4209
      %v4211 = vpop.f32.mrb[0].mxu0
      %v4212 = vpop.f32.mrb[0].mxu0
      %v4213 = vadd.f32 0.0, %v4212
      %v4214 = vpop.f32.mrb[0].mxu0
      %4215 = vmatprep.mubr.bf16.mxu0 0
      %4216 = vmatmul.mubr.bf16.gmra.mrb[0].mxu0 %v4082
      %v4217 = vpop.f32.mrb[0].mxu0
      %v4218 = vadd.f32 0.0, %v4217
      %v4219 = vpop.f32.mrb[0].mxu0
      %v4220 = vpop.f32.mrb[0].mxu0
      %v4221 = vadd.f32 0.0, %v4220
      %v4222 = vpop.f32.mrb[0].mxu0
      %4223 = vmatprep.mubr.bf16.mxu0 0
      %4224 = vmatmul.mubr.bf16.gmra.mrb[0].mxu0 %v4083
      %v4225 = vpop.f32.mrb[0].mxu0
      %v4226 = vadd.f32 0.0, %v4225
      %v4227 = vpop.f32.mrb[0].mxu0
      %v4228 = vpop.f32.mrb[0].mxu0
      %v4229 = vadd.f32 0.0, %v4228
      %v4230 = vpop.f32.mrb[0].mxu0
      %4231 = vmatprep.mubr.bf16.mxu0 0
      %4232 = vmatmul.mubr.bf16.gmra.mrb[0].mxu0 %v4084
      %v4233 = vpop.f32.mrb[0].mxu0
      %v4234 = vadd.f32 0.0, %v4233
      %v4235 = vpop.f32.mrb[0].mxu0
      %v4236 = vpop.f32.mrb[0].mxu0
      %v4237 = vadd.f32 0.0, %v4236
      %v4238 = vpop.f32.mrb[0].mxu0
      %4239 = vmatprep.mubr.bf16.mxu0 0
      %4240 = vmatmul.mubr.bf16.gmra.mrb[0].mxu0 %v4085
      %v4241 = vpop.f32.mrb[0].mxu0
      %v4242 = vadd.f32 0.0, %v4241
      %v4243 = vpop.f32.mrb[0].mxu0
      %v4244 = vpop.f32.mrb[0].mxu0
      %v4245 = vadd.f32 0.0, %v4244
      %v4246 = vpop.f32.mrb[0].mxu0
      %4247 = vmatprep.mubr.bf16.mxu0 0
      %4248 = vmatmul.mubr.bf16.gmra.mrb[0].mxu0 %v4086
      %v4249 = vpop.f32.mrb[0].mxu0
      %v4250 = vadd.f32 0.0, %v4249
      %v4251 = vpop.f32.mrb[0].mxu0
      %v4252 = vpop.f32.mrb[0].mxu0
      %v4253 = vadd.f32 0.0, %v4252
      %v4254 = vpop.f32.mrb[0].mxu0
      %4255 = vmatprep.mubr.bf16.mxu0 0
      %4256 = vmatmul.mubr.bf16.gmra.mrb[0].mxu0 %v4087
      %v4257 = vpop.f32.mrb[0].mxu0
      %v4258 = vadd.f32 0.0, %v4257
      %v4259 = vpop.f32.mrb[0].mxu0
      %v4260 = vpop.f32.mrb[0].mxu0
      %v4261 = vadd.f32 0.0, %v4260
      %v4262 = vpop.f32.mrb[0].mxu0
      %4263 = vmatprep.mubr.bf16.mxu0 0
      %4264 = vmatmul.mubr.bf16.gmra.mrb[0].mxu0 %v4088
      %v4265 = vpop.f32.mrb[0].mxu0
      %v4266 = vadd.f32 0.0, %v4265
      %v4267 = vpop.f32.mrb[0].mxu0
      %v4268 = vpop.f32.mrb[0].mxu0
      %v4269 = vadd.f32 0.0, %v4268
      %v4270 = vpop.f32.mrb[0].mxu0
      %4271 = vmatprep.mubr.bf16.mxu0 0
      %4272 = vmatmul.mubr.bf16.gmra.mrb[0].mxu0 %v4089
      %v4273 = vpop.f32.mrb[0].mxu0
      %v4274 = vadd.f32 0.0, %v4273
      %v4275 = vpop.f32.mrb[0].mxu0
      %v4276 = vpop.f32.mrb[0].mxu0
      %v4277 = vadd.f32 0.0, %v4276
      %v4278 = vpop.f32.mrb[0].mxu0
      %4279 = vmatprep.mubr.bf16.mxu0 0
      %4280 = vmatmul.mubr.bf16.gmra.mrb[0].mxu0 %v4090
      %v4281 = vpop.f32.mrb[0].mxu0
      %v4282 = vadd.f32 0.0, %v4281
      %v4283 = vpop.f32.mrb[0].mxu0
      %v4284 = vpop.f32.mrb[0].mxu0
      %v4285 = vadd.f32 0.0, %v4284
      %v4286 = vpop.f32.mrb[0].mxu0
      %4287 = vmatprep.mubr.bf16.mxu0 0
      %4288 = vmatmul.mubr.bf16.gmra.mrb[0].mxu0 %v4091
      %v4289 = vpop.f32.mrb[0].mxu0
      %v4290 = vadd.f32 0.0, %v4289
      %v4291 = vpop.f32.mrb[0].mxu0
      %v4292 = vpop.f32.mrb[0].mxu0
      %v4293 = vadd.f32 0.0, %v4292
      %v4294 = vpop.f32.mrb[0].mxu0
      %4295 = vmatprep.mubr.bf16.mxu0 0
      %4296 = vmatmul.mubr.bf16.gmra.mrb[0].mxu0 %v4092
      %v4297 = vpop.f32.mrb[0].mxu0
      %v4298 = vadd.f32 0.0, %v4297
      %v4299 = vpop.f32.mrb[0].mxu0
      %v4300 = vpop.f32.mrb[0].mxu0
      %v4301 = vadd.f32 0.0, %v4300
      %v4302 = vpop.f32.mrb[0].mxu0
      %4303 = vmatprep.mubr.bf16.mxu0 0
      %4304 = vmatmul.mubr.bf16.gmra.mrb[0].mxu0 %v4093
      %v4305 = vpop.f32.mrb[0].mxu0
      %v4306 = vadd.f32 0.0, %v4305
      %v4307 = vpop.f32.mrb[0].mxu0
      %v4308 = vpop.f32.mrb[0].mxu0
      %v4309 = vadd.f32 0.0, %v4308
      %v4310 = vpop.f32.mrb[0].mxu0
      %4311 = vmatprep.mubr.bf16.mxu0 0
      %4312 = vmatmul.mubr.bf16.gmra.mrb[0].mxu0 %v4094
      %v4313 = vpop.f32.mrb[0].mxu0
      %v4314 = vadd.f32 0.0, %v4313
      %v4315 = vpop.f32.mrb[0].mxu0
      %v4316 = vpop.f32.mrb[0].mxu0
      %v4317 = vadd.f32 0.0, %v4316
      %v4318 = vpop.f32.mrb[0].mxu0
      %4319 = vdwg.mxu0
      %v4320 = vadd.f32 %v3614, %v4194
      %v4321 = vadd.f32 %v3615, %v4197
      %v4322 = vadd.f32 %v3616, %v4202
      %v4323 = vadd.f32 %v3617, %v4205
      %v4324 = vadd.f32 %v3618, %v4210
      %v4325 = vadd.f32 %v3619, %v4213
      %v4326 = vadd.f32 %v3620, %v4218
      %v4327 = vadd.f32 %v3621, %v4221
      %v4328 = vadd.f32 %v3622, %v4226
      %v4329 = vadd.f32 %v3623, %v4229
      %v4330 = vadd.f32 %v3624, %v4234
      %v4331 = vadd.f32 %v3625, %v4237
      %v4332 = vadd.f32 %v3626, %v4242
      %v4333 = vadd.f32 %v3627, %v4245
      %v4334 = vadd.f32 %v3628, %v4250
      %v4335 = vadd.f32 %v3629, %v4253
      %v4336 = vadd.f32 %v3630, %v4258
      %v4337 = vadd.f32 %v3631, %v4261
      %v4338 = vadd.f32 %v3632, %v4266
      %v4339 = vadd.f32 %v3633, %v4269
      %v4340 = vadd.f32 %v3634, %v4274
      %v4341 = vadd.f32 %v3635, %v4277
      %v4342 = vadd.f32 %v3636, %v4282
      %v4343 = vadd.f32 %v3637, %v4285
      %v4344 = vadd.f32 %v3638, %v4290
      %v4345 = vadd.f32 %v3639, %v4293
      %v4346 = vadd.f32 %v3640, %v4298
      %v4347 = vadd.f32 %v3641, %v4301
      %v4348 = vadd.f32 %v3642, %v4306
      %v4349 = vadd.f32 %v3643, %v4309
      %v4350 = vadd.f32 %v3644, %v4314
      %v4351 = vadd.f32 %v3645, %v4317
      %v4368 = vrot.slane %v3244, 5
      %v4369 = vrot.slane %v4368, 4
      %v4370 = vrot.slane %v3245, 5
      %v4371 = vsel %vm1249, %v4369, %v4370
      %v4372 = vrot.slane %v4370, 4
      %v4373 = vrot.slane %v3246, 5
      %v4374 = vsel %vm1249, %v4372, %v4373
      %v4375 = vrot.slane %v3247, 5
      %v4376 = vrot.slane %v4375, 4
      %v4377 = vrot.slane %v3248, 5
      %v4378 = vsel %vm1249, %v4376, %v4377
      %v4379 = vrot.slane %v4377, 4
      %v4380 = vrot.slane %v3249, 5
      %v4381 = vsel %vm1249, %v4379, %v4380
      %v4382 = vrot.slane %v3250, 5
      %v4383 = vrot.slane %v4382, 4
      %v4384 = vrot.slane %v3251, 5
      %v4385 = vsel %vm1249, %v4383, %v4384
      %v4386 = vrot.slane %v4384, 4
      %v4387 = vrot.slane %v3252, 5
      %v4388 = vsel %vm1249, %v4386, %v4387
      %v4389 = vrot.slane %v3253, 5
      %v4390 = vrot.slane %v4389, 4
      %v4391 = vrot.slane %v3254, 5
      %v4392 = vsel %vm1249, %v4390, %v4391
      %v4393 = vrot.slane %v4391, 4
      %v4394 = vrot.slane %v3255, 5
      %v4395 = vsel %vm1249, %v4393, %v4394
      %v4396 = vrot.slane %v3256, 5
      %v4397 = vrot.slane %v4396, 4
      %v4398 = vrot.slane %v3257, 5
      %v4399 = vsel %vm1249, %v4397, %v4398
      %v4400 = vrot.slane %v4398, 4
      %v4401 = vrot.slane %v3258, 5
      %v4402 = vsel %vm1249, %v4400, %v4401
      %v4403 = vrot.slane %v3259, 5
      %v4404 = vrot.slane %v4403, 4
      %v4405 = vrot.slane %v3260, 5
      %v4406 = vsel %vm1249, %v4404, %v4405
      %v4407 = vrot.slane %v4405, 4
      %v4408 = vrot.slane %v3261, 5
      %v4409 = vsel %vm1249, %v4407, %v4408
      %v4410 = vrot.slane %v3262, 5
      %v4411 = vrot.slane %v4410, 4
      %v4412 = vrot.slane %v3263, 5
      %v4413 = vsel %vm1249, %v4411, %v4412
      %v4414 = vrot.slane %v4412, 4
      %v4415 = vrot.slane %v3264, 5
      %v4416 = vsel %vm1249, %v4414, %v4415
      %v4417 = vrot.slane %v3265, 5
      %v4418 = vrot.slane %v4417, 4
      %v4419 = vrot.slane %v3266, 5
      %v4420 = vsel %vm1249, %v4418, %v4419
      %v4421 = vrot.slane %v4419, 4
      %v4422 = vrot.slane %v3267, 5
      %v4423 = vsel %vm1249, %v4421, %v4422
      %v4424 = vrot.slane %v3268, 5
      %v4425 = vrot.slane %v4424, 4
      %v4426 = vrot.slane %v3269, 5
      %v4427 = vsel %vm1249, %v4425, %v4426
      %v4428 = vrot.slane %v4426, 4
      %v4429 = vrot.slane %v3270, 5
      %v4430 = vsel %vm1249, %v4428, %v4429
      %v4431 = vrot.slane %v3271, 5
      %v4432 = vrot.slane %v4431, 4
      %v4433 = vrot.slane %v3272, 5
      %v4434 = vsel %vm1249, %v4432, %v4433
      %v4435 = vrot.slane %v4433, 4
      %v4436 = vrot.slane %v3273, 5
      %v4437 = vsel %vm1249, %v4435, %v4436
      %v4438 = vrot.slane %v3274, 5
      %v4439 = vrot.slane %v4438, 4
      %v4440 = vrot.slane %v3275, 5
      %v4441 = vsel %vm1249, %v4439, %v4440
      %v4442 = vrot.slane %v4440, 4
      %v4443 = vrot.slane %v3276, 5
      %v4444 = vsel %vm1249, %v4442, %v4443
      %v4445 = vrot.slane %v3277, 5
      %v4446 = vrot.slane %v4445, 4
      %v4447 = vrot.slane %v3278, 5
      %v4448 = vsel %vm1249, %v4446, %v4447
      %v4449 = vrot.slane %v4447, 4
      %v4450 = vrot.slane %v3279, 5
      %v4451 = vsel %vm1249, %v4449, %v4450
      %v4452 = vrot.slane %v3280, 5
      %v4453 = vrot.slane %v4452, 4
      %v4454 = vrot.slane %v3281, 5
      %v4455 = vsel %vm1249, %v4453, %v4454
      %v4456 = vrot.slane %v4454, 4
      %v4457 = vrot.slane %v3282, 5
      %v4458 = vsel %vm1249, %v4456, %v4457
      %v4459 = vrot.slane %v3283, 5
      %v4460 = vrot.slane %v4459, 4
      %v4461 = vrot.slane %v3284, 5
      %v4462 = vsel %vm1249, %v4460, %v4461
      %v4463 = vrot.slane %v4461, 4
      %v4464 = vrot.slane %v3285, 5
      %v4465 = vsel %vm1249, %v4463, %v4464
      %v4466 = vrot.slane %v3286, 5
      %v4467 = vrot.slane %v4466, 4
      %v4468 = vrot.slane %v3287, 5
      %v4469 = vsel %vm1249, %v4467, %v4468
      %v4470 = vrot.slane %v4468, 4
      %v4471 = vrot.slane %v3288, 5
      %v4472 = vsel %vm1249, %v4470, %v4471
      %v4473 = vrot.slane %v3289, 5
      %v4474 = vrot.slane %v4473, 4
      %v4475 = vrot.slane %v3290, 5
      %v4476 = vsel %vm1249, %v4474, %v4475
      %v4477 = vrot.slane %v4475, 4
      %v4478 = vrot.slane %v3291, 5
      %v4479 = vsel %vm1249, %v4477, %v4478
      %s4480 = scalar_lea.vmem %s1, 512
      %v4481 = vld [vmem:[%s4480] sm:$0xf]
      %v4482 = vld [vmem:[%s4480 + $0x4] sm:$0xf]
      %v4483 = vld [vmem:[%s4480 + $0x8] sm:$0xf]
      %v4484 = vld [vmem:[%s4480 + $0xc] sm:$0xf]
      %v4485 = vld [vmem:[%s4480 + $0x10] sm:$0xf]
      %v4486 = vld [vmem:[%s4480 + $0x14] sm:$0xf]
      %v4487 = vld [vmem:[%s4480 + $0x18] sm:$0xf]
      %v4488 = vld [vmem:[%s4480 + $0x1c] sm:$0xf]
      %v4489 = vld [vmem:[%s4480 + $0x20] sm:$0xf]
      %v4490 = vld [vmem:[%s4480 + $0x24] sm:$0xf]
      %v4491 = vld [vmem:[%s4480 + $0x28] sm:$0xf]
      %v4492 = vld [vmem:[%s4480 + $0x2c] sm:$0xf]
      %v4493 = vld [vmem:[%s4480 + $0x30] sm:$0xf]
      %v4494 = vld [vmem:[%s4480 + $0x34] sm:$0xf]
      %v4495 = vld [vmem:[%s4480 + $0x38] sm:$0xf]
      %v4496 = vld [vmem:[%s4480 + $0x3c] sm:$0xf]
      %v4497 = vunpack.c.l.b16 %v4371
      %v4498 = vunpack.c.l.b16 %v4374
      %v4499 = vunpack.c.l.b16 %v4378
      %v4500 = vunpack.c.l.b16 %v4381
      %v4501 = vunpack.c.l.b16 %v4385
      %v4502 = vunpack.c.l.b16 %v4388
      %v4503 = vunpack.c.l.b16 %v4392
      %v4504 = vunpack.c.l.b16 %v4395
      %v4505 = vunpack.c.l.b16 %v4399
      %v4506 = vunpack.c.l.b16 %v4402
      %v4507 = vunpack.c.l.b16 %v4406
      %v4508 = vunpack.c.l.b16 %v4409
      %v4509 = vunpack.c.l.b16 %v4413
      %v4510 = vunpack.c.l.b16 %v4416
      %v4511 = vunpack.c.l.b16 %v4420
      %v4512 = vunpack.c.l.b16 %v4423
      %v4513 = vunpack.c.l.b16 %v4427
      %v4514 = vunpack.c.l.b16 %v4430
      %v4515 = vunpack.c.l.b16 %v4434
      %v4516 = vunpack.c.l.b16 %v4437
      %v4517 = vunpack.c.l.b16 %v4441
      %v4518 = vunpack.c.l.b16 %v4444
      %v4519 = vunpack.c.l.b16 %v4448
      %v4520 = vunpack.c.l.b16 %v4451
      %v4521 = vunpack.c.l.b16 %v4455
      %v4522 = vunpack.c.l.b16 %v4458
      %v4523 = vunpack.c.l.b16 %v4462
      %v4524 = vunpack.c.l.b16 %v4465
      %v4525 = vunpack.c.l.b16 %v4469
      %v4526 = vunpack.c.l.b16 %v4472
      %v4527 = vunpack.c.l.b16 %v4476
      %v4528 = vunpack.c.l.b16 %v4479
      %v4529 = vpack.c.b16 %v4498, %v4497
      %v4530 = vpack.c.b16 %v4500, %v4499
      %v4531 = vpack.c.b16 %v4502, %v4501
      %v4532 = vpack.c.b16 %v4504, %v4503
      %v4533 = vpack.c.b16 %v4506, %v4505
      %v4534 = vpack.c.b16 %v4508, %v4507
      %v4535 = vpack.c.b16 %v4510, %v4509
      %v4536 = vpack.c.b16 %v4512, %v4511
      %v4537 = vpack.c.b16 %v4514, %v4513
      %v4538 = vpack.c.b16 %v4516, %v4515
      %v4539 = vpack.c.b16 %v4518, %v4517
      %v4540 = vpack.c.b16 %v4520, %v4519
      %v4541 = vpack.c.b16 %v4522, %v4521
      %v4542 = vpack.c.b16 %v4524, %v4523
      %v4543 = vpack.c.b16 %v4526, %v4525
      %v4544 = vpack.c.b16 %v4528, %v4527
      %v4577 = vunpack.c.l.b16 %v4481
      %v4578 = vunpack.c.l.b16 %v4482
      %v4579 = vunpack.c.l.b16 %v4483
      %v4580 = vunpack.c.l.b16 %v4484
      %v4581 = vunpack.c.l.b16 %v4485
      %v4582 = vunpack.c.l.b16 %v4486
      %v4583 = vunpack.c.l.b16 %v4487
      %v4584 = vunpack.c.l.b16 %v4488
      %v4585 = vunpack.c.l.b16 %v4489
      %v4586 = vunpack.c.l.b16 %v4490
      %v4587 = vunpack.c.l.b16 %v4491
      %v4588 = vunpack.c.l.b16 %v4492
      %v4589 = vunpack.c.l.b16 %v4493
      %v4590 = vunpack.c.l.b16 %v4494
      %v4591 = vunpack.c.l.b16 %v4495
      %v4592 = vunpack.c.l.b16 %v4496
      %v4593 = vpack.c.b16 %v4578, %v4577
      %v4594 = vpack.c.b16 %v4580, %v4579
      %v4595 = vpack.c.b16 %v4582, %v4581
      %v4596 = vpack.c.b16 %v4584, %v4583
      %v4597 = vpack.c.b16 %v4586, %v4585
      %v4598 = vpack.c.b16 %v4588, %v4587
      %v4599 = vpack.c.b16 %v4590, %v4589
      %v4600 = vpack.c.b16 %v4592, %v4591
      %4609 = vmatprep.subr.bf16.mxu0 0
      %4610 = vmatpush1.bf16.msra.mxu0 %v4593
      %4611 = vmatprep.subr.bf16.mxu0 0
      %4612 = vmatpush1.bf16.msra.mxu0 %v4594
      %4613 = vmatprep.subr.bf16.mxu0 0
      %4614 = vmatpush1.bf16.msra.mxu0 %v4595
      %4615 = vmatprep.subr.bf16.mxu0 0
      %4616 = vmatpush1.bf16.msra.mxu0 %v4596
      %4617 = vmatprep.subr.bf16.mxu0 0
      %4618 = vmatpush1.bf16.msra.mxu0 %v4597
      %4619 = vmatprep.subr.bf16.mxu0 0
      %4620 = vmatpush1.bf16.msra.mxu0 %v4598
      %4621 = vmatprep.subr.bf16.mxu0 0
      %4622 = vmatpush1.bf16.msra.mxu0 %v4599
      %4623 = vmatprep.subr.bf16.mxu0 0
      %4624 = vmatpush1.bf16.msra.mxu0 %v4600
      %4625 = vmatprep.subr.bf16.mxu0 0
      %4626 = vmatpush1.bf16.msra.mxu0 0
      %4627 = vmatprep.subr.bf16.mxu0 0
      %4628 = vmatpush1.bf16.msra.mxu0 0
      %4629 = vmatprep.subr.bf16.mxu0 0
      %4630 = vmatpush1.bf16.msra.mxu0 0
      %4631 = vmatprep.subr.bf16.mxu0 0
      %4632 = vmatpush1.bf16.msra.mxu0 0
      %4633 = vmatprep.subr.bf16.mxu0 0
      %4634 = vmatpush1.bf16.msra.mxu0 0
      %4635 = vmatprep.subr.bf16.mxu0 0
      %4636 = vmatpush1.bf16.msra.mxu0 0
      %4637 = vmatprep.subr.bf16.mxu0 0
      %4638 = vmatpush1.bf16.msra.mxu0 0
      %4639 = vmatprep.subr.bf16.mxu0 0
      %4640 = vmatpush1.bf16.msra.mxu0 0
      %4641 = vmatprep.mubr.bf16.mxu0 0
      %4642 = vmatmul.mubr.bf16.gmra.mrb[0].mxu0 %v4529
      %v4643 = vpop.f32.mrb[0].mxu0
      %v4644 = vadd.f32 0.0, %v4643
      %v4645 = vpop.f32.mrb[0].mxu0
      %v4646 = vpop.f32.mrb[0].mxu0
      %v4647 = vadd.f32 0.0, %v4646
      %v4648 = vpop.f32.mrb[0].mxu0
      %4649 = vmatprep.mubr.bf16.mxu0 0
      %4650 = vmatmul.mubr.bf16.gmra.mrb[0].mxu0 %v4530
      %v4651 = vpop.f32.mrb[0].mxu0
      %v4652 = vadd.f32 0.0, %v4651
      %v4653 = vpop.f32.mrb[0].mxu0
      %v4654 = vpop.f32.mrb[0].mxu0
      %v4655 = vadd.f32 0.0, %v4654
      %v4656 = vpop.f32.mrb[0].mxu0
      %4657 = vmatprep.mubr.bf16.mxu0 0
      %4658 = vmatmul.mubr.bf16.gmra.mrb[0].mxu0 %v4531
      %v4659 = vpop.f32.mrb[0].mxu0
      %v4660 = vadd.f32 0.0, %v4659
      %v4661 = vpop.f32.mrb[0].mxu0
      %v4662 = vpop.f32.mrb[0].mxu0
      %v4663 = vadd.f32 0.0, %v4662
      %v4664 = vpop.f32.mrb[0].mxu0
      %4665 = vmatprep.mubr.bf16.mxu0 0
      %4666 = vmatmul.mubr.bf16.gmra.mrb[0].mxu0 %v4532
      %v4667 = vpop.f32.mrb[0].mxu0
      %v4668 = vadd.f32 0.0, %v4667
      %v4669 = vpop.f32.mrb[0].mxu0
      %v4670 = vpop.f32.mrb[0].mxu0
      %v4671 = vadd.f32 0.0, %v4670
      %v4672 = vpop.f32.mrb[0].mxu0
      %4673 = vmatprep.mubr.bf16.mxu0 0
      %4674 = vmatmul.mubr.bf16.gmra.mrb[0].mxu0 %v4533
      %v4675 = vpop.f32.mrb[0].mxu0
      %v4676 = vadd.f32 0.0, %v4675
      %v4677 = vpop.f32.mrb[0].mxu0
      %v4678 = vpop.f32.mrb[0].mxu0
      %v4679 = vadd.f32 0.0, %v4678
      %v4680 = vpop.f32.mrb[0].mxu0
      %4681 = vmatprep.mubr.bf16.mxu0 0
      %4682 = vmatmul.mubr.bf16.gmra.mrb[0].mxu0 %v4534
      %v4683 = vpop.f32.mrb[0].mxu0
      %v4684 = vadd.f32 0.0, %v4683
      %v4685 = vpop.f32.mrb[0].mxu0
      %v4686 = vpop.f32.mrb[0].mxu0
      %v4687 = vadd.f32 0.0, %v4686
      %v4688 = vpop.f32.mrb[0].mxu0
      %4689 = vmatprep.mubr.bf16.mxu0 0
      %4690 = vmatmul.mubr.bf16.gmra.mrb[0].mxu0 %v4535
      %v4691 = vpop.f32.mrb[0].mxu0
      %v4692 = vadd.f32 0.0, %v4691
      %v4693 = vpop.f32.mrb[0].mxu0
      %v4694 = vpop.f32.mrb[0].mxu0
      %v4695 = vadd.f32 0.0, %v4694
      %v4696 = vpop.f32.mrb[0].mxu0
      %4697 = vmatprep.mubr.bf16.mxu0 0
      %4698 = vmatmul.mubr.bf16.gmra.mrb[0].mxu0 %v4536
      %v4699 = vpop.f32.mrb[0].mxu0
      %v4700 = vadd.f32 0.0, %v4699
      %v4701 = vpop.f32.mrb[0].mxu0
      %v4702 = vpop.f32.mrb[0].mxu0
      %v4703 = vadd.f32 0.0, %v4702
      %v4704 = vpop.f32.mrb[0].mxu0
      %4705 = vmatprep.mubr.bf16.mxu0 0
      %4706 = vmatmul.mubr.bf16.gmra.mrb[0].mxu0 %v4537
      %v4707 = vpop.f32.mrb[0].mxu0
      %v4708 = vadd.f32 0.0, %v4707
      %v4709 = vpop.f32.mrb[0].mxu0
      %v4710 = vpop.f32.mrb[0].mxu0
      %v4711 = vadd.f32 0.0, %v4710
      %v4712 = vpop.f32.mrb[0].mxu0
      %4713 = vmatprep.mubr.bf16.mxu0 0
      %4714 = vmatmul.mubr.bf16.gmra.mrb[0].mxu0 %v4538
      %v4715 = vpop.f32.mrb[0].mxu0
      %v4716 = vadd.f32 0.0, %v4715
      %v4717 = vpop.f32.mrb[0].mxu0
      %v4718 = vpop.f32.mrb[0].mxu0
      %v4719 = vadd.f32 0.0, %v4718
      %v4720 = vpop.f32.mrb[0].mxu0
      %4721 = vmatprep.mubr.bf16.mxu0 0
      %4722 = vmatmul.mubr.bf16.gmra.mrb[0].mxu0 %v4539
      %v4723 = vpop.f32.mrb[0].mxu0
      %v4724 = vadd.f32 0.0, %v4723
      %v4725 = vpop.f32.mrb[0].mxu0
      %v4726 = vpop.f32.mrb[0].mxu0
      %v4727 = vadd.f32 0.0, %v4726
      %v4728 = vpop.f32.mrb[0].mxu0
      %4729 = vmatprep.mubr.bf16.mxu0 0
      %4730 = vmatmul.mubr.bf16.gmra.mrb[0].mxu0 %v4540
      %v4731 = vpop.f32.mrb[0].mxu0
      %v4732 = vadd.f32 0.0, %v4731
      %v4733 = vpop.f32.mrb[0].mxu0
      %v4734 = vpop.f32.mrb[0].mxu0
      %v4735 = vadd.f32 0.0, %v4734
      %v4736 = vpop.f32.mrb[0].mxu0
      %4737 = vmatprep.mubr.bf16.mxu0 0
      %4738 = vmatmul.mubr.bf16.gmra.mrb[0].mxu0 %v4541
      %v4739 = vpop.f32.mrb[0].mxu0
      %v4740 = vadd.f32 0.0, %v4739
      %v4741 = vpop.f32.mrb[0].mxu0
      %v4742 = vpop.f32.mrb[0].mxu0
      %v4743 = vadd.f32 0.0, %v4742
      %v4744 = vpop.f32.mrb[0].mxu0
      %4745 = vmatprep.mubr.bf16.mxu0 0
      %4746 = vmatmul.mubr.bf16.gmra.mrb[0].mxu0 %v4542
      %v4747 = vpop.f32.mrb[0].mxu0
      %v4748 = vadd.f32 0.0, %v4747
      %v4749 = vpop.f32.mrb[0].mxu0
      %v4750 = vpop.f32.mrb[0].mxu0
      %v4751 = vadd.f32 0.0, %v4750
      %v4752 = vpop.f32.mrb[0].mxu0
      %4753 = vmatprep.mubr.bf16.mxu0 0
      %4754 = vmatmul.mubr.bf16.gmra.mrb[0].mxu0 %v4543
      %v4755 = vpop.f32.mrb[0].mxu0
      %v4756 = vadd.f32 0.0, %v4755
      %v4757 = vpop.f32.mrb[0].mxu0
      %v4758 = vpop.f32.mrb[0].mxu0
      %v4759 = vadd.f32 0.0, %v4758
      %v4760 = vpop.f32.mrb[0].mxu0
      %4761 = vmatprep.mubr.bf16.mxu0 0
      %4762 = vmatmul.mubr.bf16.gmra.mrb[0].mxu0 %v4544
      %v4763 = vpop.f32.mrb[0].mxu0
      %v4764 = vadd.f32 0.0, %v4763
      %v4765 = vpop.f32.mrb[0].mxu0
      %v4766 = vpop.f32.mrb[0].mxu0
      %v4767 = vadd.f32 0.0, %v4766
      %v4768 = vpop.f32.mrb[0].mxu0
      %4769 = vdwg.mxu0
      %v4770 = vadd.f32 %v4320, %v4644
      %v4771 = vadd.f32 %v4321, %v4647
      %v4772 = vadd.f32 %v4322, %v4652
      %v4773 = vadd.f32 %v4323, %v4655
      %v4774 = vadd.f32 %v4324, %v4660
      %v4775 = vadd.f32 %v4325, %v4663
      %v4776 = vadd.f32 %v4326, %v4668
      %v4777 = vadd.f32 %v4327, %v4671
      %v4778 = vadd.f32 %v4328, %v4676
      %v4779 = vadd.f32 %v4329, %v4679
      %v4780 = vadd.f32 %v4330, %v4684
      %v4781 = vadd.f32 %v4331, %v4687
      %v4782 = vadd.f32 %v4332, %v4692
      %v4783 = vadd.f32 %v4333, %v4695
      %v4784 = vadd.f32 %v4334, %v4700
      %v4785 = vadd.f32 %v4335, %v4703
      %v4786 = vadd.f32 %v4336, %v4708
      %v4787 = vadd.f32 %v4337, %v4711
      %v4788 = vadd.f32 %v4338, %v4716
      %v4789 = vadd.f32 %v4339, %v4719
      %v4790 = vadd.f32 %v4340, %v4724
      %v4791 = vadd.f32 %v4341, %v4727
      %v4792 = vadd.f32 %v4342, %v4732
      %v4793 = vadd.f32 %v4343, %v4735
      %v4794 = vadd.f32 %v4344, %v4740
      %v4795 = vadd.f32 %v4345, %v4743
      %v4796 = vadd.f32 %v4346, %v4748
      %v4797 = vadd.f32 %v4347, %v4751
      %v4798 = vadd.f32 %v4348, %v4756
      %v4799 = vadd.f32 %v4349, %v4759
      %v4800 = vadd.f32 %v4350, %v4764
      %v4801 = vadd.f32 %v4351, %v4767
      %v4802 = vpack.c.bf16 %v4771, %v4770
      %v4803 = vpack.c.bf16 %v4773, %v4772
      %v4804 = vpack.c.bf16 %v4775, %v4774
      %v4805 = vpack.c.bf16 %v4777, %v4776
      %v4806 = vpack.c.bf16 %v4779, %v4778
      %v4807 = vpack.c.bf16 %v4781, %v4780
      %v4808 = vpack.c.bf16 %v4783, %v4782
      %v4809 = vpack.c.bf16 %v4785, %v4784
      %v4810 = vpack.c.bf16 %v4787, %v4786
      %v4811 = vpack.c.bf16 %v4789, %v4788
      %v4812 = vpack.c.bf16 %v4791, %v4790
      %v4813 = vpack.c.bf16 %v4793, %v4792
      %v4814 = vpack.c.bf16 %v4795, %v4794
      %v4815 = vpack.c.bf16 %v4797, %v4796
      %v4816 = vpack.c.bf16 %v4799, %v4798
      %v4817 = vpack.c.bf16 %v4801, %v4800
      %v4834 = vunpack.c.l.b16 %v4802
      %v4835 = vunpack.c.h.b16 %v4802
      %v4836 = vunpack.c.l.b16 %v4803
      %v4837 = vunpack.c.h.b16 %v4803
      %v4838 = vunpack.c.l.b16 %v4804
      %v4839 = vunpack.c.h.b16 %v4804
      %v4840 = vunpack.c.l.b16 %v4805
      %v4841 = vunpack.c.h.b16 %v4805
      %v4842 = vunpack.c.l.b16 %v4806
      %v4843 = vunpack.c.h.b16 %v4806
      %v4844 = vunpack.c.l.b16 %v4807
      %v4845 = vunpack.c.h.b16 %v4807
      %v4846 = vunpack.c.l.b16 %v4808
      %v4847 = vunpack.c.h.b16 %v4808
      %v4848 = vunpack.c.l.b16 %v4809
      %v4849 = vunpack.c.h.b16 %v4809
      %v4850 = vunpack.c.l.b16 %v4810
      %v4851 = vunpack.c.h.b16 %v4810
      %v4852 = vunpack.c.l.b16 %v4811
      %v4853 = vunpack.c.h.b16 %v4811
      %v4854 = vunpack.c.l.b16 %v4812
      %v4855 = vunpack.c.h.b16 %v4812
      %v4856 = vunpack.c.l.b16 %v4813
      %v4857 = vunpack.c.h.b16 %v4813
      %v4858 = vunpack.c.l.b16 %v4814
      %v4859 = vunpack.c.h.b16 %v4814
      %v4860 = vunpack.c.l.b16 %v4815
      %v4861 = vunpack.c.h.b16 %v4815
      %v4862 = vunpack.c.l.b16 %v4816
      %v4863 = vunpack.c.h.b16 %v4816
      %v4864 = vunpack.c.l.b16 %v4817
      %v4865 = vunpack.c.h.b16 %v4817
      %v4866 = vpack.c.b16 %v4834, %v4834
      %v4867 = vpack.c.b16 %v4835, %v4835
      %v4868 = vpack.c.b16 %v4836, %v4836
      %v4869 = vpack.c.b16 %v4837, %v4837
      %v4870 = vpack.c.b16 %v4838, %v4838
      %v4871 = vpack.c.b16 %v4839, %v4839
      %v4872 = vpack.c.b16 %v4840, %v4840
      %v4873 = vpack.c.b16 %v4841, %v4841
      %v4874 = vpack.c.b16 %v4842, %v4842
      %v4875 = vpack.c.b16 %v4843, %v4843
      %v4876 = vpack.c.b16 %v4844, %v4844
      %v4877 = vpack.c.b16 %v4845, %v4845
      %v4878 = vpack.c.b16 %v4846, %v4846
      %v4879 = vpack.c.b16 %v4847, %v4847
      %v4880 = vpack.c.b16 %v4848, %v4848
      %v4881 = vpack.c.b16 %v4849, %v4849
      %v4882 = vpack.c.b16 %v4850, %v4850
      %v4883 = vpack.c.b16 %v4851, %v4851
      %v4884 = vpack.c.b16 %v4852, %v4852
      %v4885 = vpack.c.b16 %v4853, %v4853
      %v4886 = vpack.c.b16 %v4854, %v4854
      %v4887 = vpack.c.b16 %v4855, %v4855
      %v4888 = vpack.c.b16 %v4856, %v4856
      %v4889 = vpack.c.b16 %v4857, %v4857
      %v4890 = vpack.c.b16 %v4858, %v4858
      %v4891 = vpack.c.b16 %v4859, %v4859
      %v4892 = vpack.c.b16 %v4860, %v4860
      %v4893 = vpack.c.b16 %v4861, %v4861
      %v4894 = vpack.c.b16 %v4862, %v4862
      %v4895 = vpack.c.b16 %v4863, %v4863
      %v4896 = vpack.c.b16 %v4864, %v4864
      %v4897 = vpack.c.b16 %v4865, %v4865
      %4930 = vst [vmem:[%s177] sm:$0xf] %v4866
      %4931 = vst [vmem:[%s177 + $0x4] sm:$0xf] %v4867
      %4932 = vst [vmem:[%s177 + $0x8] sm:$0xf] %v4868
      %4933 = vst [vmem:[%s177 + $0xc] sm:$0xf] %v4869
      %4934 = vst [vmem:[%s177 + $0x10] sm:$0xf] %v4870
      %4935 = vst [vmem:[%s177 + $0x14] sm:$0xf] %v4871
      %4936 = vst [vmem:[%s177 + $0x18] sm:$0xf] %v4872
      %4937 = vst [vmem:[%s177 + $0x1c] sm:$0xf] %v4873
      %4938 = vst [vmem:[%s177 + $0x20] sm:$0xf] %v4874
      %4939 = vst [vmem:[%s177 + $0x24] sm:$0xf] %v4875
      %4940 = vst [vmem:[%s177 + $0x28] sm:$0xf] %v4876
      %4941 = vst [vmem:[%s177 + $0x2c] sm:$0xf] %v4877
      %4942 = vst [vmem:[%s177 + $0x30] sm:$0xf] %v4878
      %4943 = vst [vmem:[%s177 + $0x34] sm:$0xf] %v4879
      %4944 = vst [vmem:[%s177 + $0x38] sm:$0xf] %v4880
      %4945 = vst [vmem:[%s177 + $0x3c] sm:$0xf] %v4881
      %4946 = vst [vmem:[%s177 + $0x40] sm:$0xf] %v4882
      %4947 = vst [vmem:[%s177 + $0x44] sm:$0xf] %v4883
      %4948 = vst [vmem:[%s177 + $0x48] sm:$0xf] %v4884
      %4949 = vst [vmem:[%s177 + $0x4c] sm:$0xf] %v4885
      %4950 = vst [vmem:[%s177 + $0x50] sm:$0xf] %v4886
      %4951 = vst [vmem:[%s177 + $0x54] sm:$0xf] %v4887
      %4952 = vst [vmem:[%s177 + $0x58] sm:$0xf] %v4888
      %4953 = vst [vmem:[%s177 + $0x5c] sm:$0xf] %v4889
      %4954 = vst [vmem:[%s177 + $0x60] sm:$0xf] %v4890
      %4955 = vst [vmem:[%s177 + $0x64] sm:$0xf] %v4891
      %4956 = vst [vmem:[%s177 + $0x68] sm:$0xf] %v4892
      %4957 = vst [vmem:[%s177 + $0x6c] sm:$0xf] %v4893
      %4958 = vst [vmem:[%s177 + $0x70] sm:$0xf] %v4894
      %4959 = vst [vmem:[%s177 + $0x74] sm:$0xf] %v4895
      %4960 = vst [vmem:[%s177 + $0x78] sm:$0xf] %v4896
      %4961 = vst [vmem:[%s177 + $0x7c] sm:$0xf] %v4897
      %v4962 = vld [vmem:[#allocation2] sm:$0x1]
      %v4963 = vadd.f32 %v4770, %v4771
      %v4964 = vadd.f32 %v4963, %v4772
      %v4965 = vadd.f32 %v4964, %v4773
      %v4966 = vadd.f32 %v4965, %v4774
      %v4967 = vadd.f32 %v4966, %v4775
      %v4968 = vadd.f32 %v4967, %v4776
      %v4969 = vadd.f32 %v4968, %v4777
      %v4970 = vadd.f32 %v4969, %v4778
      %v4971 = vadd.f32 %v4970, %v4779
      %v4972 = vadd.f32 %v4971, %v4780
      %v4973 = vadd.f32 %v4972, %v4781
      %v4974 = vadd.f32 %v4973, %v4782
      %v4975 = vadd.f32 %v4974, %v4783
      %v4976 = vadd.f32 %v4975, %v4784
      %v4977 = vadd.f32 %v4976, %v4785
      %v4978 = vadd.f32 %v4977, %v4786
      %v4979 = vadd.f32 %v4978, %v4787
      %v4980 = vadd.f32 %v4979, %v4788
      %v4981 = vadd.f32 %v4980, %v4789
      %v4982 = vadd.f32 %v4981, %v4790
      %v4983 = vadd.f32 %v4982, %v4791
      %v4984 = vadd.f32 %v4983, %v4792
      %v4985 = vadd.f32 %v4984, %v4793
      %v4986 = vadd.f32 %v4985, %v4794
      %v4987 = vadd.f32 %v4986, %v4795
      %v4988 = vadd.f32 %v4987, %v4796
      %v4989 = vadd.f32 %v4988, %v4797
      %v4990 = vadd.f32 %v4989, %v4798
      %v4991 = vadd.f32 %v4990, %v4799
      %v4992 = vadd.f32 %v4991, %v4800
      %v4993 = vadd.f32 %v4992, %v4801
      %v4994 = vrot.slane %v4993, 4
      %v4995 = vadd.f32 %v4993, %v4994
      %v4996 = vrot.slane %v4995, 2
      %v4997 = vadd.f32 %v4995, %v4996
      %v4998 = vrot.slane %v4997, 1
      %v4999 = vadd.f32 %v4997, %v4998
      %v5000 = vadd.f32 %v4962, %v4999
      %5001 = vst [vmem:[#allocation2] sm:$0x1] %v5000
      %v5002 = vld [vmem:[#allocation3] sm:$0x1]
      %v5003 = vmul.f32 %v4770, %v4770
      %v5004 = vmul.f32 %v4771, %v4771
      %v5005 = vmul.f32 %v4772, %v4772
      %v5006 = vmul.f32 %v4773, %v4773
      %v5007 = vmul.f32 %v4774, %v4774
      %v5008 = vmul.f32 %v4775, %v4775
      %v5009 = vmul.f32 %v4776, %v4776
      %v5010 = vmul.f32 %v4777, %v4777
      %v5011 = vmul.f32 %v4778, %v4778
      %v5012 = vmul.f32 %v4779, %v4779
      %v5013 = vmul.f32 %v4780, %v4780
      %v5014 = vmul.f32 %v4781, %v4781
      %v5015 = vmul.f32 %v4782, %v4782
      %v5016 = vmul.f32 %v4783, %v4783
      %v5017 = vmul.f32 %v4784, %v4784
      %v5018 = vmul.f32 %v4785, %v4785
      %v5019 = vmul.f32 %v4786, %v4786
      %v5020 = vmul.f32 %v4787, %v4787
      %v5021 = vmul.f32 %v4788, %v4788
      %v5022 = vmul.f32 %v4789, %v4789
      %v5023 = vmul.f32 %v4790, %v4790
      %v5024 = vmul.f32 %v4791, %v4791
      %v5025 = vmul.f32 %v4792, %v4792
      %v5026 = vmul.f32 %v4793, %v4793
      %v5027 = vmul.f32 %v4794, %v4794
      %v5028 = vmul.f32 %v4795, %v4795
      %v5029 = vmul.f32 %v4796, %v4796
      %v5030 = vmul.f32 %v4797, %v4797
      %v5031 = vmul.f32 %v4798, %v4798
      %v5032 = vmul.f32 %v4799, %v4799
      %v5033 = vmul.f32 %v4800, %v4800
      %v5034 = vmul.f32 %v4801, %v4801
      %v5035 = vadd.f32 %v5003, %v5004
      %v5036 = vadd.f32 %v5035, %v5005
      %v5037 = vadd.f32 %v5036, %v5006
      %v5038 = vadd.f32 %v5037, %v5007
      %v5039 = vadd.f32 %v5038, %v5008
      %v5040 = vadd.f32 %v5039, %v5009
      %v5041 = vadd.f32 %v5040, %v5010
      %v5042 = vadd.f32 %v5041, %v5011
      %v5043 = vadd.f32 %v5042, %v5012
      %v5044 = vadd.f32 %v5043, %v5013
      %v5045 = vadd.f32 %v5044, %v5014
      %v5046 = vadd.f32 %v5045, %v5015
      %v5047 = vadd.f32 %v5046, %v5016
      %v5048 = vadd.f32 %v5047, %v5017
      %v5049 = vadd.f32 %v5048, %v5018
      %v5050 = vadd.f32 %v5049, %v5019
      %v5051 = vadd.f32 %v5050, %v5020
      %v5052 = vadd.f32 %v5051, %v5021
      %v5053 = vadd.f32 %v5052, %v5022
      %v5054 = vadd.f32 %v5053, %v5023
      %v5055 = vadd.f32 %v5054, %v5024
      %v5056 = vadd.f32 %v5055, %v5025
      %v5057 = vadd.f32 %v5056, %v5026
      %v5058 = vadd.f32 %v5057, %v5027
      %v5059 = vadd.f32 %v5058, %v5028
      %v5060 = vadd.f32 %v5059, %v5029
      %v5061 = vadd.f32 %v5060, %v5030
      %v5062 = vadd.f32 %v5061, %v5031
      %v5063 = vadd.f32 %v5062, %v5032
      %v5064 = vadd.f32 %v5063, %v5033
      %v5065 = vadd.f32 %v5064, %v5034
      %v5066 = vrot.slane %v5065, 4
      %v5067 = vadd.f32 %v5065, %v5066
      %v5068 = vrot.slane %v5067, 2
      %v5069 = vadd.f32 %v5067, %v5068
      %v5070 = vrot.slane %v5069, 1
      %v5071 = vadd.f32 %v5069, %v5070
      %v5072 = vadd.f32 %v5002, %v5071
      %5073 = vst [vmem:[#allocation3] sm:$0x1] %v5072
      %v5074 = vld [vmem:[#allocation2] sm:$0x1]
      %v5075 = vld [vmem:[#allocation3] sm:$0x1]
      %v5077 = vlaneseq
      %v5078 = vshrl.u32 %v5077, 7
      %v5079 = vsub.s32 0, %v5078
      %v5080 = vrot.slane %v5075, %v5079
      %vm5082 = vcmask 1040384
      %v5083 = vsel %vm5082, %v5074, %v5080
      %5084 = vst [vmem:[%s181] sm:$0x3] %v5083
      %p5085 = scmp.lt.s32.totalorder %s15, 1
      %s5086 = scalar_select %p5085, %s15, 1
      %s5087 = smul.addr %s5086, 32
      %s5088 = smul.addr %s5087, 4
      %s5089 = scalar_lea.vmem %s2, %s5088
      %p5090 = scmp.lt.s32.totalorder %s15, 1
      %s5091 = scalar_select %p5090, %s15, 1
      %s5092 = smul.addr %s5091, 2
      %s5093 = scalar_lea.vmem %s3, %s5092
      // Predicated region
      $region29: #{plain_block.2} parent=27 // pred_check
        %p5094 = pneg %p80
      $region30: #{plain_block.2} parent=27 // pred_check_branch
        %5096 = sbr.rel (%p5094) target = $region32
      $region31: #{plain_block.2} parent=27 // pred_region
        _
      $region32: #{plain_block.2} parent=27 // pred_fallthru
        _
      // Predicated region
      $region33: #{plain_block.2} parent=27 // pred_check
        %p5097 = pneg %p106
      $region34: #{plain_block.2} parent=27 // pred_check_branch
        %5099 = sbr.rel (%p5097) target = $region36
      $region35: #{plain_block.2} parent=27 // pred_region
        _
      $region36: #{plain_block.2} parent=27 // pred_fallthru
        _
    $region28: #{plain_block.2} parent=5 // pred_fallthru
      _
    %p5100 = scmp.le.s32.totalorder 2, %s10
    // Predicated region
    $region37: #{plain_block.2} parent=5 // pred_check
      %p5101 = pneg %p5100
    $region38: #{plain_block.2} parent=5 // pred_check_branch
      %5103 = sbr.rel (%p5101) target = $region40
    $region39: #{plain_block.2} parent=5 // pred_region
      %s5104 = ssub.s32 %s10, 2
      // Predicated region
      $region41: #{plain_block.2} parent=39 // pred_check
        %p5105 = pneg %p86
      $region42: #{plain_block.2} parent=39 // pred_check_branch
        %5107 = sbr.rel (%p5105) target = $region44
      $region43: #{plain_block.2} parent=39 // pred_region
        %p5108 = scmp.lt.s32.totalorder %s16, 1
        %s5109 = scalar_select %p5108, %s16, 1
        %s5110 = smul.addr %s5109, 32
        %s5111 = smul.addr %s5110, 4
        %s5112 = scalar_lea.vmem %s2, %s5111
      $region44: #{plain_block.2} parent=39 // pred_fallthru
        _
      // Predicated region
      $region45: #{plain_block.2} parent=39 // pred_check
        %p5113 = pneg %p112
      $region46: #{plain_block.2} parent=39 // pred_check_branch
        %5115 = sbr.rel (%p5113) target = $region48
      $region47: #{plain_block.2} parent=39 // pred_region
        %p5116 = scmp.lt.s32.totalorder %s16, 1
        %s5117 = scalar_select %p5116, %s16, 1
        %s5118 = smul.addr %s5117, 2
        %s5119 = scalar_lea.vmem %s3, %s5118
      $region48: #{plain_block.2} parent=39 // pred_fallthru
        _
    $region40: #{plain_block.2} parent=5 // pred_fallthru
      _
  $region6: #{plain_block.2} parent=0 // loop_footer
    %s14 = sadd.s32 1, %s10
  $region7: #{plain_block.2} parent=0 // loop_footer_branch
    %9 = sbr.rel target = $region3
  $region8: #{plain_block.2} parent=0 // loop_exit
    _

// kernel: plain_block.3
$region0: #{plain_block.3}
  #allocation0 [shape = 'u32[]', space=smem, size = 0x4, offset = 0x4, fixed_abs, tag = 'smem constant byte address 0x4 - core index']
  #allocation1 [shape = 'u32[144,128]{1,0:T(1,128)}', space=vmem, size = 0x12000, scoped, tag = 'internal scratch']
  #allocation2 [shape = 'bf16[18,18,128]{2,1,0:T(8,128)(2,1)}', space=vmem, size = 0x1b000, scoped, tag = 'scratch operand']
  #allocation3 [shape = 'f32[1,128]{1,0:T(1,128)}', space=vmem, size = 0x200, scoped, tag = 'scratch operand']
  #allocation4 [shape = 'f32[1,128]{1,0:T(1,128)}', space=vmem, size = 0x200, scoped, tag = 'scratch operand']
  %s0 = inlined_call_operand.vmem [shape: bf16[2,16,16,128], index: 0, kind: input, shape index: {}]
  %s1 = inlined_call_operand.vmem [shape: f32[1,128], index: 1, kind: input, shape index: {}]
  %s2 = inlined_call_operand.vmem [shape: f32[1,128], index: 2, kind: input, shape index: {}]
  %s3 = inlined_call_operand.vmem [shape: bf16[9,128,128], index: 3, kind: input, shape index: {}]
  %s4 = inlined_call_operand.vmem [shape: bf16[2,16,16,128], index: 4, kind: output, shape index: {0}]
  %s5 = inlined_call_operand.vmem [shape: f32[2,2,128], index: 5, kind: output, shape index: {1}]
  %6 = xla_tuple %s4, %s5
  %s7 = sld [smem:[#allocation0]]
  $region57: #{plain_block.3} parent=0
    _
  %s9 = ssub.s32 1, %s7
  %s10 = scalar_select 0, %s9, %s7
  loop: start=0, step=1, limit=4
  $region2: #{plain_block.3} parent=0 // loop_pre_header
    _
  $region3: #{plain_block.3} parent=0 // loop_header
    %s12 = sphi 0, %s16
    %p13 = scmp.ge.s32.totalorder %s12, 4
    %s22 = sphi 0, %s24
    %s25 = sphi 0, %s22
    %s26 = sphi 0, %s25
    %s42 = sphi 0, %s26
    %s46 = sphi 0, %s46
    %s48 = sphi 0, %s46
    %s49 = sphi 0, %s48
    %s63 = sphi 0, %s49
    %s67 = sphi 0, %s67
    %s69 = sphi 0, %s67
    %s70 = sphi 0, %s69
    %s84 = sphi 0, %s70
    %s88 = sphi 0, %s88
    %s90 = sphi 0, %s88
    %s91 = sphi 0, %s90
    %s105 = sphi 0, %s91
    %s111 = sphi 0, %s113
    %s114 = sphi 0, %s111
    %s115 = sphi 0, %s114
    %s131 = sphi 0, %s115
    %s137 = sphi 0, %s139
    %s140 = sphi 0, %s137
    %s141 = sphi 0, %s140
    %s157 = sphi 0, %s141
  $region4: #{plain_block.3} parent=0 // loop_header_branch
    %15 = sbr.rel (%p13) target = $region8
  $region5: #{plain_block.3} parent=0 // loop_body
    %s17 = ssub.s32 %s12, 1
    %s18 = ssub.s32 %s12, 2
    %s19 = sadd.s32 %s12, 1
    %s20 = ssub.s32 %s12, %s19
    %p21 = scmp.eq.s32.totalorder %s20, 0
    %s23 = sadd.s32 %s22, 1
    %s24 = scalar_select %p21, %s22, %s23
    %p27 = pneg %p21
    %p28 = scmp.eq.s32.totalorder %s12, 1
    %p29 = por %p27, %p28
    %p30 = scmp.ne.s32.totalorder %s22, %s25
    %p31 = scmp.eq.s32.totalorder %s12, 0
    %p32 = por %p30, %p31
    %p33 = scmp.ne.s32.totalorder %s22, %s25
    %p34 = scmp.eq.s32.totalorder %s17, 1
    %p35 = por %p33, %p34
    %p36 = scmp.ne.s32.totalorder %s25, %s26
    %p37 = scmp.eq.s32.totalorder %s17, 0
    %p38 = por %p36, %p37
    %p39 = scmp.ne.s32.totalorder %s25, %s26
    %p40 = scmp.eq.s32.totalorder %s18, 1
    %p41 = por %p39, %p40
    %p43 = scmp.ne.s32.totalorder %s26, %s42
    %p44 = scmp.eq.s32.totalorder %s18, 0
    %p45 = por %p43, %p44
    %s47 = sadd.s32 %s46, 1
    %p50 = scmp.eq.s32.totalorder %s12, 1
    %p51 = scmp.ne.s32.totalorder %s46, %s48
    %p52 = scmp.eq.s32.totalorder %s12, 0
    %p53 = por %p51, %p52
    %p54 = scmp.ne.s32.totalorder %s46, %s48
    %p55 = scmp.eq.s32.totalorder %s17, 1
    %p56 = por %p54, %p55
    %p57 = scmp.ne.s32.totalorder %s48, %s49
    %p58 = scmp.eq.s32.totalorder %s17, 0
    %p59 = por %p57, %p58
    %p60 = scmp.ne.s32.totalorder %s48, %s49
    %p61 = scmp.eq.s32.totalorder %s18, 1
    %p62 = por %p60, %p61
    %p64 = scmp.ne.s32.totalorder %s49, %s63
    %p65 = scmp.eq.s32.totalorder %s18, 0
    %p66 = por %p64, %p65
    %s68 = sadd.s32 %s67, 1
    %p71 = scmp.eq.s32.totalorder %s12, 1
    %p72 = scmp.ne.s32.totalorder %s67, %s69
    %p73 = scmp.eq.s32.totalorder %s12, 0
    %p74 = por %p72, %p73
    %p75 = scmp.ne.s32.totalorder %s67, %s69
    %p76 = scmp.eq.s32.totalorder %s17, 1
    %p77 = por %p75, %p76
    %p78 = scmp.ne.s32.totalorder %s69, %s70
    %p79 = scmp.eq.s32.totalorder %s17, 0
    %p80 = por %p78, %p79
    %p81 = scmp.ne.s32.totalorder %s69, %s70
    %p82 = scmp.eq.s32.totalorder %s18, 1
    %p83 = por %p81, %p82
    %p85 = scmp.ne.s32.totalorder %s70, %s84
    %p86 = scmp.eq.s32.totalorder %s18, 0
    %p87 = por %p85, %p86
    %s89 = sadd.s32 %s88, 1
    %p92 = scmp.eq.s32.totalorder %s12, 1
    %p93 = scmp.ne.s32.totalorder %s88, %s90
    %p94 = scmp.eq.s32.totalorder %s12, 0
    %p95 = por %p93, %p94
    %p96 = scmp.ne.s32.totalorder %s88, %s90
    %p97 = scmp.eq.s32.totalorder %s17, 1
    %p98 = por %p96, %p97
    %p99 = scmp.ne.s32.totalorder %s90, %s91
    %p100 = scmp.eq.s32.totalorder %s17, 0
    %p101 = por %p99, %p100
    %p102 = scmp.ne.s32.totalorder %s90, %s91
    %p103 = scmp.eq.s32.totalorder %s18, 1
    %p104 = por %p102, %p103
    %p106 = scmp.ne.s32.totalorder %s91, %s105
    %p107 = scmp.eq.s32.totalorder %s18, 0
    %p108 = por %p106, %p107
    %s109 = ssub.s32 %s12, %s19
    %p110 = scmp.eq.s32.totalorder %s109, 0
    %s112 = sadd.s32 %s111, 1
    %s113 = scalar_select %p110, %s111, %s112
    %p116 = pneg %p110
    %p117 = scmp.eq.s32.totalorder %s12, 1
    %p118 = por %p116, %p117
    %p119 = scmp.ne.s32.totalorder %s111, %s114
    %p120 = scmp.eq.s32.totalorder %s12, 0
    %p121 = por %p119, %p120
    %p122 = scmp.ne.s32.totalorder %s111, %s114
    %p123 = scmp.eq.s32.totalorder %s17, 1
    %p124 = por %p122, %p123
    %p125 = scmp.ne.s32.totalorder %s114, %s115
    %p126 = scmp.eq.s32.totalorder %s17, 0
    %p127 = por %p125, %p126
    %p128 = scmp.ne.s32.totalorder %s114, %s115
    %p129 = scmp.eq.s32.totalorder %s18, 1
    %p130 = por %p128, %p129
    %p132 = scmp.ne.s32.totalorder %s115, %s131
    %p133 = scmp.eq.s32.totalorder %s18, 0
    %p134 = por %p132, %p133
    %s135 = ssub.s32 %s12, %s19
    %p136 = scmp.eq.s32.totalorder %s135, 0
    %s138 = sadd.s32 %s137, 1
    %s139 = scalar_select %p136, %s137, %s138
    %p142 = pneg %p136
    %p143 = scmp.eq.s32.totalorder %s12, 1
    %p144 = por %p142, %p143
    %p145 = scmp.ne.s32.totalorder %s137, %s140
    %p146 = scmp.eq.s32.totalorder %s12, 0
    %p147 = por %p145, %p146
    %p148 = scmp.ne.s32.totalorder %s137, %s140
    %p149 = scmp.eq.s32.totalorder %s17, 1
    %p150 = por %p148, %p149
    %p151 = scmp.ne.s32.totalorder %s140, %s141
    %p152 = scmp.eq.s32.totalorder %s17, 0
    %p153 = por %p151, %p152
    %p154 = scmp.ne.s32.totalorder %s140, %s141
    %p155 = scmp.eq.s32.totalorder %s18, 1
    %p156 = por %p154, %p155
    %p158 = scmp.ne.s32.totalorder %s141, %s157
    %p159 = scmp.eq.s32.totalorder %s18, 0
    %p160 = por %p158, %p159
    %p161 = scmp.le.s32.totalorder 1, %s12
    %p162 = scmp.lt.s32.totalorder %s12, 3
    %p163 = pnand %p161, %p162
    %p164 = pneg %p163
    // Predicated region
    $region9: #{plain_block.3} parent=5 // pred_check
      _
    $region10: #{plain_block.3} parent=5 // pred_check_branch
      %166 = sbr.rel (%p163) target = $region12
    $region11: #{plain_block.3} parent=5 // pred_region
      %s167 = ssub.s32 %s12, 1
      // Predicated region
      $region13: #{plain_block.3} parent=11 // pred_check
        %p168 = pneg %p59
      $region14: #{plain_block.3} parent=11 // pred_check_branch
        %170 = sbr.rel (%p168) target = $region16
      $region15: #{plain_block.3} parent=11 // pred_region
        _
      $region16: #{plain_block.3} parent=11 // pred_fallthru
        _
      // Predicated region
      $region17: #{plain_block.3} parent=11 // pred_check
        %p171 = pneg %p80
      $region18: #{plain_block.3} parent=11 // pred_check_branch
        %173 = sbr.rel (%p171) target = $region20
      $region19: #{plain_block.3} parent=11 // pred_region
        _
      $region20: #{plain_block.3} parent=11 // pred_fallthru
        _
      // Predicated region
      $region21: #{plain_block.3} parent=11 // pred_check
        %p174 = pneg %p101
      $region22: #{plain_block.3} parent=11 // pred_check_branch
        %176 = sbr.rel (%p174) target = $region24
      $region23: #{plain_block.3} parent=11 // pred_region
        _
      $region24: #{plain_block.3} parent=11 // pred_fallthru
        _
    $region12: #{plain_block.3} parent=5 // pred_fallthru
      _
    %p177 = scmp.lt.s32.totalorder %s12, 2
    // Predicated region
    $region25: #{plain_block.3} parent=5 // pred_check
      %p178 = pneg %p177
    $region26: #{plain_block.3} parent=5 // pred_check_branch
      %180 = sbr.rel (%p178) target = $region28
    $region27: #{plain_block.3} parent=5 // pred_region
      // Predicated region
      $region29: #{plain_block.3} parent=27 // pred_check
        %p181 = pneg %p32
      $region30: #{plain_block.3} parent=27 // pred_check_branch
        %183 = sbr.rel (%p181) target = $region32
      $region31: #{plain_block.3} parent=27 // pred_region
        %p184 = scmp.lt.s32.totalorder %s12, 1
        %s185 = scalar_select %p184, %s12, 1
        %s186 = smul.addr %s185, 32
        %s187 = smul.addr %s186, 4
        %s188 = scalar_lea.vmem %s0, %s187
      $region32: #{plain_block.3} parent=27 // pred_fallthru
        _
    $region28: #{plain_block.3} parent=5 // pred_fallthru
      _
    %p189 = scmp.le.s32.totalorder 1, %s12
    %p190 = scmp.lt.s32.totalorder %s12, 3
    %p191 = pnand %p189, %p190
    %p192 = pneg %p191
    // Predicated region
    $region33: #{plain_block.3} parent=5 // pred_check
      _
    $region34: #{plain_block.3} parent=5 // pred_check_branch
      %194 = sbr.rel (%p191) target = $region36
    $region35: #{plain_block.3} parent=5 // pred_region
      %s195 = ssub.s32 %s12, 1
      %p196 = scmp.lt.s32.totalorder %s17, 1
      %s197 = scalar_select %p196, %s17, 1
      %s198 = smul.addr %s197, 32
      %s199 = smul.addr %s198, 4
      %s200 = scalar_lea.vmem %s0, %s199
      %p201 = pneg %p38
      %p202 = pneg %p35
      %p203 = pneg %p59
      %p204 = pneg %p56
      %p205 = pneg %p80
      %p206 = pneg %p77
      %p207 = pneg %p101
      %p208 = pneg %p98
      %p209 = pneg %p127
      %p210 = pneg %p124
      %p211 = scmp.lt.s32.totalorder %s17, 1
      %s212 = scalar_select %p211, %s17, 1
      %s213 = smul.addr %s212, 32
      %s214 = smul.addr %s213, 4
      %s215 = scalar_lea.vmem %s4, %s214
      %p216 = pneg %p153
      %p217 = pneg %p150
      %p218 = scmp.lt.s32.totalorder %s17, 1
      %s219 = scalar_select %p218, %s17, 1
      %s220 = smul.addr %s219, 2
      %s221 = scalar_lea.vmem %s5, %s220
      %p222 = scmp.lt.s32.totalorder %s17, 1
      %s223 = scalar_select %p222, %s17, 1
      %s224 = smul.addr %s223, 32
      %s225 = smul.addr %s224, 4
      %s226 = scalar_lea.vmem %s0, %s225
      %p227 = scmp.lt.s32.totalorder %s17, 1
      %s228 = scalar_select %p227, %s17, 1
      %s229 = smul.addr %s228, 32
      %s230 = smul.addr %s229, 4
      %s231 = scalar_lea.vmem %s4, %s230
      %p232 = scmp.lt.s32.totalorder %s17, 1
      %s233 = scalar_select %p232, %s17, 1
      %s234 = smul.addr %s233, 2
      %s235 = scalar_lea.vmem %s5, %s234
      %237 = vst [vmem:[#allocation2] sm:$0xf] 0
      %238 = vst [vmem:[#allocation2 + $0x4] sm:$0xf] 0
      %239 = vst [vmem:[#allocation2 + $0x8] sm:$0x1] 0
      %s240 = scalar_lea.vmem [#allocation2], 204
      %241 = vst [vmem:[%s240] sm:$0xf] 0
      %242 = vst [vmem:[%s240 + $0x4] sm:$0xf] 0
      %243 = vst [vmem:[%s240 + $0x8] sm:$0x1] 0
      %v244 = vld [vmem:[%s1] sm:$0x1]
      %v245 = vld [vmem:[%s2] sm:$0x1]
      %v246 = vld [vmem:[%s226] sm:$0xf]
      %v247 = vld [vmem:[%s226 + $0x4] sm:$0xf]
      %v248 = vld [vmem:[%s226 + $0x8] sm:$0xf]
      %v249 = vld [vmem:[%s226 + $0xc] sm:$0xf]
      %v250 = vld [vmem:[%s226 + $0x10] sm:$0xf]
      %v251 = vld [vmem:[%s226 + $0x14] sm:$0xf]
      %v252 = vld [vmem:[%s226 + $0x18] sm:$0xf]
      %v253 = vld [vmem:[%s226 + $0x1c] sm:$0xf]
      %v254 = vld [vmem:[%s226 + $0x20] sm:$0xf]
      %v255 = vld [vmem:[%s226 + $0x24] sm:$0xf]
      %v256 = vld [vmem:[%s226 + $0x28] sm:$0xf]
      %v257 = vld [vmem:[%s226 + $0x2c] sm:$0xf]
      %v258 = vld [vmem:[%s226 + $0x30] sm:$0xf]
      %v259 = vld [vmem:[%s226 + $0x34] sm:$0xf]
      %v260 = vld [vmem:[%s226 + $0x38] sm:$0xf]
      %v261 = vld [vmem:[%s226 + $0x3c] sm:$0xf]
      %v262 = vld [vmem:[%s226 + $0x40] sm:$0xf]
      %v263 = vld [vmem:[%s226 + $0x44] sm:$0xf]
      %v264 = vld [vmem:[%s226 + $0x48] sm:$0xf]
      %v265 = vld [vmem:[%s226 + $0x4c] sm:$0xf]
      %v266 = vld [vmem:[%s226 + $0x50] sm:$0xf]
      %v267 = vld [vmem:[%s226 + $0x54] sm:$0xf]
      %v268 = vld [vmem:[%s226 + $0x58] sm:$0xf]
      %v269 = vld [vmem:[%s226 + $0x5c] sm:$0xf]
      %v270 = vld [vmem:[%s226 + $0x60] sm:$0xf]
      %v271 = vld [vmem:[%s226 + $0x64] sm:$0xf]
      %v272 = vld [vmem:[%s226 + $0x68] sm:$0xf]
      %v273 = vld [vmem:[%s226 + $0x6c] sm:$0xf]
      %v274 = vld [vmem:[%s226 + $0x70] sm:$0xf]
      %v275 = vld [vmem:[%s226 + $0x74] sm:$0xf]
      %v276 = vld [vmem:[%s226 + $0x78] sm:$0xf]
      %v277 = vld [vmem:[%s226 + $0x7c] sm:$0xf]
      %v278 = vunpack.c.l.bf16 %v246
      %v279 = vunpack.c.l.bf16 %v247
      %v280 = vunpack.c.l.bf16 %v248
      %v281 = vunpack.c.l.bf16 %v249
      %v282 = vunpack.c.l.bf16 %v250
      %v283 = vunpack.c.l.bf16 %v251
      %v284 = vunpack.c.l.bf16 %v252
      %v285 = vunpack.c.l.bf16 %v253
      %v286 = vunpack.c.l.bf16 %v254
      %v287 = vunpack.c.l.bf16 %v255
      %v288 = vunpack.c.l.bf16 %v256
      %v289 = vunpack.c.l.bf16 %v257
      %v290 = vunpack.c.l.bf16 %v258
      %v291 = vunpack.c.l.bf16 %v259
      %v292 = vunpack.c.l.bf16 %v260
      %v293 = vunpack.c.l.bf16 %v261
      %v294 = vunpack.c.l.bf16 %v262
      %v295 = vunpack.c.l.bf16 %v263
      %v296 = vunpack.c.l.bf16 %v264
      %v297 = vunpack.c.l.bf16 %v265
      %v298 = vunpack.c.l.bf16 %v266
      %v299 = vunpack.c.l.bf16 %v267
      %v300 = vunpack.c.l.bf16 %v268
      %v301 = vunpack.c.l.bf16 %v269
      %v302 = vunpack.c.l.bf16 %v270
      %v303 = vunpack.c.l.bf16 %v271
      %v304 = vunpack.c.l.bf16 %v272
      %v305 = vunpack.c.l.bf16 %v273
      %v306 = vunpack.c.l.bf16 %v274
      %v307 = vunpack.c.l.bf16 %v275
      %v308 = vunpack.c.l.bf16 %v276
      %v309 = vunpack.c.l.bf16 %v277
      %v311 = vlaneseq
      %v312 = vshrl.u32 %v311, 7
      %v313 = vsub.s32 0, %v312
      %v314 = vrot.slane %v244, %v313
      %v316 = vmul.f32 %v278, %v314
      %v317 = vmul.f32 %v279, %v314
      %v318 = vmul.f32 %v280, %v314
      %v319 = vmul.f32 %v281, %v314
      %v320 = vmul.f32 %v282, %v314
      %v321 = vmul.f32 %v283, %v314
      %v322 = vmul.f32 %v284, %v314
      %v323 = vmul.f32 %v285, %v314
      %v324 = vmul.f32 %v286, %v314
      %v325 = vmul.f32 %v287, %v314
      %v326 = vmul.f32 %v288, %v314
      %v327 = vmul.f32 %v289, %v314
      %v328 = vmul.f32 %v290, %v314
      %v329 = vmul.f32 %v291, %v314
      %v330 = vmul.f32 %v292, %v314
      %v331 = vmul.f32 %v293, %v314
      %v332 = vmul.f32 %v294, %v314
      %v333 = vmul.f32 %v295, %v314
      %v334 = vmul.f32 %v296, %v314
      %v335 = vmul.f32 %v297, %v314
      %v336 = vmul.f32 %v298, %v314
      %v337 = vmul.f32 %v299, %v314
      %v338 = vmul.f32 %v300, %v314
      %v339 = vmul.f32 %v301, %v314
      %v340 = vmul.f32 %v302, %v314
      %v341 = vmul.f32 %v303, %v314
      %v342 = vmul.f32 %v304, %v314
      %v343 = vmul.f32 %v305, %v314
      %v344 = vmul.f32 %v306, %v314
      %v345 = vmul.f32 %v307, %v314
      %v346 = vmul.f32 %v308, %v314
      %v347 = vmul.f32 %v309, %v314
      %v349 = vlaneseq
      %v350 = vshrl.u32 %v349, 7
      %v351 = vsub.s32 0, %v350
      %v352 = vrot.slane %v245, %v351
      %v354 = vadd.f32 %v316, %v352
      %v355 = vadd.f32 %v317, %v352
      %v356 = vadd.f32 %v318, %v352
      %v357 = vadd.f32 %v319, %v352
      %v358 = vadd.f32 %v320, %v352
      %v359 = vadd.f32 %v321, %v352
      %v360 = vadd.f32 %v322, %v352
      %v361 = vadd.f32 %v323, %v352
      %v362 = vadd.f32 %v324, %v352
      %v363 = vadd.f32 %v325, %v352
      %v364 = vadd.f32 %v326, %v352
      %v365 = vadd.f32 %v327, %v352
      %v366 = vadd.f32 %v328, %v352
      %v367 = vadd.f32 %v329, %v352
      %v368 = vadd.f32 %v330, %v352
      %v369 = vadd.f32 %v331, %v352
      %v370 = vadd.f32 %v332, %v352
      %v371 = vadd.f32 %v333, %v352
      %v372 = vadd.f32 %v334, %v352
      %v373 = vadd.f32 %v335, %v352
      %v374 = vadd.f32 %v336, %v352
      %v375 = vadd.f32 %v337, %v352
      %v376 = vadd.f32 %v338, %v352
      %v377 = vadd.f32 %v339, %v352
      %v378 = vadd.f32 %v340, %v352
      %v379 = vadd.f32 %v341, %v352
      %v380 = vadd.f32 %v342, %v352
      %v381 = vadd.f32 %v343, %v352
      %v382 = vadd.f32 %v344, %v352
      %v383 = vadd.f32 %v345, %v352
      %v384 = vadd.f32 %v346, %v352
      %v385 = vadd.f32 %v347, %v352
      %v386 = vmax.f32 %v354, 0.0
      %v387 = vmax.f32 %v355, 0.0
      %v388 = vmax.f32 %v356, 0.0
      %v389 = vmax.f32 %v357, 0.0
      %v390 = vmax.f32 %v358, 0.0
      %v391 = vmax.f32 %v359, 0.0
      %v392 = vmax.f32 %v360, 0.0
      %v393 = vmax.f32 %v361, 0.0
      %v394 = vmax.f32 %v362, 0.0
      %v395 = vmax.f32 %v363, 0.0
      %v396 = vmax.f32 %v364, 0.0
      %v397 = vmax.f32 %v365, 0.0
      %v398 = vmax.f32 %v366, 0.0
      %v399 = vmax.f32 %v367, 0.0
      %v400 = vmax.f32 %v368, 0.0
      %v401 = vmax.f32 %v369, 0.0
      %v402 = vmax.f32 %v370, 0.0
      %v403 = vmax.f32 %v371, 0.0
      %v404 = vmax.f32 %v372, 0.0
      %v405 = vmax.f32 %v373, 0.0
      %v406 = vmax.f32 %v374, 0.0
      %v407 = vmax.f32 %v375, 0.0
      %v408 = vmax.f32 %v376, 0.0
      %v409 = vmax.f32 %v377, 0.0
      %v410 = vmax.f32 %v378, 0.0
      %v411 = vmax.f32 %v379, 0.0
      %v412 = vmax.f32 %v380, 0.0
      %v413 = vmax.f32 %v381, 0.0
      %v414 = vmax.f32 %v382, 0.0
      %v415 = vmax.f32 %v383, 0.0
      %v416 = vmax.f32 %v384, 0.0
      %v417 = vmax.f32 %v385, 0.0
      %v418 = vpack.c.bf16 %v387, %v386
      %v419 = vpack.c.bf16 %v389, %v388
      %v420 = vpack.c.bf16 %v391, %v390
      %v421 = vpack.c.bf16 %v393, %v392
      %v422 = vpack.c.bf16 %v395, %v394
      %v423 = vpack.c.bf16 %v397, %v396
      %v424 = vpack.c.bf16 %v399, %v398
      %v425 = vpack.c.bf16 %v401, %v400
      %v426 = vpack.c.bf16 %v403, %v402
      %v427 = vpack.c.bf16 %v405, %v404
      %v428 = vpack.c.bf16 %v407, %v406
      %v429 = vpack.c.bf16 %v409, %v408
      %v430 = vpack.c.bf16 %v411, %v410
      %v431 = vpack.c.bf16 %v413, %v412
      %v432 = vpack.c.bf16 %v415, %v414
      %v433 = vpack.c.bf16 %v417, %v416
      %v435 = vshrl.u32 %v418, 16
      %v437 = vrot.slane %v435, 7
      %v438 = vshll.u32 %v418, 16
      %v440 = vor.u32 %v437, %v438
      %v442 = vshrl.u32 %v419, 16
      %v444 = vrot.slane %v442, 7
      %v445 = vshll.u32 %v419, 16
      %v447 = vor.u32 %v444, %v445
      %v449 = vshrl.u32 %v420, 16
      %v451 = vrot.slane %v449, 7
      %v452 = vshll.u32 %v420, 16
      %v454 = vor.u32 %v451, %v452
      %v456 = vshrl.u32 %v421, 16
      %v458 = vrot.slane %v456, 7
      %v459 = vshll.u32 %v421, 16
      %v461 = vor.u32 %v458, %v459
      %v463 = vshrl.u32 %v422, 16
      %v465 = vrot.slane %v463, 7
      %v466 = vshll.u32 %v422, 16
      %v468 = vor.u32 %v465, %v466
      %v470 = vshrl.u32 %v423, 16
      %v472 = vrot.slane %v470, 7
      %v473 = vshll.u32 %v423, 16
      %v475 = vor.u32 %v472, %v473
      %v477 = vshrl.u32 %v424, 16
      %v479 = vrot.slane %v477, 7
      %v480 = vshll.u32 %v424, 16
      %v482 = vor.u32 %v479, %v480
      %v484 = vshrl.u32 %v425, 16
      %v486 = vrot.slane %v484, 7
      %v487 = vshll.u32 %v425, 16
      %v489 = vor.u32 %v486, %v487
      %v491 = vshrl.u32 %v426, 16
      %v493 = vrot.slane %v491, 7
      %v494 = vshll.u32 %v426, 16
      %v496 = vor.u32 %v493, %v494
      %v498 = vshrl.u32 %v427, 16
      %v500 = vrot.slane %v498, 7
      %v501 = vshll.u32 %v427, 16
      %v503 = vor.u32 %v500, %v501
      %v505 = vshrl.u32 %v428, 16
      %v507 = vrot.slane %v505, 7
      %v508 = vshll.u32 %v428, 16
      %v510 = vor.u32 %v507, %v508
      %v512 = vshrl.u32 %v429, 16
      %v514 = vrot.slane %v512, 7
      %v515 = vshll.u32 %v429, 16
      %v517 = vor.u32 %v514, %v515
      %v519 = vshrl.u32 %v430, 16
      %v521 = vrot.slane %v519, 7
      %v522 = vshll.u32 %v430, 16
      %v524 = vor.u32 %v521, %v522
      %v526 = vshrl.u32 %v431, 16
      %v528 = vrot.slane %v526, 7
      %v529 = vshll.u32 %v431, 16
      %v531 = vor.u32 %v528, %v529
      %v533 = vshrl.u32 %v432, 16
      %v535 = vrot.slane %v533, 7
      %v536 = vshll.u32 %v432, 16
      %v538 = vor.u32 %v535, %v536
      %v540 = vshrl.u32 %v433, 16
      %v542 = vrot.slane %v540, 7
      %v543 = vshll.u32 %v433, 16
      %v545 = vor.u32 %v542, %v543
      %vm578 = vcmask 1040384
      %vm579 = vsmask.f32 256
      %vm580 = vmand %vm578, %vm579
      %v581 = vsel %vm580, 0, %v440
      %v582 = vsel %vm580, 0, %v447
      %v583 = vsel %vm580, 0, %v454
      %v584 = vsel %vm580, 0, %v461
      %v585 = vsel %vm580, 0, %v468
      %v586 = vsel %vm580, 0, %v475
      %v587 = vsel %vm580, 0, %v482
      %v588 = vsel %vm580, 0, %v489
      %v589 = vsel %vm580, 0, %v496
      %v590 = vsel %vm580, 0, %v503
      %v591 = vsel %vm580, 0, %v510
      %v592 = vsel %vm580, 0, %v517
      %v593 = vsel %vm580, 0, %v524
      %v594 = vsel %vm580, 0, %v531
      %v595 = vsel %vm580, 0, %v538
      %v596 = vsel %vm580, 0, %v545
      %v597 = vsel %vm580, %v437, 0
      %v598 = vsel %vm580, %v444, 0
      %v599 = vsel %vm580, %v451, 0
      %v600 = vsel %vm580, %v458, 0
      %v601 = vsel %vm580, %v465, 0
      %v602 = vsel %vm580, %v472, 0
      %v603 = vsel %vm580, %v479, 0
      %v604 = vsel %vm580, %v486, 0
      %v605 = vsel %vm580, %v493, 0
      %v606 = vsel %vm580, %v500, 0
      %v607 = vsel %vm580, %v507, 0
      %v608 = vsel %vm580, %v514, 0
      %v609 = vsel %vm580, %v521, 0
      %v610 = vsel %vm580, %v528, 0
      %v611 = vsel %vm580, %v535, 0
      %v612 = vsel %vm580, %v542, 0
      %v645 = vunpack.c.l.b16 %v581
      %v646 = vunpack.c.h.b16 %v581
      %v647 = vunpack.c.l.b16 %v597
      %v648 = vunpack.c.l.b16 %v582
      %v649 = vunpack.c.h.b16 %v582
      %v650 = vunpack.c.l.b16 %v598
      %v651 = vunpack.c.l.b16 %v583
      %v652 = vunpack.c.h.b16 %v583
      %v653 = vunpack.c.l.b16 %v599
      %v654 = vunpack.c.l.b16 %v584
      %v655 = vunpack.c.h.b16 %v584
      %v656 = vunpack.c.l.b16 %v600
      %v657 = vunpack.c.l.b16 %v585
      %v658 = vunpack.c.h.b16 %v585
      %v659 = vunpack.c.l.b16 %v601
      %v660 = vunpack.c.l.b16 %v586
      %v661 = vunpack.c.h.b16 %v586
      %v662 = vunpack.c.l.b16 %v602
      %v663 = vunpack.c.l.b16 %v587
      %v664 = vunpack.c.h.b16 %v587
      %v665 = vunpack.c.l.b16 %v603
      %v666 = vunpack.c.l.b16 %v588
      %v667 = vunpack.c.h.b16 %v588
      %v668 = vunpack.c.l.b16 %v604
      %v669 = vunpack.c.l.b16 %v589
      %v670 = vunpack.c.h.b16 %v589
      %v671 = vunpack.c.l.b16 %v605
      %v672 = vunpack.c.l.b16 %v590
      %v673 = vunpack.c.h.b16 %v590
      %v674 = vunpack.c.l.b16 %v606
      %v675 = vunpack.c.l.b16 %v591
      %v676 = vunpack.c.h.b16 %v591
      %v677 = vunpack.c.l.b16 %v607
      %v678 = vunpack.c.l.b16 %v592
      %v679 = vunpack.c.h.b16 %v592
      %v680 = vunpack.c.l.b16 %v608
      %v681 = vunpack.c.l.b16 %v593
      %v682 = vunpack.c.h.b16 %v593
      %v683 = vunpack.c.l.b16 %v609
      %v684 = vunpack.c.l.b16 %v594
      %v685 = vunpack.c.h.b16 %v594
      %v686 = vunpack.c.l.b16 %v610
      %v687 = vunpack.c.l.b16 %v595
      %v688 = vunpack.c.h.b16 %v595
      %v689 = vunpack.c.l.b16 %v611
      %v690 = vunpack.c.l.b16 %v596
      %v691 = vunpack.c.h.b16 %v596
      %v692 = vunpack.c.l.b16 %v612
      %v693 = vpack.c.b16 %v645, %v645
      %v694 = vpack.c.b16 %v646, %v646
      %v695 = vpack.c.b16 %v647, %v647
      %v696 = vpack.c.b16 %v648, %v648
      %v697 = vpack.c.b16 %v649, %v649
      %v698 = vpack.c.b16 %v650, %v650
      %v699 = vpack.c.b16 %v651, %v651
      %v700 = vpack.c.b16 %v652, %v652
      %v701 = vpack.c.b16 %v653, %v653
      %v702 = vpack.c.b16 %v654, %v654
      %v703 = vpack.c.b16 %v655, %v655
      %v704 = vpack.c.b16 %v656, %v656
      %v705 = vpack.c.b16 %v657, %v657
      %v706 = vpack.c.b16 %v658, %v658
      %v707 = vpack.c.b16 %v659, %v659
      %v708 = vpack.c.b16 %v660, %v660
      %v709 = vpack.c.b16 %v661, %v661
      %v710 = vpack.c.b16 %v662, %v662
      %v711 = vpack.c.b16 %v663, %v663
      %v712 = vpack.c.b16 %v664, %v664
      %v713 = vpack.c.b16 %v665, %v665
      %v714 = vpack.c.b16 %v666, %v666
      %v715 = vpack.c.b16 %v667, %v667
      %v716 = vpack.c.b16 %v668, %v668
      %v717 = vpack.c.b16 %v669, %v669
      %v718 = vpack.c.b16 %v670, %v670
      %v719 = vpack.c.b16 %v671, %v671
      %v720 = vpack.c.b16 %v672, %v672
      %v721 = vpack.c.b16 %v673, %v673
      %v722 = vpack.c.b16 %v674, %v674
      %v723 = vpack.c.b16 %v675, %v675
      %v724 = vpack.c.b16 %v676, %v676
      %v725 = vpack.c.b16 %v677, %v677
      %v726 = vpack.c.b16 %v678, %v678
      %v727 = vpack.c.b16 %v679, %v679
      %v728 = vpack.c.b16 %v680, %v680
      %v729 = vpack.c.b16 %v681, %v681
      %v730 = vpack.c.b16 %v682, %v682
      %v731 = vpack.c.b16 %v683, %v683
      %v732 = vpack.c.b16 %v684, %v684
      %v733 = vpack.c.b16 %v685, %v685
      %v734 = vpack.c.b16 %v686, %v686
      %v735 = vpack.c.b16 %v687, %v687
      %v736 = vpack.c.b16 %v688, %v688
      %v737 = vpack.c.b16 %v689, %v689
      %v738 = vpack.c.b16 %v690, %v690
      %v739 = vpack.c.b16 %v691, %v691
      %v740 = vpack.c.b16 %v692, %v692
      %s789 = scalar_lea.vmem [#allocation2], 12
      %790 = vst [vmem:[%s789] sm:$0xf] %v693
      %791 = vst [vmem:[%s789 + $0x4] sm:$0xf] %v694
      %792 = vst [vmem:[%s789 + $0x8] sm:$0x1] %v695
      %793 = vst [vmem:[%s789 + $0xc] sm:$0xf] %v696
      %794 = vst [vmem:[%s789 + $0x10] sm:$0xf] %v697
      %795 = vst [vmem:[%s789 + $0x14] sm:$0x1] %v698
      %796 = vst [vmem:[%s789 + $0x18] sm:$0xf] %v699
      %797 = vst [vmem:[%s789 + $0x1c] sm:$0xf] %v700
      %798 = vst [vmem:[%s789 + $0x20] sm:$0x1] %v701
      %799 = vst [vmem:[%s789 + $0x24] sm:$0xf] %v702
      %800 = vst [vmem:[%s789 + $0x28] sm:$0xf] %v703
      %801 = vst [vmem:[%s789 + $0x2c] sm:$0x1] %v704
      %802 = vst [vmem:[%s789 + $0x30] sm:$0xf] %v705
      %803 = vst [vmem:[%s789 + $0x34] sm:$0xf] %v706
      %804 = vst [vmem:[%s789 + $0x38] sm:$0x1] %v707
      %805 = vst [vmem:[%s789 + $0x3c] sm:$0xf] %v708
      %806 = vst [vmem:[%s789 + $0x40] sm:$0xf] %v709
      %807 = vst [vmem:[%s789 + $0x44] sm:$0x1] %v710
      %808 = vst [vmem:[%s789 + $0x48] sm:$0xf] %v711
      %809 = vst [vmem:[%s789 + $0x4c] sm:$0xf] %v712
      %810 = vst [vmem:[%s789 + $0x50] sm:$0x1] %v713
      %811 = vst [vmem:[%s789 + $0x54] sm:$0xf] %v714
      %812 = vst [vmem:[%s789 + $0x58] sm:$0xf] %v715
      %813 = vst [vmem:[%s789 + $0x5c] sm:$0x1] %v716
      %814 = vst [vmem:[%s789 + $0x60] sm:$0xf] %v717
      %815 = vst [vmem:[%s789 + $0x64] sm:$0xf] %v718
      %816 = vst [vmem:[%s789 + $0x68] sm:$0x1] %v719
      %817 = vst [vmem:[%s789 + $0x6c] sm:$0xf] %v720
      %818 = vst [vmem:[%s789 + $0x70] sm:$0xf] %v721
      %819 = vst [vmem:[%s789 + $0x74] sm:$0x1] %v722
      %820 = vst [vmem:[%s789 + $0x78] sm:$0xf] %v723
      %821 = vst [vmem:[%s789 + $0x7c] sm:$0xf] %v724
      %822 = vst [vmem:[%s789 + $0x80] sm:$0x1] %v725
      %823 = vst [vmem:[%s789 + $0x84] sm:$0xf] %v726
      %824 = vst [vmem:[%s789 + $0x88] sm:$0xf] %v727
      %825 = vst [vmem:[%s789 + $0x8c] sm:$0x1] %v728
      %826 = vst [vmem:[%s789 + $0x90] sm:$0xf] %v729
      %827 = vst [vmem:[%s789 + $0x94] sm:$0xf] %v730
      %828 = vst [vmem:[%s789 + $0x98] sm:$0x1] %v731
      %829 = vst [vmem:[%s789 + $0x9c] sm:$0xf] %v732
      %830 = vst [vmem:[%s789 + $0xa0] sm:$0xf] %v733
      %831 = vst [vmem:[%s789 + $0xa4] sm:$0x1] %v734
      %832 = vst [vmem:[%s789 + $0xa8] sm:$0xf] %v735
      %833 = vst [vmem:[%s789 + $0xac] sm:$0xf] %v736
      %834 = vst [vmem:[%s789 + $0xb0] sm:$0x1] %v737
      %835 = vst [vmem:[%s789 + $0xb4] sm:$0xf] %v738
      %836 = vst [vmem:[%s789 + $0xb8] sm:$0xf] %v739
      %837 = vst [vmem:[%s789 + $0xbc] sm:$0x1] %v740
      %838 = vst [vmem:[#allocation3] sm:$0x1] 0.0
      %839 = vst [vmem:[#allocation4] sm:$0x1] 0.0
      %v840 = vld [vmem:[#allocation2] sm:$0xf]
      %v841 = vld [vmem:[#allocation2 + $0x4] sm:$0xf]
      %v842 = vld [vmem:[#allocation2 + $0x8] sm:$0x1]
      %v843 = vld [vmem:[#allocation2 + $0xc] sm:$0xf]
      %v844 = vld [vmem:[#allocation2 + $0x10] sm:$0xf]
      %v845 = vld [vmem:[#allocation2 + $0x14] sm:$0x1]
      %v846 = vld [vmem:[#allocation2 + $0x18] sm:$0xf]
      %v847 = vld [vmem:[#allocation2 + $0x1c] sm:$0xf]
      %v848 = vld [vmem:[#allocation2 + $0x20] sm:$0x1]
      %v849 = vld [vmem:[#allocation2 + $0x24] sm:$0xf]
      %v850 = vld [vmem:[#allocation2 + $0x28] sm:$0xf]
      %v851 = vld [vmem:[#allocation2 + $0x2c] sm:$0x1]
      %v852 = vld [vmem:[#allocation2 + $0x30] sm:$0xf]
      %v853 = vld [vmem:[#allocation2 + $0x34] sm:$0xf]
      %v854 = vld [vmem:[#allocation2 + $0x38] sm:$0x1]
      %v855 = vld [vmem:[#allocation2 + $0x3c] sm:$0xf]
      %v856 = vld [vmem:[#allocation2 + $0x40] sm:$0xf]
      %v857 = vld [vmem:[#allocation2 + $0x44] sm:$0x1]
      %v858 = vld [vmem:[#allocation2 + $0x48] sm:$0xf]
      %v859 = vld [vmem:[#allocation2 + $0x4c] sm:$0xf]
      %v860 = vld [vmem:[#allocation2 + $0x50] sm:$0x1]
      %v861 = vld [vmem:[#allocation2 + $0x54] sm:$0xf]
      %v862 = vld [vmem:[#allocation2 + $0x58] sm:$0xf]
      %v863 = vld [vmem:[#allocation2 + $0x5c] sm:$0x1]
      %v864 = vld [vmem:[#allocation2 + $0x60] sm:$0xf]
      %v865 = vld [vmem:[#allocation2 + $0x64] sm:$0xf]
      %v866 = vld [vmem:[#allocation2 + $0x68] sm:$0x1]
      %v867 = vld [vmem:[#allocation2 + $0x6c] sm:$0xf]
      %v868 = vld [vmem:[#allocation2 + $0x70] sm:$0xf]
      %v869 = vld [vmem:[#allocation2 + $0x74] sm:$0x1]
      %v870 = vld [vmem:[#allocation2 + $0x78] sm:$0xf]
      %v871 = vld [vmem:[#allocation2 + $0x7c] sm:$0xf]
      %v872 = vld [vmem:[#allocation2 + $0x80] sm:$0x1]
      %v873 = vld [vmem:[#allocation2 + $0x84] sm:$0xf]
      %v874 = vld [vmem:[#allocation2 + $0x88] sm:$0xf]
      %v875 = vld [vmem:[#allocation2 + $0x8c] sm:$0x1]
      %v876 = vld [vmem:[#allocation2 + $0x90] sm:$0xf]
      %v877 = vld [vmem:[#allocation2 + $0x94] sm:$0xf]
      %v878 = vld [vmem:[#allocation2 + $0x98] sm:$0x1]
      %v879 = vld [vmem:[#allocation2 + $0x9c] sm:$0xf]
      %v880 = vld [vmem:[#allocation2 + $0xa0] sm:$0xf]
      %v881 = vld [vmem:[#allocation2 + $0xa4] sm:$0x1]
      %v882 = vld [vmem:[#allocation2 + $0xa8] sm:$0xf]
      %v883 = vld [vmem:[#allocation2 + $0xac] sm:$0xf]
      %v884 = vld [vmem:[#allocation2 + $0xb0] sm:$0x1]
      %v885 = vld [vmem:[#allocation2 + $0xb4] sm:$0xf]
      %v886 = vld [vmem:[#allocation2 + $0xb8] sm:$0xf]
      %v887 = vld [vmem:[#allocation2 + $0xbc] sm:$0x1]
      %v888 = vld [vmem:[%s3] sm:$0xf]
      %v889 = vld [vmem:[%s3 + $0x4] sm:$0xf]
      %v890 = vld [vmem:[%s3 + $0x8] sm:$0xf]
      %v891 = vld [vmem:[%s3 + $0xc] sm:$0xf]
      %v892 = vld [vmem:[%s3 + $0x10] sm:$0xf]
      %v893 = vld [vmem:[%s3 + $0x14] sm:$0xf]
      %v894 = vld [vmem:[%s3 + $0x18] sm:$0xf]
      %v895 = vld [vmem:[%s3 + $0x1c] sm:$0xf]
      %v896 = vld [vmem:[%s3 + $0x20] sm:$0xf]
      %v897 = vld [vmem:[%s3 + $0x24] sm:$0xf]
      %v898 = vld [vmem:[%s3 + $0x28] sm:$0xf]
      %v899 = vld [vmem:[%s3 + $0x2c] sm:$0xf]
      %v900 = vld [vmem:[%s3 + $0x30] sm:$0xf]
      %v901 = vld [vmem:[%s3 + $0x34] sm:$0xf]
      %v902 = vld [vmem:[%s3 + $0x38] sm:$0xf]
      %v903 = vld [vmem:[%s3 + $0x3c] sm:$0xf]
      %vm904 = vsmask.f32 3328
      %vm905 = vsmask.f32 7440
      %vm906 = vmor %vm904, %vm905
      %v908 = vshrl.u32 %v840, 16
      %v910 = vrot.slane %v908, 4
      %v911 = vshll.u32 %v840, 16
      %v913 = vrot.slane %v911, 5
      %v914 = vor.u32 %v910, %v913
      %v915 = vrot.slane %v914, 4
      %v917 = vshll.u32 %v841, 16
      %v919 = vrot.slane %v917, 5
      %v920 = vsel %vm906, %v915, %v919
      %v921 = vshrl.u32 %v841, 16
      %v923 = vrot.slane %v921, 4
      %v924 = vor.u32 %v923, %v919
      %v925 = vrot.slane %v924, 4
      %v927 = vshll.u32 %v842, 16
      %v929 = vrot.slane %v927, 5
      %v930 = vsel %vm906, %v925, %v929
      %v932 = vshrl.u32 %v843, 16
      %v934 = vrot.slane %v932, 4
      %v935 = vshll.u32 %v843, 16
      %v937 = vrot.slane %v935, 5
      %v938 = vor.u32 %v934, %v937
      %v939 = vrot.slane %v938, 4
      %v941 = vshll.u32 %v844, 16
      %v943 = vrot.slane %v941, 5
      %v944 = vsel %vm906, %v939, %v943
      %v945 = vshrl.u32 %v844, 16
      %v947 = vrot.slane %v945, 4
      %v948 = vor.u32 %v947, %v943
      %v949 = vrot.slane %v948, 4
      %v951 = vshll.u32 %v845, 16
      %v953 = vrot.slane %v951, 5
      %v954 = vsel %vm906, %v949, %v953
      %v956 = vshrl.u32 %v846, 16
      %v958 = vrot.slane %v956, 4
      %v959 = vshll.u32 %v846, 16
      %v961 = vrot.slane %v959, 5
      %v962 = vor.u32 %v958, %v961
      %v963 = vrot.slane %v962, 4
      %v965 = vshll.u32 %v847, 16
      %v967 = vrot.slane %v965, 5
      %v968 = vsel %vm906, %v963, %v967
      %v969 = vshrl.u32 %v847, 16
      %v971 = vrot.slane %v969, 4
      %v972 = vor.u32 %v971, %v967
      %v973 = vrot.slane %v972, 4
      %v975 = vshll.u32 %v848, 16
      %v977 = vrot.slane %v975, 5
      %v978 = vsel %vm906, %v973, %v977
      %v980 = vshrl.u32 %v849, 16
      %v982 = vrot.slane %v980, 4
      %v983 = vshll.u32 %v849, 16
      %v985 = vrot.slane %v983, 5
      %v986 = vor.u32 %v982, %v985
      %v987 = vrot.slane %v986, 4
      %v989 = vshll.u32 %v850, 16
      %v991 = vrot.slane %v989, 5
      %v992 = vsel %vm906, %v987, %v991
      %v993 = vshrl.u32 %v850, 16
      %v995 = vrot.slane %v993, 4
      %v996 = vor.u32 %v995, %v991
      %v997 = vrot.slane %v996, 4
      %v999 = vshll.u32 %v851, 16
      %v1001 = vrot.slane %v999, 5
      %v1002 = vsel %vm906, %v997, %v1001
      %v1004 = vshrl.u32 %v852, 16
      %v1006 = vrot.slane %v1004, 4
      %v1007 = vshll.u32 %v852, 16
      %v1009 = vrot.slane %v1007, 5
      %v1010 = vor.u32 %v1006, %v1009
      %v1011 = vrot.slane %v1010, 4
      %v1013 = vshll.u32 %v853, 16
      %v1015 = vrot.slane %v1013, 5
      %v1016 = vsel %vm906, %v1011, %v1015
      %v1017 = vshrl.u32 %v853, 16
      %v1019 = vrot.slane %v1017, 4
      %v1020 = vor.u32 %v1019, %v1015
      %v1021 = vrot.slane %v1020, 4
      %v1023 = vshll.u32 %v854, 16
      %v1025 = vrot.slane %v1023, 5
      %v1026 = vsel %vm906, %v1021, %v1025
      %v1028 = vshrl.u32 %v855, 16
      %v1030 = vrot.slane %v1028, 4
      %v1031 = vshll.u32 %v855, 16
      %v1033 = vrot.slane %v1031, 5
      %v1034 = vor.u32 %v1030, %v1033
      %v1035 = vrot.slane %v1034, 4
      %v1037 = vshll.u32 %v856, 16
      %v1039 = vrot.slane %v1037, 5
      %v1040 = vsel %vm906, %v1035, %v1039
      %v1041 = vshrl.u32 %v856, 16
      %v1043 = vrot.slane %v1041, 4
      %v1044 = vor.u32 %v1043, %v1039
      %v1045 = vrot.slane %v1044, 4
      %v1047 = vshll.u32 %v857, 16
      %v1049 = vrot.slane %v1047, 5
      %v1050 = vsel %vm906, %v1045, %v1049
      %v1052 = vshrl.u32 %v858, 16
      %v1054 = vrot.slane %v1052, 4
      %v1055 = vshll.u32 %v858, 16
      %v1057 = vrot.slane %v1055, 5
      %v1058 = vor.u32 %v1054, %v1057
      %v1059 = vrot.slane %v1058, 4
      %v1061 = vshll.u32 %v859, 16
      %v1063 = vrot.slane %v1061, 5
      %v1064 = vsel %vm906, %v1059, %v1063
      %v1065 = vshrl.u32 %v859, 16
      %v1067 = vrot.slane %v1065, 4
      %v1068 = vor.u32 %v1067, %v1063
      %v1069 = vrot.slane %v1068, 4
      %v1071 = vshll.u32 %v860, 16
      %v1073 = vrot.slane %v1071, 5
      %v1074 = vsel %vm906, %v1069, %v1073
      %v1076 = vshrl.u32 %v861, 16
      %v1078 = vrot.slane %v1076, 4
      %v1079 = vshll.u32 %v861, 16
      %v1081 = vrot.slane %v1079, 5
      %v1082 = vor.u32 %v1078, %v1081
      %v1083 = vrot.slane %v1082, 4
      %v1085 = vshll.u32 %v862, 16
      %v1087 = vrot.slane %v1085, 5
      %v1088 = vsel %vm906, %v1083, %v1087
      %v1089 = vshrl.u32 %v862, 16
      %v1091 = vrot.slane %v1089, 4
      %v1092 = vor.u32 %v1091, %v1087
      %v1093 = vrot.slane %v1092, 4
      %v1095 = vshll.u32 %v863, 16
      %v1097 = vrot.slane %v1095, 5
      %v1098 = vsel %vm906, %v1093, %v1097
      %v1100 = vshrl.u32 %v864, 16
      %v1102 = vrot.slane %v1100, 4
      %v1103 = vshll.u32 %v864, 16
      %v1105 = vrot.slane %v1103, 5
      %v1106 = vor.u32 %v1102, %v1105
      %v1107 = vrot.slane %v1106, 4
      %v1109 = vshll.u32 %v865, 16
      %v1111 = vrot.slane %v1109, 5
      %v1112 = vsel %vm906, %v1107, %v1111
      %v1113 = vshrl.u32 %v865, 16
      %v1115 = vrot.slane %v1113, 4
      %v1116 = vor.u32 %v1115, %v1111
      %v1117 = vrot.slane %v1116, 4
      %v1119 = vshll.u32 %v866, 16
      %v1121 = vrot.slane %v1119, 5
      %v1122 = vsel %vm906, %v1117, %v1121
      %v1124 = vshrl.u32 %v867, 16
      %v1126 = vrot.slane %v1124, 4
      %v1127 = vshll.u32 %v867, 16
      %v1129 = vrot.slane %v1127, 5
      %v1130 = vor.u32 %v1126, %v1129
      %v1131 = vrot.slane %v1130, 4
      %v1133 = vshll.u32 %v868, 16
      %v1135 = vrot.slane %v1133, 5
      %v1136 = vsel %vm906, %v1131, %v1135
      %v1137 = vshrl.u32 %v868, 16
      %v1139 = vrot.slane %v1137, 4
      %v1140 = vor.u32 %v1139, %v1135
      %v1141 = vrot.slane %v1140, 4
      %v1143 = vshll.u32 %v869, 16
      %v1145 = vrot.slane %v1143, 5
      %v1146 = vsel %vm906, %v1141, %v1145
      %v1148 = vshrl.u32 %v870, 16
      %v1150 = vrot.slane %v1148, 4
      %v1151 = vshll.u32 %v870, 16
      %v1153 = vrot.slane %v1151, 5
      %v1154 = vor.u32 %v1150, %v1153
      %v1155 = vrot.slane %v1154, 4
      %v1157 = vshll.u32 %v871, 16
      %v1159 = vrot.slane %v1157, 5
      %v1160 = vsel %vm906, %v1155, %v1159
      %v1161 = vshrl.u32 %v871, 16
      %v1163 = vrot.slane %v1161, 4
      %v1164 = vor.u32 %v1163, %v1159
      %v1165 = vrot.slane %v1164, 4
      %v1167 = vshll.u32 %v872, 16
      %v1169 = vrot.slane %v1167, 5
      %v1170 = vsel %vm906, %v1165, %v1169
      %v1172 = vshrl.u32 %v873, 16
      %v1174 = vrot.slane %v1172, 4
      %v1175 = vshll.u32 %v873, 16
      %v1177 = vrot.slane %v1175, 5
      %v1178 = vor.u32 %v1174, %v1177
      %v1179 = vrot.slane %v1178, 4
      %v1181 = vshll.u32 %v874, 16
      %v1183 = vrot.slane %v1181, 5
      %v1184 = vsel %vm906, %v1179, %v1183
      %v1185 = vshrl.u32 %v874, 16
      %v1187 = vrot.slane %v1185, 4
      %v1188 = vor.u32 %v1187, %v1183
      %v1189 = vrot.slane %v1188, 4
      %v1191 = vshll.u32 %v875, 16
      %v1193 = vrot.slane %v1191, 5
      %v1194 = vsel %vm906, %v1189, %v1193
      %v1196 = vshrl.u32 %v876, 16
      %v1198 = vrot.slane %v1196, 4
      %v1199 = vshll.u32 %v876, 16
      %v1201 = vrot.slane %v1199, 5
      %v1202 = vor.u32 %v1198, %v1201
      %v1203 = vrot.slane %v1202, 4
      %v1205 = vshll.u32 %v877, 16
      %v1207 = vrot.slane %v1205, 5
      %v1208 = vsel %vm906, %v1203, %v1207
      %v1209 = vshrl.u32 %v877, 16
      %v1211 = vrot.slane %v1209, 4
      %v1212 = vor.u32 %v1211, %v1207
      %v1213 = vrot.slane %v1212, 4
      %v1215 = vshll.u32 %v878, 16
      %v1217 = vrot.slane %v1215, 5
      %v1218 = vsel %vm906, %v1213, %v1217
      %v1220 = vshrl.u32 %v879, 16
      %v1222 = vrot.slane %v1220, 4
      %v1223 = vshll.u32 %v879, 16
      %v1225 = vrot.slane %v1223, 5
      %v1226 = vor.u32 %v1222, %v1225
      %v1227 = vrot.slane %v1226, 4
      %v1229 = vshll.u32 %v880, 16
      %v1231 = vrot.slane %v1229, 5
      %v1232 = vsel %vm906, %v1227, %v1231
      %v1233 = vshrl.u32 %v880, 16
      %v1235 = vrot.slane %v1233, 4
      %v1236 = vor.u32 %v1235, %v1231
      %v1237 = vrot.slane %v1236, 4
      %v1239 = vshll.u32 %v881, 16
      %v1241 = vrot.slane %v1239, 5
      %v1242 = vsel %vm906, %v1237, %v1241
      %v1244 = vshrl.u32 %v882, 16
      %v1246 = vrot.slane %v1244, 4
      %v1247 = vshll.u32 %v882, 16
      %v1249 = vrot.slane %v1247, 5
      %v1250 = vor.u32 %v1246, %v1249
      %v1251 = vrot.slane %v1250, 4
      %v1253 = vshll.u32 %v883, 16
      %v1255 = vrot.slane %v1253, 5
      %v1256 = vsel %vm906, %v1251, %v1255
      %v1257 = vshrl.u32 %v883, 16
      %v1259 = vrot.slane %v1257, 4
      %v1260 = vor.u32 %v1259, %v1255
      %v1261 = vrot.slane %v1260, 4
      %v1263 = vshll.u32 %v884, 16
      %v1265 = vrot.slane %v1263, 5
      %v1266 = vsel %vm906, %v1261, %v1265
      %v1268 = vshrl.u32 %v885, 16
      %v1270 = vrot.slane %v1268, 4
      %v1271 = vshll.u32 %v885, 16
      %v1273 = vrot.slane %v1271, 5
      %v1274 = vor.u32 %v1270, %v1273
      %v1275 = vrot.slane %v1274, 4
      %v1277 = vshll.u32 %v886, 16
      %v1279 = vrot.slane %v1277, 5
      %v1280 = vsel %vm906, %v1275, %v1279
      %v1281 = vshrl.u32 %v886, 16
      %v1283 = vrot.slane %v1281, 4
      %v1284 = vor.u32 %v1283, %v1279
      %v1285 = vrot.slane %v1284, 4
      %v1287 = vshll.u32 %v887, 16
      %v1289 = vrot.slane %v1287, 5
      %v1290 = vsel %vm906, %v1285, %v1289
      %s1291 = scalar_lea.vmem %s3, 64
      %v1292 = vld [vmem:[%s1291] sm:$0xf]
      %v1293 = vld [vmem:[%s1291 + $0x4] sm:$0xf]
      %v1294 = vld [vmem:[%s1291 + $0x8] sm:$0xf]
      %v1295 = vld [vmem:[%s1291 + $0xc] sm:$0xf]
      %v1296 = vld [vmem:[%s1291 + $0x10] sm:$0xf]
      %v1297 = vld [vmem:[%s1291 + $0x14] sm:$0xf]
      %v1298 = vld [vmem:[%s1291 + $0x18] sm:$0xf]
      %v1299 = vld [vmem:[%s1291 + $0x1c] sm:$0xf]
      %v1300 = vld [vmem:[%s1291 + $0x20] sm:$0xf]
      %v1301 = vld [vmem:[%s1291 + $0x24] sm:$0xf]
      %v1302 = vld [vmem:[%s1291 + $0x28] sm:$0xf]
      %v1303 = vld [vmem:[%s1291 + $0x2c] sm:$0xf]
      %v1304 = vld [vmem:[%s1291 + $0x30] sm:$0xf]
      %v1305 = vld [vmem:[%s1291 + $0x34] sm:$0xf]
      %v1306 = vld [vmem:[%s1291 + $0x38] sm:$0xf]
      %v1307 = vld [vmem:[%s1291 + $0x3c] sm:$0xf]
      %v1308 = vunpack.c.l.b16 %v920
      %v1309 = vunpack.c.l.b16 %v930
      %v1310 = vunpack.c.l.b16 %v944
      %v1311 = vunpack.c.l.b16 %v954
      %v1312 = vunpack.c.l.b16 %v968
      %v1313 = vunpack.c.l.b16 %v978
      %v1314 = vunpack.c.l.b16 %v992
      %v1315 = vunpack.c.l.b16 %v1002
      %v1316 = vunpack.c.l.b16 %v1016
      %v1317 = vunpack.c.l.b16 %v1026
      %v1318 = vunpack.c.l.b16 %v1040
      %v1319 = vunpack.c.l.b16 %v1050
      %v1320 = vunpack.c.l.b16 %v1064
      %v1321 = vunpack.c.l.b16 %v1074
      %v1322 = vunpack.c.l.b16 %v1088
      %v1323 = vunpack.c.l.b16 %v1098
      %v1324 = vunpack.c.l.b16 %v1112
      %v1325 = vunpack.c.l.b16 %v1122
      %v1326 = vunpack.c.l.b16 %v1136
      %v1327 = vunpack.c.l.b16 %v1146
      %v1328 = vunpack.c.l.b16 %v1160
      %v1329 = vunpack.c.l.b16 %v1170
      %v1330 = vunpack.c.l.b16 %v1184
      %v1331 = vunpack.c.l.b16 %v1194
      %v1332 = vunpack.c.l.b16 %v1208
      %v1333 = vunpack.c.l.b16 %v1218
      %v1334 = vunpack.c.l.b16 %v1232
      %v1335 = vunpack.c.l.b16 %v1242
      %v1336 = vunpack.c.l.b16 %v1256
      %v1337 = vunpack.c.l.b16 %v1266
      %v1338 = vunpack.c.l.b16 %v1280
      %v1339 = vunpack.c.l.b16 %v1290
      %v1340 = vpack.c.b16 %v1309, %v1308
      %v1341 = vpack.c.b16 %v1311, %v1310
      %v1342 = vpack.c.b16 %v1313, %v1312
      %v1343 = vpack.c.b16 %v1315, %v1314
      %v1344 = vpack.c.b16 %v1317, %v1316
      %v1345 = vpack.c.b16 %v1319, %v1318
      %v1346 = vpack.c.b16 %v1321, %v1320
      %v1347 = vpack.c.b16 %v1323, %v1322
      %v1348 = vpack.c.b16 %v1325, %v1324
      %v1349 = vpack.c.b16 %v1327, %v1326
      %v1350 = vpack.c.b16 %v1329, %v1328
      %v1351 = vpack.c.b16 %v1331, %v1330
      %v1352 = vpack.c.b16 %v1333, %v1332
      %v1353 = vpack.c.b16 %v1335, %v1334
      %v1354 = vpack.c.b16 %v1337, %v1336
      %v1355 = vpack.c.b16 %v1339, %v1338
      %v1388 = vunpack.c.l.b16 %v1292
      %v1389 = vunpack.c.l.b16 %v1293
      %v1390 = vunpack.c.l.b16 %v1294
      %v1391 = vunpack.c.l.b16 %v1295
      %v1392 = vunpack.c.l.b16 %v1296
      %v1393 = vunpack.c.l.b16 %v1297
      %v1394 = vunpack.c.l.b16 %v1298
      %v1395 = vunpack.c.l.b16 %v1299
      %v1396 = vunpack.c.l.b16 %v1300
      %v1397 = vunpack.c.l.b16 %v1301
      %v1398 = vunpack.c.l.b16 %v1302
      %v1399 = vunpack.c.l.b16 %v1303
      %v1400 = vunpack.c.l.b16 %v1304
      %v1401 = vunpack.c.l.b16 %v1305
      %v1402 = vunpack.c.l.b16 %v1306
      %v1403 = vunpack.c.l.b16 %v1307
      %v1404 = vpack.c.b16 %v1389, %v1388
      %v1405 = vpack.c.b16 %v1391, %v1390
      %v1406 = vpack.c.b16 %v1393, %v1392
      %v1407 = vpack.c.b16 %v1395, %v1394
      %v1408 = vpack.c.b16 %v1397, %v1396
      %v1409 = vpack.c.b16 %v1399, %v1398
      %v1410 = vpack.c.b16 %v1401, %v1400
      %v1411 = vpack.c.b16 %v1403, %v1402
      %1420 = vmatprep.subr.bf16.mxu0 0
      %1421 = vmatpush1.bf16.msra.mxu0 %v1404
      %1422 = vmatprep.subr.bf16.mxu0 0
      %1423 = vmatpush1.bf16.msra.mxu0 %v1405
      %1424 = vmatprep.subr.bf16.mxu0 0
      %1425 = vmatpush1.bf16.msra.mxu0 %v1406
      %1426 = vmatprep.subr.bf16.mxu0 0
      %1427 = vmatpush1.bf16.msra.mxu0 %v1407
      %1428 = vmatprep.subr.bf16.mxu0 0
      %1429 = vmatpush1.bf16.msra.mxu0 %v1408
      %1430 = vmatprep.subr.bf16.mxu0 0
      %1431 = vmatpush1.bf16.msra.mxu0 %v1409
      %1432 = vmatprep.subr.bf16.mxu0 0
      %1433 = vmatpush1.bf16.msra.mxu0 %v1410
      %1434 = vmatprep.subr.bf16.mxu0 0
      %1435 = vmatpush1.bf16.msra.mxu0 %v1411
      %1436 = vmatprep.subr.bf16.mxu0 0
      %1437 = vmatpush1.bf16.msra.mxu0 0
      %1438 = vmatprep.subr.bf16.mxu0 0
      %1439 = vmatpush1.bf16.msra.mxu0 0
      %1440 = vmatprep.subr.bf16.mxu0 0
      %1441 = vmatpush1.bf16.msra.mxu0 0
      %1442 = vmatprep.subr.bf16.mxu0 0
      %1443 = vmatpush1.bf16.msra.mxu0 0
      %1444 = vmatprep.subr.bf16.mxu0 0
      %1445 = vmatpush1.bf16.msra.mxu0 0
      %1446 = vmatprep.subr.bf16.mxu0 0
      %1447 = vmatpush1.bf16.msra.mxu0 0
      %1448 = vmatprep.subr.bf16.mxu0 0
      %1449 = vmatpush1.bf16.msra.mxu0 0
      %1450 = vmatprep.subr.bf16.mxu0 0
      %1451 = vmatpush1.bf16.msra.mxu0 0
      %1452 = vmatprep.mubr.bf16.mxu0 0
      %1453 = vmatmul.mubr.bf16.gmra.mrb[0].mxu0 %v1340
      %v1454 = vpop.f32.mrb[0].mxu0
      %v1455 = vadd.f32 0.0, %v1454
      %v1456 = vpop.f32.mrb[0].mxu0
      %v1457 = vpop.f32.mrb[0].mxu0
      %v1458 = vadd.f32 0.0, %v1457
      %v1459 = vpop.f32.mrb[0].mxu0
      %1460 = vmatprep.mubr.bf16.mxu0 0
      %1461 = vmatmul.mubr.bf16.gmra.mrb[0].mxu0 %v1341
      %v1462 = vpop.f32.mrb[0].mxu0
      %v1463 = vadd.f32 0.0, %v1462
      %v1464 = vpop.f32.mrb[0].mxu0
      %v1465 = vpop.f32.mrb[0].mxu0
      %v1466 = vadd.f32 0.0, %v1465
      %v1467 = vpop.f32.mrb[0].mxu0
      %1468 = vmatprep.mubr.bf16.mxu0 0
      %1469 = vmatmul.mubr.bf16.gmra.mrb[0].mxu0 %v1342
      %v1470 = vpop.f32.mrb[0].mxu0
      %v1471 = vadd.f32 0.0, %v1470
      %v1472 = vpop.f32.mrb[0].mxu0
      %v1473 = vpop.f32.mrb[0].mxu0
      %v1474 = vadd.f32 0.0, %v1473
      %v1475 = vpop.f32.mrb[0].mxu0
      %1476 = vmatprep.mubr.bf16.mxu0 0
      %1477 = vmatmul.mubr.bf16.gmra.mrb[0].mxu0 %v1343
      %v1478 = vpop.f32.mrb[0].mxu0
      %v1479 = vadd.f32 0.0, %v1478
      %v1480 = vpop.f32.mrb[0].mxu0
      %v1481 = vpop.f32.mrb[0].mxu0
      %v1482 = vadd.f32 0.0, %v1481
      %v1483 = vpop.f32.mrb[0].mxu0
      %1484 = vmatprep.mubr.bf16.mxu0 0
      %1485 = vmatmul.mubr.bf16.gmra.mrb[0].mxu0 %v1344
      %v1486 = vpop.f32.mrb[0].mxu0
      %v1487 = vadd.f32 0.0, %v1486
      %v1488 = vpop.f32.mrb[0].mxu0
      %v1489 = vpop.f32.mrb[0].mxu0
      %v1490 = vadd.f32 0.0, %v1489
      %v1491 = vpop.f32.mrb[0].mxu0
      %1492 = vmatprep.mubr.bf16.mxu0 0
      %1493 = vmatmul.mubr.bf16.gmra.mrb[0].mxu0 %v1345
      %v1494 = vpop.f32.mrb[0].mxu0
      %v1495 = vadd.f32 0.0, %v1494
      %v1496 = vpop.f32.mrb[0].mxu0
      %v1497 = vpop.f32.mrb[0].mxu0
      %v1498 = vadd.f32 0.0, %v1497
      %v1499 = vpop.f32.mrb[0].mxu0
      %1500 = vmatprep.mubr.bf16.mxu0 0
      %1501 = vmatmul.mubr.bf16.gmra.mrb[0].mxu0 %v1346
      %v1502 = vpop.f32.mrb[0].mxu0
      %v1503 = vadd.f32 0.0, %v1502
      %v1504 = vpop.f32.mrb[0].mxu0
      %v1505 = vpop.f32.mrb[0].mxu0
      %v1506 = vadd.f32 0.0, %v1505
      %v1507 = vpop.f32.mrb[0].mxu0
      %1508 = vmatprep.mubr.bf16.mxu0 0
      %1509 = vmatmul.mubr.bf16.gmra.mrb[0].mxu0 %v1347
      %v1510 = vpop.f32.mrb[0].mxu0
      %v1511 = vadd.f32 0.0, %v1510
      %v1512 = vpop.f32.mrb[0].mxu0
      %v1513 = vpop.f32.mrb[0].mxu0
      %v1514 = vadd.f32 0.0, %v1513
      %v1515 = vpop.f32.mrb[0].mxu0
      %1516 = vmatprep.mubr.bf16.mxu0 0
      %1517 = vmatmul.mubr.bf16.gmra.mrb[0].mxu0 %v1348
      %v1518 = vpop.f32.mrb[0].mxu0
      %v1519 = vadd.f32 0.0, %v1518
      %v1520 = vpop.f32.mrb[0].mxu0
      %v1521 = vpop.f32.mrb[0].mxu0
      %v1522 = vadd.f32 0.0, %v1521
      %v1523 = vpop.f32.mrb[0].mxu0
      %1524 = vmatprep.mubr.bf16.mxu0 0
      %1525 = vmatmul.mubr.bf16.gmra.mrb[0].mxu0 %v1349
      %v1526 = vpop.f32.mrb[0].mxu0
      %v1527 = vadd.f32 0.0, %v1526
      %v1528 = vpop.f32.mrb[0].mxu0
      %v1529 = vpop.f32.mrb[0].mxu0
      %v1530 = vadd.f32 0.0, %v1529
      %v1531 = vpop.f32.mrb[0].mxu0
      %1532 = vmatprep.mubr.bf16.mxu0 0
      %1533 = vmatmul.mubr.bf16.gmra.mrb[0].mxu0 %v1350
      %v1534 = vpop.f32.mrb[0].mxu0
      %v1535 = vadd.f32 0.0, %v1534
      %v1536 = vpop.f32.mrb[0].mxu0
      %v1537 = vpop.f32.mrb[0].mxu0
      %v1538 = vadd.f32 0.0, %v1537
      %v1539 = vpop.f32.mrb[0].mxu0
      %1540 = vmatprep.mubr.bf16.mxu0 0
      %1541 = vmatmul.mubr.bf16.gmra.mrb[0].mxu0 %v1351
      %v1542 = vpop.f32.mrb[0].mxu0
      %v1543 = vadd.f32 0.0, %v1542
      %v1544 = vpop.f32.mrb[0].mxu0
      %v1545 = vpop.f32.mrb[0].mxu0
      %v1546 = vadd.f32 0.0, %v1545
      %v1547 = vpop.f32.mrb[0].mxu0
      %1548 = vmatprep.mubr.bf16.mxu0 0
      %1549 = vmatmul.mubr.bf16.gmra.mrb[0].mxu0 %v1352
      %v1550 = vpop.f32.mrb[0].mxu0
      %v1551 = vadd.f32 0.0, %v1550
      %v1552 = vpop.f32.mrb[0].mxu0
      %v1553 = vpop.f32.mrb[0].mxu0
      %v1554 = vadd.f32 0.0, %v1553
      %v1555 = vpop.f32.mrb[0].mxu0
      %1556 = vmatprep.mubr.bf16.mxu0 0
      %1557 = vmatmul.mubr.bf16.gmra.mrb[0].mxu0 %v1353
      %v1558 = vpop.f32.mrb[0].mxu0
      %v1559 = vadd.f32 0.0, %v1558
      %v1560 = vpop.f32.mrb[0].mxu0
      %v1561 = vpop.f32.mrb[0].mxu0
      %v1562 = vadd.f32 0.0, %v1561
      %v1563 = vpop.f32.mrb[0].mxu0
      %1564 = vmatprep.mubr.bf16.mxu0 0
      %1565 = vmatmul.mubr.bf16.gmra.mrb[0].mxu0 %v1354
      %v1566 = vpop.f32.mrb[0].mxu0
      %v1567 = vadd.f32 0.0, %v1566
      %v1568 = vpop.f32.mrb[0].mxu0
      %v1569 = vpop.f32.mrb[0].mxu0
      %v1570 = vadd.f32 0.0, %v1569
      %v1571 = vpop.f32.mrb[0].mxu0
      %1572 = vmatprep.mubr.bf16.mxu0 0
      %1573 = vmatmul.mubr.bf16.gmra.mrb[0].mxu0 %v1355
      %v1574 = vpop.f32.mrb[0].mxu0
      %v1575 = vadd.f32 0.0, %v1574
      %v1576 = vpop.f32.mrb[0].mxu0
      %v1577 = vpop.f32.mrb[0].mxu0
      %v1578 = vadd.f32 0.0, %v1577
      %v1579 = vpop.f32.mrb[0].mxu0
      %1580 = vdwg.mxu0
      %v1613 = vunpack.c.l.b16 %v840
      %v1614 = vunpack.c.l.b16 %v841
      %v1615 = vunpack.c.l.b16 %v843
      %v1616 = vunpack.c.l.b16 %v844
      %v1617 = vunpack.c.l.b16 %v846
      %v1618 = vunpack.c.l.b16 %v847
      %v1619 = vunpack.c.l.b16 %v849
      %v1620 = vunpack.c.l.b16 %v850
      %v1621 = vunpack.c.l.b16 %v852
      %v1622 = vunpack.c.l.b16 %v853
      %v1623 = vunpack.c.l.b16 %v855
      %v1624 = vunpack.c.l.b16 %v856
      %v1625 = vunpack.c.l.b16 %v858
      %v1626 = vunpack.c.l.b16 %v859
      %v1627 = vunpack.c.l.b16 %v861
      %v1628 = vunpack.c.l.b16 %v862
      %v1629 = vunpack.c.l.b16 %v864
      %v1630 = vunpack.c.l.b16 %v865
      %v1631 = vunpack.c.l.b16 %v867
      %v1632 = vunpack.c.l.b16 %v868
      %v1633 = vunpack.c.l.b16 %v870
      %v1634 = vunpack.c.l.b16 %v871
      %v1635 = vunpack.c.l.b16 %v873
      %v1636 = vunpack.c.l.b16 %v874
      %v1637 = vunpack.c.l.b16 %v876
      %v1638 = vunpack.c.l.b16 %v877
      %v1639 = vunpack.c.l.b16 %v879
      %v1640 = vunpack.c.l.b16 %v880
      %v1641 = vunpack.c.l.b16 %v882
      %v1642 = vunpack.c.l.b16 %v883
      %v1643 = vunpack.c.l.b16 %v885
      %v1644 = vunpack.c.l.b16 %v886
      %v1645 = vpack.c.b16 %v1614, %v1613
      %v1646 = vpack.c.b16 %v1616, %v1615
      %v1647 = vpack.c.b16 %v1618, %v1617
      %v1648 = vpack.c.b16 %v1620, %v1619
      %v1649 = vpack.c.b16 %v1622, %v1621
      %v1650 = vpack.c.b16 %v1624, %v1623
      %v1651 = vpack.c.b16 %v1626, %v1625
      %v1652 = vpack.c.b16 %v1628, %v1627
      %v1653 = vpack.c.b16 %v1630, %v1629
      %v1654 = vpack.c.b16 %v1632, %v1631
      %v1655 = vpack.c.b16 %v1634, %v1633
      %v1656 = vpack.c.b16 %v1636, %v1635
      %v1657 = vpack.c.b16 %v1638, %v1637
      %v1658 = vpack.c.b16 %v1640, %v1639
      %v1659 = vpack.c.b16 %v1642, %v1641
      %v1660 = vpack.c.b16 %v1644, %v1643
      %v1693 = vunpack.c.l.b16 %v888
      %v1694 = vunpack.c.l.b16 %v889
      %v1695 = vunpack.c.l.b16 %v890
      %v1696 = vunpack.c.l.b16 %v891
      %v1697 = vunpack.c.l.b16 %v892
      %v1698 = vunpack.c.l.b16 %v893
      %v1699 = vunpack.c.l.b16 %v894
      %v1700 = vunpack.c.l.b16 %v895
      %v1701 = vunpack.c.l.b16 %v896
      %v1702 = vunpack.c.l.b16 %v897
      %v1703 = vunpack.c.l.b16 %v898
      %v1704 = vunpack.c.l.b16 %v899
      %v1705 = vunpack.c.l.b16 %v900
      %v1706 = vunpack.c.l.b16 %v901
      %v1707 = vunpack.c.l.b16 %v902
      %v1708 = vunpack.c.l.b16 %v903
      %v1709 = vpack.c.b16 %v1694, %v1693
      %v1710 = vpack.c.b16 %v1696, %v1695
      %v1711 = vpack.c.b16 %v1698, %v1697
      %v1712 = vpack.c.b16 %v1700, %v1699
      %v1713 = vpack.c.b16 %v1702, %v1701
      %v1714 = vpack.c.b16 %v1704, %v1703
      %v1715 = vpack.c.b16 %v1706, %v1705
      %v1716 = vpack.c.b16 %v1708, %v1707
      %1725 = vmatprep.subr.bf16.mxu0 0
      %1726 = vmatpush1.bf16.msra.mxu0 %v1709
      %1727 = vmatprep.subr.bf16.mxu0 0
      %1728 = vmatpush1.bf16.msra.mxu0 %v1710
      %1729 = vmatprep.subr.bf16.mxu0 0
      %1730 = vmatpush1.bf16.msra.mxu0 %v1711
      %1731 = vmatprep.subr.bf16.mxu0 0
      %1732 = vmatpush1.bf16.msra.mxu0 %v1712
      %1733 = vmatprep.subr.bf16.mxu0 0
      %1734 = vmatpush1.bf16.msra.mxu0 %v1713
      %1735 = vmatprep.subr.bf16.mxu0 0
      %1736 = vmatpush1.bf16.msra.mxu0 %v1714
      %1737 = vmatprep.subr.bf16.mxu0 0
      %1738 = vmatpush1.bf16.msra.mxu0 %v1715
      %1739 = vmatprep.subr.bf16.mxu0 0
      %1740 = vmatpush1.bf16.msra.mxu0 %v1716
      %1741 = vmatprep.subr.bf16.mxu0 0
      %1742 = vmatpush1.bf16.msra.mxu0 0
      %1743 = vmatprep.subr.bf16.mxu0 0
      %1744 = vmatpush1.bf16.msra.mxu0 0
      %1745 = vmatprep.subr.bf16.mxu0 0
      %1746 = vmatpush1.bf16.msra.mxu0 0
      %1747 = vmatprep.subr.bf16.mxu0 0
      %1748 = vmatpush1.bf16.msra.mxu0 0
      %1749 = vmatprep.subr.bf16.mxu0 0
      %1750 = vmatpush1.bf16.msra.mxu0 0
      %1751 = vmatprep.subr.bf16.mxu0 0
      %1752 = vmatpush1.bf16.msra.mxu0 0
      %1753 = vmatprep.subr.bf16.mxu0 0
      %1754 = vmatpush1.bf16.msra.mxu0 0
      %1755 = vmatprep.subr.bf16.mxu0 0
      %1756 = vmatpush1.bf16.msra.mxu0 0
      %1757 = vmatprep.mubr.bf16.mxu0 0
      %1758 = vmatmul.mubr.bf16.gmra.mrb[0].mxu0 %v1645
      %v1759 = vpop.f32.mrb[0].mxu0
      %v1760 = vadd.f32 %v1455, %v1759
      %v1761 = vpop.f32.mrb[0].mxu0
      %v1762 = vpop.f32.mrb[0].mxu0
      %v1763 = vadd.f32 %v1458, %v1762
      %v1764 = vpop.f32.mrb[0].mxu0
      %1765 = vmatprep.mubr.bf16.mxu0 0
      %1766 = vmatmul.mubr.bf16.gmra.mrb[0].mxu0 %v1646
      %v1767 = vpop.f32.mrb[0].mxu0
      %v1768 = vadd.f32 %v1463, %v1767
      %v1769 = vpop.f32.mrb[0].mxu0
      %v1770 = vpop.f32.mrb[0].mxu0
      %v1771 = vadd.f32 %v1466, %v1770
      %v1772 = vpop.f32.mrb[0].mxu0
      %1773 = vmatprep.mubr.bf16.mxu0 0
      %1774 = vmatmul.mubr.bf16.gmra.mrb[0].mxu0 %v1647
      %v1775 = vpop.f32.mrb[0].mxu0
      %v1776 = vadd.f32 %v1471, %v1775
      %v1777 = vpop.f32.mrb[0].mxu0
      %v1778 = vpop.f32.mrb[0].mxu0
      %v1779 = vadd.f32 %v1474, %v1778
      %v1780 = vpop.f32.mrb[0].mxu0
      %1781 = vmatprep.mubr.bf16.mxu0 0
      %1782 = vmatmul.mubr.bf16.gmra.mrb[0].mxu0 %v1648
      %v1783 = vpop.f32.mrb[0].mxu0
      %v1784 = vadd.f32 %v1479, %v1783
      %v1785 = vpop.f32.mrb[0].mxu0
      %v1786 = vpop.f32.mrb[0].mxu0
      %v1787 = vadd.f32 %v1482, %v1786
      %v1788 = vpop.f32.mrb[0].mxu0
      %1789 = vmatprep.mubr.bf16.mxu0 0
      %1790 = vmatmul.mubr.bf16.gmra.mrb[0].mxu0 %v1649
      %v1791 = vpop.f32.mrb[0].mxu0
      %v1792 = vadd.f32 %v1487, %v1791
      %v1793 = vpop.f32.mrb[0].mxu0
      %v1794 = vpop.f32.mrb[0].mxu0
      %v1795 = vadd.f32 %v1490, %v1794
      %v1796 = vpop.f32.mrb[0].mxu0
      %1797 = vmatprep.mubr.bf16.mxu0 0
      %1798 = vmatmul.mubr.bf16.gmra.mrb[0].mxu0 %v1650
      %v1799 = vpop.f32.mrb[0].mxu0
      %v1800 = vadd.f32 %v1495, %v1799
      %v1801 = vpop.f32.mrb[0].mxu0
      %v1802 = vpop.f32.mrb[0].mxu0
      %v1803 = vadd.f32 %v1498, %v1802
      %v1804 = vpop.f32.mrb[0].mxu0
      %1805 = vmatprep.mubr.bf16.mxu0 0
      %1806 = vmatmul.mubr.bf16.gmra.mrb[0].mxu0 %v1651
      %v1807 = vpop.f32.mrb[0].mxu0
      %v1808 = vadd.f32 %v1503, %v1807
      %v1809 = vpop.f32.mrb[0].mxu0
      %v1810 = vpop.f32.mrb[0].mxu0
      %v1811 = vadd.f32 %v1506, %v1810
      %v1812 = vpop.f32.mrb[0].mxu0
      %1813 = vmatprep.mubr.bf16.mxu0 0
      %1814 = vmatmul.mubr.bf16.gmra.mrb[0].mxu0 %v1652
      %v1815 = vpop.f32.mrb[0].mxu0
      %v1816 = vadd.f32 %v1511, %v1815
      %v1817 = vpop.f32.mrb[0].mxu0
      %v1818 = vpop.f32.mrb[0].mxu0
      %v1819 = vadd.f32 %v1514, %v1818
      %v1820 = vpop.f32.mrb[0].mxu0
      %1821 = vmatprep.mubr.bf16.mxu0 0
      %1822 = vmatmul.mubr.bf16.gmra.mrb[0].mxu0 %v1653
      %v1823 = vpop.f32.mrb[0].mxu0
      %v1824 = vadd.f32 %v1519, %v1823
      %v1825 = vpop.f32.mrb[0].mxu0
      %v1826 = vpop.f32.mrb[0].mxu0
      %v1827 = vadd.f32 %v1522, %v1826
      %v1828 = vpop.f32.mrb[0].mxu0
      %1829 = vmatprep.mubr.bf16.mxu0 0
      %1830 = vmatmul.mubr.bf16.gmra.mrb[0].mxu0 %v1654
      %v1831 = vpop.f32.mrb[0].mxu0
      %v1832 = vadd.f32 %v1527, %v1831
      %v1833 = vpop.f32.mrb[0].mxu0
      %v1834 = vpop.f32.mrb[0].mxu0
      %v1835 = vadd.f32 %v1530, %v1834
      %v1836 = vpop.f32.mrb[0].mxu0
      %1837 = vmatprep.mubr.bf16.mxu0 0
      %1838 = vmatmul.mubr.bf16.gmra.mrb[0].mxu0 %v1655
      %v1839 = vpop.f32.mrb[0].mxu0
      %v1840 = vadd.f32 %v1535, %v1839
      %v1841 = vpop.f32.mrb[0].mxu0
      %v1842 = vpop.f32.mrb[0].mxu0
      %v1843 = vadd.f32 %v1538, %v1842
      %v1844 = vpop.f32.mrb[0].mxu0
      %1845 = vmatprep.mubr.bf16.mxu0 0
      %1846 = vmatmul.mubr.bf16.gmra.mrb[0].mxu0 %v1656
      %v1847 = vpop.f32.mrb[0].mxu0
      %v1848 = vadd.f32 %v1543, %v1847
      %v1849 = vpop.f32.mrb[0].mxu0
      %v1850 = vpop.f32.mrb[0].mxu0
      %v1851 = vadd.f32 %v1546, %v1850
      %v1852 = vpop.f32.mrb[0].mxu0
      %1853 = vmatprep.mubr.bf16.mxu0 0
      %1854 = vmatmul.mubr.bf16.gmra.mrb[0].mxu0 %v1657
      %v1855 = vpop.f32.mrb[0].mxu0
      %v1856 = vadd.f32 %v1551, %v1855
      %v1857 = vpop.f32.mrb[0].mxu0
      %v1858 = vpop.f32.mrb[0].mxu0
      %v1859 = vadd.f32 %v1554, %v1858
      %v1860 = vpop.f32.mrb[0].mxu0
      %1861 = vmatprep.mubr.bf16.mxu0 0
      %1862 = vmatmul.mubr.bf16.gmra.mrb[0].mxu0 %v1658
      %v1863 = vpop.f32.mrb[0].mxu0
      %v1864 = vadd.f32 %v1559, %v1863
      %v1865 = vpop.f32.mrb[0].mxu0
      %v1866 = vpop.f32.mrb[0].mxu0
      %v1867 = vadd.f32 %v1562, %v1866
      %v1868 = vpop.f32.mrb[0].mxu0
      %1869 = vmatprep.mubr.bf16.mxu0 0
      %1870 = vmatmul.mubr.bf16.gmra.mrb[0].mxu0 %v1659
      %v1871 = vpop.f32.mrb[0].mxu0
      %v1872 = vadd.f32 %v1567, %v1871
      %v1873 = vpop.f32.mrb[0].mxu0
      %v1874 = vpop.f32.mrb[0].mxu0
      %v1875 = vadd.f32 %v1570, %v1874
      %v1876 = vpop.f32.mrb[0].mxu0
      %1877 = vmatprep.mubr.bf16.mxu0 0
      %1878 = vmatmul.mubr.bf16.gmra.mrb[0].mxu0 %v1660
      %v1879 = vpop.f32.mrb[0].mxu0
      %v1880 = vadd.f32 %v1575, %v1879
      %v1881 = vpop.f32.mrb[0].mxu0
      %v1882 = vpop.f32.mrb[0].mxu0
      %v1883 = vadd.f32 %v1578, %v1882
      %v1884 = vpop.f32.mrb[0].mxu0
      %1885 = vdwg.mxu0
      %vm1902 = vcmask 1042432
      %vm1903 = vcmask 1046532
      %vm1904 = vmor %vm1902, %vm1903
      %v1905 = vrot.slane %v840, 5
      %v1906 = vrot.slane %v1905, 4
      %v1907 = vrot.slane %v841, 5
      %v1908 = vsel %vm1904, %v1906, %v1907
      %v1909 = vrot.slane %v1907, 4
      %v1910 = vrot.slane %v842, 5
      %v1911 = vsel %vm1904, %v1909, %v1910
      %v1912 = vrot.slane %v843, 5
      %v1913 = vrot.slane %v1912, 4
      %v1914 = vrot.slane %v844, 5
      %v1915 = vsel %vm1904, %v1913, %v1914
      %v1916 = vrot.slane %v1914, 4
      %v1917 = vrot.slane %v845, 5
      %v1918 = vsel %vm1904, %v1916, %v1917
      %v1919 = vrot.slane %v846, 5
      %v1920 = vrot.slane %v1919, 4
      %v1921 = vrot.slane %v847, 5
      %v1922 = vsel %vm1904, %v1920, %v1921
      %v1923 = vrot.slane %v1921, 4
      %v1924 = vrot.slane %v848, 5
      %v1925 = vsel %vm1904, %v1923, %v1924
      %v1926 = vrot.slane %v849, 5
      %v1927 = vrot.slane %v1926, 4
      %v1928 = vrot.slane %v850, 5
      %v1929 = vsel %vm1904, %v1927, %v1928
      %v1930 = vrot.slane %v1928, 4
      %v1931 = vrot.slane %v851, 5
      %v1932 = vsel %vm1904, %v1930, %v1931
      %v1933 = vrot.slane %v852, 5
      %v1934 = vrot.slane %v1933, 4
      %v1935 = vrot.slane %v853, 5
      %v1936 = vsel %vm1904, %v1934, %v1935
      %v1937 = vrot.slane %v1935, 4
      %v1938 = vrot.slane %v854, 5
      %v1939 = vsel %vm1904, %v1937, %v1938
      %v1940 = vrot.slane %v855, 5
      %v1941 = vrot.slane %v1940, 4
      %v1942 = vrot.slane %v856, 5
      %v1943 = vsel %vm1904, %v1941, %v1942
      %v1944 = vrot.slane %v1942, 4
      %v1945 = vrot.slane %v857, 5
      %v1946 = vsel %vm1904, %v1944, %v1945
      %v1947 = vrot.slane %v858, 5
      %v1948 = vrot.slane %v1947, 4
      %v1949 = vrot.slane %v859, 5
      %v1950 = vsel %vm1904, %v1948, %v1949
      %v1951 = vrot.slane %v1949, 4
      %v1952 = vrot.slane %v860, 5
      %v1953 = vsel %vm1904, %v1951, %v1952
      %v1954 = vrot.slane %v861, 5
      %v1955 = vrot.slane %v1954, 4
      %v1956 = vrot.slane %v862, 5
      %v1957 = vsel %vm1904, %v1955, %v1956
      %v1958 = vrot.slane %v1956, 4
      %v1959 = vrot.slane %v863, 5
      %v1960 = vsel %vm1904, %v1958, %v1959
      %v1961 = vrot.slane %v864, 5
      %v1962 = vrot.slane %v1961, 4
      %v1963 = vrot.slane %v865, 5
      %v1964 = vsel %vm1904, %v1962, %v1963
      %v1965 = vrot.slane %v1963, 4
      %v1966 = vrot.slane %v866, 5
      %v1967 = vsel %vm1904, %v1965, %v1966
      %v1968 = vrot.slane %v867, 5
      %v1969 = vrot.slane %v1968, 4
      %v1970 = vrot.slane %v868, 5
      %v1971 = vsel %vm1904, %v1969, %v1970
      %v1972 = vrot.slane %v1970, 4
      %v1973 = vrot.slane %v869, 5
      %v1974 = vsel %vm1904, %v1972, %v1973
      %v1975 = vrot.slane %v870, 5
      %v1976 = vrot.slane %v1975, 4
      %v1977 = vrot.slane %v871, 5
      %v1978 = vsel %vm1904, %v1976, %v1977
      %v1979 = vrot.slane %v1977, 4
      %v1980 = vrot.slane %v872, 5
      %v1981 = vsel %vm1904, %v1979, %v1980
      %v1982 = vrot.slane %v873, 5
      %v1983 = vrot.slane %v1982, 4
      %v1984 = vrot.slane %v874, 5
      %v1985 = vsel %vm1904, %v1983, %v1984
      %v1986 = vrot.slane %v1984, 4
      %v1987 = vrot.slane %v875, 5
      %v1988 = vsel %vm1904, %v1986, %v1987
      %v1989 = vrot.slane %v876, 5
      %v1990 = vrot.slane %v1989, 4
      %v1991 = vrot.slane %v877, 5
      %v1992 = vsel %vm1904, %v1990, %v1991
      %v1993 = vrot.slane %v1991, 4
      %v1994 = vrot.slane %v878, 5
      %v1995 = vsel %vm1904, %v1993, %v1994
      %v1996 = vrot.slane %v879, 5
      %v1997 = vrot.slane %v1996, 4
      %v1998 = vrot.slane %v880, 5
      %v1999 = vsel %vm1904, %v1997, %v1998
      %v2000 = vrot.slane %v1998, 4
      %v2001 = vrot.slane %v881, 5
      %v2002 = vsel %vm1904, %v2000, %v2001
      %v2003 = vrot.slane %v882, 5
      %v2004 = vrot.slane %v2003, 4
      %v2005 = vrot.slane %v883, 5
      %v2006 = vsel %vm1904, %v2004, %v2005
      %v2007 = vrot.slane %v2005, 4
      %v2008 = vrot.slane %v884, 5
      %v2009 = vsel %vm1904, %v2007, %v2008
      %v2010 = vrot.slane %v885, 5
      %v2011 = vrot.slane %v2010, 4
      %v2012 = vrot.slane %v886, 5
      %v2013 = vsel %vm1904, %v2011, %v2012
      %v2014 = vrot.slane %v2012, 4
      %v2015 = vrot.slane %v887, 5
      %v2016 = vsel %vm1904, %v2014, %v2015
      %s2017 = scalar_lea.vmem %s3, 128
      %v2018 = vld [vmem:[%s2017] sm:$0xf]
      %v2019 = vld [vmem:[%s2017 + $0x4] sm:$0xf]
      %v2020 = vld [vmem:[%s2017 + $0x8] sm:$0xf]
      %v2021 = vld [vmem:[%s2017 + $0xc] sm:$0xf]
      %v2022 = vld [vmem:[%s2017 + $0x10] sm:$0xf]
      %v2023 = vld [vmem:[%s2017 + $0x14] sm:$0xf]
      %v2024 = vld [vmem:[%s2017 + $0x18] sm:$0xf]
      %v2025 = vld [vmem:[%s2017 + $0x1c] sm:$0xf]
      %v2026 = vld [vmem:[%s2017 + $0x20] sm:$0xf]
      %v2027 = vld [vmem:[%s2017 + $0x24] sm:$0xf]
      %v2028 = vld [vmem:[%s2017 + $0x28] sm:$0xf]
      %v2029 = vld [vmem:[%s2017 + $0x2c] sm:$0xf]
      %v2030 = vld [vmem:[%s2017 + $0x30] sm:$0xf]
      %v2031 = vld [vmem:[%s2017 + $0x34] sm:$0xf]
      %v2032 = vld [vmem:[%s2017 + $0x38] sm:$0xf]
      %v2033 = vld [vmem:[%s2017 + $0x3c] sm:$0xf]
      %v2034 = vunpack.c.l.b16 %v1908
      %v2035 = vunpack.c.l.b16 %v1911
      %v2036 = vunpack.c.l.b16 %v1915
      %v2037 = vunpack.c.l.b16 %v1918
      %v2038 = vunpack.c.l.b16 %v1922
      %v2039 = vunpack.c.l.b16 %v1925
      %v2040 = vunpack.c.l.b16 %v1929
      %v2041 = vunpack.c.l.b16 %v1932
      %v2042 = vunpack.c.l.b16 %v1936
      %v2043 = vunpack.c.l.b16 %v1939
      %v2044 = vunpack.c.l.b16 %v1943
      %v2045 = vunpack.c.l.b16 %v1946
      %v2046 = vunpack.c.l.b16 %v1950
      %v2047 = vunpack.c.l.b16 %v1953
      %v2048 = vunpack.c.l.b16 %v1957
      %v2049 = vunpack.c.l.b16 %v1960
      %v2050 = vunpack.c.l.b16 %v1964
      %v2051 = vunpack.c.l.b16 %v1967
      %v2052 = vunpack.c.l.b16 %v1971
      %v2053 = vunpack.c.l.b16 %v1974
      %v2054 = vunpack.c.l.b16 %v1978
      %v2055 = vunpack.c.l.b16 %v1981
      %v2056 = vunpack.c.l.b16 %v1985
      %v2057 = vunpack.c.l.b16 %v1988
      %v2058 = vunpack.c.l.b16 %v1992
      %v2059 = vunpack.c.l.b16 %v1995
      %v2060 = vunpack.c.l.b16 %v1999
      %v2061 = vunpack.c.l.b16 %v2002
      %v2062 = vunpack.c.l.b16 %v2006
      %v2063 = vunpack.c.l.b16 %v2009
      %v2064 = vunpack.c.l.b16 %v2013
      %v2065 = vunpack.c.l.b16 %v2016
      %v2066 = vpack.c.b16 %v2035, %v2034
      %v2067 = vpack.c.b16 %v2037, %v2036
      %v2068 = vpack.c.b16 %v2039, %v2038
      %v2069 = vpack.c.b16 %v2041, %v2040
      %v2070 = vpack.c.b16 %v2043, %v2042
      %v2071 = vpack.c.b16 %v2045, %v2044
      %v2072 = vpack.c.b16 %v2047, %v2046
      %v2073 = vpack.c.b16 %v2049, %v2048
      %v2074 = vpack.c.b16 %v2051, %v2050
      %v2075 = vpack.c.b16 %v2053, %v2052
      %v2076 = vpack.c.b16 %v2055, %v2054
      %v2077 = vpack.c.b16 %v2057, %v2056
      %v2078 = vpack.c.b16 %v2059, %v2058
      %v2079 = vpack.c.b16 %v2061, %v2060
      %v2080 = vpack.c.b16 %v2063, %v2062
      %v2081 = vpack.c.b16 %v2065, %v2064
      %v2114 = vunpack.c.l.b16 %v2018
      %v2115 = vunpack.c.l.b16 %v2019
      %v2116 = vunpack.c.l.b16 %v2020
      %v2117 = vunpack.c.l.b16 %v2021
      %v2118 = vunpack.c.l.b16 %v2022
      %v2119 = vunpack.c.l.b16 %v2023
      %v2120 = vunpack.c.l.b16 %v2024
      %v2121 = vunpack.c.l.b16 %v2025
      %v2122 = vunpack.c.l.b16 %v2026
      %v2123 = vunpack.c.l.b16 %v2027
      %v2124 = vunpack.c.l.b16 %v2028
      %v2125 = vunpack.c.l.b16 %v2029
      %v2126 = vunpack.c.l.b16 %v2030
      %v2127 = vunpack.c.l.b16 %v2031
      %v2128 = vunpack.c.l.b16 %v2032
      %v2129 = vunpack.c.l.b16 %v2033
      %v2130 = vpack.c.b16 %v2115, %v2114
      %v2131 = vpack.c.b16 %v2117, %v2116
      %v2132 = vpack.c.b16 %v2119, %v2118
      %v2133 = vpack.c.b16 %v2121, %v2120
      %v2134 = vpack.c.b16 %v2123, %v2122
      %v2135 = vpack.c.b16 %v2125, %v2124
      %v2136 = vpack.c.b16 %v2127, %v2126
      %v2137 = vpack.c.b16 %v2129, %v2128
      %2146 = vmatprep.subr.bf16.mxu0 0
      %2147 = vmatpush1.bf16.msra.mxu0 %v2130
      %2148 = vmatprep.subr.bf16.mxu0 0
      %2149 = vmatpush1.bf16.msra.mxu0 %v2131
      %2150 = vmatprep.subr.bf16.mxu0 0
      %2151 = vmatpush1.bf16.msra.mxu0 %v2132
      %2152 = vmatprep.subr.bf16.mxu0 0
      %2153 = vmatpush1.bf16.msra.mxu0 %v2133
      %2154 = vmatprep.subr.bf16.mxu0 0
      %2155 = vmatpush1.bf16.msra.mxu0 %v2134
      %2156 = vmatprep.subr.bf16.mxu0 0
      %2157 = vmatpush1.bf16.msra.mxu0 %v2135
      %2158 = vmatprep.subr.bf16.mxu0 0
      %2159 = vmatpush1.bf16.msra.mxu0 %v2136
      %2160 = vmatprep.subr.bf16.mxu0 0
      %2161 = vmatpush1.bf16.msra.mxu0 %v2137
      %2162 = vmatprep.subr.bf16.mxu0 0
      %2163 = vmatpush1.bf16.msra.mxu0 0
      %2164 = vmatprep.subr.bf16.mxu0 0
      %2165 = vmatpush1.bf16.msra.mxu0 0
      %2166 = vmatprep.subr.bf16.mxu0 0
      %2167 = vmatpush1.bf16.msra.mxu0 0
      %2168 = vmatprep.subr.bf16.mxu0 0
      %2169 = vmatpush1.bf16.msra.mxu0 0
      %2170 = vmatprep.subr.bf16.mxu0 0
      %2171 = vmatpush1.bf16.msra.mxu0 0
      %2172 = vmatprep.subr.bf16.mxu0 0
      %2173 = vmatpush1.bf16.msra.mxu0 0
      %2174 = vmatprep.subr.bf16.mxu0 0
      %2175 = vmatpush1.bf16.msra.mxu0 0
      %2176 = vmatprep.subr.bf16.mxu0 0
      %2177 = vmatpush1.bf16.msra.mxu0 0
      %2178 = vmatprep.mubr.bf16.mxu0 0
      %2179 = vmatmul.mubr.bf16.gmra.mrb[0].mxu0 %v2066
      %v2180 = vpop.f32.mrb[0].mxu0
      %v2181 = vadd.f32 0.0, %v2180
      %v2182 = vpop.f32.mrb[0].mxu0
      %v2183 = vpop.f32.mrb[0].mxu0
      %v2184 = vadd.f32 0.0, %v2183
      %v2185 = vpop.f32.mrb[0].mxu0
      %2186 = vmatprep.mubr.bf16.mxu0 0
      %2187 = vmatmul.mubr.bf16.gmra.mrb[0].mxu0 %v2067
      %v2188 = vpop.f32.mrb[0].mxu0
      %v2189 = vadd.f32 0.0, %v2188
      %v2190 = vpop.f32.mrb[0].mxu0
      %v2191 = vpop.f32.mrb[0].mxu0
      %v2192 = vadd.f32 0.0, %v2191
      %v2193 = vpop.f32.mrb[0].mxu0
      %2194 = vmatprep.mubr.bf16.mxu0 0
      %2195 = vmatmul.mubr.bf16.gmra.mrb[0].mxu0 %v2068
      %v2196 = vpop.f32.mrb[0].mxu0
      %v2197 = vadd.f32 0.0, %v2196
      %v2198 = vpop.f32.mrb[0].mxu0
      %v2199 = vpop.f32.mrb[0].mxu0
      %v2200 = vadd.f32 0.0, %v2199
      %v2201 = vpop.f32.mrb[0].mxu0
      %2202 = vmatprep.mubr.bf16.mxu0 0
      %2203 = vmatmul.mubr.bf16.gmra.mrb[0].mxu0 %v2069
      %v2204 = vpop.f32.mrb[0].mxu0
      %v2205 = vadd.f32 0.0, %v2204
      %v2206 = vpop.f32.mrb[0].mxu0
      %v2207 = vpop.f32.mrb[0].mxu0
      %v2208 = vadd.f32 0.0, %v2207
      %v2209 = vpop.f32.mrb[0].mxu0
      %2210 = vmatprep.mubr.bf16.mxu0 0
      %2211 = vmatmul.mubr.bf16.gmra.mrb[0].mxu0 %v2070
      %v2212 = vpop.f32.mrb[0].mxu0
      %v2213 = vadd.f32 0.0, %v2212
      %v2214 = vpop.f32.mrb[0].mxu0
      %v2215 = vpop.f32.mrb[0].mxu0
      %v2216 = vadd.f32 0.0, %v2215
      %v2217 = vpop.f32.mrb[0].mxu0
      %2218 = vmatprep.mubr.bf16.mxu0 0
      %2219 = vmatmul.mubr.bf16.gmra.mrb[0].mxu0 %v2071
      %v2220 = vpop.f32.mrb[0].mxu0
      %v2221 = vadd.f32 0.0, %v2220
      %v2222 = vpop.f32.mrb[0].mxu0
      %v2223 = vpop.f32.mrb[0].mxu0
      %v2224 = vadd.f32 0.0, %v2223
      %v2225 = vpop.f32.mrb[0].mxu0
      %2226 = vmatprep.mubr.bf16.mxu0 0
      %2227 = vmatmul.mubr.bf16.gmra.mrb[0].mxu0 %v2072
      %v2228 = vpop.f32.mrb[0].mxu0
      %v2229 = vadd.f32 0.0, %v2228
      %v2230 = vpop.f32.mrb[0].mxu0
      %v2231 = vpop.f32.mrb[0].mxu0
      %v2232 = vadd.f32 0.0, %v2231
      %v2233 = vpop.f32.mrb[0].mxu0
      %2234 = vmatprep.mubr.bf16.mxu0 0
      %2235 = vmatmul.mubr.bf16.gmra.mrb[0].mxu0 %v2073
      %v2236 = vpop.f32.mrb[0].mxu0
      %v2237 = vadd.f32 0.0, %v2236
      %v2238 = vpop.f32.mrb[0].mxu0
      %v2239 = vpop.f32.mrb[0].mxu0
      %v2240 = vadd.f32 0.0, %v2239
      %v2241 = vpop.f32.mrb[0].mxu0
      %2242 = vmatprep.mubr.bf16.mxu0 0
      %2243 = vmatmul.mubr.bf16.gmra.mrb[0].mxu0 %v2074
      %v2244 = vpop.f32.mrb[0].mxu0
      %v2245 = vadd.f32 0.0, %v2244
      %v2246 = vpop.f32.mrb[0].mxu0
      %v2247 = vpop.f32.mrb[0].mxu0
      %v2248 = vadd.f32 0.0, %v2247
      %v2249 = vpop.f32.mrb[0].mxu0
      %2250 = vmatprep.mubr.bf16.mxu0 0
      %2251 = vmatmul.mubr.bf16.gmra.mrb[0].mxu0 %v2075
      %v2252 = vpop.f32.mrb[0].mxu0
      %v2253 = vadd.f32 0.0, %v2252
      %v2254 = vpop.f32.mrb[0].mxu0
      %v2255 = vpop.f32.mrb[0].mxu0
      %v2256 = vadd.f32 0.0, %v2255
      %v2257 = vpop.f32.mrb[0].mxu0
      %2258 = vmatprep.mubr.bf16.mxu0 0
      %2259 = vmatmul.mubr.bf16.gmra.mrb[0].mxu0 %v2076
      %v2260 = vpop.f32.mrb[0].mxu0
      %v2261 = vadd.f32 0.0, %v2260
      %v2262 = vpop.f32.mrb[0].mxu0
      %v2263 = vpop.f32.mrb[0].mxu0
      %v2264 = vadd.f32 0.0, %v2263
      %v2265 = vpop.f32.mrb[0].mxu0
      %2266 = vmatprep.mubr.bf16.mxu0 0
      %2267 = vmatmul.mubr.bf16.gmra.mrb[0].mxu0 %v2077
      %v2268 = vpop.f32.mrb[0].mxu0
      %v2269 = vadd.f32 0.0, %v2268
      %v2270 = vpop.f32.mrb[0].mxu0
      %v2271 = vpop.f32.mrb[0].mxu0
      %v2272 = vadd.f32 0.0, %v2271
      %v2273 = vpop.f32.mrb[0].mxu0
      %2274 = vmatprep.mubr.bf16.mxu0 0
      %2275 = vmatmul.mubr.bf16.gmra.mrb[0].mxu0 %v2078
      %v2276 = vpop.f32.mrb[0].mxu0
      %v2277 = vadd.f32 0.0, %v2276
      %v2278 = vpop.f32.mrb[0].mxu0
      %v2279 = vpop.f32.mrb[0].mxu0
      %v2280 = vadd.f32 0.0, %v2279
      %v2281 = vpop.f32.mrb[0].mxu0
      %2282 = vmatprep.mubr.bf16.mxu0 0
      %2283 = vmatmul.mubr.bf16.gmra.mrb[0].mxu0 %v2079
      %v2284 = vpop.f32.mrb[0].mxu0
      %v2285 = vadd.f32 0.0, %v2284
      %v2286 = vpop.f32.mrb[0].mxu0
      %v2287 = vpop.f32.mrb[0].mxu0
      %v2288 = vadd.f32 0.0, %v2287
      %v2289 = vpop.f32.mrb[0].mxu0
      %2290 = vmatprep.mubr.bf16.mxu0 0
      %2291 = vmatmul.mubr.bf16.gmra.mrb[0].mxu0 %v2080
      %v2292 = vpop.f32.mrb[0].mxu0
      %v2293 = vadd.f32 0.0, %v2292
      %v2294 = vpop.f32.mrb[0].mxu0
      %v2295 = vpop.f32.mrb[0].mxu0
      %v2296 = vadd.f32 0.0, %v2295
      %v2297 = vpop.f32.mrb[0].mxu0
      %2298 = vmatprep.mubr.bf16.mxu0 0
      %2299 = vmatmul.mubr.bf16.gmra.mrb[0].mxu0 %v2081
      %v2300 = vpop.f32.mrb[0].mxu0
      %v2301 = vadd.f32 0.0, %v2300
      %v2302 = vpop.f32.mrb[0].mxu0
      %v2303 = vpop.f32.mrb[0].mxu0
      %v2304 = vadd.f32 0.0, %v2303
      %v2305 = vpop.f32.mrb[0].mxu0
      %2306 = vdwg.mxu0
      %v2307 = vadd.f32 %v1760, %v2181
      %v2308 = vadd.f32 %v1763, %v2184
      %v2309 = vadd.f32 %v1768, %v2189
      %v2310 = vadd.f32 %v1771, %v2192
      %v2311 = vadd.f32 %v1776, %v2197
      %v2312 = vadd.f32 %v1779, %v2200
      %v2313 = vadd.f32 %v1784, %v2205
      %v2314 = vadd.f32 %v1787, %v2208
      %v2315 = vadd.f32 %v1792, %v2213
      %v2316 = vadd.f32 %v1795, %v2216
      %v2317 = vadd.f32 %v1800, %v2221
      %v2318 = vadd.f32 %v1803, %v2224
      %v2319 = vadd.f32 %v1808, %v2229
      %v2320 = vadd.f32 %v1811, %v2232
      %v2321 = vadd.f32 %v1816, %v2237
      %v2322 = vadd.f32 %v1819, %v2240
      %v2323 = vadd.f32 %v1824, %v2245
      %v2324 = vadd.f32 %v1827, %v2248
      %v2325 = vadd.f32 %v1832, %v2253
      %v2326 = vadd.f32 %v1835, %v2256
      %v2327 = vadd.f32 %v1840, %v2261
      %v2328 = vadd.f32 %v1843, %v2264
      %v2329 = vadd.f32 %v1848, %v2269
      %v2330 = vadd.f32 %v1851, %v2272
      %v2331 = vadd.f32 %v1856, %v2277
      %v2332 = vadd.f32 %v1859, %v2280
      %v2333 = vadd.f32 %v1864, %v2285
      %v2334 = vadd.f32 %v1867, %v2288
      %v2335 = vadd.f32 %v1872, %v2293
      %v2336 = vadd.f32 %v1875, %v2296
      %v2337 = vadd.f32 %v1880, %v2301
      %v2338 = vadd.f32 %v1883, %v2304
      %v2339 = vld [vmem:[%s789] sm:$0xf]
      %v2340 = vld [vmem:[%s789 + $0x4] sm:$0xf]
      %v2341 = vld [vmem:[%s789 + $0x8] sm:$0x1]
      %v2342 = vld [vmem:[%s789 + $0xc] sm:$0xf]
      %v2343 = vld [vmem:[%s789 + $0x10] sm:$0xf]
      %v2344 = vld [vmem:[%s789 + $0x14] sm:$0x1]
      %v2345 = vld [vmem:[%s789 + $0x18] sm:$0xf]
      %v2346 = vld [vmem:[%s789 + $0x1c] sm:$0xf]
      %v2347 = vld [vmem:[%s789 + $0x20] sm:$0x1]
      %v2348 = vld [vmem:[%s789 + $0x24] sm:$0xf]
      %v2349 = vld [vmem:[%s789 + $0x28] sm:$0xf]
      %v2350 = vld [vmem:[%s789 + $0x2c] sm:$0x1]
      %v2351 = vld [vmem:[%s789 + $0x30] sm:$0xf]
      %v2352 = vld [vmem:[%s789 + $0x34] sm:$0xf]
      %v2353 = vld [vmem:[%s789 + $0x38] sm:$0x1]
      %v2354 = vld [vmem:[%s789 + $0x3c] sm:$0xf]
      %v2355 = vld [vmem:[%s789 + $0x40] sm:$0xf]
      %v2356 = vld [vmem:[%s789 + $0x44] sm:$0x1]
      %v2357 = vld [vmem:[%s789 + $0x48] sm:$0xf]
      %v2358 = vld [vmem:[%s789 + $0x4c] sm:$0xf]
      %v2359 = vld [vmem:[%s789 + $0x50] sm:$0x1]
      %v2360 = vld [vmem:[%s789 + $0x54] sm:$0xf]
      %v2361 = vld [vmem:[%s789 + $0x58] sm:$0xf]
      %v2362 = vld [vmem:[%s789 + $0x5c] sm:$0x1]
      %v2363 = vld [vmem:[%s789 + $0x60] sm:$0xf]
      %v2364 = vld [vmem:[%s789 + $0x64] sm:$0xf]
      %v2365 = vld [vmem:[%s789 + $0x68] sm:$0x1]
      %v2366 = vld [vmem:[%s789 + $0x6c] sm:$0xf]
      %v2367 = vld [vmem:[%s789 + $0x70] sm:$0xf]
      %v2368 = vld [vmem:[%s789 + $0x74] sm:$0x1]
      %v2369 = vld [vmem:[%s789 + $0x78] sm:$0xf]
      %v2370 = vld [vmem:[%s789 + $0x7c] sm:$0xf]
      %v2371 = vld [vmem:[%s789 + $0x80] sm:$0x1]
      %v2372 = vld [vmem:[%s789 + $0x84] sm:$0xf]
      %v2373 = vld [vmem:[%s789 + $0x88] sm:$0xf]
      %v2374 = vld [vmem:[%s789 + $0x8c] sm:$0x1]
      %v2375 = vld [vmem:[%s789 + $0x90] sm:$0xf]
      %v2376 = vld [vmem:[%s789 + $0x94] sm:$0xf]
      %v2377 = vld [vmem:[%s789 + $0x98] sm:$0x1]
      %v2378 = vld [vmem:[%s789 + $0x9c] sm:$0xf]
      %v2379 = vld [vmem:[%s789 + $0xa0] sm:$0xf]
      %v2380 = vld [vmem:[%s789 + $0xa4] sm:$0x1]
      %v2381 = vld [vmem:[%s789 + $0xa8] sm:$0xf]
      %v2382 = vld [vmem:[%s789 + $0xac] sm:$0xf]
      %v2383 = vld [vmem:[%s789 + $0xb0] sm:$0x1]
      %v2384 = vld [vmem:[%s789 + $0xb4] sm:$0xf]
      %v2385 = vld [vmem:[%s789 + $0xb8] sm:$0xf]
      %v2386 = vld [vmem:[%s789 + $0xbc] sm:$0x1]
      %s2387 = scalar_lea.vmem %s3, 192
      %v2388 = vld [vmem:[%s2387] sm:$0xf]
      %v2389 = vld [vmem:[%s2387 + $0x4] sm:$0xf]
      %v2390 = vld [vmem:[%s2387 + $0x8] sm:$0xf]
      %v2391 = vld [vmem:[%s2387 + $0xc] sm:$0xf]
      %v2392 = vld [vmem:[%s2387 + $0x10] sm:$0xf]
      %v2393 = vld [vmem:[%s2387 + $0x14] sm:$0xf]
      %v2394 = vld [vmem:[%s2387 + $0x18] sm:$0xf]
      %v2395 = vld [vmem:[%s2387 + $0x1c] sm:$0xf]
      %v2396 = vld [vmem:[%s2387 + $0x20] sm:$0xf]
      %v2397 = vld [vmem:[%s2387 + $0x24] sm:$0xf]
      %v2398 = vld [vmem:[%s2387 + $0x28] sm:$0xf]
      %v2399 = vld [vmem:[%s2387 + $0x2c] sm:$0xf]
      %v2400 = vld [vmem:[%s2387 + $0x30] sm:$0xf]
      %v2401 = vld [vmem:[%s2387 + $0x34] sm:$0xf]
      %v2402 = vld [vmem:[%s2387 + $0x38] sm:$0xf]
      %v2403 = vld [vmem:[%s2387 + $0x3c] sm:$0xf]
      %v2436 = vunpack.c.l.b16 %v2339
      %v2437 = vunpack.c.l.b16 %v2340
      %v2438 = vunpack.c.l.b16 %v2342
      %v2439 = vunpack.c.l.b16 %v2343
      %v2440 = vunpack.c.l.b16 %v2345
      %v2441 = vunpack.c.l.b16 %v2346
      %v2442 = vunpack.c.l.b16 %v2348
      %v2443 = vunpack.c.l.b16 %v2349
      %v2444 = vunpack.c.l.b16 %v2351
      %v2445 = vunpack.c.l.b16 %v2352
      %v2446 = vunpack.c.l.b16 %v2354
      %v2447 = vunpack.c.l.b16 %v2355
      %v2448 = vunpack.c.l.b16 %v2357
      %v2449 = vunpack.c.l.b16 %v2358
      %v2450 = vunpack.c.l.b16 %v2360
      %v2451 = vunpack.c.l.b16 %v2361
      %v2452 = vunpack.c.l.b16 %v2363
      %v2453 = vunpack.c.l.b16 %v2364
      %v2454 = vunpack.c.l.b16 %v2366
      %v2455 = vunpack.c.l.b16 %v2367
      %v2456 = vunpack.c.l.b16 %v2369
      %v2457 = vunpack.c.l.b16 %v2370
      %v2458 = vunpack.c.l.b16 %v2372
      %v2459 = vunpack.c.l.b16 %v2373
      %v2460 = vunpack.c.l.b16 %v2375
      %v2461 = vunpack.c.l.b16 %v2376
      %v2462 = vunpack.c.l.b16 %v2378
      %v2463 = vunpack.c.l.b16 %v2379
      %v2464 = vunpack.c.l.b16 %v2381
      %v2465 = vunpack.c.l.b16 %v2382
      %v2466 = vunpack.c.l.b16 %v2384
      %v2467 = vunpack.c.l.b16 %v2385
      %v2468 = vpack.c.b16 %v2437, %v2436
      %v2469 = vpack.c.b16 %v2439, %v2438
      %v2470 = vpack.c.b16 %v2441, %v2440
      %v2471 = vpack.c.b16 %v2443, %v2442
      %v2472 = vpack.c.b16 %v2445, %v2444
      %v2473 = vpack.c.b16 %v2447, %v2446
      %v2474 = vpack.c.b16 %v2449, %v2448
      %v2475 = vpack.c.b16 %v2451, %v2450
      %v2476 = vpack.c.b16 %v2453, %v2452
      %v2477 = vpack.c.b16 %v2455, %v2454
      %v2478 = vpack.c.b16 %v2457, %v2456
      %v2479 = vpack.c.b16 %v2459, %v2458
      %v2480 = vpack.c.b16 %v2461, %v2460
      %v2481 = vpack.c.b16 %v2463, %v2462
      %v2482 = vpack.c.b16 %v2465, %v2464
      %v2483 = vpack.c.b16 %v2467, %v2466
      %v2516 = vunpack.c.l.b16 %v2388
      %v2517 = vunpack.c.l.b16 %v2389
      %v2518 = vunpack.c.l.b16 %v2390
      %v2519 = vunpack.c.l.b16 %v2391
      %v2520 = vunpack.c.l.b16 %v2392
      %v2521 = vunpack.c.l.b16 %v2393
      %v2522 = vunpack.c.l.b16 %v2394
      %v2523 = vunpack.c.l.b16 %v2395
      %v2524 = vunpack.c.l.b16 %v2396
      %v2525 = vunpack.c.l.b16 %v2397
      %v2526 = vunpack.c.l.b16 %v2398
      %v2527 = vunpack.c.l.b16 %v2399
      %v2528 = vunpack.c.l.b16 %v2400
      %v2529 = vunpack.c.l.b16 %v2401
      %v2530 = vunpack.c.l.b16 %v2402
      %v2531 = vunpack.c.l.b16 %v2403
      %v2532 = vpack.c.b16 %v2517, %v2516
      %v2533 = vpack.c.b16 %v2519, %v2518
      %v2534 = vpack.c.b16 %v2521, %v2520
      %v2535 = vpack.c.b16 %v2523, %v2522
      %v2536 = vpack.c.b16 %v2525, %v2524
      %v2537 = vpack.c.b16 %v2527, %v2526
      %v2538 = vpack.c.b16 %v2529, %v2528
      %v2539 = vpack.c.b16 %v2531, %v2530
      %2548 = vmatprep.subr.bf16.mxu0 0
      %2549 = vmatpush1.bf16.msra.mxu0 %v2532
      %2550 = vmatprep.subr.bf16.mxu0 0
      %2551 = vmatpush1.bf16.msra.mxu0 %v2533
      %2552 = vmatprep.subr.bf16.mxu0 0
      %2553 = vmatpush1.bf16.msra.mxu0 %v2534
      %2554 = vmatprep.subr.bf16.mxu0 0
      %2555 = vmatpush1.bf16.msra.mxu0 %v2535
      %2556 = vmatprep.subr.bf16.mxu0 0
      %2557 = vmatpush1.bf16.msra.mxu0 %v2536
      %2558 = vmatprep.subr.bf16.mxu0 0
      %2559 = vmatpush1.bf16.msra.mxu0 %v2537
      %2560 = vmatprep.subr.bf16.mxu0 0
      %2561 = vmatpush1.bf16.msra.mxu0 %v2538
      %2562 = vmatprep.subr.bf16.mxu0 0
      %2563 = vmatpush1.bf16.msra.mxu0 %v2539
      %2564 = vmatprep.subr.bf16.mxu0 0
      %2565 = vmatpush1.bf16.msra.mxu0 0
      %2566 = vmatprep.subr.bf16.mxu0 0
      %2567 = vmatpush1.bf16.msra.mxu0 0
      %2568 = vmatprep.subr.bf16.mxu0 0
      %2569 = vmatpush1.bf16.msra.mxu0 0
      %2570 = vmatprep.subr.bf16.mxu0 0
      %2571 = vmatpush1.bf16.msra.mxu0 0
      %2572 = vmatprep.subr.bf16.mxu0 0
      %2573 = vmatpush1.bf16.msra.mxu0 0
      %2574 = vmatprep.subr.bf16.mxu0 0
      %2575 = vmatpush1.bf16.msra.mxu0 0
      %2576 = vmatprep.subr.bf16.mxu0 0
      %2577 = vmatpush1.bf16.msra.mxu0 0
      %2578 = vmatprep.subr.bf16.mxu0 0
      %2579 = vmatpush1.bf16.msra.mxu0 0
      %2580 = vmatprep.mubr.bf16.mxu0 0
      %2581 = vmatmul.mubr.bf16.gmra.mrb[0].mxu0 %v2468
      %v2582 = vpop.f32.mrb[0].mxu0
      %v2583 = vadd.f32 0.0, %v2582
      %v2584 = vpop.f32.mrb[0].mxu0
      %v2585 = vpop.f32.mrb[0].mxu0
      %v2586 = vadd.f32 0.0, %v2585
      %v2587 = vpop.f32.mrb[0].mxu0
      %2588 = vmatprep.mubr.bf16.mxu0 0
      %2589 = vmatmul.mubr.bf16.gmra.mrb[0].mxu0 %v2469
      %v2590 = vpop.f32.mrb[0].mxu0
      %v2591 = vadd.f32 0.0, %v2590
      %v2592 = vpop.f32.mrb[0].mxu0
      %v2593 = vpop.f32.mrb[0].mxu0
      %v2594 = vadd.f32 0.0, %v2593
      %v2595 = vpop.f32.mrb[0].mxu0
      %2596 = vmatprep.mubr.bf16.mxu0 0
      %2597 = vmatmul.mubr.bf16.gmra.mrb[0].mxu0 %v2470
      %v2598 = vpop.f32.mrb[0].mxu0
      %v2599 = vadd.f32 0.0, %v2598
      %v2600 = vpop.f32.mrb[0].mxu0
      %v2601 = vpop.f32.mrb[0].mxu0
      %v2602 = vadd.f32 0.0, %v2601
      %v2603 = vpop.f32.mrb[0].mxu0
      %2604 = vmatprep.mubr.bf16.mxu0 0
      %2605 = vmatmul.mubr.bf16.gmra.mrb[0].mxu0 %v2471
      %v2606 = vpop.f32.mrb[0].mxu0
      %v2607 = vadd.f32 0.0, %v2606
      %v2608 = vpop.f32.mrb[0].mxu0
      %v2609 = vpop.f32.mrb[0].mxu0
      %v2610 = vadd.f32 0.0, %v2609
      %v2611 = vpop.f32.mrb[0].mxu0
      %2612 = vmatprep.mubr.bf16.mxu0 0
      %2613 = vmatmul.mubr.bf16.gmra.mrb[0].mxu0 %v2472
      %v2614 = vpop.f32.mrb[0].mxu0
      %v2615 = vadd.f32 0.0, %v2614
      %v2616 = vpop.f32.mrb[0].mxu0
      %v2617 = vpop.f32.mrb[0].mxu0
      %v2618 = vadd.f32 0.0, %v2617
      %v2619 = vpop.f32.mrb[0].mxu0
      %2620 = vmatprep.mubr.bf16.mxu0 0
      %2621 = vmatmul.mubr.bf16.gmra.mrb[0].mxu0 %v2473
      %v2622 = vpop.f32.mrb[0].mxu0
      %v2623 = vadd.f32 0.0, %v2622
      %v2624 = vpop.f32.mrb[0].mxu0
      %v2625 = vpop.f32.mrb[0].mxu0
      %v2626 = vadd.f32 0.0, %v2625
      %v2627 = vpop.f32.mrb[0].mxu0
      %2628 = vmatprep.mubr.bf16.mxu0 0
      %2629 = vmatmul.mubr.bf16.gmra.mrb[0].mxu0 %v2474
      %v2630 = vpop.f32.mrb[0].mxu0
      %v2631 = vadd.f32 0.0, %v2630
      %v2632 = vpop.f32.mrb[0].mxu0
      %v2633 = vpop.f32.mrb[0].mxu0
      %v2634 = vadd.f32 0.0, %v2633
      %v2635 = vpop.f32.mrb[0].mxu0
      %2636 = vmatprep.mubr.bf16.mxu0 0
      %2637 = vmatmul.mubr.bf16.gmra.mrb[0].mxu0 %v2475
      %v2638 = vpop.f32.mrb[0].mxu0
      %v2639 = vadd.f32 0.0, %v2638
      %v2640 = vpop.f32.mrb[0].mxu0
      %v2641 = vpop.f32.mrb[0].mxu0
      %v2642 = vadd.f32 0.0, %v2641
      %v2643 = vpop.f32.mrb[0].mxu0
      %2644 = vmatprep.mubr.bf16.mxu0 0
      %2645 = vmatmul.mubr.bf16.gmra.mrb[0].mxu0 %v2476
      %v2646 = vpop.f32.mrb[0].mxu0
      %v2647 = vadd.f32 0.0, %v2646
      %v2648 = vpop.f32.mrb[0].mxu0
      %v2649 = vpop.f32.mrb[0].mxu0
      %v2650 = vadd.f32 0.0, %v2649
      %v2651 = vpop.f32.mrb[0].mxu0
      %2652 = vmatprep.mubr.bf16.mxu0 0
      %2653 = vmatmul.mubr.bf16.gmra.mrb[0].mxu0 %v2477
      %v2654 = vpop.f32.mrb[0].mxu0
      %v2655 = vadd.f32 0.0, %v2654
      %v2656 = vpop.f32.mrb[0].mxu0
      %v2657 = vpop.f32.mrb[0].mxu0
      %v2658 = vadd.f32 0.0, %v2657
      %v2659 = vpop.f32.mrb[0].mxu0
      %2660 = vmatprep.mubr.bf16.mxu0 0
      %2661 = vmatmul.mubr.bf16.gmra.mrb[0].mxu0 %v2478
      %v2662 = vpop.f32.mrb[0].mxu0
      %v2663 = vadd.f32 0.0, %v2662
      %v2664 = vpop.f32.mrb[0].mxu0
      %v2665 = vpop.f32.mrb[0].mxu0
      %v2666 = vadd.f32 0.0, %v2665
      %v2667 = vpop.f32.mrb[0].mxu0
      %2668 = vmatprep.mubr.bf16.mxu0 0
      %2669 = vmatmul.mubr.bf16.gmra.mrb[0].mxu0 %v2479
      %v2670 = vpop.f32.mrb[0].mxu0
      %v2671 = vadd.f32 0.0, %v2670
      %v2672 = vpop.f32.mrb[0].mxu0
      %v2673 = vpop.f32.mrb[0].mxu0
      %v2674 = vadd.f32 0.0, %v2673
      %v2675 = vpop.f32.mrb[0].mxu0
      %2676 = vmatprep.mubr.bf16.mxu0 0
      %2677 = vmatmul.mubr.bf16.gmra.mrb[0].mxu0 %v2480
      %v2678 = vpop.f32.mrb[0].mxu0
      %v2679 = vadd.f32 0.0, %v2678
      %v2680 = vpop.f32.mrb[0].mxu0
      %v2681 = vpop.f32.mrb[0].mxu0
      %v2682 = vadd.f32 0.0, %v2681
      %v2683 = vpop.f32.mrb[0].mxu0
      %2684 = vmatprep.mubr.bf16.mxu0 0
      %2685 = vmatmul.mubr.bf16.gmra.mrb[0].mxu0 %v2481
      %v2686 = vpop.f32.mrb[0].mxu0
      %v2687 = vadd.f32 0.0, %v2686
      %v2688 = vpop.f32.mrb[0].mxu0
      %v2689 = vpop.f32.mrb[0].mxu0
      %v2690 = vadd.f32 0.0, %v2689
      %v2691 = vpop.f32.mrb[0].mxu0
      %2692 = vmatprep.mubr.bf16.mxu0 0
      %2693 = vmatmul.mubr.bf16.gmra.mrb[0].mxu0 %v2482
      %v2694 = vpop.f32.mrb[0].mxu0
      %v2695 = vadd.f32 0.0, %v2694
      %v2696 = vpop.f32.mrb[0].mxu0
      %v2697 = vpop.f32.mrb[0].mxu0
      %v2698 = vadd.f32 0.0, %v2697
      %v2699 = vpop.f32.mrb[0].mxu0
      %2700 = vmatprep.mubr.bf16.mxu0 0
      %2701 = vmatmul.mubr.bf16.gmra.mrb[0].mxu0 %v2483
      %v2702 = vpop.f32.mrb[0].mxu0
      %v2703 = vadd.f32 0.0, %v2702
      %v2704 = vpop.f32.mrb[0].mxu0
      %v2705 = vpop.f32.mrb[0].mxu0
      %v2706 = vadd.f32 0.0, %v2705
      %v2707 = vpop.f32.mrb[0].mxu0
      %2708 = vdwg.mxu0
      %v2709 = vadd.f32 %v2307, %v2583
      %v2710 = vadd.f32 %v2308, %v2586
      %v2711 = vadd.f32 %v2309, %v2591
      %v2712 = vadd.f32 %v2310, %v2594
      %v2713 = vadd.f32 %v2311, %v2599
      %v2714 = vadd.f32 %v2312, %v2602
      %v2715 = vadd.f32 %v2313, %v2607
      %v2716 = vadd.f32 %v2314, %v2610
      %v2717 = vadd.f32 %v2315, %v2615
      %v2718 = vadd.f32 %v2316, %v2618
      %v2719 = vadd.f32 %v2317, %v2623
      %v2720 = vadd.f32 %v2318, %v2626
      %v2721 = vadd.f32 %v2319, %v2631
      %v2722 = vadd.f32 %v2320, %v2634
      %v2723 = vadd.f32 %v2321, %v2639
      %v2724 = vadd.f32 %v2322, %v2642
      %v2725 = vadd.f32 %v2323, %v2647
      %v2726 = vadd.f32 %v2324, %v2650
      %v2727 = vadd.f32 %v2325, %v2655
      %v2728 = vadd.f32 %v2326, %v2658
      %v2729 = vadd.f32 %v2327, %v2663
      %v2730 = vadd.f32 %v2328, %v2666
      %v2731 = vadd.f32 %v2329, %v2671
      %v2732 = vadd.f32 %v2330, %v2674
      %v2733 = vadd.f32 %v2331, %v2679
      %v2734 = vadd.f32 %v2332, %v2682
      %v2735 = vadd.f32 %v2333, %v2687
      %v2736 = vadd.f32 %v2334, %v2690
      %v2737 = vadd.f32 %v2335, %v2695
      %v2738 = vadd.f32 %v2336, %v2698
      %v2739 = vadd.f32 %v2337, %v2703
      %v2740 = vadd.f32 %v2338, %v2706
      %v2742 = vshrl.u32 %v2339, 16
      %v2744 = vrot.slane %v2742, 4
      %v2745 = vshll.u32 %v2339, 16
      %v2747 = vrot.slane %v2745, 5
      %v2748 = vor.u32 %v2744, %v2747
      %v2749 = vrot.slane %v2748, 4
      %v2751 = vshll.u32 %v2340, 16
      %v2753 = vrot.slane %v2751, 5
      %v2754 = vsel %vm906, %v2749, %v2753
      %v2755 = vshrl.u32 %v2340, 16
      %v2757 = vrot.slane %v2755, 4
      %v2758 = vor.u32 %v2757, %v2753
      %v2759 = vrot.slane %v2758, 4
      %v2761 = vshll.u32 %v2341, 16
      %v2763 = vrot.slane %v2761, 5
      %v2764 = vsel %vm906, %v2759, %v2763
      %v2766 = vshrl.u32 %v2342, 16
      %v2768 = vrot.slane %v2766, 4
      %v2769 = vshll.u32 %v2342, 16
      %v2771 = vrot.slane %v2769, 5
      %v2772 = vor.u32 %v2768, %v2771
      %v2773 = vrot.slane %v2772, 4
      %v2775 = vshll.u32 %v2343, 16
      %v2777 = vrot.slane %v2775, 5
      %v2778 = vsel %vm906, %v2773, %v2777
      %v2779 = vshrl.u32 %v2343, 16
      %v2781 = vrot.slane %v2779, 4
      %v2782 = vor.u32 %v2781, %v2777
      %v2783 = vrot.slane %v2782, 4
      %v2785 = vshll.u32 %v2344, 16
      %v2787 = vrot.slane %v2785, 5
      %v2788 = vsel %vm906, %v2783, %v2787
      %v2790 = vshrl.u32 %v2345, 16
      %v2792 = vrot.slane %v2790, 4
      %v2793 = vshll.u32 %v2345, 16
      %v2795 = vrot.slane %v2793, 5
      %v2796 = vor.u32 %v2792, %v2795
      %v2797 = vrot.slane %v2796, 4
      %v2799 = vshll.u32 %v2346, 16
      %v2801 = vrot.slane %v2799, 5
      %v2802 = vsel %vm906, %v2797, %v2801
      %v2803 = vshrl.u32 %v2346, 16
      %v2805 = vrot.slane %v2803, 4
      %v2806 = vor.u32 %v2805, %v2801
      %v2807 = vrot.slane %v2806, 4
      %v2809 = vshll.u32 %v2347, 16
      %v2811 = vrot.slane %v2809, 5
      %v2812 = vsel %vm906, %v2807, %v2811
      %v2814 = vshrl.u32 %v2348, 16
      %v2816 = vrot.slane %v2814, 4
      %v2817 = vshll.u32 %v2348, 16
      %v2819 = vrot.slane %v2817, 5
      %v2820 = vor.u32 %v2816, %v2819
      %v2821 = vrot.slane %v2820, 4
      %v2823 = vshll.u32 %v2349, 16
      %v2825 = vrot.slane %v2823, 5
      %v2826 = vsel %vm906, %v2821, %v2825
      %v2827 = vshrl.u32 %v2349, 16
      %v2829 = vrot.slane %v2827, 4
      %v2830 = vor.u32 %v2829, %v2825
      %v2831 = vrot.slane %v2830, 4
      %v2833 = vshll.u32 %v2350, 16
      %v2835 = vrot.slane %v2833, 5
      %v2836 = vsel %vm906, %v2831, %v2835
      %v2838 = vshrl.u32 %v2351, 16
      %v2840 = vrot.slane %v2838, 4
      %v2841 = vshll.u32 %v2351, 16
      %v2843 = vrot.slane %v2841, 5
      %v2844 = vor.u32 %v2840, %v2843
      %v2845 = vrot.slane %v2844, 4
      %v2847 = vshll.u32 %v2352, 16
      %v2849 = vrot.slane %v2847, 5
      %v2850 = vsel %vm906, %v2845, %v2849
      %v2851 = vshrl.u32 %v2352, 16
      %v2853 = vrot.slane %v2851, 4
      %v2854 = vor.u32 %v2853, %v2849
      %v2855 = vrot.slane %v2854, 4
      %v2857 = vshll.u32 %v2353, 16
      %v2859 = vrot.slane %v2857, 5
      %v2860 = vsel %vm906, %v2855, %v2859
      %v2862 = vshrl.u32 %v2354, 16
      %v2864 = vrot.slane %v2862, 4
      %v2865 = vshll.u32 %v2354, 16
      %v2867 = vrot.slane %v2865, 5
      %v2868 = vor.u32 %v2864, %v2867
      %v2869 = vrot.slane %v2868, 4
      %v2871 = vshll.u32 %v2355, 16
      %v2873 = vrot.slane %v2871, 5
      %v2874 = vsel %vm906, %v2869, %v2873
      %v2875 = vshrl.u32 %v2355, 16
      %v2877 = vrot.slane %v2875, 4
      %v2878 = vor.u32 %v2877, %v2873
      %v2879 = vrot.slane %v2878, 4
      %v2881 = vshll.u32 %v2356, 16
      %v2883 = vrot.slane %v2881, 5
      %v2884 = vsel %vm906, %v2879, %v2883
      %v2886 = vshrl.u32 %v2357, 16
      %v2888 = vrot.slane %v2886, 4
      %v2889 = vshll.u32 %v2357, 16
      %v2891 = vrot.slane %v2889, 5
      %v2892 = vor.u32 %v2888, %v2891
      %v2893 = vrot.slane %v2892, 4
      %v2895 = vshll.u32 %v2358, 16
      %v2897 = vrot.slane %v2895, 5
      %v2898 = vsel %vm906, %v2893, %v2897
      %v2899 = vshrl.u32 %v2358, 16
      %v2901 = vrot.slane %v2899, 4
      %v2902 = vor.u32 %v2901, %v2897
      %v2903 = vrot.slane %v2902, 4
      %v2905 = vshll.u32 %v2359, 16
      %v2907 = vrot.slane %v2905, 5
      %v2908 = vsel %vm906, %v2903, %v2907
      %v2910 = vshrl.u32 %v2360, 16
      %v2912 = vrot.slane %v2910, 4
      %v2913 = vshll.u32 %v2360, 16
      %v2915 = vrot.slane %v2913, 5
      %v2916 = vor.u32 %v2912, %v2915
      %v2917 = vrot.slane %v2916, 4
      %v2919 = vshll.u32 %v2361, 16
      %v2921 = vrot.slane %v2919, 5
      %v2922 = vsel %vm906, %v2917, %v2921
      %v2923 = vshrl.u32 %v2361, 16
      %v2925 = vrot.slane %v2923, 4
      %v2926 = vor.u32 %v2925, %v2921
      %v2927 = vrot.slane %v2926, 4
      %v2929 = vshll.u32 %v2362, 16
      %v2931 = vrot.slane %v2929, 5
      %v2932 = vsel %vm906, %v2927, %v2931
      %v2934 = vshrl.u32 %v2363, 16
      %v2936 = vrot.slane %v2934, 4
      %v2937 = vshll.u32 %v2363, 16
      %v2939 = vrot.slane %v2937, 5
      %v2940 = vor.u32 %v2936, %v2939
      %v2941 = vrot.slane %v2940, 4
      %v2943 = vshll.u32 %v2364, 16
      %v2945 = vrot.slane %v2943, 5
      %v2946 = vsel %vm906, %v2941, %v2945
      %v2947 = vshrl.u32 %v2364, 16
      %v2949 = vrot.slane %v2947, 4
      %v2950 = vor.u32 %v2949, %v2945
      %v2951 = vrot.slane %v2950, 4
      %v2953 = vshll.u32 %v2365, 16
      %v2955 = vrot.slane %v2953, 5
      %v2956 = vsel %vm906, %v2951, %v2955
      %v2958 = vshrl.u32 %v2366, 16
      %v2960 = vrot.slane %v2958, 4
      %v2961 = vshll.u32 %v2366, 16
      %v2963 = vrot.slane %v2961, 5
      %v2964 = vor.u32 %v2960, %v2963
      %v2965 = vrot.slane %v2964, 4
      %v2967 = vshll.u32 %v2367, 16
      %v2969 = vrot.slane %v2967, 5
      %v2970 = vsel %vm906, %v2965, %v2969
      %v2971 = vshrl.u32 %v2367, 16
      %v2973 = vrot.slane %v2971, 4
      %v2974 = vor.u32 %v2973, %v2969
      %v2975 = vrot.slane %v2974, 4
      %v2977 = vshll.u32 %v2368, 16
      %v2979 = vrot.slane %v2977, 5
      %v2980 = vsel %vm906, %v2975, %v2979
      %v2982 = vshrl.u32 %v2369, 16
      %v2984 = vrot.slane %v2982, 4
      %v2985 = vshll.u32 %v2369, 16
      %v2987 = vrot.slane %v2985, 5
      %v2988 = vor.u32 %v2984, %v2987
      %v2989 = vrot.slane %v2988, 4
      %v2991 = vshll.u32 %v2370, 16
      %v2993 = vrot.slane %v2991, 5
      %v2994 = vsel %vm906, %v2989, %v2993
      %v2995 = vshrl.u32 %v2370, 16
      %v2997 = vrot.slane %v2995, 4
      %v2998 = vor.u32 %v2997, %v2993
      %v2999 = vrot.slane %v2998, 4
      %v3001 = vshll.u32 %v2371, 16
      %v3003 = vrot.slane %v3001, 5
      %v3004 = vsel %vm906, %v2999, %v3003
      %v3006 = vshrl.u32 %v2372, 16
      %v3008 = vrot.slane %v3006, 4
      %v3009 = vshll.u32 %v2372, 16
      %v3011 = vrot.slane %v3009, 5
      %v3012 = vor.u32 %v3008, %v3011
      %v3013 = vrot.slane %v3012, 4
      %v3015 = vshll.u32 %v2373, 16
      %v3017 = vrot.slane %v3015, 5
      %v3018 = vsel %vm906, %v3013, %v3017
      %v3019 = vshrl.u32 %v2373, 16
      %v3021 = vrot.slane %v3019, 4
      %v3022 = vor.u32 %v3021, %v3017
      %v3023 = vrot.slane %v3022, 4
      %v3025 = vshll.u32 %v2374, 16
      %v3027 = vrot.slane %v3025, 5
      %v3028 = vsel %vm906, %v3023, %v3027
      %v3030 = vshrl.u32 %v2375, 16
      %v3032 = vrot.slane %v3030, 4
      %v3033 = vshll.u32 %v2375, 16
      %v3035 = vrot.slane %v3033, 5
      %v3036 = vor.u32 %v3032, %v3035
      %v3037 = vrot.slane %v3036, 4
      %v3039 = vshll.u32 %v2376, 16
      %v3041 = vrot.slane %v3039, 5
      %v3042 = vsel %vm906, %v3037, %v3041
      %v3043 = vshrl.u32 %v2376, 16
      %v3045 = vrot.slane %v3043, 4
      %v3046 = vor.u32 %v3045, %v3041
      %v3047 = vrot.slane %v3046, 4
      %v3049 = vshll.u32 %v2377, 16
      %v3051 = vrot.slane %v3049, 5
      %v3052 = vsel %vm906, %v3047, %v3051
      %v3054 = vshrl.u32 %v2378, 16
      %v3056 = vrot.slane %v3054, 4
      %v3057 = vshll.u32 %v2378, 16
      %v3059 = vrot.slane %v3057, 5
      %v3060 = vor.u32 %v3056, %v3059
      %v3061 = vrot.slane %v3060, 4
      %v3063 = vshll.u32 %v2379, 16
      %v3065 = vrot.slane %v3063, 5
      %v3066 = vsel %vm906, %v3061, %v3065
      %v3067 = vshrl.u32 %v2379, 16
      %v3069 = vrot.slane %v3067, 4
      %v3070 = vor.u32 %v3069, %v3065
      %v3071 = vrot.slane %v3070, 4
      %v3073 = vshll.u32 %v2380, 16
      %v3075 = vrot.slane %v3073, 5
      %v3076 = vsel %vm906, %v3071, %v3075
      %v3078 = vshrl.u32 %v2381, 16
      %v3080 = vrot.slane %v3078, 4
      %v3081 = vshll.u32 %v2381, 16
      %v3083 = vrot.slane %v3081, 5
      %v3084 = vor.u32 %v3080, %v3083
      %v3085 = vrot.slane %v3084, 4
      %v3087 = vshll.u32 %v2382, 16
      %v3089 = vrot.slane %v3087, 5
      %v3090 = vsel %vm906, %v3085, %v3089
      %v3091 = vshrl.u32 %v2382, 16
      %v3093 = vrot.slane %v3091, 4
      %v3094 = vor.u32 %v3093, %v3089
      %v3095 = vrot.slane %v3094, 4
      %v3097 = vshll.u32 %v2383, 16
      %v3099 = vrot.slane %v3097, 5
      %v3100 = vsel %vm906, %v3095, %v3099
      %v3102 = vshrl.u32 %v2384, 16
      %v3104 = vrot.slane %v3102, 4
      %v3105 = vshll.u32 %v2384, 16
      %v3107 = vrot.slane %v3105, 5
      %v3108 = vor.u32 %v3104, %v3107
      %v3109 = vrot.slane %v3108, 4
      %v3111 = vshll.u32 %v2385, 16
      %v3113 = vrot.slane %v3111, 5
      %v3114 = vsel %vm906, %v3109, %v3113
      %v3115 = vshrl.u32 %v2385, 16
      %v3117 = vrot.slane %v3115, 4
      %v3118 = vor.u32 %v3117, %v3113
      %v3119 = vrot.slane %v3118, 4
      %v3121 = vshll.u32 %v2386, 16
      %v3123 = vrot.slane %v3121, 5
      %v3124 = vsel %vm906, %v3119, %v3123
      %s3125 = scalar_lea.vmem %s3, 256
      %v3126 = vld [vmem:[%s3125] sm:$0xf]
      %v3127 = vld [vmem:[%s3125 + $0x4] sm:$0xf]
      %v3128 = vld [vmem:[%s3125 + $0x8] sm:$0xf]
      %v3129 = vld [vmem:[%s3125 + $0xc] sm:$0xf]
      %v3130 = vld [vmem:[%s3125 + $0x10] sm:$0xf]
      %v3131 = vld [vmem:[%s3125 + $0x14] sm:$0xf]
      %v3132 = vld [vmem:[%s3125 + $0x18] sm:$0xf]
      %v3133 = vld [vmem:[%s3125 + $0x1c] sm:$0xf]
      %v3134 = vld [vmem:[%s3125 + $0x20] sm:$0xf]
      %v3135 = vld [vmem:[%s3125 + $0x24] sm:$0xf]
      %v3136 = vld [vmem:[%s3125 + $0x28] sm:$0xf]
      %v3137 = vld [vmem:[%s3125 + $0x2c] sm:$0xf]
      %v3138 = vld [vmem:[%s3125 + $0x30] sm:$0xf]
      %v3139 = vld [vmem:[%s3125 + $0x34] sm:$0xf]
      %v3140 = vld [vmem:[%s3125 + $0x38] sm:$0xf]
      %v3141 = vld [vmem:[%s3125 + $0x3c] sm:$0xf]
      %v3142 = vunpack.c.l.b16 %v2754
      %v3143 = vunpack.c.l.b16 %v2764
      %v3144 = vunpack.c.l.b16 %v2778
      %v3145 = vunpack.c.l.b16 %v2788
      %v3146 = vunpack.c.l.b16 %v2802
      %v3147 = vunpack.c.l.b16 %v2812
      %v3148 = vunpack.c.l.b16 %v2826
      %v3149 = vunpack.c.l.b16 %v2836
      %v3150 = vunpack.c.l.b16 %v2850
      %v3151 = vunpack.c.l.b16 %v2860
      %v3152 = vunpack.c.l.b16 %v2874
      %v3153 = vunpack.c.l.b16 %v2884
      %v3154 = vunpack.c.l.b16 %v2898
      %v3155 = vunpack.c.l.b16 %v2908
      %v3156 = vunpack.c.l.b16 %v2922
      %v3157 = vunpack.c.l.b16 %v2932
      %v3158 = vunpack.c.l.b16 %v2946
      %v3159 = vunpack.c.l.b16 %v2956
      %v3160 = vunpack.c.l.b16 %v2970
      %v3161 = vunpack.c.l.b16 %v2980
      %v3162 = vunpack.c.l.b16 %v2994
      %v3163 = vunpack.c.l.b16 %v3004
      %v3164 = vunpack.c.l.b16 %v3018
      %v3165 = vunpack.c.l.b16 %v3028
      %v3166 = vunpack.c.l.b16 %v3042
      %v3167 = vunpack.c.l.b16 %v3052
      %v3168 = vunpack.c.l.b16 %v3066
      %v3169 = vunpack.c.l.b16 %v3076
      %v3170 = vunpack.c.l.b16 %v3090
      %v3171 = vunpack.c.l.b16 %v3100
      %v3172 = vunpack.c.l.b16 %v3114
      %v3173 = vunpack.c.l.b16 %v3124
      %v3174 = vpack.c.b16 %v3143, %v3142
      %v3175 = vpack.c.b16 %v3145, %v3144
      %v3176 = vpack.c.b16 %v3147, %v3146
      %v3177 = vpack.c.b16 %v3149, %v3148
      %v3178 = vpack.c.b16 %v3151, %v3150
      %v3179 = vpack.c.b16 %v3153, %v3152
      %v3180 = vpack.c.b16 %v3155, %v3154
      %v3181 = vpack.c.b16 %v3157, %v3156
      %v3182 = vpack.c.b16 %v3159, %v3158
      %v3183 = vpack.c.b16 %v3161, %v3160
      %v3184 = vpack.c.b16 %v3163, %v3162
      %v3185 = vpack.c.b16 %v3165, %v3164
      %v3186 = vpack.c.b16 %v3167, %v3166
      %v3187 = vpack.c.b16 %v3169, %v3168
      %v3188 = vpack.c.b16 %v3171, %v3170
      %v3189 = vpack.c.b16 %v3173, %v3172
      %v3222 = vunpack.c.l.b16 %v3126
      %v3223 = vunpack.c.l.b16 %v3127
      %v3224 = vunpack.c.l.b16 %v3128
      %v3225 = vunpack.c.l.b16 %v3129
      %v3226 = vunpack.c.l.b16 %v3130
      %v3227 = vunpack.c.l.b16 %v3131
      %v3228 = vunpack.c.l.b16 %v3132
      %v3229 = vunpack.c.l.b16 %v3133
      %v3230 = vunpack.c.l.b16 %v3134
      %v3231 = vunpack.c.l.b16 %v3135
      %v3232 = vunpack.c.l.b16 %v3136
      %v3233 = vunpack.c.l.b16 %v3137
      %v3234 = vunpack.c.l.b16 %v3138
      %v3235 = vunpack.c.l.b16 %v3139
      %v3236 = vunpack.c.l.b16 %v3140
      %v3237 = vunpack.c.l.b16 %v3141
      %v3238 = vpack.c.b16 %v3223, %v3222
      %v3239 = vpack.c.b16 %v3225, %v3224
      %v3240 = vpack.c.b16 %v3227, %v3226
      %v3241 = vpack.c.b16 %v3229, %v3228
      %v3242 = vpack.c.b16 %v3231, %v3230
      %v3243 = vpack.c.b16 %v3233, %v3232
      %v3244 = vpack.c.b16 %v3235, %v3234
      %v3245 = vpack.c.b16 %v3237, %v3236
      %3254 = vmatprep.subr.bf16.mxu0 0
      %3255 = vmatpush1.bf16.msra.mxu0 %v3238
      %3256 = vmatprep.subr.bf16.mxu0 0
      %3257 = vmatpush1.bf16.msra.mxu0 %v3239
      %3258 = vmatprep.subr.bf16.mxu0 0
      %3259 = vmatpush1.bf16.msra.mxu0 %v3240
      %3260 = vmatprep.subr.bf16.mxu0 0
      %3261 = vmatpush1.bf16.msra.mxu0 %v3241
      %3262 = vmatprep.subr.bf16.mxu0 0
      %3263 = vmatpush1.bf16.msra.mxu0 %v3242
      %3264 = vmatprep.subr.bf16.mxu0 0
      %3265 = vmatpush1.bf16.msra.mxu0 %v3243
      %3266 = vmatprep.subr.bf16.mxu0 0
      %3267 = vmatpush1.bf16.msra.mxu0 %v3244
      %3268 = vmatprep.subr.bf16.mxu0 0
      %3269 = vmatpush1.bf16.msra.mxu0 %v3245
      %3270 = vmatprep.subr.bf16.mxu0 0
      %3271 = vmatpush1.bf16.msra.mxu0 0
      %3272 = vmatprep.subr.bf16.mxu0 0
      %3273 = vmatpush1.bf16.msra.mxu0 0
      %3274 = vmatprep.subr.bf16.mxu0 0
      %3275 = vmatpush1.bf16.msra.mxu0 0
      %3276 = vmatprep.subr.bf16.mxu0 0
      %3277 = vmatpush1.bf16.msra.mxu0 0
      %3278 = vmatprep.subr.bf16.mxu0 0
      %3279 = vmatpush1.bf16.msra.mxu0 0
      %3280 = vmatprep.subr.bf16.mxu0 0
      %3281 = vmatpush1.bf16.msra.mxu0 0
      %3282 = vmatprep.subr.bf16.mxu0 0
      %3283 = vmatpush1.bf16.msra.mxu0 0
      %3284 = vmatprep.subr.bf16.mxu0 0
      %3285 = vmatpush1.bf16.msra.mxu0 0
      %3286 = vmatprep.mubr.bf16.mxu0 0
      %3287 = vmatmul.mubr.bf16.gmra.mrb[0].mxu0 %v3174
      %v3288 = vpop.f32.mrb[0].mxu0
      %v3289 = vadd.f32 0.0, %v3288
      %v3290 = vpop.f32.mrb[0].mxu0
      %v3291 = vpop.f32.mrb[0].mxu0
      %v3292 = vadd.f32 0.0, %v3291
      %v3293 = vpop.f32.mrb[0].mxu0
      %3294 = vmatprep.mubr.bf16.mxu0 0
      %3295 = vmatmul.mubr.bf16.gmra.mrb[0].mxu0 %v3175
      %v3296 = vpop.f32.mrb[0].mxu0
      %v3297 = vadd.f32 0.0, %v3296
      %v3298 = vpop.f32.mrb[0].mxu0
      %v3299 = vpop.f32.mrb[0].mxu0
      %v3300 = vadd.f32 0.0, %v3299
      %v3301 = vpop.f32.mrb[0].mxu0
      %3302 = vmatprep.mubr.bf16.mxu0 0
      %3303 = vmatmul.mubr.bf16.gmra.mrb[0].mxu0 %v3176
      %v3304 = vpop.f32.mrb[0].mxu0
      %v3305 = vadd.f32 0.0, %v3304
      %v3306 = vpop.f32.mrb[0].mxu0
      %v3307 = vpop.f32.mrb[0].mxu0
      %v3308 = vadd.f32 0.0, %v3307
      %v3309 = vpop.f32.mrb[0].mxu0
      %3310 = vmatprep.mubr.bf16.mxu0 0
      %3311 = vmatmul.mubr.bf16.gmra.mrb[0].mxu0 %v3177
      %v3312 = vpop.f32.mrb[0].mxu0
      %v3313 = vadd.f32 0.0, %v3312
      %v3314 = vpop.f32.mrb[0].mxu0
      %v3315 = vpop.f32.mrb[0].mxu0
      %v3316 = vadd.f32 0.0, %v3315
      %v3317 = vpop.f32.mrb[0].mxu0
      %3318 = vmatprep.mubr.bf16.mxu0 0
      %3319 = vmatmul.mubr.bf16.gmra.mrb[0].mxu0 %v3178
      %v3320 = vpop.f32.mrb[0].mxu0
      %v3321 = vadd.f32 0.0, %v3320
      %v3322 = vpop.f32.mrb[0].mxu0
      %v3323 = vpop.f32.mrb[0].mxu0
      %v3324 = vadd.f32 0.0, %v3323
      %v3325 = vpop.f32.mrb[0].mxu0
      %3326 = vmatprep.mubr.bf16.mxu0 0
      %3327 = vmatmul.mubr.bf16.gmra.mrb[0].mxu0 %v3179
      %v3328 = vpop.f32.mrb[0].mxu0
      %v3329 = vadd.f32 0.0, %v3328
      %v3330 = vpop.f32.mrb[0].mxu0
      %v3331 = vpop.f32.mrb[0].mxu0
      %v3332 = vadd.f32 0.0, %v3331
      %v3333 = vpop.f32.mrb[0].mxu0
      %3334 = vmatprep.mubr.bf16.mxu0 0
      %3335 = vmatmul.mubr.bf16.gmra.mrb[0].mxu0 %v3180
      %v3336 = vpop.f32.mrb[0].mxu0
      %v3337 = vadd.f32 0.0, %v3336
      %v3338 = vpop.f32.mrb[0].mxu0
      %v3339 = vpop.f32.mrb[0].mxu0
      %v3340 = vadd.f32 0.0, %v3339
      %v3341 = vpop.f32.mrb[0].mxu0
      %3342 = vmatprep.mubr.bf16.mxu0 0
      %3343 = vmatmul.mubr.bf16.gmra.mrb[0].mxu0 %v3181
      %v3344 = vpop.f32.mrb[0].mxu0
      %v3345 = vadd.f32 0.0, %v3344
      %v3346 = vpop.f32.mrb[0].mxu0
      %v3347 = vpop.f32.mrb[0].mxu0
      %v3348 = vadd.f32 0.0, %v3347
      %v3349 = vpop.f32.mrb[0].mxu0
      %3350 = vmatprep.mubr.bf16.mxu0 0
      %3351 = vmatmul.mubr.bf16.gmra.mrb[0].mxu0 %v3182
      %v3352 = vpop.f32.mrb[0].mxu0
      %v3353 = vadd.f32 0.0, %v3352
      %v3354 = vpop.f32.mrb[0].mxu0
      %v3355 = vpop.f32.mrb[0].mxu0
      %v3356 = vadd.f32 0.0, %v3355
      %v3357 = vpop.f32.mrb[0].mxu0
      %3358 = vmatprep.mubr.bf16.mxu0 0
      %3359 = vmatmul.mubr.bf16.gmra.mrb[0].mxu0 %v3183
      %v3360 = vpop.f32.mrb[0].mxu0
      %v3361 = vadd.f32 0.0, %v3360
      %v3362 = vpop.f32.mrb[0].mxu0
      %v3363 = vpop.f32.mrb[0].mxu0
      %v3364 = vadd.f32 0.0, %v3363
      %v3365 = vpop.f32.mrb[0].mxu0
      %3366 = vmatprep.mubr.bf16.mxu0 0
      %3367 = vmatmul.mubr.bf16.gmra.mrb[0].mxu0 %v3184
      %v3368 = vpop.f32.mrb[0].mxu0
      %v3369 = vadd.f32 0.0, %v3368
      %v3370 = vpop.f32.mrb[0].mxu0
      %v3371 = vpop.f32.mrb[0].mxu0
      %v3372 = vadd.f32 0.0, %v3371
      %v3373 = vpop.f32.mrb[0].mxu0
      %3374 = vmatprep.mubr.bf16.mxu0 0
      %3375 = vmatmul.mubr.bf16.gmra.mrb[0].mxu0 %v3185
      %v3376 = vpop.f32.mrb[0].mxu0
      %v3377 = vadd.f32 0.0, %v3376
      %v3378 = vpop.f32.mrb[0].mxu0
      %v3379 = vpop.f32.mrb[0].mxu0
      %v3380 = vadd.f32 0.0, %v3379
      %v3381 = vpop.f32.mrb[0].mxu0
      %3382 = vmatprep.mubr.bf16.mxu0 0
      %3383 = vmatmul.mubr.bf16.gmra.mrb[0].mxu0 %v3186
      %v3384 = vpop.f32.mrb[0].mxu0
      %v3385 = vadd.f32 0.0, %v3384
      %v3386 = vpop.f32.mrb[0].mxu0
      %v3387 = vpop.f32.mrb[0].mxu0
      %v3388 = vadd.f32 0.0, %v3387
      %v3389 = vpop.f32.mrb[0].mxu0
      %3390 = vmatprep.mubr.bf16.mxu0 0
      %3391 = vmatmul.mubr.bf16.gmra.mrb[0].mxu0 %v3187
      %v3392 = vpop.f32.mrb[0].mxu0
      %v3393 = vadd.f32 0.0, %v3392
      %v3394 = vpop.f32.mrb[0].mxu0
      %v3395 = vpop.f32.mrb[0].mxu0
      %v3396 = vadd.f32 0.0, %v3395
      %v3397 = vpop.f32.mrb[0].mxu0
      %3398 = vmatprep.mubr.bf16.mxu0 0
      %3399 = vmatmul.mubr.bf16.gmra.mrb[0].mxu0 %v3188
      %v3400 = vpop.f32.mrb[0].mxu0
      %v3401 = vadd.f32 0.0, %v3400
      %v3402 = vpop.f32.mrb[0].mxu0
      %v3403 = vpop.f32.mrb[0].mxu0
      %v3404 = vadd.f32 0.0, %v3403
      %v3405 = vpop.f32.mrb[0].mxu0
      %3406 = vmatprep.mubr.bf16.mxu0 0
      %3407 = vmatmul.mubr.bf16.gmra.mrb[0].mxu0 %v3189
      %v3408 = vpop.f32.mrb[0].mxu0
      %v3409 = vadd.f32 0.0, %v3408
      %v3410 = vpop.f32.mrb[0].mxu0
      %v3411 = vpop.f32.mrb[0].mxu0
      %v3412 = vadd.f32 0.0, %v3411
      %v3413 = vpop.f32.mrb[0].mxu0
      %3414 = vdwg.mxu0
      %v3415 = vadd.f32 %v2709, %v3289
      %v3416 = vadd.f32 %v2710, %v3292
      %v3417 = vadd.f32 %v2711, %v3297
      %v3418 = vadd.f32 %v2712, %v3300
      %v3419 = vadd.f32 %v2713, %v3305
      %v3420 = vadd.f32 %v2714, %v3308
      %v3421 = vadd.f32 %v2715, %v3313
      %v3422 = vadd.f32 %v2716, %v3316
      %v3423 = vadd.f32 %v2717, %v3321
      %v3424 = vadd.f32 %v2718, %v3324
      %v3425 = vadd.f32 %v2719, %v3329
      %v3426 = vadd.f32 %v2720, %v3332
      %v3427 = vadd.f32 %v2721, %v3337
      %v3428 = vadd.f32 %v2722, %v3340
      %v3429 = vadd.f32 %v2723, %v3345
      %v3430 = vadd.f32 %v2724, %v3348
      %v3431 = vadd.f32 %v2725, %v3353
      %v3432 = vadd.f32 %v2726, %v3356
      %v3433 = vadd.f32 %v2727, %v3361
      %v3434 = vadd.f32 %v2728, %v3364
      %v3435 = vadd.f32 %v2729, %v3369
      %v3436 = vadd.f32 %v2730, %v3372
      %v3437 = vadd.f32 %v2731, %v3377
      %v3438 = vadd.f32 %v2732, %v3380
      %v3439 = vadd.f32 %v2733, %v3385
      %v3440 = vadd.f32 %v2734, %v3388
      %v3441 = vadd.f32 %v2735, %v3393
      %v3442 = vadd.f32 %v2736, %v3396
      %v3443 = vadd.f32 %v2737, %v3401
      %v3444 = vadd.f32 %v2738, %v3404
      %v3445 = vadd.f32 %v2739, %v3409
      %v3446 = vadd.f32 %v2740, %v3412
      %v3463 = vrot.slane %v2339, 5
      %v3464 = vrot.slane %v3463, 4
      %v3465 = vrot.slane %v2340, 5
      %v3466 = vsel %vm1904, %v3464, %v3465
      %v3467 = vrot.slane %v3465, 4
      %v3468 = vrot.slane %v2341, 5
      %v3469 = vsel %vm1904, %v3467, %v3468
      %v3470 = vrot.slane %v2342, 5
      %v3471 = vrot.slane %v3470, 4
      %v3472 = vrot.slane %v2343, 5
      %v3473 = vsel %vm1904, %v3471, %v3472
      %v3474 = vrot.slane %v3472, 4
      %v3475 = vrot.slane %v2344, 5
      %v3476 = vsel %vm1904, %v3474, %v3475
      %v3477 = vrot.slane %v2345, 5
      %v3478 = vrot.slane %v3477, 4
      %v3479 = vrot.slane %v2346, 5
      %v3480 = vsel %vm1904, %v3478, %v3479
      %v3481 = vrot.slane %v3479, 4
      %v3482 = vrot.slane %v2347, 5
      %v3483 = vsel %vm1904, %v3481, %v3482
      %v3484 = vrot.slane %v2348, 5
      %v3485 = vrot.slane %v3484, 4
      %v3486 = vrot.slane %v2349, 5
      %v3487 = vsel %vm1904, %v3485, %v3486
      %v3488 = vrot.slane %v3486, 4
      %v3489 = vrot.slane %v2350, 5
      %v3490 = vsel %vm1904, %v3488, %v3489
      %v3491 = vrot.slane %v2351, 5
      %v3492 = vrot.slane %v3491, 4
      %v3493 = vrot.slane %v2352, 5
      %v3494 = vsel %vm1904, %v3492, %v3493
      %v3495 = vrot.slane %v3493, 4
      %v3496 = vrot.slane %v2353, 5
      %v3497 = vsel %vm1904, %v3495, %v3496
      %v3498 = vrot.slane %v2354, 5
      %v3499 = vrot.slane %v3498, 4
      %v3500 = vrot.slane %v2355, 5
      %v3501 = vsel %vm1904, %v3499, %v3500
      %v3502 = vrot.slane %v3500, 4
      %v3503 = vrot.slane %v2356, 5
      %v3504 = vsel %vm1904, %v3502, %v3503
      %v3505 = vrot.slane %v2357, 5
      %v3506 = vrot.slane %v3505, 4
      %v3507 = vrot.slane %v2358, 5
      %v3508 = vsel %vm1904, %v3506, %v3507
      %v3509 = vrot.slane %v3507, 4
      %v3510 = vrot.slane %v2359, 5
      %v3511 = vsel %vm1904, %v3509, %v3510
      %v3512 = vrot.slane %v2360, 5
      %v3513 = vrot.slane %v3512, 4
      %v3514 = vrot.slane %v2361, 5
      %v3515 = vsel %vm1904, %v3513, %v3514
      %v3516 = vrot.slane %v3514, 4
      %v3517 = vrot.slane %v2362, 5
      %v3518 = vsel %vm1904, %v3516, %v3517
      %v3519 = vrot.slane %v2363, 5
      %v3520 = vrot.slane %v3519, 4
      %v3521 = vrot.slane %v2364, 5
      %v3522 = vsel %vm1904, %v3520, %v3521
      %v3523 = vrot.slane %v3521, 4
      %v3524 = vrot.slane %v2365, 5
      %v3525 = vsel %vm1904, %v3523, %v3524
      %v3526 = vrot.slane %v2366, 5
      %v3527 = vrot.slane %v3526, 4
      %v3528 = vrot.slane %v2367, 5
      %v3529 = vsel %vm1904, %v3527, %v3528
      %v3530 = vrot.slane %v3528, 4
      %v3531 = vrot.slane %v2368, 5
      %v3532 = vsel %vm1904, %v3530, %v3531
      %v3533 = vrot.slane %v2369, 5
      %v3534 = vrot.slane %v3533, 4
      %v3535 = vrot.slane %v2370, 5
      %v3536 = vsel %vm1904, %v3534, %v3535
      %v3537 = vrot.slane %v3535, 4
      %v3538 = vrot.slane %v2371, 5
      %v3539 = vsel %vm1904, %v3537, %v3538
      %v3540 = vrot.slane %v2372, 5
      %v3541 = vrot.slane %v3540, 4
      %v3542 = vrot.slane %v2373, 5
      %v3543 = vsel %vm1904, %v3541, %v3542
      %v3544 = vrot.slane %v3542, 4
      %v3545 = vrot.slane %v2374, 5
      %v3546 = vsel %vm1904, %v3544, %v3545
      %v3547 = vrot.slane %v2375, 5
      %v3548 = vrot.slane %v3547, 4
      %v3549 = vrot.slane %v2376, 5
      %v3550 = vsel %vm1904, %v3548, %v3549
      %v3551 = vrot.slane %v3549, 4
      %v3552 = vrot.slane %v2377, 5
      %v3553 = vsel %vm1904, %v3551, %v3552
      %v3554 = vrot.slane %v2378, 5
      %v3555 = vrot.slane %v3554, 4
      %v3556 = vrot.slane %v2379, 5
      %v3557 = vsel %vm1904, %v3555, %v3556
      %v3558 = vrot.slane %v3556, 4
      %v3559 = vrot.slane %v2380, 5
      %v3560 = vsel %vm1904, %v3558, %v3559
      %v3561 = vrot.slane %v2381, 5
      %v3562 = vrot.slane %v3561, 4
      %v3563 = vrot.slane %v2382, 5
      %v3564 = vsel %vm1904, %v3562, %v3563
      %v3565 = vrot.slane %v3563, 4
      %v3566 = vrot.slane %v2383, 5
      %v3567 = vsel %vm1904, %v3565, %v3566
      %v3568 = vrot.slane %v2384, 5
      %v3569 = vrot.slane %v3568, 4
      %v3570 = vrot.slane %v2385, 5
      %v3571 = vsel %vm1904, %v3569, %v3570
      %v3572 = vrot.slane %v3570, 4
      %v3573 = vrot.slane %v2386, 5
      %v3574 = vsel %vm1904, %v3572, %v3573
      %s3575 = scalar_lea.vmem %s3, 320
      %v3576 = vld [vmem:[%s3575] sm:$0xf]
      %v3577 = vld [vmem:[%s3575 + $0x4] sm:$0xf]
      %v3578 = vld [vmem:[%s3575 + $0x8] sm:$0xf]
      %v3579 = vld [vmem:[%s3575 + $0xc] sm:$0xf]
      %v3580 = vld [vmem:[%s3575 + $0x10] sm:$0xf]
      %v3581 = vld [vmem:[%s3575 + $0x14] sm:$0xf]
      %v3582 = vld [vmem:[%s3575 + $0x18] sm:$0xf]
      %v3583 = vld [vmem:[%s3575 + $0x1c] sm:$0xf]
      %v3584 = vld [vmem:[%s3575 + $0x20] sm:$0xf]
      %v3585 = vld [vmem:[%s3575 + $0x24] sm:$0xf]
      %v3586 = vld [vmem:[%s3575 + $0x28] sm:$0xf]
      %v3587 = vld [vmem:[%s3575 + $0x2c] sm:$0xf]
      %v3588 = vld [vmem:[%s3575 + $0x30] sm:$0xf]
      %v3589 = vld [vmem:[%s3575 + $0x34] sm:$0xf]
      %v3590 = vld [vmem:[%s3575 + $0x38] sm:$0xf]
      %v3591 = vld [vmem:[%s3575 + $0x3c] sm:$0xf]
      %v3592 = vunpack.c.l.b16 %v3466
      %v3593 = vunpack.c.l.b16 %v3469
      %v3594 = vunpack.c.l.b16 %v3473
      %v3595 = vunpack.c.l.b16 %v3476
      %v3596 = vunpack.c.l.b16 %v3480
      %v3597 = vunpack.c.l.b16 %v3483
      %v3598 = vunpack.c.l.b16 %v3487
      %v3599 = vunpack.c.l.b16 %v3490
      %v3600 = vunpack.c.l.b16 %v3494
      %v3601 = vunpack.c.l.b16 %v3497
      %v3602 = vunpack.c.l.b16 %v3501
      %v3603 = vunpack.c.l.b16 %v3504
      %v3604 = vunpack.c.l.b16 %v3508
      %v3605 = vunpack.c.l.b16 %v3511
      %v3606 = vunpack.c.l.b16 %v3515
      %v3607 = vunpack.c.l.b16 %v3518
      %v3608 = vunpack.c.l.b16 %v3522
      %v3609 = vunpack.c.l.b16 %v3525
      %v3610 = vunpack.c.l.b16 %v3529
      %v3611 = vunpack.c.l.b16 %v3532
      %v3612 = vunpack.c.l.b16 %v3536
      %v3613 = vunpack.c.l.b16 %v3539
      %v3614 = vunpack.c.l.b16 %v3543
      %v3615 = vunpack.c.l.b16 %v3546
      %v3616 = vunpack.c.l.b16 %v3550
      %v3617 = vunpack.c.l.b16 %v3553
      %v3618 = vunpack.c.l.b16 %v3557
      %v3619 = vunpack.c.l.b16 %v3560
      %v3620 = vunpack.c.l.b16 %v3564
      %v3621 = vunpack.c.l.b16 %v3567
      %v3622 = vunpack.c.l.b16 %v3571
      %v3623 = vunpack.c.l.b16 %v3574
      %v3624 = vpack.c.b16 %v3593, %v3592
      %v3625 = vpack.c.b16 %v3595, %v3594
      %v3626 = vpack.c.b16 %v3597, %v3596
      %v3627 = vpack.c.b16 %v3599, %v3598
      %v3628 = vpack.c.b16 %v3601, %v3600
      %v3629 = vpack.c.b16 %v3603, %v3602
      %v3630 = vpack.c.b16 %v3605, %v3604
      %v3631 = vpack.c.b16 %v3607, %v3606
      %v3632 = vpack.c.b16 %v3609, %v3608
      %v3633 = vpack.c.b16 %v3611, %v3610
      %v3634 = vpack.c.b16 %v3613, %v3612
      %v3635 = vpack.c.b16 %v3615, %v3614
      %v3636 = vpack.c.b16 %v3617, %v3616
      %v3637 = vpack.c.b16 %v3619, %v3618
      %v3638 = vpack.c.b16 %v3621, %v3620
      %v3639 = vpack.c.b16 %v3623, %v3622
      %v3672 = vunpack.c.l.b16 %v3576
      %v3673 = vunpack.c.l.b16 %v3577
      %v3674 = vunpack.c.l.b16 %v3578
      %v3675 = vunpack.c.l.b16 %v3579
      %v3676 = vunpack.c.l.b16 %v3580
      %v3677 = vunpack.c.l.b16 %v3581
      %v3678 = vunpack.c.l.b16 %v3582
      %v3679 = vunpack.c.l.b16 %v3583
      %v3680 = vunpack.c.l.b16 %v3584
      %v3681 = vunpack.c.l.b16 %v3585
      %v3682 = vunpack.c.l.b16 %v3586
      %v3683 = vunpack.c.l.b16 %v3587
      %v3684 = vunpack.c.l.b16 %v3588
      %v3685 = vunpack.c.l.b16 %v3589
      %v3686 = vunpack.c.l.b16 %v3590
      %v3687 = vunpack.c.l.b16 %v3591
      %v3688 = vpack.c.b16 %v3673, %v3672
      %v3689 = vpack.c.b16 %v3675, %v3674
      %v3690 = vpack.c.b16 %v3677, %v3676
      %v3691 = vpack.c.b16 %v3679, %v3678
      %v3692 = vpack.c.b16 %v3681, %v3680
      %v3693 = vpack.c.b16 %v3683, %v3682
      %v3694 = vpack.c.b16 %v3685, %v3684
      %v3695 = vpack.c.b16 %v3687, %v3686
      %3704 = vmatprep.subr.bf16.mxu0 0
      %3705 = vmatpush1.bf16.msra.mxu0 %v3688
      %3706 = vmatprep.subr.bf16.mxu0 0
      %3707 = vmatpush1.bf16.msra.mxu0 %v3689
      %3708 = vmatprep.subr.bf16.mxu0 0
      %3709 = vmatpush1.bf16.msra.mxu0 %v3690
      %3710 = vmatprep.subr.bf16.mxu0 0
      %3711 = vmatpush1.bf16.msra.mxu0 %v3691
      %3712 = vmatprep.subr.bf16.mxu0 0
      %3713 = vmatpush1.bf16.msra.mxu0 %v3692
      %3714 = vmatprep.subr.bf16.mxu0 0
      %3715 = vmatpush1.bf16.msra.mxu0 %v3693
      %3716 = vmatprep.subr.bf16.mxu0 0
      %3717 = vmatpush1.bf16.msra.mxu0 %v3694
      %3718 = vmatprep.subr.bf16.mxu0 0
      %3719 = vmatpush1.bf16.msra.mxu0 %v3695
      %3720 = vmatprep.subr.bf16.mxu0 0
      %3721 = vmatpush1.bf16.msra.mxu0 0
      %3722 = vmatprep.subr.bf16.mxu0 0
      %3723 = vmatpush1.bf16.msra.mxu0 0
      %3724 = vmatprep.subr.bf16.mxu0 0
      %3725 = vmatpush1.bf16.msra.mxu0 0
      %3726 = vmatprep.subr.bf16.mxu0 0
      %3727 = vmatpush1.bf16.msra.mxu0 0
      %3728 = vmatprep.subr.bf16.mxu0 0
      %3729 = vmatpush1.bf16.msra.mxu0 0
      %3730 = vmatprep.subr.bf16.mxu0 0
      %3731 = vmatpush1.bf16.msra.mxu0 0
      %3732 = vmatprep.subr.bf16.mxu0 0
      %3733 = vmatpush1.bf16.msra.mxu0 0
      %3734 = vmatprep.subr.bf16.mxu0 0
      %3735 = vmatpush1.bf16.msra.mxu0 0
      %3736 = vmatprep.mubr.bf16.mxu0 0
      %3737 = vmatmul.mubr.bf16.gmra.mrb[0].mxu0 %v3624
      %v3738 = vpop.f32.mrb[0].mxu0
      %v3739 = vadd.f32 0.0, %v3738
      %v3740 = vpop.f32.mrb[0].mxu0
      %v3741 = vpop.f32.mrb[0].mxu0
      %v3742 = vadd.f32 0.0, %v3741
      %v3743 = vpop.f32.mrb[0].mxu0
      %3744 = vmatprep.mubr.bf16.mxu0 0
      %3745 = vmatmul.mubr.bf16.gmra.mrb[0].mxu0 %v3625
      %v3746 = vpop.f32.mrb[0].mxu0
      %v3747 = vadd.f32 0.0, %v3746
      %v3748 = vpop.f32.mrb[0].mxu0
      %v3749 = vpop.f32.mrb[0].mxu0
      %v3750 = vadd.f32 0.0, %v3749
      %v3751 = vpop.f32.mrb[0].mxu0
      %3752 = vmatprep.mubr.bf16.mxu0 0
      %3753 = vmatmul.mubr.bf16.gmra.mrb[0].mxu0 %v3626
      %v3754 = vpop.f32.mrb[0].mxu0
      %v3755 = vadd.f32 0.0, %v3754
      %v3756 = vpop.f32.mrb[0].mxu0
      %v3757 = vpop.f32.mrb[0].mxu0
      %v3758 = vadd.f32 0.0, %v3757
      %v3759 = vpop.f32.mrb[0].mxu0
      %3760 = vmatprep.mubr.bf16.mxu0 0
      %3761 = vmatmul.mubr.bf16.gmra.mrb[0].mxu0 %v3627
      %v3762 = vpop.f32.mrb[0].mxu0
      %v3763 = vadd.f32 0.0, %v3762
      %v3764 = vpop.f32.mrb[0].mxu0
      %v3765 = vpop.f32.mrb[0].mxu0
      %v3766 = vadd.f32 0.0, %v3765
      %v3767 = vpop.f32.mrb[0].mxu0
      %3768 = vmatprep.mubr.bf16.mxu0 0
      %3769 = vmatmul.mubr.bf16.gmra.mrb[0].mxu0 %v3628
      %v3770 = vpop.f32.mrb[0].mxu0
      %v3771 = vadd.f32 0.0, %v3770
      %v3772 = vpop.f32.mrb[0].mxu0
      %v3773 = vpop.f32.mrb[0].mxu0
      %v3774 = vadd.f32 0.0, %v3773
      %v3775 = vpop.f32.mrb[0].mxu0
      %3776 = vmatprep.mubr.bf16.mxu0 0
      %3777 = vmatmul.mubr.bf16.gmra.mrb[0].mxu0 %v3629
      %v3778 = vpop.f32.mrb[0].mxu0
      %v3779 = vadd.f32 0.0, %v3778
      %v3780 = vpop.f32.mrb[0].mxu0
      %v3781 = vpop.f32.mrb[0].mxu0
      %v3782 = vadd.f32 0.0, %v3781
      %v3783 = vpop.f32.mrb[0].mxu0
      %3784 = vmatprep.mubr.bf16.mxu0 0
      %3785 = vmatmul.mubr.bf16.gmra.mrb[0].mxu0 %v3630
      %v3786 = vpop.f32.mrb[0].mxu0
      %v3787 = vadd.f32 0.0, %v3786
      %v3788 = vpop.f32.mrb[0].mxu0
      %v3789 = vpop.f32.mrb[0].mxu0
      %v3790 = vadd.f32 0.0, %v3789
      %v3791 = vpop.f32.mrb[0].mxu0
      %3792 = vmatprep.mubr.bf16.mxu0 0
      %3793 = vmatmul.mubr.bf16.gmra.mrb[0].mxu0 %v3631
      %v3794 = vpop.f32.mrb[0].mxu0
      %v3795 = vadd.f32 0.0, %v3794
      %v3796 = vpop.f32.mrb[0].mxu0
      %v3797 = vpop.f32.mrb[0].mxu0
      %v3798 = vadd.f32 0.0, %v3797
      %v3799 = vpop.f32.mrb[0].mxu0
      %3800 = vmatprep.mubr.bf16.mxu0 0
      %3801 = vmatmul.mubr.bf16.gmra.mrb[0].mxu0 %v3632
      %v3802 = vpop.f32.mrb[0].mxu0
      %v3803 = vadd.f32 0.0, %v3802
      %v3804 = vpop.f32.mrb[0].mxu0
      %v3805 = vpop.f32.mrb[0].mxu0
      %v3806 = vadd.f32 0.0, %v3805
      %v3807 = vpop.f32.mrb[0].mxu0
      %3808 = vmatprep.mubr.bf16.mxu0 0
      %3809 = vmatmul.mubr.bf16.gmra.mrb[0].mxu0 %v3633
      %v3810 = vpop.f32.mrb[0].mxu0
      %v3811 = vadd.f32 0.0, %v3810
      %v3812 = vpop.f32.mrb[0].mxu0
      %v3813 = vpop.f32.mrb[0].mxu0
      %v3814 = vadd.f32 0.0, %v3813
      %v3815 = vpop.f32.mrb[0].mxu0
      %3816 = vmatprep.mubr.bf16.mxu0 0
      %3817 = vmatmul.mubr.bf16.gmra.mrb[0].mxu0 %v3634
      %v3818 = vpop.f32.mrb[0].mxu0
      %v3819 = vadd.f32 0.0, %v3818
      %v3820 = vpop.f32.mrb[0].mxu0
      %v3821 = vpop.f32.mrb[0].mxu0
      %v3822 = vadd.f32 0.0, %v3821
      %v3823 = vpop.f32.mrb[0].mxu0
      %3824 = vmatprep.mubr.bf16.mxu0 0
      %3825 = vmatmul.mubr.bf16.gmra.mrb[0].mxu0 %v3635
      %v3826 = vpop.f32.mrb[0].mxu0
      %v3827 = vadd.f32 0.0, %v3826
      %v3828 = vpop.f32.mrb[0].mxu0
      %v3829 = vpop.f32.mrb[0].mxu0
      %v3830 = vadd.f32 0.0, %v3829
      %v3831 = vpop.f32.mrb[0].mxu0
      %3832 = vmatprep.mubr.bf16.mxu0 0
      %3833 = vmatmul.mubr.bf16.gmra.mrb[0].mxu0 %v3636
      %v3834 = vpop.f32.mrb[0].mxu0
      %v3835 = vadd.f32 0.0, %v3834
      %v3836 = vpop.f32.mrb[0].mxu0
      %v3837 = vpop.f32.mrb[0].mxu0
      %v3838 = vadd.f32 0.0, %v3837
      %v3839 = vpop.f32.mrb[0].mxu0
      %3840 = vmatprep.mubr.bf16.mxu0 0
      %3841 = vmatmul.mubr.bf16.gmra.mrb[0].mxu0 %v3637
      %v3842 = vpop.f32.mrb[0].mxu0
      %v3843 = vadd.f32 0.0, %v3842
      %v3844 = vpop.f32.mrb[0].mxu0
      %v3845 = vpop.f32.mrb[0].mxu0
      %v3846 = vadd.f32 0.0, %v3845
      %v3847 = vpop.f32.mrb[0].mxu0
      %3848 = vmatprep.mubr.bf16.mxu0 0
      %3849 = vmatmul.mubr.bf16.gmra.mrb[0].mxu0 %v3638
      %v3850 = vpop.f32.mrb[0].mxu0
      %v3851 = vadd.f32 0.0, %v3850
      %v3852 = vpop.f32.mrb[0].mxu0
      %v3853 = vpop.f32.mrb[0].mxu0
      %v3854 = vadd.f32 0.0, %v3853
      %v3855 = vpop.f32.mrb[0].mxu0
      %3856 = vmatprep.mubr.bf16.mxu0 0
      %3857 = vmatmul.mubr.bf16.gmra.mrb[0].mxu0 %v3639
      %v3858 = vpop.f32.mrb[0].mxu0
      %v3859 = vadd.f32 0.0, %v3858
      %v3860 = vpop.f32.mrb[0].mxu0
      %v3861 = vpop.f32.mrb[0].mxu0
      %v3862 = vadd.f32 0.0, %v3861
      %v3863 = vpop.f32.mrb[0].mxu0
      %3864 = vdwg.mxu0
      %v3865 = vadd.f32 %v3415, %v3739
      %v3866 = vadd.f32 %v3416, %v3742
      %v3867 = vadd.f32 %v3417, %v3747
      %v3868 = vadd.f32 %v3418, %v3750
      %v3869 = vadd.f32 %v3419, %v3755
      %v3870 = vadd.f32 %v3420, %v3758
      %v3871 = vadd.f32 %v3421, %v3763
      %v3872 = vadd.f32 %v3422, %v3766
      %v3873 = vadd.f32 %v3423, %v3771
      %v3874 = vadd.f32 %v3424, %v3774
      %v3875 = vadd.f32 %v3425, %v3779
      %v3876 = vadd.f32 %v3426, %v3782
      %v3877 = vadd.f32 %v3427, %v3787
      %v3878 = vadd.f32 %v3428, %v3790
      %v3879 = vadd.f32 %v3429, %v3795
      %v3880 = vadd.f32 %v3430, %v3798
      %v3881 = vadd.f32 %v3431, %v3803
      %v3882 = vadd.f32 %v3432, %v3806
      %v3883 = vadd.f32 %v3433, %v3811
      %v3884 = vadd.f32 %v3434, %v3814
      %v3885 = vadd.f32 %v3435, %v3819
      %v3886 = vadd.f32 %v3436, %v3822
      %v3887 = vadd.f32 %v3437, %v3827
      %v3888 = vadd.f32 %v3438, %v3830
      %v3889 = vadd.f32 %v3439, %v3835
      %v3890 = vadd.f32 %v3440, %v3838
      %v3891 = vadd.f32 %v3441, %v3843
      %v3892 = vadd.f32 %v3442, %v3846
      %v3893 = vadd.f32 %v3443, %v3851
      %v3894 = vadd.f32 %v3444, %v3854
      %v3895 = vadd.f32 %v3445, %v3859
      %v3896 = vadd.f32 %v3446, %v3862
      %s3897 = scalar_lea.vmem [#allocation2], 24
      %v3898 = vld [vmem:[%s3897] sm:$0xf]
      %v3899 = vld [vmem:[%s3897 + $0x4] sm:$0xf]
      %v3900 = vld [vmem:[%s3897 + $0x8] sm:$0x1]
      %v3901 = vld [vmem:[%s3897 + $0xc] sm:$0xf]
      %v3902 = vld [vmem:[%s3897 + $0x10] sm:$0xf]
      %v3903 = vld [vmem:[%s3897 + $0x14] sm:$0x1]
      %v3904 = vld [vmem:[%s3897 + $0x18] sm:$0xf]
      %v3905 = vld [vmem:[%s3897 + $0x1c] sm:$0xf]
      %v3906 = vld [vmem:[%s3897 + $0x20] sm:$0x1]
      %v3907 = vld [vmem:[%s3897 + $0x24] sm:$0xf]
      %v3908 = vld [vmem:[%s3897 + $0x28] sm:$0xf]
      %v3909 = vld [vmem:[%s3897 + $0x2c] sm:$0x1]
      %v3910 = vld [vmem:[%s3897 + $0x30] sm:$0xf]
      %v3911 = vld [vmem:[%s3897 + $0x34] sm:$0xf]
      %v3912 = vld [vmem:[%s3897 + $0x38] sm:$0x1]
      %v3913 = vld [vmem:[%s3897 + $0x3c] sm:$0xf]
      %v3914 = vld [vmem:[%s3897 + $0x40] sm:$0xf]
      %v3915 = vld [vmem:[%s3897 + $0x44] sm:$0x1]
      %v3916 = vld [vmem:[%s3897 + $0x48] sm:$0xf]
      %v3917 = vld [vmem:[%s3897 + $0x4c] sm:$0xf]
      %v3918 = vld [vmem:[%s3897 + $0x50] sm:$0x1]
      %v3919 = vld [vmem:[%s3897 + $0x54] sm:$0xf]
      %v3920 = vld [vmem:[%s3897 + $0x58] sm:$0xf]
      %v3921 = vld [vmem:[%s3897 + $0x5c] sm:$0x1]
      %v3922 = vld [vmem:[%s3897 + $0x60] sm:$0xf]
      %v3923 = vld [vmem:[%s3897 + $0x64] sm:$0xf]
      %v3924 = vld [vmem:[%s3897 + $0x68] sm:$0x1]
      %v3925 = vld [vmem:[%s3897 + $0x6c] sm:$0xf]
      %v3926 = vld [vmem:[%s3897 + $0x70] sm:$0xf]
      %v3927 = vld [vmem:[%s3897 + $0x74] sm:$0x1]
      %v3928 = vld [vmem:[%s3897 + $0x78] sm:$0xf]
      %v3929 = vld [vmem:[%s3897 + $0x7c] sm:$0xf]
      %v3930 = vld [vmem:[%s3897 + $0x80] sm:$0x1]
      %v3931 = vld [vmem:[%s3897 + $0x84] sm:$0xf]
      %v3932 = vld [vmem:[%s3897 + $0x88] sm:$0xf]
      %v3933 = vld [vmem:[%s3897 + $0x8c] sm:$0x1]
      %v3934 = vld [vmem:[%s3897 + $0x90] sm:$0xf]
      %v3935 = vld [vmem:[%s3897 + $0x94] sm:$0xf]
      %v3936 = vld [vmem:[%s3897 + $0x98] sm:$0x1]
      %v3937 = vld [vmem:[%s3897 + $0x9c] sm:$0xf]
      %v3938 = vld [vmem:[%s3897 + $0xa0] sm:$0xf]
      %v3939 = vld [vmem:[%s3897 + $0xa4] sm:$0x1]
      %v3940 = vld [vmem:[%s3897 + $0xa8] sm:$0xf]
      %v3941 = vld [vmem:[%s3897 + $0xac] sm:$0xf]
      %v3942 = vld [vmem:[%s3897 + $0xb0] sm:$0x1]
      %v3943 = vld [vmem:[%s3897 + $0xb4] sm:$0xf]
      %v3944 = vld [vmem:[%s3897 + $0xb8] sm:$0xf]
      %v3945 = vld [vmem:[%s3897 + $0xbc] sm:$0x1]
      %s3946 = scalar_lea.vmem %s3, 384
      %v3947 = vld [vmem:[%s3946] sm:$0xf]
      %v3948 = vld [vmem:[%s3946 + $0x4] sm:$0xf]
      %v3949 = vld [vmem:[%s3946 + $0x8] sm:$0xf]
      %v3950 = vld [vmem:[%s3946 + $0xc] sm:$0xf]
      %v3951 = vld [vmem:[%s3946 + $0x10] sm:$0xf]
      %v3952 = vld [vmem:[%s3946 + $0x14] sm:$0xf]
      %v3953 = vld [vmem:[%s3946 + $0x18] sm:$0xf]
      %v3954 = vld [vmem:[%s3946 + $0x1c] sm:$0xf]
      %v3955 = vld [vmem:[%s3946 + $0x20] sm:$0xf]
      %v3956 = vld [vmem:[%s3946 + $0x24] sm:$0xf]
      %v3957 = vld [vmem:[%s3946 + $0x28] sm:$0xf]
      %v3958 = vld [vmem:[%s3946 + $0x2c] sm:$0xf]
      %v3959 = vld [vmem:[%s3946 + $0x30] sm:$0xf]
      %v3960 = vld [vmem:[%s3946 + $0x34] sm:$0xf]
      %v3961 = vld [vmem:[%s3946 + $0x38] sm:$0xf]
      %v3962 = vld [vmem:[%s3946 + $0x3c] sm:$0xf]
      %v3995 = vunpack.c.l.b16 %v3898
      %v3996 = vunpack.c.l.b16 %v3899
      %v3997 = vunpack.c.l.b16 %v3901
      %v3998 = vunpack.c.l.b16 %v3902
      %v3999 = vunpack.c.l.b16 %v3904
      %v4000 = vunpack.c.l.b16 %v3905
      %v4001 = vunpack.c.l.b16 %v3907
      %v4002 = vunpack.c.l.b16 %v3908
      %v4003 = vunpack.c.l.b16 %v3910
      %v4004 = vunpack.c.l.b16 %v3911
      %v4005 = vunpack.c.l.b16 %v3913
      %v4006 = vunpack.c.l.b16 %v3914
      %v4007 = vunpack.c.l.b16 %v3916
      %v4008 = vunpack.c.l.b16 %v3917
      %v4009 = vunpack.c.l.b16 %v3919
      %v4010 = vunpack.c.l.b16 %v3920
      %v4011 = vunpack.c.l.b16 %v3922
      %v4012 = vunpack.c.l.b16 %v3923
      %v4013 = vunpack.c.l.b16 %v3925
      %v4014 = vunpack.c.l.b16 %v3926
      %v4015 = vunpack.c.l.b16 %v3928
      %v4016 = vunpack.c.l.b16 %v3929
      %v4017 = vunpack.c.l.b16 %v3931
      %v4018 = vunpack.c.l.b16 %v3932
      %v4019 = vunpack.c.l.b16 %v3934
      %v4020 = vunpack.c.l.b16 %v3935
      %v4021 = vunpack.c.l.b16 %v3937
      %v4022 = vunpack.c.l.b16 %v3938
      %v4023 = vunpack.c.l.b16 %v3940
      %v4024 = vunpack.c.l.b16 %v3941
      %v4025 = vunpack.c.l.b16 %v3943
      %v4026 = vunpack.c.l.b16 %v3944
      %v4027 = vpack.c.b16 %v3996, %v3995
      %v4028 = vpack.c.b16 %v3998, %v3997
      %v4029 = vpack.c.b16 %v4000, %v3999
      %v4030 = vpack.c.b16 %v4002, %v4001
      %v4031 = vpack.c.b16 %v4004, %v4003
      %v4032 = vpack.c.b16 %v4006, %v4005
      %v4033 = vpack.c.b16 %v4008, %v4007
      %v4034 = vpack.c.b16 %v4010, %v4009
      %v4035 = vpack.c.b16 %v4012, %v4011
      %v4036 = vpack.c.b16 %v4014, %v4013
      %v4037 = vpack.c.b16 %v4016, %v4015
      %v4038 = vpack.c.b16 %v4018, %v4017
      %v4039 = vpack.c.b16 %v4020, %v4019
      %v4040 = vpack.c.b16 %v4022, %v4021
      %v4041 = vpack.c.b16 %v4024, %v4023
      %v4042 = vpack.c.b16 %v4026, %v4025
      %v4075 = vunpack.c.l.b16 %v3947
      %v4076 = vunpack.c.l.b16 %v3948
      %v4077 = vunpack.c.l.b16 %v3949
      %v4078 = vunpack.c.l.b16 %v3950
      %v4079 = vunpack.c.l.b16 %v3951
      %v4080 = vunpack.c.l.b16 %v3952
      %v4081 = vunpack.c.l.b16 %v3953
      %v4082 = vunpack.c.l.b16 %v3954
      %v4083 = vunpack.c.l.b16 %v3955
      %v4084 = vunpack.c.l.b16 %v3956
      %v4085 = vunpack.c.l.b16 %v3957
      %v4086 = vunpack.c.l.b16 %v3958
      %v4087 = vunpack.c.l.b16 %v3959
      %v4088 = vunpack.c.l.b16 %v3960
      %v4089 = vunpack.c.l.b16 %v3961
      %v4090 = vunpack.c.l.b16 %v3962
      %v4091 = vpack.c.b16 %v4076, %v4075
      %v4092 = vpack.c.b16 %v4078, %v4077
      %v4093 = vpack.c.b16 %v4080, %v4079
      %v4094 = vpack.c.b16 %v4082, %v4081
      %v4095 = vpack.c.b16 %v4084, %v4083
      %v4096 = vpack.c.b16 %v4086, %v4085
      %v4097 = vpack.c.b16 %v4088, %v4087
      %v4098 = vpack.c.b16 %v4090, %v4089
      %4107 = vmatprep.subr.bf16.mxu0 0
      %4108 = vmatpush1.bf16.msra.mxu0 %v4091
      %4109 = vmatprep.subr.bf16.mxu0 0
      %4110 = vmatpush1.bf16.msra.mxu0 %v4092
      %4111 = vmatprep.subr.bf16.mxu0 0
      %4112 = vmatpush1.bf16.msra.mxu0 %v4093
      %4113 = vmatprep.subr.bf16.mxu0 0
      %4114 = vmatpush1.bf16.msra.mxu0 %v4094
      %4115 = vmatprep.subr.bf16.mxu0 0
      %4116 = vmatpush1.bf16.msra.mxu0 %v4095
      %4117 = vmatprep.subr.bf16.mxu0 0
      %4118 = vmatpush1.bf16.msra.mxu0 %v4096
      %4119 = vmatprep.subr.bf16.mxu0 0
      %4120 = vmatpush1.bf16.msra.mxu0 %v4097
      %4121 = vmatprep.subr.bf16.mxu0 0
      %4122 = vmatpush1.bf16.msra.mxu0 %v4098
      %4123 = vmatprep.subr.bf16.mxu0 0
      %4124 = vmatpush1.bf16.msra.mxu0 0
      %4125 = vmatprep.subr.bf16.mxu0 0
      %4126 = vmatpush1.bf16.msra.mxu0 0
      %4127 = vmatprep.subr.bf16.mxu0 0
      %4128 = vmatpush1.bf16.msra.mxu0 0
      %4129 = vmatprep.subr.bf16.mxu0 0
      %4130 = vmatpush1.bf16.msra.mxu0 0
      %4131 = vmatprep.subr.bf16.mxu0 0
      %4132 = vmatpush1.bf16.msra.mxu0 0
      %4133 = vmatprep.subr.bf16.mxu0 0
      %4134 = vmatpush1.bf16.msra.mxu0 0
      %4135 = vmatprep.subr.bf16.mxu0 0
      %4136 = vmatpush1.bf16.msra.mxu0 0
      %4137 = vmatprep.subr.bf16.mxu0 0
      %4138 = vmatpush1.bf16.msra.mxu0 0
      %4139 = vmatprep.mubr.bf16.mxu0 0
      %4140 = vmatmul.mubr.bf16.gmra.mrb[0].mxu0 %v4027
      %v4141 = vpop.f32.mrb[0].mxu0
      %v4142 = vadd.f32 0.0, %v4141
      %v4143 = vpop.f32.mrb[0].mxu0
      %v4144 = vpop.f32.mrb[0].mxu0
      %v4145 = vadd.f32 0.0, %v4144
      %v4146 = vpop.f32.mrb[0].mxu0
      %4147 = vmatprep.mubr.bf16.mxu0 0
      %4148 = vmatmul.mubr.bf16.gmra.mrb[0].mxu0 %v4028
      %v4149 = vpop.f32.mrb[0].mxu0
      %v4150 = vadd.f32 0.0, %v4149
      %v4151 = vpop.f32.mrb[0].mxu0
      %v4152 = vpop.f32.mrb[0].mxu0
      %v4153 = vadd.f32 0.0, %v4152
      %v4154 = vpop.f32.mrb[0].mxu0
      %4155 = vmatprep.mubr.bf16.mxu0 0
      %4156 = vmatmul.mubr.bf16.gmra.mrb[0].mxu0 %v4029
      %v4157 = vpop.f32.mrb[0].mxu0
      %v4158 = vadd.f32 0.0, %v4157
      %v4159 = vpop.f32.mrb[0].mxu0
      %v4160 = vpop.f32.mrb[0].mxu0
      %v4161 = vadd.f32 0.0, %v4160
      %v4162 = vpop.f32.mrb[0].mxu0
      %4163 = vmatprep.mubr.bf16.mxu0 0
      %4164 = vmatmul.mubr.bf16.gmra.mrb[0].mxu0 %v4030
      %v4165 = vpop.f32.mrb[0].mxu0
      %v4166 = vadd.f32 0.0, %v4165
      %v4167 = vpop.f32.mrb[0].mxu0
      %v4168 = vpop.f32.mrb[0].mxu0
      %v4169 = vadd.f32 0.0, %v4168
      %v4170 = vpop.f32.mrb[0].mxu0
      %4171 = vmatprep.mubr.bf16.mxu0 0
      %4172 = vmatmul.mubr.bf16.gmra.mrb[0].mxu0 %v4031
      %v4173 = vpop.f32.mrb[0].mxu0
      %v4174 = vadd.f32 0.0, %v4173
      %v4175 = vpop.f32.mrb[0].mxu0
      %v4176 = vpop.f32.mrb[0].mxu0
      %v4177 = vadd.f32 0.0, %v4176
      %v4178 = vpop.f32.mrb[0].mxu0
      %4179 = vmatprep.mubr.bf16.mxu0 0
      %4180 = vmatmul.mubr.bf16.gmra.mrb[0].mxu0 %v4032
      %v4181 = vpop.f32.mrb[0].mxu0
      %v4182 = vadd.f32 0.0, %v4181
      %v4183 = vpop.f32.mrb[0].mxu0
      %v4184 = vpop.f32.mrb[0].mxu0
      %v4185 = vadd.f32 0.0, %v4184
      %v4186 = vpop.f32.mrb[0].mxu0
      %4187 = vmatprep.mubr.bf16.mxu0 0
      %4188 = vmatmul.mubr.bf16.gmra.mrb[0].mxu0 %v4033
      %v4189 = vpop.f32.mrb[0].mxu0
      %v4190 = vadd.f32 0.0, %v4189
      %v4191 = vpop.f32.mrb[0].mxu0
      %v4192 = vpop.f32.mrb[0].mxu0
      %v4193 = vadd.f32 0.0, %v4192
      %v4194 = vpop.f32.mrb[0].mxu0
      %4195 = vmatprep.mubr.bf16.mxu0 0
      %4196 = vmatmul.mubr.bf16.gmra.mrb[0].mxu0 %v4034
      %v4197 = vpop.f32.mrb[0].mxu0
      %v4198 = vadd.f32 0.0, %v4197
      %v4199 = vpop.f32.mrb[0].mxu0
      %v4200 = vpop.f32.mrb[0].mxu0
      %v4201 = vadd.f32 0.0, %v4200
      %v4202 = vpop.f32.mrb[0].mxu0
      %4203 = vmatprep.mubr.bf16.mxu0 0
      %4204 = vmatmul.mubr.bf16.gmra.mrb[0].mxu0 %v4035
      %v4205 = vpop.f32.mrb[0].mxu0
      %v4206 = vadd.f32 0.0, %v4205
      %v4207 = vpop.f32.mrb[0].mxu0
      %v4208 = vpop.f32.mrb[0].mxu0
      %v4209 = vadd.f32 0.0, %v4208
      %v4210 = vpop.f32.mrb[0].mxu0
      %4211 = vmatprep.mubr.bf16.mxu0 0
      %4212 = vmatmul.mubr.bf16.gmra.mrb[0].mxu0 %v4036
      %v4213 = vpop.f32.mrb[0].mxu0
      %v4214 = vadd.f32 0.0, %v4213
      %v4215 = vpop.f32.mrb[0].mxu0
      %v4216 = vpop.f32.mrb[0].mxu0
      %v4217 = vadd.f32 0.0, %v4216
      %v4218 = vpop.f32.mrb[0].mxu0
      %4219 = vmatprep.mubr.bf16.mxu0 0
      %4220 = vmatmul.mubr.bf16.gmra.mrb[0].mxu0 %v4037
      %v4221 = vpop.f32.mrb[0].mxu0
      %v4222 = vadd.f32 0.0, %v4221
      %v4223 = vpop.f32.mrb[0].mxu0
      %v4224 = vpop.f32.mrb[0].mxu0
      %v4225 = vadd.f32 0.0, %v4224
      %v4226 = vpop.f32.mrb[0].mxu0
      %4227 = vmatprep.mubr.bf16.mxu0 0
      %4228 = vmatmul.mubr.bf16.gmra.mrb[0].mxu0 %v4038
      %v4229 = vpop.f32.mrb[0].mxu0
      %v4230 = vadd.f32 0.0, %v4229
      %v4231 = vpop.f32.mrb[0].mxu0
      %v4232 = vpop.f32.mrb[0].mxu0
      %v4233 = vadd.f32 0.0, %v4232
      %v4234 = vpop.f32.mrb[0].mxu0
      %4235 = vmatprep.mubr.bf16.mxu0 0
      %4236 = vmatmul.mubr.bf16.gmra.mrb[0].mxu0 %v4039
      %v4237 = vpop.f32.mrb[0].mxu0
      %v4238 = vadd.f32 0.0, %v4237
      %v4239 = vpop.f32.mrb[0].mxu0
      %v4240 = vpop.f32.mrb[0].mxu0
      %v4241 = vadd.f32 0.0, %v4240
      %v4242 = vpop.f32.mrb[0].mxu0
      %4243 = vmatprep.mubr.bf16.mxu0 0
      %4244 = vmatmul.mubr.bf16.gmra.mrb[0].mxu0 %v4040
      %v4245 = vpop.f32.mrb[0].mxu0
      %v4246 = vadd.f32 0.0, %v4245
      %v4247 = vpop.f32.mrb[0].mxu0
      %v4248 = vpop.f32.mrb[0].mxu0
      %v4249 = vadd.f32 0.0, %v4248
      %v4250 = vpop.f32.mrb[0].mxu0
      %4251 = vmatprep.mubr.bf16.mxu0 0
      %4252 = vmatmul.mubr.bf16.gmra.mrb[0].mxu0 %v4041
      %v4253 = vpop.f32.mrb[0].mxu0
      %v4254 = vadd.f32 0.0, %v4253
      %v4255 = vpop.f32.mrb[0].mxu0
      %v4256 = vpop.f32.mrb[0].mxu0
      %v4257 = vadd.f32 0.0, %v4256
      %v4258 = vpop.f32.mrb[0].mxu0
      %4259 = vmatprep.mubr.bf16.mxu0 0
      %4260 = vmatmul.mubr.bf16.gmra.mrb[0].mxu0 %v4042
      %v4261 = vpop.f32.mrb[0].mxu0
      %v4262 = vadd.f32 0.0, %v4261
      %v4263 = vpop.f32.mrb[0].mxu0
      %v4264 = vpop.f32.mrb[0].mxu0
      %v4265 = vadd.f32 0.0, %v4264
      %v4266 = vpop.f32.mrb[0].mxu0
      %4267 = vdwg.mxu0
      %v4268 = vadd.f32 %v3865, %v4142
      %v4269 = vadd.f32 %v3866, %v4145
      %v4270 = vadd.f32 %v3867, %v4150
      %v4271 = vadd.f32 %v3868, %v4153
      %v4272 = vadd.f32 %v3869, %v4158
      %v4273 = vadd.f32 %v3870, %v4161
      %v4274 = vadd.f32 %v3871, %v4166
      %v4275 = vadd.f32 %v3872, %v4169
      %v4276 = vadd.f32 %v3873, %v4174
      %v4277 = vadd.f32 %v3874, %v4177
      %v4278 = vadd.f32 %v3875, %v4182
      %v4279 = vadd.f32 %v3876, %v4185
      %v4280 = vadd.f32 %v3877, %v4190
      %v4281 = vadd.f32 %v3878, %v4193
      %v4282 = vadd.f32 %v3879, %v4198
      %v4283 = vadd.f32 %v3880, %v4201
      %v4284 = vadd.f32 %v3881, %v4206
      %v4285 = vadd.f32 %v3882, %v4209
      %v4286 = vadd.f32 %v3883, %v4214
      %v4287 = vadd.f32 %v3884, %v4217
      %v4288 = vadd.f32 %v3885, %v4222
      %v4289 = vadd.f32 %v3886, %v4225
      %v4290 = vadd.f32 %v3887, %v4230
      %v4291 = vadd.f32 %v3888, %v4233
      %v4292 = vadd.f32 %v3889, %v4238
      %v4293 = vadd.f32 %v3890, %v4241
      %v4294 = vadd.f32 %v3891, %v4246
      %v4295 = vadd.f32 %v3892, %v4249
      %v4296 = vadd.f32 %v3893, %v4254
      %v4297 = vadd.f32 %v3894, %v4257
      %v4298 = vadd.f32 %v3895, %v4262
      %v4299 = vadd.f32 %v3896, %v4265
      %v4301 = vshrl.u32 %v3898, 16
      %v4303 = vrot.slane %v4301, 4
      %v4304 = vshll.u32 %v3898, 16
      %v4306 = vrot.slane %v4304, 5
      %v4307 = vor.u32 %v4303, %v4306
      %v4308 = vrot.slane %v4307, 4
      %v4310 = vshll.u32 %v3899, 16
      %v4312 = vrot.slane %v4310, 5
      %v4313 = vsel %vm906, %v4308, %v4312
      %v4314 = vshrl.u32 %v3899, 16
      %v4316 = vrot.slane %v4314, 4
      %v4317 = vor.u32 %v4316, %v4312
      %v4318 = vrot.slane %v4317, 4
      %v4320 = vshll.u32 %v3900, 16
      %v4322 = vrot.slane %v4320, 5
      %v4323 = vsel %vm906, %v4318, %v4322
      %v4325 = vshrl.u32 %v3901, 16
      %v4327 = vrot.slane %v4325, 4
      %v4328 = vshll.u32 %v3901, 16
      %v4330 = vrot.slane %v4328, 5
      %v4331 = vor.u32 %v4327, %v4330
      %v4332 = vrot.slane %v4331, 4
      %v4334 = vshll.u32 %v3902, 16
      %v4336 = vrot.slane %v4334, 5
      %v4337 = vsel %vm906, %v4332, %v4336
      %v4338 = vshrl.u32 %v3902, 16
      %v4340 = vrot.slane %v4338, 4
      %v4341 = vor.u32 %v4340, %v4336
      %v4342 = vrot.slane %v4341, 4
      %v4344 = vshll.u32 %v3903, 16
      %v4346 = vrot.slane %v4344, 5
      %v4347 = vsel %vm906, %v4342, %v4346
      %v4349 = vshrl.u32 %v3904, 16
      %v4351 = vrot.slane %v4349, 4
      %v4352 = vshll.u32 %v3904, 16
      %v4354 = vrot.slane %v4352, 5
      %v4355 = vor.u32 %v4351, %v4354
      %v4356 = vrot.slane %v4355, 4
      %v4358 = vshll.u32 %v3905, 16
      %v4360 = vrot.slane %v4358, 5
      %v4361 = vsel %vm906, %v4356, %v4360
      %v4362 = vshrl.u32 %v3905, 16
      %v4364 = vrot.slane %v4362, 4
      %v4365 = vor.u32 %v4364, %v4360
      %v4366 = vrot.slane %v4365, 4
      %v4368 = vshll.u32 %v3906, 16
      %v4370 = vrot.slane %v4368, 5
      %v4371 = vsel %vm906, %v4366, %v4370
      %v4373 = vshrl.u32 %v3907, 16
      %v4375 = vrot.slane %v4373, 4
      %v4376 = vshll.u32 %v3907, 16
      %v4378 = vrot.slane %v4376, 5
      %v4379 = vor.u32 %v4375, %v4378
      %v4380 = vrot.slane %v4379, 4
      %v4382 = vshll.u32 %v3908, 16
      %v4384 = vrot.slane %v4382, 5
      %v4385 = vsel %vm906, %v4380, %v4384
      %v4386 = vshrl.u32 %v3908, 16
      %v4388 = vrot.slane %v4386, 4
      %v4389 = vor.u32 %v4388, %v4384
      %v4390 = vrot.slane %v4389, 4
      %v4392 = vshll.u32 %v3909, 16
      %v4394 = vrot.slane %v4392, 5
      %v4395 = vsel %vm906, %v4390, %v4394
      %v4397 = vshrl.u32 %v3910, 16
      %v4399 = vrot.slane %v4397, 4
      %v4400 = vshll.u32 %v3910, 16
      %v4402 = vrot.slane %v4400, 5
      %v4403 = vor.u32 %v4399, %v4402
      %v4404 = vrot.slane %v4403, 4
      %v4406 = vshll.u32 %v3911, 16
      %v4408 = vrot.slane %v4406, 5
      %v4409 = vsel %vm906, %v4404, %v4408
      %v4410 = vshrl.u32 %v3911, 16
      %v4412 = vrot.slane %v4410, 4
      %v4413 = vor.u32 %v4412, %v4408
      %v4414 = vrot.slane %v4413, 4
      %v4416 = vshll.u32 %v3912, 16
      %v4418 = vrot.slane %v4416, 5
      %v4419 = vsel %vm906, %v4414, %v4418
      %v4421 = vshrl.u32 %v3913, 16
      %v4423 = vrot.slane %v4421, 4
      %v4424 = vshll.u32 %v3913, 16
      %v4426 = vrot.slane %v4424, 5
      %v4427 = vor.u32 %v4423, %v4426
      %v4428 = vrot.slane %v4427, 4
      %v4430 = vshll.u32 %v3914, 16
      %v4432 = vrot.slane %v4430, 5
      %v4433 = vsel %vm906, %v4428, %v4432
      %v4434 = vshrl.u32 %v3914, 16
      %v4436 = vrot.slane %v4434, 4
      %v4437 = vor.u32 %v4436, %v4432
      %v4438 = vrot.slane %v4437, 4
      %v4440 = vshll.u32 %v3915, 16
      %v4442 = vrot.slane %v4440, 5
      %v4443 = vsel %vm906, %v4438, %v4442
      %v4445 = vshrl.u32 %v3916, 16
      %v4447 = vrot.slane %v4445, 4
      %v4448 = vshll.u32 %v3916, 16
      %v4450 = vrot.slane %v4448, 5
      %v4451 = vor.u32 %v4447, %v4450
      %v4452 = vrot.slane %v4451, 4
      %v4454 = vshll.u32 %v3917, 16
      %v4456 = vrot.slane %v4454, 5
      %v4457 = vsel %vm906, %v4452, %v4456
      %v4458 = vshrl.u32 %v3917, 16
      %v4460 = vrot.slane %v4458, 4
      %v4461 = vor.u32 %v4460, %v4456
      %v4462 = vrot.slane %v4461, 4
      %v4464 = vshll.u32 %v3918, 16
      %v4466 = vrot.slane %v4464, 5
      %v4467 = vsel %vm906, %v4462, %v4466
      %v4469 = vshrl.u32 %v3919, 16
      %v4471 = vrot.slane %v4469, 4
      %v4472 = vshll.u32 %v3919, 16
      %v4474 = vrot.slane %v4472, 5
      %v4475 = vor.u32 %v4471, %v4474
      %v4476 = vrot.slane %v4475, 4
      %v4478 = vshll.u32 %v3920, 16
      %v4480 = vrot.slane %v4478, 5
      %v4481 = vsel %vm906, %v4476, %v4480
      %v4482 = vshrl.u32 %v3920, 16
      %v4484 = vrot.slane %v4482, 4
      %v4485 = vor.u32 %v4484, %v4480
      %v4486 = vrot.slane %v4485, 4
      %v4488 = vshll.u32 %v3921, 16
      %v4490 = vrot.slane %v4488, 5
      %v4491 = vsel %vm906, %v4486, %v4490
      %v4493 = vshrl.u32 %v3922, 16
      %v4495 = vrot.slane %v4493, 4
      %v4496 = vshll.u32 %v3922, 16
      %v4498 = vrot.slane %v4496, 5
      %v4499 = vor.u32 %v4495, %v4498
      %v4500 = vrot.slane %v4499, 4
      %v4502 = vshll.u32 %v3923, 16
      %v4504 = vrot.slane %v4502, 5
      %v4505 = vsel %vm906, %v4500, %v4504
      %v4506 = vshrl.u32 %v3923, 16
      %v4508 = vrot.slane %v4506, 4
      %v4509 = vor.u32 %v4508, %v4504
      %v4510 = vrot.slane %v4509, 4
      %v4512 = vshll.u32 %v3924, 16
      %v4514 = vrot.slane %v4512, 5
      %v4515 = vsel %vm906, %v4510, %v4514
      %v4517 = vshrl.u32 %v3925, 16
      %v4519 = vrot.slane %v4517, 4
      %v4520 = vshll.u32 %v3925, 16
      %v4522 = vrot.slane %v4520, 5
      %v4523 = vor.u32 %v4519, %v4522
      %v4524 = vrot.slane %v4523, 4
      %v4526 = vshll.u32 %v3926, 16
      %v4528 = vrot.slane %v4526, 5
      %v4529 = vsel %vm906, %v4524, %v4528
      %v4530 = vshrl.u32 %v3926, 16
      %v4532 = vrot.slane %v4530, 4
      %v4533 = vor.u32 %v4532, %v4528
      %v4534 = vrot.slane %v4533, 4
      %v4536 = vshll.u32 %v3927, 16
      %v4538 = vrot.slane %v4536, 5
      %v4539 = vsel %vm906, %v4534, %v4538
      %v4541 = vshrl.u32 %v3928, 16
      %v4543 = vrot.slane %v4541, 4
      %v4544 = vshll.u32 %v3928, 16
      %v4546 = vrot.slane %v4544, 5
      %v4547 = vor.u32 %v4543, %v4546
      %v4548 = vrot.slane %v4547, 4
      %v4550 = vshll.u32 %v3929, 16
      %v4552 = vrot.slane %v4550, 5
      %v4553 = vsel %vm906, %v4548, %v4552
      %v4554 = vshrl.u32 %v3929, 16
      %v4556 = vrot.slane %v4554, 4
      %v4557 = vor.u32 %v4556, %v4552
      %v4558 = vrot.slane %v4557, 4
      %v4560 = vshll.u32 %v3930, 16
      %v4562 = vrot.slane %v4560, 5
      %v4563 = vsel %vm906, %v4558, %v4562
      %v4565 = vshrl.u32 %v3931, 16
      %v4567 = vrot.slane %v4565, 4
      %v4568 = vshll.u32 %v3931, 16
      %v4570 = vrot.slane %v4568, 5
      %v4571 = vor.u32 %v4567, %v4570
      %v4572 = vrot.slane %v4571, 4
      %v4574 = vshll.u32 %v3932, 16
      %v4576 = vrot.slane %v4574, 5
      %v4577 = vsel %vm906, %v4572, %v4576
      %v4578 = vshrl.u32 %v3932, 16
      %v4580 = vrot.slane %v4578, 4
      %v4581 = vor.u32 %v4580, %v4576
      %v4582 = vrot.slane %v4581, 4
      %v4584 = vshll.u32 %v3933, 16
      %v4586 = vrot.slane %v4584, 5
      %v4587 = vsel %vm906, %v4582, %v4586
      %v4589 = vshrl.u32 %v3934, 16
      %v4591 = vrot.slane %v4589, 4
      %v4592 = vshll.u32 %v3934, 16
      %v4594 = vrot.slane %v4592, 5
      %v4595 = vor.u32 %v4591, %v4594
      %v4596 = vrot.slane %v4595, 4
      %v4598 = vshll.u32 %v3935, 16
      %v4600 = vrot.slane %v4598, 5
      %v4601 = vsel %vm906, %v4596, %v4600
      %v4602 = vshrl.u32 %v3935, 16
      %v4604 = vrot.slane %v4602, 4
      %v4605 = vor.u32 %v4604, %v4600
      %v4606 = vrot.slane %v4605, 4
      %v4608 = vshll.u32 %v3936, 16
      %v4610 = vrot.slane %v4608, 5
      %v4611 = vsel %vm906, %v4606, %v4610
      %v4613 = vshrl.u32 %v3937, 16
      %v4615 = vrot.slane %v4613, 4
      %v4616 = vshll.u32 %v3937, 16
      %v4618 = vrot.slane %v4616, 5
      %v4619 = vor.u32 %v4615, %v4618
      %v4620 = vrot.slane %v4619, 4
      %v4622 = vshll.u32 %v3938, 16
      %v4624 = vrot.slane %v4622, 5
      %v4625 = vsel %vm906, %v4620, %v4624
      %v4626 = vshrl.u32 %v3938, 16
      %v4628 = vrot.slane %v4626, 4
      %v4629 = vor.u32 %v4628, %v4624
      %v4630 = vrot.slane %v4629, 4
      %v4632 = vshll.u32 %v3939, 16
      %v4634 = vrot.slane %v4632, 5
      %v4635 = vsel %vm906, %v4630, %v4634
      %v4637 = vshrl.u32 %v3940, 16
      %v4639 = vrot.slane %v4637, 4
      %v4640 = vshll.u32 %v3940, 16
      %v4642 = vrot.slane %v4640, 5
      %v4643 = vor.u32 %v4639, %v4642
      %v4644 = vrot.slane %v4643, 4
      %v4646 = vshll.u32 %v3941, 16
      %v4648 = vrot.slane %v4646, 5
      %v4649 = vsel %vm906, %v4644, %v4648
      %v4650 = vshrl.u32 %v3941, 16
      %v4652 = vrot.slane %v4650, 4
      %v4653 = vor.u32 %v4652, %v4648
      %v4654 = vrot.slane %v4653, 4
      %v4656 = vshll.u32 %v3942, 16
      %v4658 = vrot.slane %v4656, 5
      %v4659 = vsel %vm906, %v4654, %v4658
      %v4661 = vshrl.u32 %v3943, 16
      %v4663 = vrot.slane %v4661, 4
      %v4664 = vshll.u32 %v3943, 16
      %v4666 = vrot.slane %v4664, 5
      %v4667 = vor.u32 %v4663, %v4666
      %v4668 = vrot.slane %v4667, 4
      %v4670 = vshll.u32 %v3944, 16
      %v4672 = vrot.slane %v4670, 5
      %v4673 = vsel %vm906, %v4668, %v4672
      %v4674 = vshrl.u32 %v3944, 16
      %v4676 = vrot.slane %v4674, 4
      %v4677 = vor.u32 %v4676, %v4672
      %v4678 = vrot.slane %v4677, 4
      %v4680 = vshll.u32 %v3945, 16
      %v4682 = vrot.slane %v4680, 5
      %v4683 = vsel %vm906, %v4678, %v4682
      %s4684 = scalar_lea.vmem %s3, 448
      %v4685 = vld [vmem:[%s4684] sm:$0xf]
      %v4686 = vld [vmem:[%s4684 + $0x4] sm:$0xf]
      %v4687 = vld [vmem:[%s4684 + $0x8] sm:$0xf]
      %v4688 = vld [vmem:[%s4684 + $0xc] sm:$0xf]
      %v4689 = vld [vmem:[%s4684 + $0x10] sm:$0xf]
      %v4690 = vld [vmem:[%s4684 + $0x14] sm:$0xf]
      %v4691 = vld [vmem:[%s4684 + $0x18] sm:$0xf]
      %v4692 = vld [vmem:[%s4684 + $0x1c] sm:$0xf]
      %v4693 = vld [vmem:[%s4684 + $0x20] sm:$0xf]
      %v4694 = vld [vmem:[%s4684 + $0x24] sm:$0xf]
      %v4695 = vld [vmem:[%s4684 + $0x28] sm:$0xf]
      %v4696 = vld [vmem:[%s4684 + $0x2c] sm:$0xf]
      %v4697 = vld [vmem:[%s4684 + $0x30] sm:$0xf]
      %v4698 = vld [vmem:[%s4684 + $0x34] sm:$0xf]
      %v4699 = vld [vmem:[%s4684 + $0x38] sm:$0xf]
      %v4700 = vld [vmem:[%s4684 + $0x3c] sm:$0xf]
      %v4701 = vunpack.c.l.b16 %v4313
      %v4702 = vunpack.c.l.b16 %v4323
      %v4703 = vunpack.c.l.b16 %v4337
      %v4704 = vunpack.c.l.b16 %v4347
      %v4705 = vunpack.c.l.b16 %v4361
      %v4706 = vunpack.c.l.b16 %v4371
      %v4707 = vunpack.c.l.b16 %v4385
      %v4708 = vunpack.c.l.b16 %v4395
      %v4709 = vunpack.c.l.b16 %v4409
      %v4710 = vunpack.c.l.b16 %v4419
      %v4711 = vunpack.c.l.b16 %v4433
      %v4712 = vunpack.c.l.b16 %v4443
      %v4713 = vunpack.c.l.b16 %v4457
      %v4714 = vunpack.c.l.b16 %v4467
      %v4715 = vunpack.c.l.b16 %v4481
      %v4716 = vunpack.c.l.b16 %v4491
      %v4717 = vunpack.c.l.b16 %v4505
      %v4718 = vunpack.c.l.b16 %v4515
      %v4719 = vunpack.c.l.b16 %v4529
      %v4720 = vunpack.c.l.b16 %v4539
      %v4721 = vunpack.c.l.b16 %v4553
      %v4722 = vunpack.c.l.b16 %v4563
      %v4723 = vunpack.c.l.b16 %v4577
      %v4724 = vunpack.c.l.b16 %v4587
      %v4725 = vunpack.c.l.b16 %v4601
      %v4726 = vunpack.c.l.b16 %v4611
      %v4727 = vunpack.c.l.b16 %v4625
      %v4728 = vunpack.c.l.b16 %v4635
      %v4729 = vunpack.c.l.b16 %v4649
      %v4730 = vunpack.c.l.b16 %v4659
      %v4731 = vunpack.c.l.b16 %v4673
      %v4732 = vunpack.c.l.b16 %v4683
      %v4733 = vpack.c.b16 %v4702, %v4701
      %v4734 = vpack.c.b16 %v4704, %v4703
      %v4735 = vpack.c.b16 %v4706, %v4705
      %v4736 = vpack.c.b16 %v4708, %v4707
      %v4737 = vpack.c.b16 %v4710, %v4709
      %v4738 = vpack.c.b16 %v4712, %v4711
      %v4739 = vpack.c.b16 %v4714, %v4713
      %v4740 = vpack.c.b16 %v4716, %v4715
      %v4741 = vpack.c.b16 %v4718, %v4717
      %v4742 = vpack.c.b16 %v4720, %v4719
      %v4743 = vpack.c.b16 %v4722, %v4721
      %v4744 = vpack.c.b16 %v4724, %v4723
      %v4745 = vpack.c.b16 %v4726, %v4725
      %v4746 = vpack.c.b16 %v4728, %v4727
      %v4747 = vpack.c.b16 %v4730, %v4729
      %v4748 = vpack.c.b16 %v4732, %v4731
      %v4781 = vunpack.c.l.b16 %v4685
      %v4782 = vunpack.c.l.b16 %v4686
      %v4783 = vunpack.c.l.b16 %v4687
      %v4784 = vunpack.c.l.b16 %v4688
      %v4785 = vunpack.c.l.b16 %v4689
      %v4786 = vunpack.c.l.b16 %v4690
      %v4787 = vunpack.c.l.b16 %v4691
      %v4788 = vunpack.c.l.b16 %v4692
      %v4789 = vunpack.c.l.b16 %v4693
      %v4790 = vunpack.c.l.b16 %v4694
      %v4791 = vunpack.c.l.b16 %v4695
      %v4792 = vunpack.c.l.b16 %v4696
      %v4793 = vunpack.c.l.b16 %v4697
      %v4794 = vunpack.c.l.b16 %v4698
      %v4795 = vunpack.c.l.b16 %v4699
      %v4796 = vunpack.c.l.b16 %v4700
      %v4797 = vpack.c.b16 %v4782, %v4781
      %v4798 = vpack.c.b16 %v4784, %v4783
      %v4799 = vpack.c.b16 %v4786, %v4785
      %v4800 = vpack.c.b16 %v4788, %v4787
      %v4801 = vpack.c.b16 %v4790, %v4789
      %v4802 = vpack.c.b16 %v4792, %v4791
      %v4803 = vpack.c.b16 %v4794, %v4793
      %v4804 = vpack.c.b16 %v4796, %v4795
      %4813 = vmatprep.subr.bf16.mxu0 0
      %4814 = vmatpush1.bf16.msra.mxu0 %v4797
      %4815 = vmatprep.subr.bf16.mxu0 0
      %4816 = vmatpush1.bf16.msra.mxu0 %v4798
      %4817 = vmatprep.subr.bf16.mxu0 0
      %4818 = vmatpush1.bf16.msra.mxu0 %v4799
      %4819 = vmatprep.subr.bf16.mxu0 0
      %4820 = vmatpush1.bf16.msra.mxu0 %v4800
      %4821 = vmatprep.subr.bf16.mxu0 0
      %4822 = vmatpush1.bf16.msra.mxu0 %v4801
      %4823 = vmatprep.subr.bf16.mxu0 0
      %4824 = vmatpush1.bf16.msra.mxu0 %v4802
      %4825 = vmatprep.subr.bf16.mxu0 0
      %4826 = vmatpush1.bf16.msra.mxu0 %v4803
      %4827 = vmatprep.subr.bf16.mxu0 0
      %4828 = vmatpush1.bf16.msra.mxu0 %v4804
      %4829 = vmatprep.subr.bf16.mxu0 0
      %4830 = vmatpush1.bf16.msra.mxu0 0
      %4831 = vmatprep.subr.bf16.mxu0 0
      %4832 = vmatpush1.bf16.msra.mxu0 0
      %4833 = vmatprep.subr.bf16.mxu0 0
      %4834 = vmatpush1.bf16.msra.mxu0 0
      %4835 = vmatprep.subr.bf16.mxu0 0
      %4836 = vmatpush1.bf16.msra.mxu0 0
      %4837 = vmatprep.subr.bf16.mxu0 0
      %4838 = vmatpush1.bf16.msra.mxu0 0
      %4839 = vmatprep.subr.bf16.mxu0 0
      %4840 = vmatpush1.bf16.msra.mxu0 0
      %4841 = vmatprep.subr.bf16.mxu0 0
      %4842 = vmatpush1.bf16.msra.mxu0 0
      %4843 = vmatprep.subr.bf16.mxu0 0
      %4844 = vmatpush1.bf16.msra.mxu0 0
      %4845 = vmatprep.mubr.bf16.mxu0 0
      %4846 = vmatmul.mubr.bf16.gmra.mrb[0].mxu0 %v4733
      %v4847 = vpop.f32.mrb[0].mxu0
      %v4848 = vadd.f32 0.0, %v4847
      %v4849 = vpop.f32.mrb[0].mxu0
      %v4850 = vpop.f32.mrb[0].mxu0
      %v4851 = vadd.f32 0.0, %v4850
      %v4852 = vpop.f32.mrb[0].mxu0
      %4853 = vmatprep.mubr.bf16.mxu0 0
      %4854 = vmatmul.mubr.bf16.gmra.mrb[0].mxu0 %v4734
      %v4855 = vpop.f32.mrb[0].mxu0
      %v4856 = vadd.f32 0.0, %v4855
      %v4857 = vpop.f32.mrb[0].mxu0
      %v4858 = vpop.f32.mrb[0].mxu0
      %v4859 = vadd.f32 0.0, %v4858
      %v4860 = vpop.f32.mrb[0].mxu0
      %4861 = vmatprep.mubr.bf16.mxu0 0
      %4862 = vmatmul.mubr.bf16.gmra.mrb[0].mxu0 %v4735
      %v4863 = vpop.f32.mrb[0].mxu0
      %v4864 = vadd.f32 0.0, %v4863
      %v4865 = vpop.f32.mrb[0].mxu0
      %v4866 = vpop.f32.mrb[0].mxu0
      %v4867 = vadd.f32 0.0, %v4866
      %v4868 = vpop.f32.mrb[0].mxu0
      %4869 = vmatprep.mubr.bf16.mxu0 0
      %4870 = vmatmul.mubr.bf16.gmra.mrb[0].mxu0 %v4736
      %v4871 = vpop.f32.mrb[0].mxu0
      %v4872 = vadd.f32 0.0, %v4871
      %v4873 = vpop.f32.mrb[0].mxu0
      %v4874 = vpop.f32.mrb[0].mxu0
      %v4875 = vadd.f32 0.0, %v4874
      %v4876 = vpop.f32.mrb[0].mxu0
      %4877 = vmatprep.mubr.bf16.mxu0 0
      %4878 = vmatmul.mubr.bf16.gmra.mrb[0].mxu0 %v4737
      %v4879 = vpop.f32.mrb[0].mxu0
      %v4880 = vadd.f32 0.0, %v4879
      %v4881 = vpop.f32.mrb[0].mxu0
      %v4882 = vpop.f32.mrb[0].mxu0
      %v4883 = vadd.f32 0.0, %v4882
      %v4884 = vpop.f32.mrb[0].mxu0
      %4885 = vmatprep.mubr.bf16.mxu0 0
      %4886 = vmatmul.mubr.bf16.gmra.mrb[0].mxu0 %v4738
      %v4887 = vpop.f32.mrb[0].mxu0
      %v4888 = vadd.f32 0.0, %v4887
      %v4889 = vpop.f32.mrb[0].mxu0
      %v4890 = vpop.f32.mrb[0].mxu0
      %v4891 = vadd.f32 0.0, %v4890
      %v4892 = vpop.f32.mrb[0].mxu0
      %4893 = vmatprep.mubr.bf16.mxu0 0
      %4894 = vmatmul.mubr.bf16.gmra.mrb[0].mxu0 %v4739
      %v4895 = vpop.f32.mrb[0].mxu0
      %v4896 = vadd.f32 0.0, %v4895
      %v4897 = vpop.f32.mrb[0].mxu0
      %v4898 = vpop.f32.mrb[0].mxu0
      %v4899 = vadd.f32 0.0, %v4898
      %v4900 = vpop.f32.mrb[0].mxu0
      %4901 = vmatprep.mubr.bf16.mxu0 0
      %4902 = vmatmul.mubr.bf16.gmra.mrb[0].mxu0 %v4740
      %v4903 = vpop.f32.mrb[0].mxu0
      %v4904 = vadd.f32 0.0, %v4903
      %v4905 = vpop.f32.mrb[0].mxu0
      %v4906 = vpop.f32.mrb[0].mxu0
      %v4907 = vadd.f32 0.0, %v4906
      %v4908 = vpop.f32.mrb[0].mxu0
      %4909 = vmatprep.mubr.bf16.mxu0 0
      %4910 = vmatmul.mubr.bf16.gmra.mrb[0].mxu0 %v4741
      %v4911 = vpop.f32.mrb[0].mxu0
      %v4912 = vadd.f32 0.0, %v4911
      %v4913 = vpop.f32.mrb[0].mxu0
      %v4914 = vpop.f32.mrb[0].mxu0
      %v4915 = vadd.f32 0.0, %v4914
      %v4916 = vpop.f32.mrb[0].mxu0
      %4917 = vmatprep.mubr.bf16.mxu0 0
      %4918 = vmatmul.mubr.bf16.gmra.mrb[0].mxu0 %v4742
      %v4919 = vpop.f32.mrb[0].mxu0
      %v4920 = vadd.f32 0.0, %v4919
      %v4921 = vpop.f32.mrb[0].mxu0
      %v4922 = vpop.f32.mrb[0].mxu0
      %v4923 = vadd.f32 0.0, %v4922
      %v4924 = vpop.f32.mrb[0].mxu0
      %4925 = vmatprep.mubr.bf16.mxu0 0
      %4926 = vmatmul.mubr.bf16.gmra.mrb[0].mxu0 %v4743
      %v4927 = vpop.f32.mrb[0].mxu0
      %v4928 = vadd.f32 0.0, %v4927
      %v4929 = vpop.f32.mrb[0].mxu0
      %v4930 = vpop.f32.mrb[0].mxu0
      %v4931 = vadd.f32 0.0, %v4930
      %v4932 = vpop.f32.mrb[0].mxu0
      %4933 = vmatprep.mubr.bf16.mxu0 0
      %4934 = vmatmul.mubr.bf16.gmra.mrb[0].mxu0 %v4744
      %v4935 = vpop.f32.mrb[0].mxu0
      %v4936 = vadd.f32 0.0, %v4935
      %v4937 = vpop.f32.mrb[0].mxu0
      %v4938 = vpop.f32.mrb[0].mxu0
      %v4939 = vadd.f32 0.0, %v4938
      %v4940 = vpop.f32.mrb[0].mxu0
      %4941 = vmatprep.mubr.bf16.mxu0 0
      %4942 = vmatmul.mubr.bf16.gmra.mrb[0].mxu0 %v4745
      %v4943 = vpop.f32.mrb[0].mxu0
      %v4944 = vadd.f32 0.0, %v4943
      %v4945 = vpop.f32.mrb[0].mxu0
      %v4946 = vpop.f32.mrb[0].mxu0
      %v4947 = vadd.f32 0.0, %v4946
      %v4948 = vpop.f32.mrb[0].mxu0
      %4949 = vmatprep.mubr.bf16.mxu0 0
      %4950 = vmatmul.mubr.bf16.gmra.mrb[0].mxu0 %v4746
      %v4951 = vpop.f32.mrb[0].mxu0
      %v4952 = vadd.f32 0.0, %v4951
      %v4953 = vpop.f32.mrb[0].mxu0
      %v4954 = vpop.f32.mrb[0].mxu0
      %v4955 = vadd.f32 0.0, %v4954
      %v4956 = vpop.f32.mrb[0].mxu0
      %4957 = vmatprep.mubr.bf16.mxu0 0
      %4958 = vmatmul.mubr.bf16.gmra.mrb[0].mxu0 %v4747
      %v4959 = vpop.f32.mrb[0].mxu0
      %v4960 = vadd.f32 0.0, %v4959
      %v4961 = vpop.f32.mrb[0].mxu0
      %v4962 = vpop.f32.mrb[0].mxu0
      %v4963 = vadd.f32 0.0, %v4962
      %v4964 = vpop.f32.mrb[0].mxu0
      %4965 = vmatprep.mubr.bf16.mxu0 0
      %4966 = vmatmul.mubr.bf16.gmra.mrb[0].mxu0 %v4748
      %v4967 = vpop.f32.mrb[0].mxu0
      %v4968 = vadd.f32 0.0, %v4967
      %v4969 = vpop.f32.mrb[0].mxu0
      %v4970 = vpop.f32.mrb[0].mxu0
      %v4971 = vadd.f32 0.0, %v4970
      %v4972 = vpop.f32.mrb[0].mxu0
      %4973 = vdwg.mxu0
      %v4974 = vadd.f32 %v4268, %v4848
      %v4975 = vadd.f32 %v4269, %v4851
      %v4976 = vadd.f32 %v4270, %v4856
      %v4977 = vadd.f32 %v4271, %v4859
      %v4978 = vadd.f32 %v4272, %v4864
      %v4979 = vadd.f32 %v4273, %v4867
      %v4980 = vadd.f32 %v4274, %v4872
      %v4981 = vadd.f32 %v4275, %v4875
      %v4982 = vadd.f32 %v4276, %v4880
      %v4983 = vadd.f32 %v4277, %v4883
      %v4984 = vadd.f32 %v4278, %v4888
      %v4985 = vadd.f32 %v4279, %v4891
      %v4986 = vadd.f32 %v4280, %v4896
      %v4987 = vadd.f32 %v4281, %v4899
      %v4988 = vadd.f32 %v4282, %v4904
      %v4989 = vadd.f32 %v4283, %v4907
      %v4990 = vadd.f32 %v4284, %v4912
      %v4991 = vadd.f32 %v4285, %v4915
      %v4992 = vadd.f32 %v4286, %v4920
      %v4993 = vadd.f32 %v4287, %v4923
      %v4994 = vadd.f32 %v4288, %v4928
      %v4995 = vadd.f32 %v4289, %v4931
      %v4996 = vadd.f32 %v4290, %v4936
      %v4997 = vadd.f32 %v4291, %v4939
      %v4998 = vadd.f32 %v4292, %v4944
      %v4999 = vadd.f32 %v4293, %v4947
      %v5000 = vadd.f32 %v4294, %v4952
      %v5001 = vadd.f32 %v4295, %v4955
      %v5002 = vadd.f32 %v4296, %v4960
      %v5003 = vadd.f32 %v4297, %v4963
      %v5004 = vadd.f32 %v4298, %v4968
      %v5005 = vadd.f32 %v4299, %v4971
      %v5022 = vrot.slane %v3898, 5
      %v5023 = vrot.slane %v5022, 4
      %v5024 = vrot.slane %v3899, 5
      %v5025 = vsel %vm1904, %v5023, %v5024
      %v5026 = vrot.slane %v5024, 4
      %v5027 = vrot.slane %v3900, 5
      %v5028 = vsel %vm1904, %v5026, %v5027
      %v5029 = vrot.slane %v3901, 5
      %v5030 = vrot.slane %v5029, 4
      %v5031 = vrot.slane %v3902, 5
      %v5032 = vsel %vm1904, %v5030, %v5031
      %v5033 = vrot.slane %v5031, 4
      %v5034 = vrot.slane %v3903, 5
      %v5035 = vsel %vm1904, %v5033, %v5034
      %v5036 = vrot.slane %v3904, 5
      %v5037 = vrot.slane %v5036, 4
      %v5038 = vrot.slane %v3905, 5
      %v5039 = vsel %vm1904, %v5037, %v5038
      %v5040 = vrot.slane %v5038, 4
      %v5041 = vrot.slane %v3906, 5
      %v5042 = vsel %vm1904, %v5040, %v5041
      %v5043 = vrot.slane %v3907, 5
      %v5044 = vrot.slane %v5043, 4
      %v5045 = vrot.slane %v3908, 5
      %v5046 = vsel %vm1904, %v5044, %v5045
      %v5047 = vrot.slane %v5045, 4
      %v5048 = vrot.slane %v3909, 5
      %v5049 = vsel %vm1904, %v5047, %v5048
      %v5050 = vrot.slane %v3910, 5
      %v5051 = vrot.slane %v5050, 4
      %v5052 = vrot.slane %v3911, 5
      %v5053 = vsel %vm1904, %v5051, %v5052
      %v5054 = vrot.slane %v5052, 4
      %v5055 = vrot.slane %v3912, 5
      %v5056 = vsel %vm1904, %v5054, %v5055
      %v5057 = vrot.slane %v3913, 5
      %v5058 = vrot.slane %v5057, 4
      %v5059 = vrot.slane %v3914, 5
      %v5060 = vsel %vm1904, %v5058, %v5059
      %v5061 = vrot.slane %v5059, 4
      %v5062 = vrot.slane %v3915, 5
      %v5063 = vsel %vm1904, %v5061, %v5062
      %v5064 = vrot.slane %v3916, 5
      %v5065 = vrot.slane %v5064, 4
      %v5066 = vrot.slane %v3917, 5
      %v5067 = vsel %vm1904, %v5065, %v5066
      %v5068 = vrot.slane %v5066, 4
      %v5069 = vrot.slane %v3918, 5
      %v5070 = vsel %vm1904, %v5068, %v5069
      %v5071 = vrot.slane %v3919, 5
      %v5072 = vrot.slane %v5071, 4
      %v5073 = vrot.slane %v3920, 5
      %v5074 = vsel %vm1904, %v5072, %v5073
      %v5075 = vrot.slane %v5073, 4
      %v5076 = vrot.slane %v3921, 5
      %v5077 = vsel %vm1904, %v5075, %v5076
      %v5078 = vrot.slane %v3922, 5
      %v5079 = vrot.slane %v5078, 4
      %v5080 = vrot.slane %v3923, 5
      %v5081 = vsel %vm1904, %v5079, %v5080
      %v5082 = vrot.slane %v5080, 4
      %v5083 = vrot.slane %v3924, 5
      %v5084 = vsel %vm1904, %v5082, %v5083
      %v5085 = vrot.slane %v3925, 5
      %v5086 = vrot.slane %v5085, 4
      %v5087 = vrot.slane %v3926, 5
      %v5088 = vsel %vm1904, %v5086, %v5087
      %v5089 = vrot.slane %v5087, 4
      %v5090 = vrot.slane %v3927, 5
      %v5091 = vsel %vm1904, %v5089, %v5090
      %v5092 = vrot.slane %v3928, 5
      %v5093 = vrot.slane %v5092, 4
      %v5094 = vrot.slane %v3929, 5
      %v5095 = vsel %vm1904, %v5093, %v5094
      %v5096 = vrot.slane %v5094, 4
      %v5097 = vrot.slane %v3930, 5
      %v5098 = vsel %vm1904, %v5096, %v5097
      %v5099 = vrot.slane %v3931, 5
      %v5100 = vrot.slane %v5099, 4
      %v5101 = vrot.slane %v3932, 5
      %v5102 = vsel %vm1904, %v5100, %v5101
      %v5103 = vrot.slane %v5101, 4
      %v5104 = vrot.slane %v3933, 5
      %v5105 = vsel %vm1904, %v5103, %v5104
      %v5106 = vrot.slane %v3934, 5
      %v5107 = vrot.slane %v5106, 4
      %v5108 = vrot.slane %v3935, 5
      %v5109 = vsel %vm1904, %v5107, %v5108
      %v5110 = vrot.slane %v5108, 4
      %v5111 = vrot.slane %v3936, 5
      %v5112 = vsel %vm1904, %v5110, %v5111
      %v5113 = vrot.slane %v3937, 5
      %v5114 = vrot.slane %v5113, 4
      %v5115 = vrot.slane %v3938, 5
      %v5116 = vsel %vm1904, %v5114, %v5115
      %v5117 = vrot.slane %v5115, 4
      %v5118 = vrot.slane %v3939, 5
      %v5119 = vsel %vm1904, %v5117, %v5118
      %v5120 = vrot.slane %v3940, 5
      %v5121 = vrot.slane %v5120, 4
      %v5122 = vrot.slane %v3941, 5
      %v5123 = vsel %vm1904, %v5121, %v5122
      %v5124 = vrot.slane %v5122, 4
      %v5125 = vrot.slane %v3942, 5
      %v5126 = vsel %vm1904, %v5124, %v5125
      %v5127 = vrot.slane %v3943, 5
      %v5128 = vrot.slane %v5127, 4
      %v5129 = vrot.slane %v3944, 5
      %v5130 = vsel %vm1904, %v5128, %v5129
      %v5131 = vrot.slane %v5129, 4
      %v5132 = vrot.slane %v3945, 5
      %v5133 = vsel %vm1904, %v5131, %v5132
      %s5134 = scalar_lea.vmem %s3, 512
      %v5135 = vld [vmem:[%s5134] sm:$0xf]
      %v5136 = vld [vmem:[%s5134 + $0x4] sm:$0xf]
      %v5137 = vld [vmem:[%s5134 + $0x8] sm:$0xf]
      %v5138 = vld [vmem:[%s5134 + $0xc] sm:$0xf]
      %v5139 = vld [vmem:[%s5134 + $0x10] sm:$0xf]
      %v5140 = vld [vmem:[%s5134 + $0x14] sm:$0xf]
      %v5141 = vld [vmem:[%s5134 + $0x18] sm:$0xf]
      %v5142 = vld [vmem:[%s5134 + $0x1c] sm:$0xf]
      %v5143 = vld [vmem:[%s5134 + $0x20] sm:$0xf]
      %v5144 = vld [vmem:[%s5134 + $0x24] sm:$0xf]
      %v5145 = vld [vmem:[%s5134 + $0x28] sm:$0xf]
      %v5146 = vld [vmem:[%s5134 + $0x2c] sm:$0xf]
      %v5147 = vld [vmem:[%s5134 + $0x30] sm:$0xf]
      %v5148 = vld [vmem:[%s5134 + $0x34] sm:$0xf]
      %v5149 = vld [vmem:[%s5134 + $0x38] sm:$0xf]
      %v5150 = vld [vmem:[%s5134 + $0x3c] sm:$0xf]
      %v5151 = vunpack.c.l.b16 %v5025
      %v5152 = vunpack.c.l.b16 %v5028
      %v5153 = vunpack.c.l.b16 %v5032
      %v5154 = vunpack.c.l.b16 %v5035
      %v5155 = vunpack.c.l.b16 %v5039
      %v5156 = vunpack.c.l.b16 %v5042
      %v5157 = vunpack.c.l.b16 %v5046
      %v5158 = vunpack.c.l.b16 %v5049
      %v5159 = vunpack.c.l.b16 %v5053
      %v5160 = vunpack.c.l.b16 %v5056
      %v5161 = vunpack.c.l.b16 %v5060
      %v5162 = vunpack.c.l.b16 %v5063
      %v5163 = vunpack.c.l.b16 %v5067
      %v5164 = vunpack.c.l.b16 %v5070
      %v5165 = vunpack.c.l.b16 %v5074
      %v5166 = vunpack.c.l.b16 %v5077
      %v5167 = vunpack.c.l.b16 %v5081
      %v5168 = vunpack.c.l.b16 %v5084
      %v5169 = vunpack.c.l.b16 %v5088
      %v5170 = vunpack.c.l.b16 %v5091
      %v5171 = vunpack.c.l.b16 %v5095
      %v5172 = vunpack.c.l.b16 %v5098
      %v5173 = vunpack.c.l.b16 %v5102
      %v5174 = vunpack.c.l.b16 %v5105
      %v5175 = vunpack.c.l.b16 %v5109
      %v5176 = vunpack.c.l.b16 %v5112
      %v5177 = vunpack.c.l.b16 %v5116
      %v5178 = vunpack.c.l.b16 %v5119
      %v5179 = vunpack.c.l.b16 %v5123
      %v5180 = vunpack.c.l.b16 %v5126
      %v5181 = vunpack.c.l.b16 %v5130
      %v5182 = vunpack.c.l.b16 %v5133
      %v5183 = vpack.c.b16 %v5152, %v5151
      %v5184 = vpack.c.b16 %v5154, %v5153
      %v5185 = vpack.c.b16 %v5156, %v5155
      %v5186 = vpack.c.b16 %v5158, %v5157
      %v5187 = vpack.c.b16 %v5160, %v5159
      %v5188 = vpack.c.b16 %v5162, %v5161
      %v5189 = vpack.c.b16 %v5164, %v5163
      %v5190 = vpack.c.b16 %v5166, %v5165
      %v5191 = vpack.c.b16 %v5168, %v5167
      %v5192 = vpack.c.b16 %v5170, %v5169
      %v5193 = vpack.c.b16 %v5172, %v5171
      %v5194 = vpack.c.b16 %v5174, %v5173
      %v5195 = vpack.c.b16 %v5176, %v5175
      %v5196 = vpack.c.b16 %v5178, %v5177
      %v5197 = vpack.c.b16 %v5180, %v5179
      %v5198 = vpack.c.b16 %v5182, %v5181
      %v5231 = vunpack.c.l.b16 %v5135
      %v5232 = vunpack.c.l.b16 %v5136
      %v5233 = vunpack.c.l.b16 %v5137
      %v5234 = vunpack.c.l.b16 %v5138
      %v5235 = vunpack.c.l.b16 %v5139
      %v5236 = vunpack.c.l.b16 %v5140
      %v5237 = vunpack.c.l.b16 %v5141
      %v5238 = vunpack.c.l.b16 %v5142
      %v5239 = vunpack.c.l.b16 %v5143
      %v5240 = vunpack.c.l.b16 %v5144
      %v5241 = vunpack.c.l.b16 %v5145
      %v5242 = vunpack.c.l.b16 %v5146
      %v5243 = vunpack.c.l.b16 %v5147
      %v5244 = vunpack.c.l.b16 %v5148
      %v5245 = vunpack.c.l.b16 %v5149
      %v5246 = vunpack.c.l.b16 %v5150
      %v5247 = vpack.c.b16 %v5232, %v5231
      %v5248 = vpack.c.b16 %v5234, %v5233
      %v5249 = vpack.c.b16 %v5236, %v5235
      %v5250 = vpack.c.b16 %v5238, %v5237
      %v5251 = vpack.c.b16 %v5240, %v5239
      %v5252 = vpack.c.b16 %v5242, %v5241
      %v5253 = vpack.c.b16 %v5244, %v5243
      %v5254 = vpack.c.b16 %v5246, %v5245
      %5263 = vmatprep.subr.bf16.mxu0 0
      %5264 = vmatpush1.bf16.msra.mxu0 %v5247
      %5265 = vmatprep.subr.bf16.mxu0 0
      %5266 = vmatpush1.bf16.msra.mxu0 %v5248
      %5267 = vmatprep.subr.bf16.mxu0 0
      %5268 = vmatpush1.bf16.msra.mxu0 %v5249
      %5269 = vmatprep.subr.bf16.mxu0 0
      %5270 = vmatpush1.bf16.msra.mxu0 %v5250
      %5271 = vmatprep.subr.bf16.mxu0 0
      %5272 = vmatpush1.bf16.msra.mxu0 %v5251
      %5273 = vmatprep.subr.bf16.mxu0 0
      %5274 = vmatpush1.bf16.msra.mxu0 %v5252
      %5275 = vmatprep.subr.bf16.mxu0 0
      %5276 = vmatpush1.bf16.msra.mxu0 %v5253
      %5277 = vmatprep.subr.bf16.mxu0 0
      %5278 = vmatpush1.bf16.msra.mxu0 %v5254
      %5279 = vmatprep.subr.bf16.mxu0 0
      %5280 = vmatpush1.bf16.msra.mxu0 0
      %5281 = vmatprep.subr.bf16.mxu0 0
      %5282 = vmatpush1.bf16.msra.mxu0 0
      %5283 = vmatprep.subr.bf16.mxu0 0
      %5284 = vmatpush1.bf16.msra.mxu0 0
      %5285 = vmatprep.subr.bf16.mxu0 0
      %5286 = vmatpush1.bf16.msra.mxu0 0
      %5287 = vmatprep.subr.bf16.mxu0 0
      %5288 = vmatpush1.bf16.msra.mxu0 0
      %5289 = vmatprep.subr.bf16.mxu0 0
      %5290 = vmatpush1.bf16.msra.mxu0 0
      %5291 = vmatprep.subr.bf16.mxu0 0
      %5292 = vmatpush1.bf16.msra.mxu0 0
      %5293 = vmatprep.subr.bf16.mxu0 0
      %5294 = vmatpush1.bf16.msra.mxu0 0
      %5295 = vmatprep.mubr.bf16.mxu0 0
      %5296 = vmatmul.mubr.bf16.gmra.mrb[0].mxu0 %v5183
      %v5297 = vpop.f32.mrb[0].mxu0
      %v5298 = vadd.f32 0.0, %v5297
      %v5299 = vpop.f32.mrb[0].mxu0
      %v5300 = vpop.f32.mrb[0].mxu0
      %v5301 = vadd.f32 0.0, %v5300
      %v5302 = vpop.f32.mrb[0].mxu0
      %5303 = vmatprep.mubr.bf16.mxu0 0
      %5304 = vmatmul.mubr.bf16.gmra.mrb[0].mxu0 %v5184
      %v5305 = vpop.f32.mrb[0].mxu0
      %v5306 = vadd.f32 0.0, %v5305
      %v5307 = vpop.f32.mrb[0].mxu0
      %v5308 = vpop.f32.mrb[0].mxu0
      %v5309 = vadd.f32 0.0, %v5308
      %v5310 = vpop.f32.mrb[0].mxu0
      %5311 = vmatprep.mubr.bf16.mxu0 0
      %5312 = vmatmul.mubr.bf16.gmra.mrb[0].mxu0 %v5185
      %v5313 = vpop.f32.mrb[0].mxu0
      %v5314 = vadd.f32 0.0, %v5313
      %v5315 = vpop.f32.mrb[0].mxu0
      %v5316 = vpop.f32.mrb[0].mxu0
      %v5317 = vadd.f32 0.0, %v5316
      %v5318 = vpop.f32.mrb[0].mxu0
      %5319 = vmatprep.mubr.bf16.mxu0 0
      %5320 = vmatmul.mubr.bf16.gmra.mrb[0].mxu0 %v5186
      %v5321 = vpop.f32.mrb[0].mxu0
      %v5322 = vadd.f32 0.0, %v5321
      %v5323 = vpop.f32.mrb[0].mxu0
      %v5324 = vpop.f32.mrb[0].mxu0
      %v5325 = vadd.f32 0.0, %v5324
      %v5326 = vpop.f32.mrb[0].mxu0
      %5327 = vmatprep.mubr.bf16.mxu0 0
      %5328 = vmatmul.mubr.bf16.gmra.mrb[0].mxu0 %v5187
      %v5329 = vpop.f32.mrb[0].mxu0
      %v5330 = vadd.f32 0.0, %v5329
      %v5331 = vpop.f32.mrb[0].mxu0
      %v5332 = vpop.f32.mrb[0].mxu0
      %v5333 = vadd.f32 0.0, %v5332
      %v5334 = vpop.f32.mrb[0].mxu0
      %5335 = vmatprep.mubr.bf16.mxu0 0
      %5336 = vmatmul.mubr.bf16.gmra.mrb[0].mxu0 %v5188
      %v5337 = vpop.f32.mrb[0].mxu0
      %v5338 = vadd.f32 0.0, %v5337
      %v5339 = vpop.f32.mrb[0].mxu0
      %v5340 = vpop.f32.mrb[0].mxu0
      %v5341 = vadd.f32 0.0, %v5340
      %v5342 = vpop.f32.mrb[0].mxu0
      %5343 = vmatprep.mubr.bf16.mxu0 0
      %5344 = vmatmul.mubr.bf16.gmra.mrb[0].mxu0 %v5189
      %v5345 = vpop.f32.mrb[0].mxu0
      %v5346 = vadd.f32 0.0, %v5345
      %v5347 = vpop.f32.mrb[0].mxu0
      %v5348 = vpop.f32.mrb[0].mxu0
      %v5349 = vadd.f32 0.0, %v5348
      %v5350 = vpop.f32.mrb[0].mxu0
      %5351 = vmatprep.mubr.bf16.mxu0 0
      %5352 = vmatmul.mubr.bf16.gmra.mrb[0].mxu0 %v5190
      %v5353 = vpop.f32.mrb[0].mxu0
      %v5354 = vadd.f32 0.0, %v5353
      %v5355 = vpop.f32.mrb[0].mxu0
      %v5356 = vpop.f32.mrb[0].mxu0
      %v5357 = vadd.f32 0.0, %v5356
      %v5358 = vpop.f32.mrb[0].mxu0
      %5359 = vmatprep.mubr.bf16.mxu0 0
      %5360 = vmatmul.mubr.bf16.gmra.mrb[0].mxu0 %v5191
      %v5361 = vpop.f32.mrb[0].mxu0
      %v5362 = vadd.f32 0.0, %v5361
      %v5363 = vpop.f32.mrb[0].mxu0
      %v5364 = vpop.f32.mrb[0].mxu0
      %v5365 = vadd.f32 0.0, %v5364
      %v5366 = vpop.f32.mrb[0].mxu0
      %5367 = vmatprep.mubr.bf16.mxu0 0
      %5368 = vmatmul.mubr.bf16.gmra.mrb[0].mxu0 %v5192
      %v5369 = vpop.f32.mrb[0].mxu0
      %v5370 = vadd.f32 0.0, %v5369
      %v5371 = vpop.f32.mrb[0].mxu0
      %v5372 = vpop.f32.mrb[0].mxu0
      %v5373 = vadd.f32 0.0, %v5372
      %v5374 = vpop.f32.mrb[0].mxu0
      %5375 = vmatprep.mubr.bf16.mxu0 0
      %5376 = vmatmul.mubr.bf16.gmra.mrb[0].mxu0 %v5193
      %v5377 = vpop.f32.mrb[0].mxu0
      %v5378 = vadd.f32 0.0, %v5377
      %v5379 = vpop.f32.mrb[0].mxu0
      %v5380 = vpop.f32.mrb[0].mxu0
      %v5381 = vadd.f32 0.0, %v5380
      %v5382 = vpop.f32.mrb[0].mxu0
      %5383 = vmatprep.mubr.bf16.mxu0 0
      %5384 = vmatmul.mubr.bf16.gmra.mrb[0].mxu0 %v5194
      %v5385 = vpop.f32.mrb[0].mxu0
      %v5386 = vadd.f32 0.0, %v5385
      %v5387 = vpop.f32.mrb[0].mxu0
      %v5388 = vpop.f32.mrb[0].mxu0
      %v5389 = vadd.f32 0.0, %v5388
      %v5390 = vpop.f32.mrb[0].mxu0
      %5391 = vmatprep.mubr.bf16.mxu0 0
      %5392 = vmatmul.mubr.bf16.gmra.mrb[0].mxu0 %v5195
      %v5393 = vpop.f32.mrb[0].mxu0
      %v5394 = vadd.f32 0.0, %v5393
      %v5395 = vpop.f32.mrb[0].mxu0
      %v5396 = vpop.f32.mrb[0].mxu0
      %v5397 = vadd.f32 0.0, %v5396
      %v5398 = vpop.f32.mrb[0].mxu0
      %5399 = vmatprep.mubr.bf16.mxu0 0
      %5400 = vmatmul.mubr.bf16.gmra.mrb[0].mxu0 %v5196
      %v5401 = vpop.f32.mrb[0].mxu0
      %v5402 = vadd.f32 0.0, %v5401
      %v5403 = vpop.f32.mrb[0].mxu0
      %v5404 = vpop.f32.mrb[0].mxu0
      %v5405 = vadd.f32 0.0, %v5404
      %v5406 = vpop.f32.mrb[0].mxu0
      %5407 = vmatprep.mubr.bf16.mxu0 0
      %5408 = vmatmul.mubr.bf16.gmra.mrb[0].mxu0 %v5197
      %v5409 = vpop.f32.mrb[0].mxu0
      %v5410 = vadd.f32 0.0, %v5409
      %v5411 = vpop.f32.mrb[0].mxu0
      %v5412 = vpop.f32.mrb[0].mxu0
      %v5413 = vadd.f32 0.0, %v5412
      %v5414 = vpop.f32.mrb[0].mxu0
      %5415 = vmatprep.mubr.bf16.mxu0 0
      %5416 = vmatmul.mubr.bf16.gmra.mrb[0].mxu0 %v5198
      %v5417 = vpop.f32.mrb[0].mxu0
      %v5418 = vadd.f32 0.0, %v5417
      %v5419 = vpop.f32.mrb[0].mxu0
      %v5420 = vpop.f32.mrb[0].mxu0
      %v5421 = vadd.f32 0.0, %v5420
      %v5422 = vpop.f32.mrb[0].mxu0
      %5423 = vdwg.mxu0
      %v5424 = vadd.f32 %v4974, %v5298
      %v5425 = vadd.f32 %v4975, %v5301
      %v5426 = vadd.f32 %v4976, %v5306
      %v5427 = vadd.f32 %v4977, %v5309
      %v5428 = vadd.f32 %v4978, %v5314
      %v5429 = vadd.f32 %v4979, %v5317
      %v5430 = vadd.f32 %v4980, %v5322
      %v5431 = vadd.f32 %v4981, %v5325
      %v5432 = vadd.f32 %v4982, %v5330
      %v5433 = vadd.f32 %v4983, %v5333
      %v5434 = vadd.f32 %v4984, %v5338
      %v5435 = vadd.f32 %v4985, %v5341
      %v5436 = vadd.f32 %v4986, %v5346
      %v5437 = vadd.f32 %v4987, %v5349
      %v5438 = vadd.f32 %v4988, %v5354
      %v5439 = vadd.f32 %v4989, %v5357
      %v5440 = vadd.f32 %v4990, %v5362
      %v5441 = vadd.f32 %v4991, %v5365
      %v5442 = vadd.f32 %v4992, %v5370
      %v5443 = vadd.f32 %v4993, %v5373
      %v5444 = vadd.f32 %v4994, %v5378
      %v5445 = vadd.f32 %v4995, %v5381
      %v5446 = vadd.f32 %v4996, %v5386
      %v5447 = vadd.f32 %v4997, %v5389
      %v5448 = vadd.f32 %v4998, %v5394
      %v5449 = vadd.f32 %v4999, %v5397
      %v5450 = vadd.f32 %v5000, %v5402
      %v5451 = vadd.f32 %v5001, %v5405
      %v5452 = vadd.f32 %v5002, %v5410
      %v5453 = vadd.f32 %v5003, %v5413
      %v5454 = vadd.f32 %v5004, %v5418
      %v5455 = vadd.f32 %v5005, %v5421
      %v5456 = vpack.c.bf16 %v5425, %v5424
      %v5457 = vpack.c.bf16 %v5427, %v5426
      %v5458 = vpack.c.bf16 %v5429, %v5428
      %v5459 = vpack.c.bf16 %v5431, %v5430
      %v5460 = vpack.c.bf16 %v5433, %v5432
      %v5461 = vpack.c.bf16 %v5435, %v5434
      %v5462 = vpack.c.bf16 %v5437, %v5436
      %v5463 = vpack.c.bf16 %v5439, %v5438
      %v5464 = vpack.c.bf16 %v5441, %v5440
      %v5465 = vpack.c.bf16 %v5443, %v5442
      %v5466 = vpack.c.bf16 %v5445, %v5444
      %v5467 = vpack.c.bf16 %v5447, %v5446
      %v5468 = vpack.c.bf16 %v5449, %v5448
      %v5469 = vpack.c.bf16 %v5451, %v5450
      %v5470 = vpack.c.bf16 %v5453, %v5452
      %v5471 = vpack.c.bf16 %v5455, %v5454
      %v5488 = vunpack.c.l.b16 %v5456
      %v5489 = vunpack.c.h.b16 %v5456
      %v5490 = vunpack.c.l.b16 %v5457
      %v5491 = vunpack.c.h.b16 %v5457
      %v5492 = vunpack.c.l.b16 %v5458
      %v5493 = vunpack.c.h.b16 %v5458
      %v5494 = vunpack.c.l.b16 %v5459
      %v5495 = vunpack.c.h.b16 %v5459
      %v5496 = vunpack.c.l.b16 %v5460
      %v5497 = vunpack.c.h.b16 %v5460
      %v5498 = vunpack.c.l.b16 %v5461
      %v5499 = vunpack.c.h.b16 %v5461
      %v5500 = vunpack.c.l.b16 %v5462
      %v5501 = vunpack.c.h.b16 %v5462
      %v5502 = vunpack.c.l.b16 %v5463
      %v5503 = vunpack.c.h.b16 %v5463
      %v5504 = vunpack.c.l.b16 %v5464
      %v5505 = vunpack.c.h.b16 %v5464
      %v5506 = vunpack.c.l.b16 %v5465
      %v5507 = vunpack.c.h.b16 %v5465
      %v5508 = vunpack.c.l.b16 %v5466
      %v5509 = vunpack.c.h.b16 %v5466
      %v5510 = vunpack.c.l.b16 %v5467
      %v5511 = vunpack.c.h.b16 %v5467
      %v5512 = vunpack.c.l.b16 %v5468
      %v5513 = vunpack.c.h.b16 %v5468
      %v5514 = vunpack.c.l.b16 %v5469
      %v5515 = vunpack.c.h.b16 %v5469
      %v5516 = vunpack.c.l.b16 %v5470
      %v5517 = vunpack.c.h.b16 %v5470
      %v5518 = vunpack.c.l.b16 %v5471
      %v5519 = vunpack.c.h.b16 %v5471
      %v5520 = vpack.c.b16 %v5488, %v5488
      %v5521 = vpack.c.b16 %v5489, %v5489
      %v5522 = vpack.c.b16 %v5490, %v5490
      %v5523 = vpack.c.b16 %v5491, %v5491
      %v5524 = vpack.c.b16 %v5492, %v5492
      %v5525 = vpack.c.b16 %v5493, %v5493
      %v5526 = vpack.c.b16 %v5494, %v5494
      %v5527 = vpack.c.b16 %v5495, %v5495
      %v5528 = vpack.c.b16 %v5496, %v5496
      %v5529 = vpack.c.b16 %v5497, %v5497
      %v5530 = vpack.c.b16 %v5498, %v5498
      %v5531 = vpack.c.b16 %v5499, %v5499
      %v5532 = vpack.c.b16 %v5500, %v5500
      %v5533 = vpack.c.b16 %v5501, %v5501
      %v5534 = vpack.c.b16 %v5502, %v5502
      %v5535 = vpack.c.b16 %v5503, %v5503
      %v5536 = vpack.c.b16 %v5504, %v5504
      %v5537 = vpack.c.b16 %v5505, %v5505
      %v5538 = vpack.c.b16 %v5506, %v5506
      %v5539 = vpack.c.b16 %v5507, %v5507
      %v5540 = vpack.c.b16 %v5508, %v5508
      %v5541 = vpack.c.b16 %v5509, %v5509
      %v5542 = vpack.c.b16 %v5510, %v5510
      %v5543 = vpack.c.b16 %v5511, %v5511
      %v5544 = vpack.c.b16 %v5512, %v5512
      %v5545 = vpack.c.b16 %v5513, %v5513
      %v5546 = vpack.c.b16 %v5514, %v5514
      %v5547 = vpack.c.b16 %v5515, %v5515
      %v5548 = vpack.c.b16 %v5516, %v5516
      %v5549 = vpack.c.b16 %v5517, %v5517
      %v5550 = vpack.c.b16 %v5518, %v5518
      %v5551 = vpack.c.b16 %v5519, %v5519
      %5584 = vst [vmem:[%s231] sm:$0xf] %v5520
      %5585 = vst [vmem:[%s231 + $0x4] sm:$0xf] %v5521
      %5586 = vst [vmem:[%s231 + $0x8] sm:$0xf] %v5522
      %5587 = vst [vmem:[%s231 + $0xc] sm:$0xf] %v5523
      %5588 = vst [vmem:[%s231 + $0x10] sm:$0xf] %v5524
      %5589 = vst [vmem:[%s231 + $0x14] sm:$0xf] %v5525
      %5590 = vst [vmem:[%s231 + $0x18] sm:$0xf] %v5526
      %5591 = vst [vmem:[%s231 + $0x1c] sm:$0xf] %v5527
      %5592 = vst [vmem:[%s231 + $0x20] sm:$0xf] %v5528
      %5593 = vst [vmem:[%s231 + $0x24] sm:$0xf] %v5529
      %5594 = vst [vmem:[%s231 + $0x28] sm:$0xf] %v5530
      %5595 = vst [vmem:[%s231 + $0x2c] sm:$0xf] %v5531
      %5596 = vst [vmem:[%s231 + $0x30] sm:$0xf] %v5532
      %5597 = vst [vmem:[%s231 + $0x34] sm:$0xf] %v5533
      %5598 = vst [vmem:[%s231 + $0x38] sm:$0xf] %v5534
      %5599 = vst [vmem:[%s231 + $0x3c] sm:$0xf] %v5535
      %5600 = vst [vmem:[%s231 + $0x40] sm:$0xf] %v5536
      %5601 = vst [vmem:[%s231 + $0x44] sm:$0xf] %v5537
      %5602 = vst [vmem:[%s231 + $0x48] sm:$0xf] %v5538
      %5603 = vst [vmem:[%s231 + $0x4c] sm:$0xf] %v5539
      %5604 = vst [vmem:[%s231 + $0x50] sm:$0xf] %v5540
      %5605 = vst [vmem:[%s231 + $0x54] sm:$0xf] %v5541
      %5606 = vst [vmem:[%s231 + $0x58] sm:$0xf] %v5542
      %5607 = vst [vmem:[%s231 + $0x5c] sm:$0xf] %v5543
      %5608 = vst [vmem:[%s231 + $0x60] sm:$0xf] %v5544
      %5609 = vst [vmem:[%s231 + $0x64] sm:$0xf] %v5545
      %5610 = vst [vmem:[%s231 + $0x68] sm:$0xf] %v5546
      %5611 = vst [vmem:[%s231 + $0x6c] sm:$0xf] %v5547
      %5612 = vst [vmem:[%s231 + $0x70] sm:$0xf] %v5548
      %5613 = vst [vmem:[%s231 + $0x74] sm:$0xf] %v5549
      %5614 = vst [vmem:[%s231 + $0x78] sm:$0xf] %v5550
      %5615 = vst [vmem:[%s231 + $0x7c] sm:$0xf] %v5551
      %v5616 = vld [vmem:[#allocation3] sm:$0x1]
      %v5617 = vadd.f32 %v5424, %v5425
      %v5618 = vadd.f32 %v5617, %v5426
      %v5619 = vadd.f32 %v5618, %v5427
      %v5620 = vadd.f32 %v5619, %v5428
      %v5621 = vadd.f32 %v5620, %v5429
      %v5622 = vadd.f32 %v5621, %v5430
      %v5623 = vadd.f32 %v5622, %v5431
      %v5624 = vadd.f32 %v5623, %v5432
      %v5625 = vadd.f32 %v5624, %v5433
      %v5626 = vadd.f32 %v5625, %v5434
      %v5627 = vadd.f32 %v5626, %v5435
      %v5628 = vadd.f32 %v5627, %v5436
      %v5629 = vadd.f32 %v5628, %v5437
      %v5630 = vadd.f32 %v5629, %v5438
      %v5631 = vadd.f32 %v5630, %v5439
      %v5632 = vadd.f32 %v5631, %v5440
      %v5633 = vadd.f32 %v5632, %v5441
      %v5634 = vadd.f32 %v5633, %v5442
      %v5635 = vadd.f32 %v5634, %v5443
      %v5636 = vadd.f32 %v5635, %v5444
      %v5637 = vadd.f32 %v5636, %v5445
      %v5638 = vadd.f32 %v5637, %v5446
      %v5639 = vadd.f32 %v5638, %v5447
      %v5640 = vadd.f32 %v5639, %v5448
      %v5641 = vadd.f32 %v5640, %v5449
      %v5642 = vadd.f32 %v5641, %v5450
      %v5643 = vadd.f32 %v5642, %v5451
      %v5644 = vadd.f32 %v5643, %v5452
      %v5645 = vadd.f32 %v5644, %v5453
      %v5646 = vadd.f32 %v5645, %v5454
      %v5647 = vadd.f32 %v5646, %v5455
      %v5648 = vrot.slane %v5647, 4
      %v5649 = vadd.f32 %v5647, %v5648
      %v5650 = vrot.slane %v5649, 2
      %v5651 = vadd.f32 %v5649, %v5650
      %v5652 = vrot.slane %v5651, 1
      %v5653 = vadd.f32 %v5651, %v5652
      %v5654 = vadd.f32 %v5616, %v5653
      %5655 = vst [vmem:[#allocation3] sm:$0x1] %v5654
      %v5656 = vld [vmem:[#allocation4] sm:$0x1]
      %v5657 = vmul.f32 %v5424, %v5424
      %v5658 = vmul.f32 %v5425, %v5425
      %v5659 = vmul.f32 %v5426, %v5426
      %v5660 = vmul.f32 %v5427, %v5427
      %v5661 = vmul.f32 %v5428, %v5428
      %v5662 = vmul.f32 %v5429, %v5429
      %v5663 = vmul.f32 %v5430, %v5430
      %v5664 = vmul.f32 %v5431, %v5431
      %v5665 = vmul.f32 %v5432, %v5432
      %v5666 = vmul.f32 %v5433, %v5433
      %v5667 = vmul.f32 %v5434, %v5434
      %v5668 = vmul.f32 %v5435, %v5435
      %v5669 = vmul.f32 %v5436, %v5436
      %v5670 = vmul.f32 %v5437, %v5437
      %v5671 = vmul.f32 %v5438, %v5438
      %v5672 = vmul.f32 %v5439, %v5439
      %v5673 = vmul.f32 %v5440, %v5440
      %v5674 = vmul.f32 %v5441, %v5441
      %v5675 = vmul.f32 %v5442, %v5442
      %v5676 = vmul.f32 %v5443, %v5443
      %v5677 = vmul.f32 %v5444, %v5444
      %v5678 = vmul.f32 %v5445, %v5445
      %v5679 = vmul.f32 %v5446, %v5446
      %v5680 = vmul.f32 %v5447, %v5447
      %v5681 = vmul.f32 %v5448, %v5448
      %v5682 = vmul.f32 %v5449, %v5449
      %v5683 = vmul.f32 %v5450, %v5450
      %v5684 = vmul.f32 %v5451, %v5451
      %v5685 = vmul.f32 %v5452, %v5452
      %v5686 = vmul.f32 %v5453, %v5453
      %v5687 = vmul.f32 %v5454, %v5454
      %v5688 = vmul.f32 %v5455, %v5455
      %v5689 = vadd.f32 %v5657, %v5658
      %v5690 = vadd.f32 %v5689, %v5659
      %v5691 = vadd.f32 %v5690, %v5660
      %v5692 = vadd.f32 %v5691, %v5661
      %v5693 = vadd.f32 %v5692, %v5662
      %v5694 = vadd.f32 %v5693, %v5663
      %v5695 = vadd.f32 %v5694, %v5664
      %v5696 = vadd.f32 %v5695, %v5665
      %v5697 = vadd.f32 %v5696, %v5666
      %v5698 = vadd.f32 %v5697, %v5667
      %v5699 = vadd.f32 %v5698, %v5668
      %v5700 = vadd.f32 %v5699, %v5669
      %v5701 = vadd.f32 %v5700, %v5670
      %v5702 = vadd.f32 %v5701, %v5671
      %v5703 = vadd.f32 %v5702, %v5672
      %v5704 = vadd.f32 %v5703, %v5673
      %v5705 = vadd.f32 %v5704, %v5674
      %v5706 = vadd.f32 %v5705, %v5675
      %v5707 = vadd.f32 %v5706, %v5676
      %v5708 = vadd.f32 %v5707, %v5677
      %v5709 = vadd.f32 %v5708, %v5678
      %v5710 = vadd.f32 %v5709, %v5679
      %v5711 = vadd.f32 %v5710, %v5680
      %v5712 = vadd.f32 %v5711, %v5681
      %v5713 = vadd.f32 %v5712, %v5682
      %v5714 = vadd.f32 %v5713, %v5683
      %v5715 = vadd.f32 %v5714, %v5684
      %v5716 = vadd.f32 %v5715, %v5685
      %v5717 = vadd.f32 %v5716, %v5686
      %v5718 = vadd.f32 %v5717, %v5687
      %v5719 = vadd.f32 %v5718, %v5688
      %v5720 = vrot.slane %v5719, 4
      %v5721 = vadd.f32 %v5719, %v5720
      %v5722 = vrot.slane %v5721, 2
      %v5723 = vadd.f32 %v5721, %v5722
      %v5724 = vrot.slane %v5723, 1
      %v5725 = vadd.f32 %v5723, %v5724
      %v5726 = vadd.f32 %v5656, %v5725
      %5727 = vst [vmem:[#allocation4] sm:$0x1] %v5726
      %v5728 = vld [vmem:[#allocation3] sm:$0x1]
      %v5729 = vld [vmem:[#allocation4] sm:$0x1]
      %v5731 = vlaneseq
      %v5732 = vshrl.u32 %v5731, 7
      %v5733 = vsub.s32 0, %v5732
      %v5734 = vrot.slane %v5729, %v5733
      %vm5736 = vcmask 1040384
      %v5737 = vsel %vm5736, %v5728, %v5734
      %5738 = vst [vmem:[%s235] sm:$0x3] %v5737
      %p5739 = scmp.lt.s32.totalorder %s17, 1
      %s5740 = scalar_select %p5739, %s17, 1
      %s5741 = smul.addr %s5740, 32
      %s5742 = smul.addr %s5741, 4
      %s5743 = scalar_lea.vmem %s4, %s5742
      %p5744 = scmp.lt.s32.totalorder %s17, 1
      %s5745 = scalar_select %p5744, %s17, 1
      %s5746 = smul.addr %s5745, 2
      %s5747 = scalar_lea.vmem %s5, %s5746
      // Predicated region
      $region37: #{plain_block.3} parent=35 // pred_check
        %p5748 = pneg %p124
      $region38: #{plain_block.3} parent=35 // pred_check_branch
        %5750 = sbr.rel (%p5748) target = $region40
      $region39: #{plain_block.3} parent=35 // pred_region
        _
      $region40: #{plain_block.3} parent=35 // pred_fallthru
        _
      // Predicated region
      $region41: #{plain_block.3} parent=35 // pred_check
        %p5751 = pneg %p150
      $region42: #{plain_block.3} parent=35 // pred_check_branch
        %5753 = sbr.rel (%p5751) target = $region44
      $region43: #{plain_block.3} parent=35 // pred_region
        _
      $region44: #{plain_block.3} parent=35 // pred_fallthru
        _
    $region36: #{plain_block.3} parent=5 // pred_fallthru
      _
    %p5754 = scmp.le.s32.totalorder 2, %s12
    // Predicated region
    $region45: #{plain_block.3} parent=5 // pred_check
      %p5755 = pneg %p5754
    $region46: #{plain_block.3} parent=5 // pred_check_branch
      %5757 = sbr.rel (%p5755) target = $region48
    $region47: #{plain_block.3} parent=5 // pred_region
      %s5758 = ssub.s32 %s12, 2
      // Predicated region
      $region49: #{plain_block.3} parent=47 // pred_check
        %p5759 = pneg %p130
      $region50: #{plain_block.3} parent=47 // pred_check_branch
        %5761 = sbr.rel (%p5759) target = $region52
      $region51: #{plain_block.3} parent=47 // pred_region
        %p5762 = scmp.lt.s32.totalorder %s18, 1
        %s5763 = scalar_select %p5762, %s18, 1
        %s5764 = smul.addr %s5763, 32
        %s5765 = smul.addr %s5764, 4
        %s5766 = scalar_lea.vmem %s4, %s5765
      $region52: #{plain_block.3} parent=47 // pred_fallthru
        _
      // Predicated region
      $region53: #{plain_block.3} parent=47 // pred_check
        %p5767 = pneg %p156
      $region54: #{plain_block.3} parent=47 // pred_check_branch
        %5769 = sbr.rel (%p5767) target = $region56
      $region55: #{plain_block.3} parent=47 // pred_region
        %p5770 = scmp.lt.s32.totalorder %s18, 1
        %s5771 = scalar_select %p5770, %s18, 1
        %s5772 = smul.addr %s5771, 2
        %s5773 = scalar_lea.vmem %s5, %s5772
      $region56: #{plain_block.3} parent=47 // pred_fallthru
        _
    $region48: #{plain_block.3} parent=5 // pred_fallthru
      _
  $region6: #{plain_block.3} parent=0 // loop_footer
    %s16 = sadd.s32 1, %s12
  $region7: #{plain_block.3} parent=0 // loop_footer_branch
    %11 = sbr.rel target = $region3
  $region8: #{plain_block.3} parent=0 // loop_exit
    _

</llo_original>
